<compile_context>
chip_gen: v6e
topology: v6e:2x2x1
jax: 0.10.0
libtpu: 0.0.40
codegen_flags: <defaults>
</compile_context>

<pallas_src>
import functools

import jax
import jax.numpy as jnp
from jax.experimental import pallas as pl
from jax.experimental.pallas import tpu as pltpu


# ----------------------------------------------------------------------------
# Static geometry of the BasicRFB_a block (stride = 1, the module default).
#   name: ((KH, KW), (dil_h, dil_w), (pad_h, pad_w), relu)
# ----------------------------------------------------------------------------
_CONV_GEOM = {
    "b0_0": ((1, 1), (1, 1), (0, 0), True),
    "b0_1": ((3, 3), (1, 1), (1, 1), False),
    "b1_0": ((1, 1), (1, 1), (0, 0), True),
    "b1_1": ((3, 1), (1, 1), (1, 0), True),
    "b1_2": ((3, 3), (3, 3), (3, 3), False),
    "b2_0": ((1, 1), (1, 1), (0, 0), True),
    "b2_1": ((1, 3), (1, 1), (0, 1), True),
    "b2_2": ((3, 3), (3, 3), (3, 3), False),
    "b3_0": ((1, 1), (1, 1), (0, 0), True),
    "b3_1": ((1, 3), (1, 1), (0, 1), True),
    "b3_2": ((3, 1), (1, 1), (1, 0), True),
    "b3_3": ((3, 3), (5, 5), (5, 5), False),
    "conv_linear": ((1, 1), (1, 1), (0, 0), False),
    "shortcut": ((1, 1), (1, 1), (0, 0), False),
}
# 1x1 branch-stem layers applied to the block input -> fused into one matmul.
_HEAD_NAMES = ("b0_0", "b1_0", "b2_0", "b3_0")
# Spatial convs of the four branch tails, in operand order.
_CHAIN_NAMES = ("b0_1", "b1_1", "b1_2", "b2_1", "b2_2", "b3_1", "b3_2", "b3_3")
# Which chain layers belong to which branch (indices into _CHAIN_NAMES).
_BRANCH_LAYERS = ((0,), (1, 2), (3, 4), (5, 6, 7))

_PAD = max(max(g[2]) for g in _CONV_GEOM.values())        # widest pad: 5
# Cumulative row receptive-field half-extent per branch -> halo rows per side.
_HALO = max(sum(_CONV_GEOM[_CHAIN_NAMES[i]][2][0] for i in ids)
            for ids in _BRANCH_LAYERS)                    # = 6


def _padc(c):
    # Pad channel dims to a multiple of 16 so bf16 sublane tiles stay aligned.
    return ((c + 15) // 16) * 16


def _ceil_to(v, m):
    return ((v + m - 1) // m) * m


# ----------------------------------------------------------------------------
# The fused Pallas kernel: one (batch, row-tile) pair per grid step.
# ----------------------------------------------------------------------------
def _rfb_kernel(x_ref, mask_ref, hw_ref, hb_ref, *rest,
                span_start, span_len, head_spans, branch_layers, chain_meta,
                res_scale):
    """Whole BasicRFB_a block for one spatial row-tile of one batch element.

    x_ref    : (1, 1, Cin_p, L)   bf16  input over the halo-extended row tile
    mask_ref : (1, 1, L)          f32   1.0 on globally-valid pixels
    hw_ref   : (Hrows, Cin_p)     bf16  fused branch-stem 1x1 weights
    hb_ref   : (Hrows, 1)         f32   matching BN-folded biases
    rest     : per chain conv (w bf16 (Cp_out, T*Cp_in), b f32 (Cp_out, 1)),
               4 per-branch ConvLinear weight blocks, ConvLinear bias,
               shortcut weight + bias, the output ref (1, 1, Cout_p, L) bf16,
               and the persistent bf16 VMEM scratch "frame".
    """
    n_chain = len(chain_meta)
    chain_refs = rest[:2 * n_chain]
    w_lin_refs = rest[2 * n_chain: 2 * n_chain + 4]
    b_lin_ref = rest[2 * n_chain + 4]
    w_short_ref = rest[2 * n_chain + 5]
    b_short_ref = rest[2 * n_chain + 6]
    o_ref = rest[2 * n_chain + 7]
    frame_ref = rest[2 * n_chain + 8]

    f32, bf16 = jnp.float32, jnp.bfloat16

    mask = mask_ref[0]                          # (1, L) f32
    x_bf = x_ref[0, 0]                          # (Cin_p, L) bf16 -> MXU directly

    # Zero the persistent scratch frame: its border columns (never written
    # below) must read as the conv's implicit zero padding.
    frame_ref[...] = jnp.zeros(frame_ref.shape, frame_ref.dtype)

    # ---- fused branch-stem 1x1 convs: one matmul over the shared bf16 RHS.
    z = jnp.dot(hw_ref[...], x_bf, preferred_element_type=f32) + hb_ref[...]

    # ---- four branch tails; ConvLinear accumulated per branch.
    lin = None
    for b, layer_ids in enumerate(branch_layers):
        s, e = head_spans[b]
        y = jnp.maximum(z[s:e], 0.0)            # (Cp, L) f32
        for i in layer_ids:
            taps, relu = chain_meta[i]
            rows = y.shape[0]
            # Masked activation -> bf16 frame scratch (span columns only).
            frame_ref[0:rows, span_start:span_start + span_len] = (
                (y * mask).astype(bf16))
            # Each tap is a flat lane slice of the scratch ref; taps stacked
            # along the contraction -> ONE MXU matmul per conv layer.
            slabs = [frame_ref[0:rows, span_start + t: span_start + t + span_len]
                     for t in taps]
            rhs = slabs[0] if len(slabs) == 1 else jnp.concatenate(slabs, axis=0)
            y = jnp.dot(chain_refs[2 * i][...], rhs,
                        preferred_element_type=f32) + chain_refs[2 * i + 1][...]
            if relu:
                y = jnp.maximum(y, 0.0)
        d = jnp.dot(w_lin_refs[b][...], y.astype(bf16),
                    preferred_element_type=f32)
        lin = d if lin is None else lin + d
    lin = lin + b_lin_ref[...]

    # ---- shortcut recomputed from the resident input block (not carried).
    short = jnp.dot(w_short_ref[...], x_bf,
                    preferred_element_type=f32) + b_short_ref[...]

    out = jnp.maximum(lin * res_scale + short, 0.0)
    o_ref[0, 0] = out.astype(o_ref.dtype)


# ----------------------------------------------------------------------------
# Weight preparation: fold BN, pad channels, im2col layout.
# ----------------------------------------------------------------------------
def _fold_conv_weight(p, cp_in, cp_out):
    """(KH,KW,Cin,Cout) conv + folded BN -> ((Cp_out, KH*KW*Cp_in) bf16,
    (Cp_out, 1) f32)."""
    w, s, b = p["w"], p["scale"], p["bias"]
    kh, kw, ci, co = w.shape
    w = w * s[None, None, None, :]                        # fold BN scale
    w = jnp.pad(w, ((0, 0), (0, 0), (0, cp_in - ci), (0, cp_out - co)))
    w2 = jnp.transpose(w, (3, 0, 1, 2)).reshape(cp_out, kh * kw * cp_in)
    bias = jnp.pad(b, (0, cp_out - co)).reshape(cp_out, 1)
    return w2.astype(jnp.bfloat16), bias.astype(jnp.float32)


# ----------------------------------------------------------------------------
# Wrapper: NCHW in, NCHW out; one pallas_call over (batch, row_tiles).
# ----------------------------------------------------------------------------
def basic_rfb_a_forward(x_nchw, params, *, scale=0.1, row_tile=8):
    N, cin, H, W = x_nchw.shape
    out_planes = params["conv_linear"]["w"].shape[-1]
    inter = params["b0_0"]["w"].shape[-1]

    P, HALO = _PAD, _HALO
    TR = max(1, min(row_tile, H))
    n_tiles = -(-H // TR)
    ext_rows = TR + 2 * HALO                    # rows computed per tile

    # Flat-span geometry of one halo-extended row tile.
    Wg = W + 2 * P                              # row stride inside the frame
    tmax = P * Wg + P                           # largest |tap offset|
    span_start = _ceil_to(tmax, 128)            # lane-aligned span start
    span_len = _ceil_to(ext_rows * Wg, 128)     # lane-aligned compute span
    frame_len = span_start + span_len + span_start

    cin_p, inter_p, out_p = _padc(cin), _padc(inter), _padc(out_planes)

    # ---- input: channel pad, width pad to Wg, halo rows, per-tile windows.
    xq = jnp.pad(x_nchw, ((0, 0), (0, cin_p - cin), (0, 0), (0, Wg - W)))
    xq = jnp.pad(xq, ((0, 0), (0, 0), (HALO, HALO + n_tiles * TR - H), (0, 0)))
    xt = jnp.stack([xq[:, :, j * TR: j * TR + ext_rows, :]
                    for j in range(n_tiles)], axis=1)     # (N,T,Cp,ext,Wg)
    xt = xt.reshape(N, n_tiles, cin_p, ext_rows * Wg)
    xt = jnp.pad(xt, ((0, 0), (0, 0), (0, 0), (0, span_len - ext_rows * Wg)))
    xt = xt.astype(jnp.bfloat16)

    # ---- per-tile validity mask over the extended span.
    l_idx = jnp.arange(span_len)
    l_row = l_idx // Wg
    l_col = l_idx % Wg
    g_row = (jnp.arange(n_tiles) * TR - HALO)[:, None] + l_row[None, :]
    valid = ((g_row >= 0) & (g_row < H) &
             (l_row[None, :] < ext_rows) & (l_col[None, :] < W))
    mask = valid.astype(jnp.float32).reshape(n_tiles, 1, span_len)

    # ---- fused branch-stem weights (shortcut NOT included any more).
    hw_blocks, hb_blocks, head_spans = [], [], []
    row = 0
    for name in _HEAD_NAMES:
        co = params[name]["w"].shape[-1]
        cp = _padc(co)
        w2, b = _fold_conv_weight(params[name], cin_p, cp)
        hw_blocks.append(w2)
        hb_blocks.append(b)
        head_spans.append((row, row + cp))
        row += cp
    head_w = jnp.concatenate(hw_blocks, axis=0)
    head_b = jnp.concatenate(hb_blocks, axis=0)

    # ---- branch-tail conv weights + static flat tap offsets.
    chain_ops, chain_meta = [], []
    for name in _CHAIN_NAMES:
        (KH, KW), (dh, dw), (ph, pw), relu = _CONV_GEOM[name]
        ci = params[name]["w"].shape[2]
        co = params[name]["w"].shape[3]
        w2, b = _fold_conv_weight(params[name], _padc(ci), _padc(co))
        taps = tuple((kh * dh - ph) * Wg + (kw * dw - pw)
                     for kh in range(KH) for kw in range(KW))
        chain_ops += [w2, b]
        chain_meta.append((taps, relu))

    # ---- ConvLinear split into 4 per-branch (out_p, inter_p) blocks.
    cl = params["conv_linear"]
    wl = cl["w"][0, 0] * cl["scale"][None, :]              # (4*inter, out)
    wl = wl.reshape(4, inter, out_planes)
    wl = jnp.pad(wl, ((0, 0), (0, inter_p - inter), (0, out_p - out_planes)))
    w_lin_blocks = [wl[b].T.astype(jnp.bfloat16) for b in range(4)]
    b_lin = jnp.pad(cl["bias"], (0, out_p - out_planes)).reshape(out_p, 1)
    b_lin = b_lin.astype(jnp.float32)

    # ---- shortcut (applied in-kernel at the very end, from the input block).
    w_short, b_short = _fold_conv_weight(params["shortcut"], cin_p, out_p)

    operands = ([xt, mask, head_w, head_b] + chain_ops + list(w_lin_blocks)
                + [b_lin, w_short, b_short])

    kernel = functools.partial(
        _rfb_kernel,
        span_start=span_start, span_len=span_len,
        head_spans=tuple(head_spans),
        branch_layers=_BRANCH_LAYERS,
        chain_meta=tuple(chain_meta),
        res_scale=float(scale))

    in_specs = [
        pl.BlockSpec((1, 1, cin_p, span_len), lambda n, j: (n, j, 0, 0)),
        pl.BlockSpec((1, 1, span_len), lambda n, j: (j, 0, 0)),
    ]
    in_specs += [pl.BlockSpec(a.shape, lambda n, j: (0, 0))
                 for a in operands[2:]]

    y = pl.pallas_call(
        kernel,
        out_shape=jax.ShapeDtypeStruct((N, n_tiles, out_p, span_len),
                                       jnp.bfloat16),
        grid=(N, n_tiles),
        in_specs=in_specs,
        out_specs=pl.BlockSpec((1, 1, out_p, span_len),
                               lambda n, j: (n, j, 0, 0)),
        scratch_shapes=[pltpu.VMEM((inter_p, frame_len), jnp.bfloat16)],
        compiler_params=pltpu.CompilerParams(
            dimension_semantics=("parallel", "parallel"),
            vmem_limit_bytes=48 * 1024 * 1024),
    )(*operands)

    # ---- drop halo rows / border columns / channel padding, cast back to f32.
    core = y[:, :, :, HALO * Wg: HALO * Wg + TR * Wg]      # (N,T,Cout_p,TR*Wg)
    core = core.reshape(N, n_tiles, out_p, TR, Wg)
    core = jnp.transpose(core, (0, 2, 1, 3, 4)).reshape(N, out_p,
                                                        n_tiles * TR, Wg)
    return core[:, :out_planes, :H, :W].astype(jnp.float32)


# ----------------------------------------------------------------------------
# Parameter construction (deterministic, synthetic; BN folded to scale/bias).
# ----------------------------------------------------------------------------
def make_conv_bn_params(key, kh, kw, cin, cout):
    k1, k2, k3, k4, k5 = jax.random.split(key, 5)
    fan_in = kh * kw * cin
    w = jax.random.normal(k1, (kh, kw, cin, cout), jnp.float32) / jnp.sqrt(fan_in)
    gamma = 1.0 + 0.1 * jax.random.normal(k2, (cout,), jnp.float32)
    beta = 0.1 * jax.random.normal(k3, (cout,), jnp.float32)
    mean = 0.1 * jax.random.normal(k4, (cout,), jnp.float32)
    var = 0.5 + 0.5 * jnp.abs(jax.random.normal(k5, (cout,), jnp.float32))
    eps = 1e-5
    s = gamma / jnp.sqrt(var + eps)
    b = beta - mean * s
    return {"w": w, "scale": s, "bias": b}


def make_rfb_params(key, in_planes, out_planes):
    inter = in_planes // 4
    layer_defs = {
        "b0_0": (1, 1, in_planes, inter),
        "b0_1": (3, 3, inter, inter),
        "b1_0": (1, 1, in_planes, inter),
        "b1_1": (3, 1, inter, inter),
        "b1_2": (3, 3, inter, inter),
        "b2_0": (1, 1, in_planes, inter),
        "b2_1": (1, 3, inter, inter),
        "b2_2": (3, 3, inter, inter),
        "b3_0": (1, 1, in_planes, inter // 2),
        "b3_1": (1, 3, inter // 2, (inter // 4) * 3),
        "b3_2": (3, 1, (inter // 4) * 3, inter),
        "b3_3": (3, 3, inter, inter),
        "conv_linear": (1, 1, 4 * inter, out_planes),
        "shortcut": (1, 1, in_planes, out_planes),
    }
    keys = jax.random.split(key, len(layer_defs))
    return {name: make_conv_bn_params(k, *shape)
            for k, (name, shape) in zip(keys, layer_defs.items())}


# ----------------------------------------------------------------------------
# Pure-JAX (XLA, f32) reference.
# ----------------------------------------------------------------------------
def _ref_conv_bn(x, p, padding=(0, 0), dilation=(1, 1), relu=True):
    y = jax.lax.conv_general_dilated(
        x, p["w"], window_strides=(1, 1),
        padding=((padding[0], padding[0]), (padding[1], padding[1])),
        rhs_dilation=dilation,
        dimension_numbers=("NHWC", "HWIO", "NHWC"))
    y = y * p["scale"] + p["bias"]
    return jnp.maximum(y, 0.0) if relu else y


def basic_rfb_a_reference(x_nchw, params, *, scale=0.1):
    x = jnp.transpose(x_nchw, (0, 2, 3, 1))
    x0 = _ref_conv_bn(x, params["b0_0"])
    x0 = _ref_conv_bn(x0, params["b0_1"], padding=(1, 1), relu=False)
    x1 = _ref_conv_bn(x, params["b1_0"])
    x1 = _ref_conv_bn(x1, params["b1_1"], padding=(1, 0))
    x1 = _ref_conv_bn(x1, params["b1_2"], padding=(3, 3), dilation=(3, 3), relu=False)
    x2 = _ref_conv_bn(x, params["b2_0"])
    x2 = _ref_conv_bn(x2, params["b2_1"], padding=(0, 1))
    x2 = _ref_conv_bn(x2, params["b2_2"], padding=(3, 3), dilation=(3, 3), relu=False)
    x3 = _ref_conv_bn(x, params["b3_0"])
    x3 = _ref_conv_bn(x3, params["b3_1"], padding=(0, 1))
    x3 = _ref_conv_bn(x3, params["b3_2"], padding=(1, 0))
    x3 = _ref_conv_bn(x3, params["b3_3"], padding=(5, 5), dilation=(5, 5), relu=False)
    out = jnp.concatenate([x0, x1, x2, x3], axis=-1)
    out = _ref_conv_bn(out, params["conv_linear"], relu=False)
    short = _ref_conv_bn(x, params["shortcut"], relu=False)
    out = jnp.maximum(out * scale + short, 0.0)
    return jnp.transpose(out, (0, 3, 1, 2))


if __name__ == "__main__":
    key = jax.random.PRNGKey(0)
    kx, kp = jax.random.split(key)

    in_planes = 16
    out_planes = 16
    x = jax.random.normal(kx, (2, in_planes, 16, 16), jnp.float32)  # NCHW
    params = make_rfb_params(kp, in_planes, out_planes)

    # row_tile=8 -> 2 spatial tiles at H=16, exercising the halo path.
    fwd = jax.jit(functools.partial(basic_rfb_a_forward, scale=0.1, row_tile=8))
    out = jax.block_until_ready(fwd(x, params))

    ref = jax.block_until_ready(basic_rfb_a_reference(x, params, scale=0.1))
    assert out.shape == (2, out_planes, 16, 16)

    # bf16 MXU inputs / bf16 output (f32 accumulation) vs. the f32 XLA
    # reference: compare in relative L2; wiring/layout/halo bugs give O(1).
    rel = float(jnp.linalg.norm(out - ref) / (jnp.linalg.norm(ref) + 1e-8))
    assert rel < 2.5e-2, f"relative L2 error too high: {rel}"

    print("KERNEL_OK")
</pallas_src>

<mosaic_0001>
module attributes {stable_mosaic.version = 11 : i64} {
  func.func @_rfb_kernel(%arg0: i32, %arg1: i32, %arg2: memref<1x1x16x640xbf16, #tpu.memory_space<vmem>>, %arg3: memref<1x1x640xf32, #tpu.memory_space<vmem>>, %arg4: memref<64x16xbf16, #tpu.memory_space<vmem>>, %arg5: memref<64x1xf32, #tpu.memory_space<vmem>>, %arg6: memref<16x144xbf16, #tpu.memory_space<vmem>>, %arg7: memref<16x1xf32, #tpu.memory_space<vmem>>, %arg8: memref<16x48xbf16, #tpu.memory_space<vmem>>, %arg9: memref<16x1xf32, #tpu.memory_space<vmem>>, %arg10: memref<16x144xbf16, #tpu.memory_space<vmem>>, %arg11: memref<16x1xf32, #tpu.memory_space<vmem>>, %arg12: memref<16x48xbf16, #tpu.memory_space<vmem>>, %arg13: memref<16x1xf32, #tpu.memory_space<vmem>>, %arg14: memref<16x144xbf16, #tpu.memory_space<vmem>>, %arg15: memref<16x1xf32, #tpu.memory_space<vmem>>, %arg16: memref<16x48xbf16, #tpu.memory_space<vmem>>, %arg17: memref<16x1xf32, #tpu.memory_space<vmem>>, %arg18: memref<16x48xbf16, #tpu.memory_space<vmem>>, %arg19: memref<16x1xf32, #tpu.memory_space<vmem>>, %arg20: memref<16x144xbf16, #tpu.memory_space<vmem>>, %arg21: memref<16x1xf32, #tpu.memory_space<vmem>>, %arg22: memref<16x16xbf16, #tpu.memory_space<vmem>>, %arg23: memref<16x16xbf16, #tpu.memory_space<vmem>>, %arg24: memref<16x16xbf16, #tpu.memory_space<vmem>>, %arg25: memref<16x16xbf16, #tpu.memory_space<vmem>>, %arg26: memref<16x1xf32, #tpu.memory_space<vmem>>, %arg27: memref<16x16xbf16, #tpu.memory_space<vmem>>, %arg28: memref<16x1xf32, #tpu.memory_space<vmem>>, %arg29: memref<1x1x16x640xbf16, #tpu.memory_space<vmem>>, %arg30: memref<16x1152xbf16, #tpu.memory_space<vmem>>) attributes {dimension_semantics = [#tpu.dimension_semantics<parallel>, #tpu.dimension_semantics<parallel>], iteration_bounds = array<i64: 2, 2>, scalar_prefetch = 0 : i64, scratch_operands = 1 : i64, tpu.core_type = #tpu.core_type<tc>, window_params = [{transform_indices = @transform_0, window_bounds = array<i64: 1, 1, 16, 640>}, {transform_indices = @transform_1, window_bounds = array<i64: 1, 1, 640>}, {pipeline_mode = #tpu.pipeline_mode<synchronous>, transform_indices = @transform_2, window_bounds = array<i64: 64, 16>}, {pipeline_mode = #tpu.pipeline_mode<synchronous>, transform_indices = @transform_3, window_bounds = array<i64: 64, 1>}, {pipeline_mode = #tpu.pipeline_mode<synchronous>, transform_indices = @transform_4, window_bounds = array<i64: 16, 144>}, {pipeline_mode = #tpu.pipeline_mode<synchronous>, transform_indices = @transform_5, window_bounds = array<i64: 16, 1>}, {pipeline_mode = #tpu.pipeline_mode<synchronous>, transform_indices = @transform_6, window_bounds = array<i64: 16, 48>}, {pipeline_mode = #tpu.pipeline_mode<synchronous>, transform_indices = @transform_7, window_bounds = array<i64: 16, 1>}, {pipeline_mode = #tpu.pipeline_mode<synchronous>, transform_indices = @transform_8, window_bounds = array<i64: 16, 144>}, {pipeline_mode = #tpu.pipeline_mode<synchronous>, transform_indices = @transform_9, window_bounds = array<i64: 16, 1>}, {pipeline_mode = #tpu.pipeline_mode<synchronous>, transform_indices = @transform_10, window_bounds = array<i64: 16, 48>}, {pipeline_mode = #tpu.pipeline_mode<synchronous>, transform_indices = @transform_11, window_bounds = array<i64: 16, 1>}, {pipeline_mode = #tpu.pipeline_mode<synchronous>, transform_indices = @transform_12, window_bounds = array<i64: 16, 144>}, {pipeline_mode = #tpu.pipeline_mode<synchronous>, transform_indices = @transform_13, window_bounds = array<i64: 16, 1>}, {pipeline_mode = #tpu.pipeline_mode<synchronous>, transform_indices = @transform_14, window_bounds = array<i64: 16, 48>}, {pipeline_mode = #tpu.pipeline_mode<synchronous>, transform_indices = @transform_15, window_bounds = array<i64: 16, 1>}, {pipeline_mode = #tpu.pipeline_mode<synchronous>, transform_indices = @transform_16, window_bounds = array<i64: 16, 48>}, {pipeline_mode = #tpu.pipeline_mode<synchronous>, transform_indices = @transform_17, window_bounds = array<i64: 16, 1>}, {pipeline_mode = #tpu.pipeline_mode<synchronous>, transform_indices = @transform_18, window_bounds = array<i64: 16, 144>}, {pipeline_mode = #tpu.pipeline_mode<synchronous>, transform_indices = @transform_19, window_bounds = array<i64: 16, 1>}, {pipeline_mode = #tpu.pipeline_mode<synchronous>, transform_indices = @transform_20, window_bounds = array<i64: 16, 16>}, {pipeline_mode = #tpu.pipeline_mode<synchronous>, transform_indices = @transform_21, window_bounds = array<i64: 16, 16>}, {pipeline_mode = #tpu.pipeline_mode<synchronous>, transform_indices = @transform_22, window_bounds = array<i64: 16, 16>}, {pipeline_mode = #tpu.pipeline_mode<synchronous>, transform_indices = @transform_23, window_bounds = array<i64: 16, 16>}, {pipeline_mode = #tpu.pipeline_mode<synchronous>, transform_indices = @transform_24, window_bounds = array<i64: 16, 1>}, {pipeline_mode = #tpu.pipeline_mode<synchronous>, transform_indices = @transform_25, window_bounds = array<i64: 16, 16>}, {pipeline_mode = #tpu.pipeline_mode<synchronous>, transform_indices = @transform_26, window_bounds = array<i64: 16, 1>}, {transform_indices = @transform_27, window_bounds = array<i64: 1, 1, 16, 640>}]} {
    %c0 = arith.constant 0 : index
    %c0_0 = arith.constant 0 : index
    %c0_1 = arith.constant 0 : index
    %0 = vector.load %arg3[%c0, %c0_0, %c0_1] : memref<1x1x640xf32, #tpu.memory_space<vmem>>, vector<1x1x640xf32>
    %1 = vector.shape_cast %0 : vector<1x1x640xf32> to vector<1x640xf32>
    %c0_2 = arith.constant 0 : index
    %c0_3 = arith.constant 0 : index
    %c0_4 = arith.constant 0 : index
    %c0_5 = arith.constant 0 : index
    %2 = vector.load %arg2[%c0_2, %c0_3, %c0_4, %c0_5] : memref<1x1x16x640xbf16, #tpu.memory_space<vmem>>, vector<1x1x16x640xbf16>
    %3 = vector.shape_cast %2 : vector<1x1x16x640xbf16> to vector<16x640xbf16>
    %cst = arith.constant 0.000000e+00 : bf16
    %4 = vector.broadcast %cst : bf16 to vector<16x1152xbf16>
    %c0_6 = arith.constant 0 : index
    %c0_7 = arith.constant 0 : index
    %5 = vector.load %arg30[%c0_6, %c0_7] : memref<16x1152xbf16, #tpu.memory_space<vmem>>, vector<16x1152xbf16>
    tpu.vector_store %arg30[%c0_6, %c0_7], %4 {strides = array<i32>} : memref<16x1152xbf16, #tpu.memory_space<vmem>>, vector<16x1152xbf16>,
    %c0_8 = arith.constant 0 : index
    %c0_9 = arith.constant 0 : index
    %6 = vector.load %arg4[%c0_8, %c0_9] : memref<64x16xbf16, #tpu.memory_space<vmem>>, vector<64x16xbf16>
    %cst_10 = arith.constant dense<0.000000e+00> : vector<64x640xf32>
    %7 = tpu.matmul %6, %3, %cst_10 {dimension_numbers = #tpu.dot_dimension_numbers<[1], [0], [0], [1], [0, 0, 1, 1], [], []>} : vector<64x16xbf16>, vector<16x640xbf16>, vector<64x640xf32> -> vector<64x640xf32>
    %c0_11 = arith.constant 0 : index
    %c0_12 = arith.constant 0 : index
    %8 = vector.load %arg5[%c0_11, %c0_12] : memref<64x1xf32, #tpu.memory_space<vmem>>, vector<64x1xf32>
    %9 = vector.broadcast %8 : vector<64x1xf32> to vector<64x640xf32>
    %10 = arith.addf %7, %9 : vector<64x640xf32>
    %11 = vector.extract_strided_slice %10 {offsets = [0, 0], sizes = [16, 640], strides = [1, 1]} : vector<64x640xf32> to vector<16x640xf32>
    %cst_13 = arith.constant 0.000000e+00 : f32
    %12 = vector.broadcast %cst_13 : f32 to vector<16x640xf32>
    %13 = arith.maximumf %11, %12 : vector<16x640xf32>
    %14 = vector.broadcast %1 : vector<1x640xf32> to vector<16x640xf32>
    %15 = arith.mulf %13, %14 : vector<16x640xf32>
    %16 = arith.truncf %15 : vector<16x640xf32> to vector<16x640xbf16>
    %c0_14 = arith.constant 0 : index
    %c256 = arith.constant 256 : index
    %17 = vector.load %arg30[%c0_14, %c256] : memref<16x1152xbf16, #tpu.memory_space<vmem>>, vector<16x640xbf16>
    tpu.vector_store %arg30[%c0_14, %c256], %16 {strides = array<i32>} : memref<16x1152xbf16, #tpu.memory_space<vmem>>, vector<16x640xbf16>,
    %c0_15 = arith.constant 0 : index
    %c229 = arith.constant 229 : index
    %18 = vector.load %arg30[%c0_15, %c229] : memref<16x1152xbf16, #tpu.memory_space<vmem>>, vector<16x640xbf16>
    %c0_16 = arith.constant 0 : index
    %c230 = arith.constant 230 : index
    %19 = vector.load %arg30[%c0_16, %c230] : memref<16x1152xbf16, #tpu.memory_space<vmem>>, vector<16x640xbf16>
    %c0_17 = arith.constant 0 : index
    %c231 = arith.constant 231 : index
    %20 = vector.load %arg30[%c0_17, %c231] : memref<16x1152xbf16, #tpu.memory_space<vmem>>, vector<16x640xbf16>
    %c0_18 = arith.constant 0 : index
    %c255 = arith.constant 255 : index
    %21 = vector.load %arg30[%c0_18, %c255] : memref<16x1152xbf16, #tpu.memory_space<vmem>>, vector<16x640xbf16>
    %c0_19 = arith.constant 0 : index
    %c256_20 = arith.constant 256 : index
    %22 = vector.load %arg30[%c0_19, %c256_20] : memref<16x1152xbf16, #tpu.memory_space<vmem>>, vector<16x640xbf16>
    %c0_21 = arith.constant 0 : index
    %c257 = arith.constant 257 : index
    %23 = vector.load %arg30[%c0_21, %c257] : memref<16x1152xbf16, #tpu.memory_space<vmem>>, vector<16x640xbf16>
    %c0_22 = arith.constant 0 : index
    %c281 = arith.constant 281 : index
    %24 = vector.load %arg30[%c0_22, %c281] : memref<16x1152xbf16, #tpu.memory_space<vmem>>, vector<16x640xbf16>
    %c0_23 = arith.constant 0 : index
    %c282 = arith.constant 282 : index
    %25 = vector.load %arg30[%c0_23, %c282] : memref<16x1152xbf16, #tpu.memory_space<vmem>>, vector<16x640xbf16>
    %c0_24 = arith.constant 0 : index
    %c283 = arith.constant 283 : index
    %26 = vector.load %arg30[%c0_24, %c283] : memref<16x1152xbf16, #tpu.memory_space<vmem>>, vector<16x640xbf16>
    %27 = tpu.concatenate %18, %19, %20, %21, %22, %23, %24, %25, %26 in 0 : vector<16x640xbf16>, vector<16x640xbf16>, vector<16x640xbf16>, vector<16x640xbf16>, vector<16x640xbf16>, vector<16x640xbf16>, vector<16x640xbf16>, vector<16x640xbf16>, vector<16x640xbf16> -> vector<144x640xbf16>
    %c0_25 = arith.constant 0 : index
    %c0_26 = arith.constant 0 : index
    %28 = vector.load %arg6[%c0_25, %c0_26] : memref<16x144xbf16, #tpu.memory_space<vmem>>, vector<16x144xbf16>
    %cst_27 = arith.constant dense<0.000000e+00> : vector<16x640xf32>
    %29 = tpu.matmul %28, %27, %cst_27 {dimension_numbers = #tpu.dot_dimension_numbers<[1], [0], [0], [1], [0, 0, 1, 1], [], []>} : vector<16x144xbf16>, vector<144x640xbf16>, vector<16x640xf32> -> vector<16x640xf32>
    %c0_28 = arith.constant 0 : index
    %c0_29 = arith.constant 0 : index
    %30 = vector.load %arg7[%c0_28, %c0_29] : memref<16x1xf32, #tpu.memory_space<vmem>>, vector<16x1xf32>
    %31 = vector.broadcast %30 : vector<16x1xf32> to vector<16x640xf32>
    %32 = arith.addf %29, %31 : vector<16x640xf32>
    %c0_30 = arith.constant 0 : index
    %c0_31 = arith.constant 0 : index
    %33 = vector.load %arg22[%c0_30, %c0_31] : memref<16x16xbf16, #tpu.memory_space<vmem>>, vector<16x16xbf16>
    %34 = arith.truncf %32 : vector<16x640xf32> to vector<16x640xbf16>
    %cst_32 = arith.constant dense<0.000000e+00> : vector<16x640xf32>
    %35 = tpu.matmul %33, %34, %cst_32 {dimension_numbers = #tpu.dot_dimension_numbers<[1], [0], [0], [1], [0, 0, 1, 1], [], []>} : vector<16x16xbf16>, vector<16x640xbf16>, vector<16x640xf32> -> vector<16x640xf32>
    %36 = vector.extract_strided_slice %10 {offsets = [16, 0], sizes = [16, 640], strides = [1, 1]} : vector<64x640xf32> to vector<16x640xf32>
    %cst_33 = arith.constant 0.000000e+00 : f32
    %37 = vector.broadcast %cst_33 : f32 to vector<16x640xf32>
    %38 = arith.maximumf %36, %37 : vector<16x640xf32>
    %39 = vector.broadcast %1 : vector<1x640xf32> to vector<16x640xf32>
    %40 = arith.mulf %38, %39 : vector<16x640xf32>
    %41 = arith.truncf %40 : vector<16x640xf32> to vector<16x640xbf16>
    %c0_34 = arith.constant 0 : index
    %c256_35 = arith.constant 256 : index
    %42 = vector.load %arg30[%c0_34, %c256_35] : memref<16x1152xbf16, #tpu.memory_space<vmem>>, vector<16x640xbf16>
    tpu.vector_store %arg30[%c0_34, %c256_35], %41 {strides = array<i32>} : memref<16x1152xbf16, #tpu.memory_space<vmem>>, vector<16x640xbf16>,
    %c0_36 = arith.constant 0 : index
    %c230_37 = arith.constant 230 : index
    %43 = vector.load %arg30[%c0_36, %c230_37] : memref<16x1152xbf16, #tpu.memory_space<vmem>>, vector<16x640xbf16>
    %c0_38 = arith.constant 0 : index
    %c256_39 = arith.constant 256 : index
    %44 = vector.load %arg30[%c0_38, %c256_39] : memref<16x1152xbf16, #tpu.memory_space<vmem>>, vector<16x640xbf16>
    %c0_40 = arith.constant 0 : index
    %c282_41 = arith.constant 282 : index
    %45 = vector.load %arg30[%c0_40, %c282_41] : memref<16x1152xbf16, #tpu.memory_space<vmem>>, vector<16x640xbf16>
    %46 = tpu.concatenate %43, %44, %45 in 0 : vector<16x640xbf16>, vector<16x640xbf16>, vector<16x640xbf16> -> vector<48x640xbf16>
    %c0_42 = arith.constant 0 : index
    %c0_43 = arith.constant 0 : index
    %47 = vector.load %arg8[%c0_42, %c0_43] : memref<16x48xbf16, #tpu.memory_space<vmem>>, vector<16x48xbf16>
    %cst_44 = arith.constant dense<0.000000e+00> : vector<16x640xf32>
    %48 = tpu.matmul %47, %46, %cst_44 {dimension_numbers = #tpu.dot_dimension_numbers<[1], [0], [0], [1], [0, 0, 1, 1], [], []>} : vector<16x48xbf16>, vector<48x640xbf16>, vector<16x640xf32> -> vector<16x640xf32>
    %c0_45 = arith.constant 0 : index
    %c0_46 = arith.constant 0 : index
    %49 = vector.load %arg9[%c0_45, %c0_46] : memref<16x1xf32, #tpu.memory_space<vmem>>, vector<16x1xf32>
    %50 = vector.broadcast %49 : vector<16x1xf32> to vector<16x640xf32>
    %51 = arith.addf %48, %50 : vector<16x640xf32>
    %cst_47 = arith.constant 0.000000e+00 : f32
    %52 = vector.broadcast %cst_47 : f32 to vector<16x640xf32>
    %53 = arith.maximumf %51, %52 : vector<16x640xf32>
    %54 = vector.broadcast %1 : vector<1x640xf32> to vector<16x640xf32>
    %55 = arith.mulf %53, %54 : vector<16x640xf32>
    %56 = arith.truncf %55 : vector<16x640xf32> to vector<16x640xbf16>
    %c0_48 = arith.constant 0 : index
    %c256_49 = arith.constant 256 : index
    %57 = vector.load %arg30[%c0_48, %c256_49] : memref<16x1152xbf16, #tpu.memory_space<vmem>>, vector<16x640xbf16>
    tpu.vector_store %arg30[%c0_48, %c256_49], %56 {strides = array<i32>} : memref<16x1152xbf16, #tpu.memory_space<vmem>>, vector<16x640xbf16>,
    %c0_50 = arith.constant 0 : index
    %c175 = arith.constant 175 : index
    %58 = vector.load %arg30[%c0_50, %c175] : memref<16x1152xbf16, #tpu.memory_space<vmem>>, vector<16x640xbf16>
    %c0_51 = arith.constant 0 : index
    %c178 = arith.constant 178 : index
    %59 = vector.load %arg30[%c0_51, %c178] : memref<16x1152xbf16, #tpu.memory_space<vmem>>, vector<16x640xbf16>
    %c0_52 = arith.constant 0 : index
    %c181 = arith.constant 181 : index
    %60 = vector.load %arg30[%c0_52, %c181] : memref<16x1152xbf16, #tpu.memory_space<vmem>>, vector<16x640xbf16>
    %c0_53 = arith.constant 0 : index
    %c253 = arith.constant 253 : index
    %61 = vector.load %arg30[%c0_53, %c253] : memref<16x1152xbf16, #tpu.memory_space<vmem>>, vector<16x640xbf16>
    %c0_54 = arith.constant 0 : index
    %c256_55 = arith.constant 256 : index
    %62 = vector.load %arg30[%c0_54, %c256_55] : memref<16x1152xbf16, #tpu.memory_space<vmem>>, vector<16x640xbf16>
    %c0_56 = arith.constant 0 : index
    %c259 = arith.constant 259 : index
    %63 = vector.load %arg30[%c0_56, %c259] : memref<16x1152xbf16, #tpu.memory_space<vmem>>, vector<16x640xbf16>
    %c0_57 = arith.constant 0 : index
    %c331 = arith.constant 331 : index
    %64 = vector.load %arg30[%c0_57, %c331] : memref<16x1152xbf16, #tpu.memory_space<vmem>>, vector<16x640xbf16>
    %c0_58 = arith.constant 0 : index
    %c334 = arith.constant 334 : index
    %65 = vector.load %arg30[%c0_58, %c334] : memref<16x1152xbf16, #tpu.memory_space<vmem>>, vector<16x640xbf16>
    %c0_59 = arith.constant 0 : index
    %c337 = arith.constant 337 : index
    %66 = vector.load %arg30[%c0_59, %c337] : memref<16x1152xbf16, #tpu.memory_space<vmem>>, vector<16x640xbf16>
    %67 = tpu.concatenate %58, %59, %60, %61, %62, %63, %64, %65, %66 in 0 : vector<16x640xbf16>, vector<16x640xbf16>, vector<16x640xbf16>, vector<16x640xbf16>, vector<16x640xbf16>, vector<16x640xbf16>, vector<16x640xbf16>, vector<16x640xbf16>, vector<16x640xbf16> -> vector<144x640xbf16>
    %c0_60 = arith.constant 0 : index
    %c0_61 = arith.constant 0 : index
    %68 = vector.load %arg10[%c0_60, %c0_61] : memref<16x144xbf16, #tpu.memory_space<vmem>>, vector<16x144xbf16>
    %cst_62 = arith.constant dense<0.000000e+00> : vector<16x640xf32>
    %69 = tpu.matmul %68, %67, %cst_62 {dimension_numbers = #tpu.dot_dimension_numbers<[1], [0], [0], [1], [0, 0, 1, 1], [], []>} : vector<16x144xbf16>, vector<144x640xbf16>, vector<16x640xf32> -> vector<16x640xf32>
    %c0_63 = arith.constant 0 : index
    %c0_64 = arith.constant 0 : index
    %70 = vector.load %arg11[%c0_63, %c0_64] : memref<16x1xf32, #tpu.memory_space<vmem>>, vector<16x1xf32>
    %71 = vector.broadcast %70 : vector<16x1xf32> to vector<16x640xf32>
    %72 = arith.addf %69, %71 : vector<16x640xf32>
    %c0_65 = arith.constant 0 : index
    %c0_66 = arith.constant 0 : index
    %73 = vector.load %arg23[%c0_65, %c0_66] : memref<16x16xbf16, #tpu.memory_space<vmem>>, vector<16x16xbf16>
    %74 = arith.truncf %72 : vector<16x640xf32> to vector<16x640xbf16>
    %cst_67 = arith.constant dense<0.000000e+00> : vector<16x640xf32>
    %75 = tpu.matmul %73, %74, %cst_67 {dimension_numbers = #tpu.dot_dimension_numbers<[1], [0], [0], [1], [0, 0, 1, 1], [], []>} : vector<16x16xbf16>, vector<16x640xbf16>, vector<16x640xf32> -> vector<16x640xf32>
    %76 = arith.addf %35, %75 : vector<16x640xf32>
    %77 = vector.extract_strided_slice %10 {offsets = [32, 0], sizes = [16, 640], strides = [1, 1]} : vector<64x640xf32> to vector<16x640xf32>
    %cst_68 = arith.constant 0.000000e+00 : f32
    %78 = vector.broadcast %cst_68 : f32 to vector<16x640xf32>
    %79 = arith.maximumf %77, %78 : vector<16x640xf32>
    %80 = vector.broadcast %1 : vector<1x640xf32> to vector<16x640xf32>
    %81 = arith.mulf %79, %80 : vector<16x640xf32>
    %82 = arith.truncf %81 : vector<16x640xf32> to vector<16x640xbf16>
    %c0_69 = arith.constant 0 : index
    %c256_70 = arith.constant 256 : index
    %83 = vector.load %arg30[%c0_69, %c256_70] : memref<16x1152xbf16, #tpu.memory_space<vmem>>, vector<16x640xbf16>
    tpu.vector_store %arg30[%c0_69, %c256_70], %82 {strides = array<i32>} : memref<16x1152xbf16, #tpu.memory_space<vmem>>, vector<16x640xbf16>,
    %c0_71 = arith.constant 0 : index
    %c255_72 = arith.constant 255 : index
    %84 = vector.load %arg30[%c0_71, %c255_72] : memref<16x1152xbf16, #tpu.memory_space<vmem>>, vector<16x640xbf16>
    %c0_73 = arith.constant 0 : index
    %c256_74 = arith.constant 256 : index
    %85 = vector.load %arg30[%c0_73, %c256_74] : memref<16x1152xbf16, #tpu.memory_space<vmem>>, vector<16x640xbf16>
    %c0_75 = arith.constant 0 : index
    %c257_76 = arith.constant 257 : index
    %86 = vector.load %arg30[%c0_75, %c257_76] : memref<16x1152xbf16, #tpu.memory_space<vmem>>, vector<16x640xbf16>
    %87 = tpu.concatenate %84, %85, %86 in 0 : vector<16x640xbf16>, vector<16x640xbf16>, vector<16x640xbf16> -> vector<48x640xbf16>
    %c0_77 = arith.constant 0 : index
    %c0_78 = arith.constant 0 : index
    %88 = vector.load %arg12[%c0_77, %c0_78] : memref<16x48xbf16, #tpu.memory_space<vmem>>, vector<16x48xbf16>
    %cst_79 = arith.constant dense<0.000000e+00> : vector<16x640xf32>
    %89 = tpu.matmul %88, %87, %cst_79 {dimension_numbers = #tpu.dot_dimension_numbers<[1], [0], [0], [1], [0, 0, 1, 1], [], []>} : vector<16x48xbf16>, vector<48x640xbf16>, vector<16x640xf32> -> vector<16x640xf32>
    %c0_80 = arith.constant 0 : index
    %c0_81 = arith.constant 0 : index
    %90 = vector.load %arg13[%c0_80, %c0_81] : memref<16x1xf32, #tpu.memory_space<vmem>>, vector<16x1xf32>
    %91 = vector.broadcast %90 : vector<16x1xf32> to vector<16x640xf32>
    %92 = arith.addf %89, %91 : vector<16x640xf32>
    %cst_82 = arith.constant 0.000000e+00 : f32
    %93 = vector.broadcast %cst_82 : f32 to vector<16x640xf32>
    %94 = arith.maximumf %92, %93 : vector<16x640xf32>
    %95 = vector.broadcast %1 : vector<1x640xf32> to vector<16x640xf32>
    %96 = arith.mulf %94, %95 : vector<16x640xf32>
    %97 = arith.truncf %96 : vector<16x640xf32> to vector<16x640xbf16>
    %c0_83 = arith.constant 0 : index
    %c256_84 = arith.constant 256 : index
    %98 = vector.load %arg30[%c0_83, %c256_84] : memref<16x1152xbf16, #tpu.memory_space<vmem>>, vector<16x640xbf16>
    tpu.vector_store %arg30[%c0_83, %c256_84], %97 {strides = array<i32>} : memref<16x1152xbf16, #tpu.memory_space<vmem>>, vector<16x640xbf16>,
    %c0_85 = arith.constant 0 : index
    %c175_86 = arith.constant 175 : index
    %99 = vector.load %arg30[%c0_85, %c175_86] : memref<16x1152xbf16, #tpu.memory_space<vmem>>, vector<16x640xbf16>
    %c0_87 = arith.constant 0 : index
    %c178_88 = arith.constant 178 : index
    %100 = vector.load %arg30[%c0_87, %c178_88] : memref<16x1152xbf16, #tpu.memory_space<vmem>>, vector<16x640xbf16>
    %c0_89 = arith.constant 0 : index
    %c181_90 = arith.constant 181 : index
    %101 = vector.load %arg30[%c0_89, %c181_90] : memref<16x1152xbf16, #tpu.memory_space<vmem>>, vector<16x640xbf16>
    %c0_91 = arith.constant 0 : index
    %c253_92 = arith.constant 253 : index
    %102 = vector.load %arg30[%c0_91, %c253_92] : memref<16x1152xbf16, #tpu.memory_space<vmem>>, vector<16x640xbf16>
    %c0_93 = arith.constant 0 : index
    %c256_94 = arith.constant 256 : index
    %103 = vector.load %arg30[%c0_93, %c256_94] : memref<16x1152xbf16, #tpu.memory_space<vmem>>, vector<16x640xbf16>
    %c0_95 = arith.constant 0 : index
    %c259_96 = arith.constant 259 : index
    %104 = vector.load %arg30[%c0_95, %c259_96] : memref<16x1152xbf16, #tpu.memory_space<vmem>>, vector<16x640xbf16>
    %c0_97 = arith.constant 0 : index
    %c331_98 = arith.constant 331 : index
    %105 = vector.load %arg30[%c0_97, %c331_98] : memref<16x1152xbf16, #tpu.memory_space<vmem>>, vector<16x640xbf16>
    %c0_99 = arith.constant 0 : index
    %c334_100 = arith.constant 334 : index
    %106 = vector.load %arg30[%c0_99, %c334_100] : memref<16x1152xbf16, #tpu.memory_space<vmem>>, vector<16x640xbf16>
    %c0_101 = arith.constant 0 : index
    %c337_102 = arith.constant 337 : index
    %107 = vector.load %arg30[%c0_101, %c337_102] : memref<16x1152xbf16, #tpu.memory_space<vmem>>, vector<16x640xbf16>
    %108 = tpu.concatenate %99, %100, %101, %102, %103, %104, %105, %106, %107 in 0 : vector<16x640xbf16>, vector<16x640xbf16>, vector<16x640xbf16>, vector<16x640xbf16>, vector<16x640xbf16>, vector<16x640xbf16>, vector<16x640xbf16>, vector<16x640xbf16>, vector<16x640xbf16> -> vector<144x640xbf16>
    %c0_103 = arith.constant 0 : index
    %c0_104 = arith.constant 0 : index
    %109 = vector.load %arg14[%c0_103, %c0_104] : memref<16x144xbf16, #tpu.memory_space<vmem>>, vector<16x144xbf16>
    %cst_105 = arith.constant dense<0.000000e+00> : vector<16x640xf32>
    %110 = tpu.matmul %109, %108, %cst_105 {dimension_numbers = #tpu.dot_dimension_numbers<[1], [0], [0], [1], [0, 0, 1, 1], [], []>} : vector<16x144xbf16>, vector<144x640xbf16>, vector<16x640xf32> -> vector<16x640xf32>
    %c0_106 = arith.constant 0 : index
    %c0_107 = arith.constant 0 : index
    %111 = vector.load %arg15[%c0_106, %c0_107] : memref<16x1xf32, #tpu.memory_space<vmem>>, vector<16x1xf32>
    %112 = vector.broadcast %111 : vector<16x1xf32> to vector<16x640xf32>
    %113 = arith.addf %110, %112 : vector<16x640xf32>
    %c0_108 = arith.constant 0 : index
    %c0_109 = arith.constant 0 : index
    %114 = vector.load %arg24[%c0_108, %c0_109] : memref<16x16xbf16, #tpu.memory_space<vmem>>, vector<16x16xbf16>
    %115 = arith.truncf %113 : vector<16x640xf32> to vector<16x640xbf16>
    %cst_110 = arith.constant dense<0.000000e+00> : vector<16x640xf32>
    %116 = tpu.matmul %114, %115, %cst_110 {dimension_numbers = #tpu.dot_dimension_numbers<[1], [0], [0], [1], [0, 0, 1, 1], [], []>} : vector<16x16xbf16>, vector<16x640xbf16>, vector<16x640xf32> -> vector<16x640xf32>
    %117 = arith.addf %76, %116 : vector<16x640xf32>
    %118 = vector.extract_strided_slice %10 {offsets = [48, 0], sizes = [16, 640], strides = [1, 1]} : vector<64x640xf32> to vector<16x640xf32>
    %cst_111 = arith.constant 0.000000e+00 : f32
    %119 = vector.broadcast %cst_111 : f32 to vector<16x640xf32>
    %120 = arith.maximumf %118, %119 : vector<16x640xf32>
    %121 = vector.broadcast %1 : vector<1x640xf32> to vector<16x640xf32>
    %122 = arith.mulf %120, %121 : vector<16x640xf32>
    %123 = arith.truncf %122 : vector<16x640xf32> to vector<16x640xbf16>
    %c0_112 = arith.constant 0 : index
    %c256_113 = arith.constant 256 : index
    %124 = vector.load %arg30[%c0_112, %c256_113] : memref<16x1152xbf16, #tpu.memory_space<vmem>>, vector<16x640xbf16>
    tpu.vector_store %arg30[%c0_112, %c256_113], %123 {strides = array<i32>} : memref<16x1152xbf16, #tpu.memory_space<vmem>>, vector<16x640xbf16>,
    %c0_114 = arith.constant 0 : index
    %c255_115 = arith.constant 255 : index
    %125 = vector.load %arg30[%c0_114, %c255_115] : memref<16x1152xbf16, #tpu.memory_space<vmem>>, vector<16x640xbf16>
    %c0_116 = arith.constant 0 : index
    %c256_117 = arith.constant 256 : index
    %126 = vector.load %arg30[%c0_116, %c256_117] : memref<16x1152xbf16, #tpu.memory_space<vmem>>, vector<16x640xbf16>
    %c0_118 = arith.constant 0 : index
    %c257_119 = arith.constant 257 : index
    %127 = vector.load %arg30[%c0_118, %c257_119] : memref<16x1152xbf16, #tpu.memory_space<vmem>>, vector<16x640xbf16>
    %128 = tpu.concatenate %125, %126, %127 in 0 : vector<16x640xbf16>, vector<16x640xbf16>, vector<16x640xbf16> -> vector<48x640xbf16>
    %c0_120 = arith.constant 0 : index
    %c0_121 = arith.constant 0 : index
    %129 = vector.load %arg16[%c0_120, %c0_121] : memref<16x48xbf16, #tpu.memory_space<vmem>>, vector<16x48xbf16>
    %cst_122 = arith.constant dense<0.000000e+00> : vector<16x640xf32>
    %130 = tpu.matmul %129, %128, %cst_122 {dimension_numbers = #tpu.dot_dimension_numbers<[1], [0], [0], [1], [0, 0, 1, 1], [], []>} : vector<16x48xbf16>, vector<48x640xbf16>, vector<16x640xf32> -> vector<16x640xf32>
    %c0_123 = arith.constant 0 : index
    %c0_124 = arith.constant 0 : index
    %131 = vector.load %arg17[%c0_123, %c0_124] : memref<16x1xf32, #tpu.memory_space<vmem>>, vector<16x1xf32>
    %132 = vector.broadcast %131 : vector<16x1xf32> to vector<16x640xf32>
    %133 = arith.addf %130, %132 : vector<16x640xf32>
    %cst_125 = arith.constant 0.000000e+00 : f32
    %134 = vector.broadcast %cst_125 : f32 to vector<16x640xf32>
    %135 = arith.maximumf %133, %134 : vector<16x640xf32>
    %136 = vector.broadcast %1 : vector<1x640xf32> to vector<16x640xf32>
    %137 = arith.mulf %135, %136 : vector<16x640xf32>
    %138 = arith.truncf %137 : vector<16x640xf32> to vector<16x640xbf16>
    %c0_126 = arith.constant 0 : index
    %c256_127 = arith.constant 256 : index
    %139 = vector.load %arg30[%c0_126, %c256_127] : memref<16x1152xbf16, #tpu.memory_space<vmem>>, vector<16x640xbf16>
    tpu.vector_store %arg30[%c0_126, %c256_127], %138 {strides = array<i32>} : memref<16x1152xbf16, #tpu.memory_space<vmem>>, vector<16x640xbf16>,
    %c0_128 = arith.constant 0 : index
    %c230_129 = arith.constant 230 : index
    %140 = vector.load %arg30[%c0_128, %c230_129] : memref<16x1152xbf16, #tpu.memory_space<vmem>>, vector<16x640xbf16>
    %c0_130 = arith.constant 0 : index
    %c256_131 = arith.constant 256 : index
    %141 = vector.load %arg30[%c0_130, %c256_131] : memref<16x1152xbf16, #tpu.memory_space<vmem>>, vector<16x640xbf16>
    %c0_132 = arith.constant 0 : index
    %c282_133 = arith.constant 282 : index
    %142 = vector.load %arg30[%c0_132, %c282_133] : memref<16x1152xbf16, #tpu.memory_space<vmem>>, vector<16x640xbf16>
    %143 = tpu.concatenate %140, %141, %142 in 0 : vector<16x640xbf16>, vector<16x640xbf16>, vector<16x640xbf16> -> vector<48x640xbf16>
    %c0_134 = arith.constant 0 : index
    %c0_135 = arith.constant 0 : index
    %144 = vector.load %arg18[%c0_134, %c0_135] : memref<16x48xbf16, #tpu.memory_space<vmem>>, vector<16x48xbf16>
    %cst_136 = arith.constant dense<0.000000e+00> : vector<16x640xf32>
    %145 = tpu.matmul %144, %143, %cst_136 {dimension_numbers = #tpu.dot_dimension_numbers<[1], [0], [0], [1], [0, 0, 1, 1], [], []>} : vector<16x48xbf16>, vector<48x640xbf16>, vector<16x640xf32> -> vector<16x640xf32>
    %c0_137 = arith.constant 0 : index
    %c0_138 = arith.constant 0 : index
    %146 = vector.load %arg19[%c0_137, %c0_138] : memref<16x1xf32, #tpu.memory_space<vmem>>, vector<16x1xf32>
    %147 = vector.broadcast %146 : vector<16x1xf32> to vector<16x640xf32>
    %148 = arith.addf %145, %147 : vector<16x640xf32>
    %cst_139 = arith.constant 0.000000e+00 : f32
    %149 = vector.broadcast %cst_139 : f32 to vector<16x640xf32>
    %150 = arith.maximumf %148, %149 : vector<16x640xf32>
    %151 = vector.broadcast %1 : vector<1x640xf32> to vector<16x640xf32>
    %152 = arith.mulf %150, %151 : vector<16x640xf32>
    %153 = arith.truncf %152 : vector<16x640xf32> to vector<16x640xbf16>
    %c0_140 = arith.constant 0 : index
    %c256_141 = arith.constant 256 : index
    %154 = vector.load %arg30[%c0_140, %c256_141] : memref<16x1152xbf16, #tpu.memory_space<vmem>>, vector<16x640xbf16>
    tpu.vector_store %arg30[%c0_140, %c256_141], %153 {strides = array<i32>} : memref<16x1152xbf16, #tpu.memory_space<vmem>>, vector<16x640xbf16>,
    %c0_142 = arith.constant 0 : index
    %c121 = arith.constant 121 : index
    %155 = vector.load %arg30[%c0_142, %c121] : memref<16x1152xbf16, #tpu.memory_space<vmem>>, vector<16x640xbf16>
    %c0_143 = arith.constant 0 : index
    %c126 = arith.constant 126 : index
    %156 = vector.load %arg30[%c0_143, %c126] : memref<16x1152xbf16, #tpu.memory_space<vmem>>, vector<16x640xbf16>
    %c0_144 = arith.constant 0 : index
    %c131 = arith.constant 131 : index
    %157 = vector.load %arg30[%c0_144, %c131] : memref<16x1152xbf16, #tpu.memory_space<vmem>>, vector<16x640xbf16>
    %c0_145 = arith.constant 0 : index
    %c251 = arith.constant 251 : index
    %158 = vector.load %arg30[%c0_145, %c251] : memref<16x1152xbf16, #tpu.memory_space<vmem>>, vector<16x640xbf16>
    %c0_146 = arith.constant 0 : index
    %c256_147 = arith.constant 256 : index
    %159 = vector.load %arg30[%c0_146, %c256_147] : memref<16x1152xbf16, #tpu.memory_space<vmem>>, vector<16x640xbf16>
    %c0_148 = arith.constant 0 : index
    %c261 = arith.constant 261 : index
    %160 = vector.load %arg30[%c0_148, %c261] : memref<16x1152xbf16, #tpu.memory_space<vmem>>, vector<16x640xbf16>
    %c0_149 = arith.constant 0 : index
    %c381 = arith.constant 381 : index
    %161 = vector.load %arg30[%c0_149, %c381] : memref<16x1152xbf16, #tpu.memory_space<vmem>>, vector<16x640xbf16>
    %c0_150 = arith.constant 0 : index
    %c386 = arith.constant 386 : index
    %162 = vector.load %arg30[%c0_150, %c386] : memref<16x1152xbf16, #tpu.memory_space<vmem>>, vector<16x640xbf16>
    %c0_151 = arith.constant 0 : index
    %c391 = arith.constant 391 : index
    %163 = vector.load %arg30[%c0_151, %c391] : memref<16x1152xbf16, #tpu.memory_space<vmem>>, vector<16x640xbf16>
    %164 = tpu.concatenate %155, %156, %157, %158, %159, %160, %161, %162, %163 in 0 : vector<16x640xbf16>, vector<16x640xbf16>, vector<16x640xbf16>, vector<16x640xbf16>, vector<16x640xbf16>, vector<16x640xbf16>, vector<16x640xbf16>, vector<16x640xbf16>, vector<16x640xbf16> -> vector<144x640xbf16>
    %c0_152 = arith.constant 0 : index
    %c0_153 = arith.constant 0 : index
    %165 = vector.load %arg20[%c0_152, %c0_153] : memref<16x144xbf16, #tpu.memory_space<vmem>>, vector<16x144xbf16>
    %cst_154 = arith.constant dense<0.000000e+00> : vector<16x640xf32>
    %166 = tpu.matmul %165, %164, %cst_154 {dimension_numbers = #tpu.dot_dimension_numbers<[1], [0], [0], [1], [0, 0, 1, 1], [], []>} : vector<16x144xbf16>, vector<144x640xbf16>, vector<16x640xf32> -> vector<16x640xf32>
    %c0_155 = arith.constant 0 : index
    %c0_156 = arith.constant 0 : index
    %167 = vector.load %arg21[%c0_155, %c0_156] : memref<16x1xf32, #tpu.memory_space<vmem>>, vector<16x1xf32>
    %168 = vector.broadcast %167 : vector<16x1xf32> to vector<16x640xf32>
    %169 = arith.addf %166, %168 : vector<16x640xf32>
    %c0_157 = arith.constant 0 : index
    %c0_158 = arith.constant 0 : index
    %170 = vector.load %arg25[%c0_157, %c0_158] : memref<16x16xbf16, #tpu.memory_space<vmem>>, vector<16x16xbf16>
    %171 = arith.truncf %169 : vector<16x640xf32> to vector<16x640xbf16>
    %cst_159 = arith.constant dense<0.000000e+00> : vector<16x640xf32>
    %172 = tpu.matmul %170, %171, %cst_159 {dimension_numbers = #tpu.dot_dimension_numbers<[1], [0], [0], [1], [0, 0, 1, 1], [], []>} : vector<16x16xbf16>, vector<16x640xbf16>, vector<16x640xf32> -> vector<16x640xf32>
    %173 = arith.addf %117, %172 : vector<16x640xf32>
    %c0_160 = arith.constant 0 : index
    %c0_161 = arith.constant 0 : index
    %174 = vector.load %arg26[%c0_160, %c0_161] : memref<16x1xf32, #tpu.memory_space<vmem>>, vector<16x1xf32>
    %175 = vector.broadcast %174 : vector<16x1xf32> to vector<16x640xf32>
    %176 = arith.addf %173, %175 : vector<16x640xf32>
    %c0_162 = arith.constant 0 : index
    %c0_163 = arith.constant 0 : index
    %177 = vector.load %arg27[%c0_162, %c0_163] : memref<16x16xbf16, #tpu.memory_space<vmem>>, vector<16x16xbf16>
    %cst_164 = arith.constant dense<0.000000e+00> : vector<16x640xf32>
    %178 = tpu.matmul %177, %3, %cst_164 {dimension_numbers = #tpu.dot_dimension_numbers<[1], [0], [0], [1], [0, 0, 1, 1], [], []>} : vector<16x16xbf16>, vector<16x640xbf16>, vector<16x640xf32> -> vector<16x640xf32>
    %c0_165 = arith.constant 0 : index
    %c0_166 = arith.constant 0 : index
    %179 = vector.load %arg28[%c0_165, %c0_166] : memref<16x1xf32, #tpu.memory_space<vmem>>, vector<16x1xf32>
    %180 = vector.broadcast %179 : vector<16x1xf32> to vector<16x640xf32>
    %181 = arith.addf %178, %180 : vector<16x640xf32>
    %cst_167 = arith.constant 1.000000e-01 : f32
    %182 = vector.broadcast %cst_167 : f32 to vector<16x640xf32>
    %183 = arith.mulf %176, %182 : vector<16x640xf32>
    %184 = arith.addf %183, %181 : vector<16x640xf32>
    %cst_168 = arith.constant 0.000000e+00 : f32
    %185 = vector.broadcast %cst_168 : f32 to vector<16x640xf32>
    %186 = arith.maximumf %184, %185 : vector<16x640xf32>
    %187 = arith.truncf %186 : vector<16x640xf32> to vector<16x640xbf16>
    %c0_169 = arith.constant 0 : index
    %c0_170 = arith.constant 0 : index
    %c0_171 = arith.constant 0 : index
    %c0_172 = arith.constant 0 : index
    %188 = vector.load %arg29[%c0_169, %c0_170, %c0_171, %c0_172] : memref<1x1x16x640xbf16, #tpu.memory_space<vmem>>, vector<1x1x16x640xbf16>
    %189 = vector.shape_cast %188 : vector<1x1x16x640xbf16> to vector<16x640xbf16>
    %190 = vector.shape_cast %187 : vector<16x640xbf16> to vector<1x1x16x640xbf16>
    tpu.vector_store %arg29[%c0_169, %c0_170, %c0_171, %c0_172], %190 {strides = array<i32>} : memref<1x1x16x640xbf16, #tpu.memory_space<vmem>>, vector<1x1x16x640xbf16>,
    return
  }
  func.func @transform_0(%arg0: i32, %arg1: i32) -> (i32, i32, i32, i32) {
    %c0_i32 = arith.constant 0 : i32
    %c0_i32_0 = arith.constant 0 : i32
    %c0_i32_1 = arith.constant 0 : i32
    return %arg0, %arg1, %c0_i32, %c0_i32_0 : i32, i32, i32, i32
  }
  func.func @transform_1(%arg0: i32, %arg1: i32) -> (i32, i32, i32) {
    %c0_i32 = arith.constant 0 : i32
    %c0_i32_0 = arith.constant 0 : i32
    %c0_i32_1 = arith.constant 0 : i32
    return %arg1, %c0_i32, %c0_i32_0 : i32, i32, i32
  }
  func.func @transform_2(%arg0: i32, %arg1: i32) -> (i32, i32) {
    %c0_i32 = arith.constant 0 : i32
    %c0_i32_0 = arith.constant 0 : i32
    %c0_i32_1 = arith.constant 0 : i32
    return %c0_i32, %c0_i32_0 : i32, i32
  }
  func.func @transform_3(%arg0: i32, %arg1: i32) -> (i32, i32) {
    %c0_i32 = arith.constant 0 : i32
    %c0_i32_0 = arith.constant 0 : i32
    %c0_i32_1 = arith.constant 0 : i32
    return %c0_i32, %c0_i32_0 : i32, i32
  }
  func.func @transform_4(%arg0: i32, %arg1: i32) -> (i32, i32) {
    %c0_i32 = arith.constant 0 : i32
    %c0_i32_0 = arith.constant 0 : i32
    %c0_i32_1 = arith.constant 0 : i32
    return %c0_i32, %c0_i32_0 : i32, i32
  }
  func.func @transform_5(%arg0: i32, %arg1: i32) -> (i32, i32) {
    %c0_i32 = arith.constant 0 : i32
    %c0_i32_0 = arith.constant 0 : i32
    %c0_i32_1 = arith.constant 0 : i32
    return %c0_i32, %c0_i32_0 : i32, i32
  }
  func.func @transform_6(%arg0: i32, %arg1: i32) -> (i32, i32) {
    %c0_i32 = arith.constant 0 : i32
    %c0_i32_0 = arith.constant 0 : i32
    %c0_i32_1 = arith.constant 0 : i32
    return %c0_i32, %c0_i32_0 : i32, i32
  }
  func.func @transform_7(%arg0: i32, %arg1: i32) -> (i32, i32) {
    %c0_i32 = arith.constant 0 : i32
    %c0_i32_0 = arith.constant 0 : i32
    %c0_i32_1 = arith.constant 0 : i32
    return %c0_i32, %c0_i32_0 : i32, i32
  }
  func.func @transform_8(%arg0: i32, %arg1: i32) -> (i32, i32) {
    %c0_i32 = arith.constant 0 : i32
    %c0_i32_0 = arith.constant 0 : i32
    %c0_i32_1 = arith.constant 0 : i32
    return %c0_i32, %c0_i32_0 : i32, i32
  }
  func.func @transform_9(%arg0: i32, %arg1: i32) -> (i32, i32) {
    %c0_i32 = arith.constant 0 : i32
    %c0_i32_0 = arith.constant 0 : i32
    %c0_i32_1 = arith.constant 0 : i32
    return %c0_i32, %c0_i32_0 : i32, i32
  }
  func.func @transform_10(%arg0: i32, %arg1: i32) -> (i32, i32) {
    %c0_i32 = arith.constant 0 : i32
    %c0_i32_0 = arith.constant 0 : i32
    %c0_i32_1 = arith.constant 0 : i32
    return %c0_i32, %c0_i32_0 : i32, i32
  }
  func.func @transform_11(%arg0: i32, %arg1: i32) -> (i32, i32) {
    %c0_i32 = arith.constant 0 : i32
    %c0_i32_0 = arith.constant 0 : i32
    %c0_i32_1 = arith.constant 0 : i32
    return %c0_i32, %c0_i32_0 : i32, i32
  }
  func.func @transform_12(%arg0: i32, %arg1: i32) -> (i32, i32) {
    %c0_i32 = arith.constant 0 : i32
    %c0_i32_0 = arith.constant 0 : i32
    %c0_i32_1 = arith.constant 0 : i32
    return %c0_i32, %c0_i32_0 : i32, i32
  }
  func.func @transform_13(%arg0: i32, %arg1: i32) -> (i32, i32) {
    %c0_i32 = arith.constant 0 : i32
    %c0_i32_0 = arith.constant 0 : i32
    %c0_i32_1 = arith.constant 0 : i32
    return %c0_i32, %c0_i32_0 : i32, i32
  }
  func.func @transform_14(%arg0: i32, %arg1: i32) -> (i32, i32) {
    %c0_i32 = arith.constant 0 : i32
    %c0_i32_0 = arith.constant 0 : i32
    %c0_i32_1 = arith.constant 0 : i32
    return %c0_i32, %c0_i32_0 : i32, i32
  }
  func.func @transform_15(%arg0: i32, %arg1: i32) -> (i32, i32) {
    %c0_i32 = arith.constant 0 : i32
    %c0_i32_0 = arith.constant 0 : i32
    %c0_i32_1 = arith.constant 0 : i32
    return %c0_i32, %c0_i32_0 : i32, i32
  }
  func.func @transform_16(%arg0: i32, %arg1: i32) -> (i32, i32) {
    %c0_i32 = arith.constant 0 : i32
    %c0_i32_0 = arith.constant 0 : i32
    %c0_i32_1 = arith.constant 0 : i32
    return %c0_i32, %c0_i32_0 : i32, i32
  }
  func.func @transform_17(%arg0: i32, %arg1: i32) -> (i32, i32) {
    %c0_i32 = arith.constant 0 : i32
    %c0_i32_0 = arith.constant 0 : i32
    %c0_i32_1 = arith.constant 0 : i32
    return %c0_i32, %c0_i32_0 : i32, i32
  }
  func.func @transform_18(%arg0: i32, %arg1: i32) -> (i32, i32) {
    %c0_i32 = arith.constant 0 : i32
    %c0_i32_0 = arith.constant 0 : i32
    %c0_i32_1 = arith.constant 0 : i32
    return %c0_i32, %c0_i32_0 : i32, i32
  }
  func.func @transform_19(%arg0: i32, %arg1: i32) -> (i32, i32) {
    %c0_i32 = arith.constant 0 : i32
    %c0_i32_0 = arith.constant 0 : i32
    %c0_i32_1 = arith.constant 0 : i32
    return %c0_i32, %c0_i32_0 : i32, i32
  }
  func.func @transform_20(%arg0: i32, %arg1: i32) -> (i32, i32) {
    %c0_i32 = arith.constant 0 : i32
    %c0_i32_0 = arith.constant 0 : i32
    %c0_i32_1 = arith.constant 0 : i32
    return %c0_i32, %c0_i32_0 : i32, i32
  }
  func.func @transform_21(%arg0: i32, %arg1: i32) -> (i32, i32) {
    %c0_i32 = arith.constant 0 : i32
    %c0_i32_0 = arith.constant 0 : i32
    %c0_i32_1 = arith.constant 0 : i32
    return %c0_i32, %c0_i32_0 : i32, i32
  }
  func.func @transform_22(%arg0: i32, %arg1: i32) -> (i32, i32) {
    %c0_i32 = arith.constant 0 : i32
    %c0_i32_0 = arith.constant 0 : i32
    %c0_i32_1 = arith.constant 0 : i32
    return %c0_i32, %c0_i32_0 : i32, i32
  }
  func.func @transform_23(%arg0: i32, %arg1: i32) -> (i32, i32) {
    %c0_i32 = arith.constant 0 : i32
    %c0_i32_0 = arith.constant 0 : i32
    %c0_i32_1 = arith.constant 0 : i32
    return %c0_i32, %c0_i32_0 : i32, i32
  }
  func.func @transform_24(%arg0: i32, %arg1: i32) -> (i32, i32) {
    %c0_i32 = arith.constant 0 : i32
    %c0_i32_0 = arith.constant 0 : i32
    %c0_i32_1 = arith.constant 0 : i32
    return %c0_i32, %c0_i32_0 : i32, i32
  }
  func.func @transform_25(%arg0: i32, %arg1: i32) -> (i32, i32) {
    %c0_i32 = arith.constant 0 : i32
    %c0_i32_0 = arith.constant 0 : i32
    %c0_i32_1 = arith.constant 0 : i32
    return %c0_i32, %c0_i32_0 : i32, i32
  }
  func.func @transform_26(%arg0: i32, %arg1: i32) -> (i32, i32) {
    %c0_i32 = arith.constant 0 : i32
    %c0_i32_0 = arith.constant 0 : i32
    %c0_i32_1 = arith.constant 0 : i32
    return %c0_i32, %c0_i32_0 : i32, i32
  }
  func.func @transform_27(%arg0: i32, %arg1: i32) -> (i32, i32, i32, i32) {
    %c0_i32 = arith.constant 0 : i32
    %c0_i32_0 = arith.constant 0 : i32
    %c0_i32_1 = arith.constant 0 : i32
    return %arg0, %arg1, %c0_i32, %c0_i32_0 : i32, i32, i32, i32
  }
}

</mosaic_0001>

<llo_original>
// kernel: basic_rfb_a_forward.1
$region0: #{basic_rfb_a_forward.1}
  #allocation0 [shape = 'u32[]', space=smem, size = 0x4, offset = 0x4, fixed_abs, tag = 'smem constant byte address 0x4 - core index']
  #allocation1 [shape = 'u32[144,128]{1,0:T(1,128)}', space=vmem, size = 0x12000, scoped, tag = 'internal scratch']
  #allocation2 [shape = 'bf16[16,1152]{1,0:T(8,128)(2,1)}', space=vmem, size = 0x9000, scoped, tag = 'scratch operand']
  %s0 = inlined_call_operand.vmem [shape: bf16[2,2,16,640], index: 0, kind: input, shape index: {}]
  %s1 = inlined_call_operand.vmem [shape: f32[2,1,640], index: 1, kind: input, shape index: {}]
  %s2 = inlined_call_operand.vmem [shape: bf16[64,16], index: 2, kind: input, shape index: {}]
  %s3 = inlined_call_operand.vmem [shape: f32[64,1], index: 3, kind: input, shape index: {}]
  %s4 = inlined_call_operand.vmem [shape: bf16[16,144], index: 4, kind: input, shape index: {}]
  %s5 = inlined_call_operand.vmem [shape: f32[16,1], index: 5, kind: input, shape index: {}]
  %s6 = inlined_call_operand.vmem [shape: bf16[16,48], index: 6, kind: input, shape index: {}]
  %s7 = inlined_call_operand.vmem [shape: f32[16,1], index: 7, kind: input, shape index: {}]
  %s8 = inlined_call_operand.vmem [shape: bf16[16,144], index: 8, kind: input, shape index: {}]
  %s9 = inlined_call_operand.vmem [shape: f32[16,1], index: 9, kind: input, shape index: {}]
  %s10 = inlined_call_operand.vmem [shape: bf16[16,48], index: 10, kind: input, shape index: {}]
  %s11 = inlined_call_operand.vmem [shape: f32[16,1], index: 11, kind: input, shape index: {}]
  %s12 = inlined_call_operand.vmem [shape: bf16[16,144], index: 12, kind: input, shape index: {}]
  %s13 = inlined_call_operand.vmem [shape: f32[16,1], index: 13, kind: input, shape index: {}]
  %s14 = inlined_call_operand.vmem [shape: bf16[16,48], index: 14, kind: input, shape index: {}]
  %s15 = inlined_call_operand.vmem [shape: f32[16,1], index: 15, kind: input, shape index: {}]
  %s16 = inlined_call_operand.vmem [shape: bf16[16,48], index: 16, kind: input, shape index: {}]
  %s17 = inlined_call_operand.vmem [shape: f32[16,1], index: 17, kind: input, shape index: {}]
  %s18 = inlined_call_operand.vmem [shape: bf16[16,144], index: 18, kind: input, shape index: {}]
  %s19 = inlined_call_operand.vmem [shape: f32[16,1], index: 19, kind: input, shape index: {}]
  %s20 = inlined_call_operand.vmem [shape: bf16[16,16], index: 20, kind: input, shape index: {}]
  %s21 = inlined_call_operand.vmem [shape: bf16[16,16], index: 21, kind: input, shape index: {}]
  %s22 = inlined_call_operand.vmem [shape: bf16[16,16], index: 22, kind: input, shape index: {}]
  %s23 = inlined_call_operand.vmem [shape: bf16[16,16], index: 23, kind: input, shape index: {}]
  %s24 = inlined_call_operand.vmem [shape: f32[16,1], index: 24, kind: input, shape index: {}]
  %s25 = inlined_call_operand.vmem [shape: bf16[16,16], index: 25, kind: input, shape index: {}]
  %s26 = inlined_call_operand.vmem [shape: f32[16,1], index: 26, kind: input, shape index: {}]
  %s27 = inlined_call_operand.vmem [shape: bf16[2,2,16,640], index: 27, kind: output, shape index: {}]
  %s28 = sld [smem:[#allocation0]]
  $region141: #{basic_rfb_a_forward.1} parent=0
    _
  %s30 = ssub.s32 1, %s28
  %s31 = scalar_select 0, %s30, %s28
  loop: start=0, step=1, limit=6
  $region2: #{basic_rfb_a_forward.1} parent=0 // loop_pre_header
    _
  $region3: #{basic_rfb_a_forward.1} parent=0 // loop_header
    %s33 = sphi 0, %s37
    %p34 = scmp.ge.s32.totalorder %s33, 6
    %s40 = sphi 0, %s52
    %s41 = sphi 0, %s48
    %s42 = sphi 0, %s40
    %s43 = sphi 0, %s41
    %s44 = sphi 0, %s42
    %s45 = sphi 0, %s43
    %s57 = sphi 0, %s59
    %s60 = sphi 0, %s57
    %s61 = sphi 0, %s60
    %s77 = sphi 0, %s61
    %s83 = sphi 0, %s85
    %s86 = sphi 0, %s83
    %s87 = sphi 0, %s86
    %s103 = sphi 0, %s87
    %s107 = sphi 0, %s107
    %s109 = sphi 0, %s107
    %s110 = sphi 0, %s109
    %s124 = sphi 0, %s110
    %s128 = sphi 0, %s128
    %s130 = sphi 0, %s128
    %s131 = sphi 0, %s130
    %s145 = sphi 0, %s131
    %s149 = sphi 0, %s149
    %s151 = sphi 0, %s149
    %s152 = sphi 0, %s151
    %s166 = sphi 0, %s152
    %s170 = sphi 0, %s170
    %s172 = sphi 0, %s170
    %s173 = sphi 0, %s172
    %s187 = sphi 0, %s173
    %s191 = sphi 0, %s191
    %s193 = sphi 0, %s191
    %s194 = sphi 0, %s193
    %s208 = sphi 0, %s194
    %s212 = sphi 0, %s212
    %s214 = sphi 0, %s212
    %s215 = sphi 0, %s214
    %s229 = sphi 0, %s215
    %s233 = sphi 0, %s233
    %s235 = sphi 0, %s233
    %s236 = sphi 0, %s235
    %s250 = sphi 0, %s236
    %s254 = sphi 0, %s254
    %s256 = sphi 0, %s254
    %s257 = sphi 0, %s256
    %s271 = sphi 0, %s257
    %s275 = sphi 0, %s275
    %s277 = sphi 0, %s275
    %s278 = sphi 0, %s277
    %s292 = sphi 0, %s278
    %s296 = sphi 0, %s296
    %s298 = sphi 0, %s296
    %s299 = sphi 0, %s298
    %s313 = sphi 0, %s299
    %s317 = sphi 0, %s317
    %s319 = sphi 0, %s317
    %s320 = sphi 0, %s319
    %s334 = sphi 0, %s320
    %s338 = sphi 0, %s338
    %s340 = sphi 0, %s338
    %s341 = sphi 0, %s340
    %s355 = sphi 0, %s341
    %s359 = sphi 0, %s359
    %s361 = sphi 0, %s359
    %s362 = sphi 0, %s361
    %s376 = sphi 0, %s362
    %s380 = sphi 0, %s380
    %s382 = sphi 0, %s380
    %s383 = sphi 0, %s382
    %s397 = sphi 0, %s383
    %s401 = sphi 0, %s401
    %s403 = sphi 0, %s401
    %s404 = sphi 0, %s403
    %s418 = sphi 0, %s404
    %s422 = sphi 0, %s422
    %s424 = sphi 0, %s422
    %s425 = sphi 0, %s424
    %s439 = sphi 0, %s425
    %s443 = sphi 0, %s443
    %s445 = sphi 0, %s443
    %s446 = sphi 0, %s445
    %s460 = sphi 0, %s446
    %s464 = sphi 0, %s464
    %s466 = sphi 0, %s464
    %s467 = sphi 0, %s466
    %s481 = sphi 0, %s467
    %s485 = sphi 0, %s485
    %s487 = sphi 0, %s485
    %s488 = sphi 0, %s487
    %s502 = sphi 0, %s488
    %s506 = sphi 0, %s506
    %s508 = sphi 0, %s506
    %s509 = sphi 0, %s508
    %s523 = sphi 0, %s509
    %s527 = sphi 0, %s527
    %s529 = sphi 0, %s527
    %s530 = sphi 0, %s529
    %s544 = sphi 0, %s530
    %s548 = sphi 0, %s548
    %s550 = sphi 0, %s548
    %s551 = sphi 0, %s550
    %s565 = sphi 0, %s551
    %s569 = sphi 0, %s569
    %s571 = sphi 0, %s569
    %s572 = sphi 0, %s571
    %s586 = sphi 0, %s572
    %s590 = sphi 0, %s590
    %s592 = sphi 0, %s590
    %s593 = sphi 0, %s592
    %s607 = sphi 0, %s593
    %s611 = sphi 0, %s611
    %s613 = sphi 0, %s611
    %s614 = sphi 0, %s613
    %s628 = sphi 0, %s614
    %s636 = sphi 0, %s638
    %s639 = sphi 0, %s636
    %s640 = sphi 0, %s639
    %s656 = sphi 0, %s640
  $region4: #{basic_rfb_a_forward.1} parent=0 // loop_header_branch
    %36 = sbr.rel (%p34) target = $region8
  $region5: #{basic_rfb_a_forward.1} parent=0 // loop_body
    %s38 = ssub.s32 %s33, 1
    %s39 = ssub.s32 %s33, 2
    %s46 = sadd.s32 1, %s41
    %p47 = scmp.ge.s32.totalorder %s46, 2
    %s48 = scalar_select %p47, 0, %s46
    %s49 = sadd.s32 1, %s40
    %s50 = scalar_select %p47, %s49, %s40
    %p51 = scmp.ge.s32.totalorder %s50, 2
    %s52 = scalar_select %p51, 0, %s50
    %s53 = ssub.s32 %s40, %s52
    %s54 = ssub.s32 %s41, %s48
    %s55 = sor.u32 %s53, %s54
    %p56 = scmp.eq.s32.totalorder %s55, 0
    %s58 = sadd.s32 %s57, 1
    %s59 = scalar_select %p56, %s57, %s58
    %p62 = pneg %p56
    %p63 = scmp.eq.s32.totalorder %s33, 3
    %p64 = por %p62, %p63
    %p65 = scmp.ne.s32.totalorder %s57, %s60
    %p66 = scmp.eq.s32.totalorder %s33, 0
    %p67 = por %p65, %p66
    %p68 = scmp.ne.s32.totalorder %s57, %s60
    %p69 = scmp.eq.s32.totalorder %s38, 3
    %p70 = por %p68, %p69
    %p71 = scmp.ne.s32.totalorder %s60, %s61
    %p72 = scmp.eq.s32.totalorder %s38, 0
    %p73 = por %p71, %p72
    %p74 = scmp.ne.s32.totalorder %s60, %s61
    %p75 = scmp.eq.s32.totalorder %s39, 3
    %p76 = por %p74, %p75
    %p78 = scmp.ne.s32.totalorder %s61, %s77
    %p79 = scmp.eq.s32.totalorder %s39, 0
    %p80 = por %p78, %p79
    %s81 = ssub.s32 %s41, %s48
    %p82 = scmp.eq.s32.totalorder %s81, 0
    %s84 = sadd.s32 %s83, 1
    %s85 = scalar_select %p82, %s83, %s84
    %p88 = pneg %p82
    %p89 = scmp.eq.s32.totalorder %s33, 3
    %p90 = por %p88, %p89
    %p91 = scmp.ne.s32.totalorder %s83, %s86
    %p92 = scmp.eq.s32.totalorder %s33, 0
    %p93 = por %p91, %p92
    %p94 = scmp.ne.s32.totalorder %s83, %s86
    %p95 = scmp.eq.s32.totalorder %s38, 3
    %p96 = por %p94, %p95
    %p97 = scmp.ne.s32.totalorder %s86, %s87
    %p98 = scmp.eq.s32.totalorder %s38, 0
    %p99 = por %p97, %p98
    %p100 = scmp.ne.s32.totalorder %s86, %s87
    %p101 = scmp.eq.s32.totalorder %s39, 3
    %p102 = por %p100, %p101
    %p104 = scmp.ne.s32.totalorder %s87, %s103
    %p105 = scmp.eq.s32.totalorder %s39, 0
    %p106 = por %p104, %p105
    %s108 = sadd.s32 %s107, 1
    %p111 = scmp.eq.s32.totalorder %s33, 3
    %p112 = scmp.ne.s32.totalorder %s107, %s109
    %p113 = scmp.eq.s32.totalorder %s33, 0
    %p114 = por %p112, %p113
    %p115 = scmp.ne.s32.totalorder %s107, %s109
    %p116 = scmp.eq.s32.totalorder %s38, 3
    %p117 = por %p115, %p116
    %p118 = scmp.ne.s32.totalorder %s109, %s110
    %p119 = scmp.eq.s32.totalorder %s38, 0
    %p120 = por %p118, %p119
    %p121 = scmp.ne.s32.totalorder %s109, %s110
    %p122 = scmp.eq.s32.totalorder %s39, 3
    %p123 = por %p121, %p122
    %p125 = scmp.ne.s32.totalorder %s110, %s124
    %p126 = scmp.eq.s32.totalorder %s39, 0
    %p127 = por %p125, %p126
    %s129 = sadd.s32 %s128, 1
    %p132 = scmp.eq.s32.totalorder %s33, 3
    %p133 = scmp.ne.s32.totalorder %s128, %s130
    %p134 = scmp.eq.s32.totalorder %s33, 0
    %p135 = por %p133, %p134
    %p136 = scmp.ne.s32.totalorder %s128, %s130
    %p137 = scmp.eq.s32.totalorder %s38, 3
    %p138 = por %p136, %p137
    %p139 = scmp.ne.s32.totalorder %s130, %s131
    %p140 = scmp.eq.s32.totalorder %s38, 0
    %p141 = por %p139, %p140
    %p142 = scmp.ne.s32.totalorder %s130, %s131
    %p143 = scmp.eq.s32.totalorder %s39, 3
    %p144 = por %p142, %p143
    %p146 = scmp.ne.s32.totalorder %s131, %s145
    %p147 = scmp.eq.s32.totalorder %s39, 0
    %p148 = por %p146, %p147
    %s150 = sadd.s32 %s149, 1
    %p153 = scmp.eq.s32.totalorder %s33, 3
    %p154 = scmp.ne.s32.totalorder %s149, %s151
    %p155 = scmp.eq.s32.totalorder %s33, 0
    %p156 = por %p154, %p155
    %p157 = scmp.ne.s32.totalorder %s149, %s151
    %p158 = scmp.eq.s32.totalorder %s38, 3
    %p159 = por %p157, %p158
    %p160 = scmp.ne.s32.totalorder %s151, %s152
    %p161 = scmp.eq.s32.totalorder %s38, 0
    %p162 = por %p160, %p161
    %p163 = scmp.ne.s32.totalorder %s151, %s152
    %p164 = scmp.eq.s32.totalorder %s39, 3
    %p165 = por %p163, %p164
    %p167 = scmp.ne.s32.totalorder %s152, %s166
    %p168 = scmp.eq.s32.totalorder %s39, 0
    %p169 = por %p167, %p168
    %s171 = sadd.s32 %s170, 1
    %p174 = scmp.eq.s32.totalorder %s33, 3
    %p175 = scmp.ne.s32.totalorder %s170, %s172
    %p176 = scmp.eq.s32.totalorder %s33, 0
    %p177 = por %p175, %p176
    %p178 = scmp.ne.s32.totalorder %s170, %s172
    %p179 = scmp.eq.s32.totalorder %s38, 3
    %p180 = por %p178, %p179
    %p181 = scmp.ne.s32.totalorder %s172, %s173
    %p182 = scmp.eq.s32.totalorder %s38, 0
    %p183 = por %p181, %p182
    %p184 = scmp.ne.s32.totalorder %s172, %s173
    %p185 = scmp.eq.s32.totalorder %s39, 3
    %p186 = por %p184, %p185
    %p188 = scmp.ne.s32.totalorder %s173, %s187
    %p189 = scmp.eq.s32.totalorder %s39, 0
    %p190 = por %p188, %p189
    %s192 = sadd.s32 %s191, 1
    %p195 = scmp.eq.s32.totalorder %s33, 3
    %p196 = scmp.ne.s32.totalorder %s191, %s193
    %p197 = scmp.eq.s32.totalorder %s33, 0
    %p198 = por %p196, %p197
    %p199 = scmp.ne.s32.totalorder %s191, %s193
    %p200 = scmp.eq.s32.totalorder %s38, 3
    %p201 = por %p199, %p200
    %p202 = scmp.ne.s32.totalorder %s193, %s194
    %p203 = scmp.eq.s32.totalorder %s38, 0
    %p204 = por %p202, %p203
    %p205 = scmp.ne.s32.totalorder %s193, %s194
    %p206 = scmp.eq.s32.totalorder %s39, 3
    %p207 = por %p205, %p206
    %p209 = scmp.ne.s32.totalorder %s194, %s208
    %p210 = scmp.eq.s32.totalorder %s39, 0
    %p211 = por %p209, %p210
    %s213 = sadd.s32 %s212, 1
    %p216 = scmp.eq.s32.totalorder %s33, 3
    %p217 = scmp.ne.s32.totalorder %s212, %s214
    %p218 = scmp.eq.s32.totalorder %s33, 0
    %p219 = por %p217, %p218
    %p220 = scmp.ne.s32.totalorder %s212, %s214
    %p221 = scmp.eq.s32.totalorder %s38, 3
    %p222 = por %p220, %p221
    %p223 = scmp.ne.s32.totalorder %s214, %s215
    %p224 = scmp.eq.s32.totalorder %s38, 0
    %p225 = por %p223, %p224
    %p226 = scmp.ne.s32.totalorder %s214, %s215
    %p227 = scmp.eq.s32.totalorder %s39, 3
    %p228 = por %p226, %p227
    %p230 = scmp.ne.s32.totalorder %s215, %s229
    %p231 = scmp.eq.s32.totalorder %s39, 0
    %p232 = por %p230, %p231
    %s234 = sadd.s32 %s233, 1
    %p237 = scmp.eq.s32.totalorder %s33, 3
    %p238 = scmp.ne.s32.totalorder %s233, %s235
    %p239 = scmp.eq.s32.totalorder %s33, 0
    %p240 = por %p238, %p239
    %p241 = scmp.ne.s32.totalorder %s233, %s235
    %p242 = scmp.eq.s32.totalorder %s38, 3
    %p243 = por %p241, %p242
    %p244 = scmp.ne.s32.totalorder %s235, %s236
    %p245 = scmp.eq.s32.totalorder %s38, 0
    %p246 = por %p244, %p245
    %p247 = scmp.ne.s32.totalorder %s235, %s236
    %p248 = scmp.eq.s32.totalorder %s39, 3
    %p249 = por %p247, %p248
    %p251 = scmp.ne.s32.totalorder %s236, %s250
    %p252 = scmp.eq.s32.totalorder %s39, 0
    %p253 = por %p251, %p252
    %s255 = sadd.s32 %s254, 1
    %p258 = scmp.eq.s32.totalorder %s33, 3
    %p259 = scmp.ne.s32.totalorder %s254, %s256
    %p260 = scmp.eq.s32.totalorder %s33, 0
    %p261 = por %p259, %p260
    %p262 = scmp.ne.s32.totalorder %s254, %s256
    %p263 = scmp.eq.s32.totalorder %s38, 3
    %p264 = por %p262, %p263
    %p265 = scmp.ne.s32.totalorder %s256, %s257
    %p266 = scmp.eq.s32.totalorder %s38, 0
    %p267 = por %p265, %p266
    %p268 = scmp.ne.s32.totalorder %s256, %s257
    %p269 = scmp.eq.s32.totalorder %s39, 3
    %p270 = por %p268, %p269
    %p272 = scmp.ne.s32.totalorder %s257, %s271
    %p273 = scmp.eq.s32.totalorder %s39, 0
    %p274 = por %p272, %p273
    %s276 = sadd.s32 %s275, 1
    %p279 = scmp.eq.s32.totalorder %s33, 3
    %p280 = scmp.ne.s32.totalorder %s275, %s277
    %p281 = scmp.eq.s32.totalorder %s33, 0
    %p282 = por %p280, %p281
    %p283 = scmp.ne.s32.totalorder %s275, %s277
    %p284 = scmp.eq.s32.totalorder %s38, 3
    %p285 = por %p283, %p284
    %p286 = scmp.ne.s32.totalorder %s277, %s278
    %p287 = scmp.eq.s32.totalorder %s38, 0
    %p288 = por %p286, %p287
    %p289 = scmp.ne.s32.totalorder %s277, %s278
    %p290 = scmp.eq.s32.totalorder %s39, 3
    %p291 = por %p289, %p290
    %p293 = scmp.ne.s32.totalorder %s278, %s292
    %p294 = scmp.eq.s32.totalorder %s39, 0
    %p295 = por %p293, %p294
    %s297 = sadd.s32 %s296, 1
    %p300 = scmp.eq.s32.totalorder %s33, 3
    %p301 = scmp.ne.s32.totalorder %s296, %s298
    %p302 = scmp.eq.s32.totalorder %s33, 0
    %p303 = por %p301, %p302
    %p304 = scmp.ne.s32.totalorder %s296, %s298
    %p305 = scmp.eq.s32.totalorder %s38, 3
    %p306 = por %p304, %p305
    %p307 = scmp.ne.s32.totalorder %s298, %s299
    %p308 = scmp.eq.s32.totalorder %s38, 0
    %p309 = por %p307, %p308
    %p310 = scmp.ne.s32.totalorder %s298, %s299
    %p311 = scmp.eq.s32.totalorder %s39, 3
    %p312 = por %p310, %p311
    %p314 = scmp.ne.s32.totalorder %s299, %s313
    %p315 = scmp.eq.s32.totalorder %s39, 0
    %p316 = por %p314, %p315
    %s318 = sadd.s32 %s317, 1
    %p321 = scmp.eq.s32.totalorder %s33, 3
    %p322 = scmp.ne.s32.totalorder %s317, %s319
    %p323 = scmp.eq.s32.totalorder %s33, 0
    %p324 = por %p322, %p323
    %p325 = scmp.ne.s32.totalorder %s317, %s319
    %p326 = scmp.eq.s32.totalorder %s38, 3
    %p327 = por %p325, %p326
    %p328 = scmp.ne.s32.totalorder %s319, %s320
    %p329 = scmp.eq.s32.totalorder %s38, 0
    %p330 = por %p328, %p329
    %p331 = scmp.ne.s32.totalorder %s319, %s320
    %p332 = scmp.eq.s32.totalorder %s39, 3
    %p333 = por %p331, %p332
    %p335 = scmp.ne.s32.totalorder %s320, %s334
    %p336 = scmp.eq.s32.totalorder %s39, 0
    %p337 = por %p335, %p336
    %s339 = sadd.s32 %s338, 1
    %p342 = scmp.eq.s32.totalorder %s33, 3
    %p343 = scmp.ne.s32.totalorder %s338, %s340
    %p344 = scmp.eq.s32.totalorder %s33, 0
    %p345 = por %p343, %p344
    %p346 = scmp.ne.s32.totalorder %s338, %s340
    %p347 = scmp.eq.s32.totalorder %s38, 3
    %p348 = por %p346, %p347
    %p349 = scmp.ne.s32.totalorder %s340, %s341
    %p350 = scmp.eq.s32.totalorder %s38, 0
    %p351 = por %p349, %p350
    %p352 = scmp.ne.s32.totalorder %s340, %s341
    %p353 = scmp.eq.s32.totalorder %s39, 3
    %p354 = por %p352, %p353
    %p356 = scmp.ne.s32.totalorder %s341, %s355
    %p357 = scmp.eq.s32.totalorder %s39, 0
    %p358 = por %p356, %p357
    %s360 = sadd.s32 %s359, 1
    %p363 = scmp.eq.s32.totalorder %s33, 3
    %p364 = scmp.ne.s32.totalorder %s359, %s361
    %p365 = scmp.eq.s32.totalorder %s33, 0
    %p366 = por %p364, %p365
    %p367 = scmp.ne.s32.totalorder %s359, %s361
    %p368 = scmp.eq.s32.totalorder %s38, 3
    %p369 = por %p367, %p368
    %p370 = scmp.ne.s32.totalorder %s361, %s362
    %p371 = scmp.eq.s32.totalorder %s38, 0
    %p372 = por %p370, %p371
    %p373 = scmp.ne.s32.totalorder %s361, %s362
    %p374 = scmp.eq.s32.totalorder %s39, 3
    %p375 = por %p373, %p374
    %p377 = scmp.ne.s32.totalorder %s362, %s376
    %p378 = scmp.eq.s32.totalorder %s39, 0
    %p379 = por %p377, %p378
    %s381 = sadd.s32 %s380, 1
    %p384 = scmp.eq.s32.totalorder %s33, 3
    %p385 = scmp.ne.s32.totalorder %s380, %s382
    %p386 = scmp.eq.s32.totalorder %s33, 0
    %p387 = por %p385, %p386
    %p388 = scmp.ne.s32.totalorder %s380, %s382
    %p389 = scmp.eq.s32.totalorder %s38, 3
    %p390 = por %p388, %p389
    %p391 = scmp.ne.s32.totalorder %s382, %s383
    %p392 = scmp.eq.s32.totalorder %s38, 0
    %p393 = por %p391, %p392
    %p394 = scmp.ne.s32.totalorder %s382, %s383
    %p395 = scmp.eq.s32.totalorder %s39, 3
    %p396 = por %p394, %p395
    %p398 = scmp.ne.s32.totalorder %s383, %s397
    %p399 = scmp.eq.s32.totalorder %s39, 0
    %p400 = por %p398, %p399
    %s402 = sadd.s32 %s401, 1
    %p405 = scmp.eq.s32.totalorder %s33, 3
    %p406 = scmp.ne.s32.totalorder %s401, %s403
    %p407 = scmp.eq.s32.totalorder %s33, 0
    %p408 = por %p406, %p407
    %p409 = scmp.ne.s32.totalorder %s401, %s403
    %p410 = scmp.eq.s32.totalorder %s38, 3
    %p411 = por %p409, %p410
    %p412 = scmp.ne.s32.totalorder %s403, %s404
    %p413 = scmp.eq.s32.totalorder %s38, 0
    %p414 = por %p412, %p413
    %p415 = scmp.ne.s32.totalorder %s403, %s404
    %p416 = scmp.eq.s32.totalorder %s39, 3
    %p417 = por %p415, %p416
    %p419 = scmp.ne.s32.totalorder %s404, %s418
    %p420 = scmp.eq.s32.totalorder %s39, 0
    %p421 = por %p419, %p420
    %s423 = sadd.s32 %s422, 1
    %p426 = scmp.eq.s32.totalorder %s33, 3
    %p427 = scmp.ne.s32.totalorder %s422, %s424
    %p428 = scmp.eq.s32.totalorder %s33, 0
    %p429 = por %p427, %p428
    %p430 = scmp.ne.s32.totalorder %s422, %s424
    %p431 = scmp.eq.s32.totalorder %s38, 3
    %p432 = por %p430, %p431
    %p433 = scmp.ne.s32.totalorder %s424, %s425
    %p434 = scmp.eq.s32.totalorder %s38, 0
    %p435 = por %p433, %p434
    %p436 = scmp.ne.s32.totalorder %s424, %s425
    %p437 = scmp.eq.s32.totalorder %s39, 3
    %p438 = por %p436, %p437
    %p440 = scmp.ne.s32.totalorder %s425, %s439
    %p441 = scmp.eq.s32.totalorder %s39, 0
    %p442 = por %p440, %p441
    %s444 = sadd.s32 %s443, 1
    %p447 = scmp.eq.s32.totalorder %s33, 3
    %p448 = scmp.ne.s32.totalorder %s443, %s445
    %p449 = scmp.eq.s32.totalorder %s33, 0
    %p450 = por %p448, %p449
    %p451 = scmp.ne.s32.totalorder %s443, %s445
    %p452 = scmp.eq.s32.totalorder %s38, 3
    %p453 = por %p451, %p452
    %p454 = scmp.ne.s32.totalorder %s445, %s446
    %p455 = scmp.eq.s32.totalorder %s38, 0
    %p456 = por %p454, %p455
    %p457 = scmp.ne.s32.totalorder %s445, %s446
    %p458 = scmp.eq.s32.totalorder %s39, 3
    %p459 = por %p457, %p458
    %p461 = scmp.ne.s32.totalorder %s446, %s460
    %p462 = scmp.eq.s32.totalorder %s39, 0
    %p463 = por %p461, %p462
    %s465 = sadd.s32 %s464, 1
    %p468 = scmp.eq.s32.totalorder %s33, 3
    %p469 = scmp.ne.s32.totalorder %s464, %s466
    %p470 = scmp.eq.s32.totalorder %s33, 0
    %p471 = por %p469, %p470
    %p472 = scmp.ne.s32.totalorder %s464, %s466
    %p473 = scmp.eq.s32.totalorder %s38, 3
    %p474 = por %p472, %p473
    %p475 = scmp.ne.s32.totalorder %s466, %s467
    %p476 = scmp.eq.s32.totalorder %s38, 0
    %p477 = por %p475, %p476
    %p478 = scmp.ne.s32.totalorder %s466, %s467
    %p479 = scmp.eq.s32.totalorder %s39, 3
    %p480 = por %p478, %p479
    %p482 = scmp.ne.s32.totalorder %s467, %s481
    %p483 = scmp.eq.s32.totalorder %s39, 0
    %p484 = por %p482, %p483
    %s486 = sadd.s32 %s485, 1
    %p489 = scmp.eq.s32.totalorder %s33, 3
    %p490 = scmp.ne.s32.totalorder %s485, %s487
    %p491 = scmp.eq.s32.totalorder %s33, 0
    %p492 = por %p490, %p491
    %p493 = scmp.ne.s32.totalorder %s485, %s487
    %p494 = scmp.eq.s32.totalorder %s38, 3
    %p495 = por %p493, %p494
    %p496 = scmp.ne.s32.totalorder %s487, %s488
    %p497 = scmp.eq.s32.totalorder %s38, 0
    %p498 = por %p496, %p497
    %p499 = scmp.ne.s32.totalorder %s487, %s488
    %p500 = scmp.eq.s32.totalorder %s39, 3
    %p501 = por %p499, %p500
    %p503 = scmp.ne.s32.totalorder %s488, %s502
    %p504 = scmp.eq.s32.totalorder %s39, 0
    %p505 = por %p503, %p504
    %s507 = sadd.s32 %s506, 1
    %p510 = scmp.eq.s32.totalorder %s33, 3
    %p511 = scmp.ne.s32.totalorder %s506, %s508
    %p512 = scmp.eq.s32.totalorder %s33, 0
    %p513 = por %p511, %p512
    %p514 = scmp.ne.s32.totalorder %s506, %s508
    %p515 = scmp.eq.s32.totalorder %s38, 3
    %p516 = por %p514, %p515
    %p517 = scmp.ne.s32.totalorder %s508, %s509
    %p518 = scmp.eq.s32.totalorder %s38, 0
    %p519 = por %p517, %p518
    %p520 = scmp.ne.s32.totalorder %s508, %s509
    %p521 = scmp.eq.s32.totalorder %s39, 3
    %p522 = por %p520, %p521
    %p524 = scmp.ne.s32.totalorder %s509, %s523
    %p525 = scmp.eq.s32.totalorder %s39, 0
    %p526 = por %p524, %p525
    %s528 = sadd.s32 %s527, 1
    %p531 = scmp.eq.s32.totalorder %s33, 3
    %p532 = scmp.ne.s32.totalorder %s527, %s529
    %p533 = scmp.eq.s32.totalorder %s33, 0
    %p534 = por %p532, %p533
    %p535 = scmp.ne.s32.totalorder %s527, %s529
    %p536 = scmp.eq.s32.totalorder %s38, 3
    %p537 = por %p535, %p536
    %p538 = scmp.ne.s32.totalorder %s529, %s530
    %p539 = scmp.eq.s32.totalorder %s38, 0
    %p540 = por %p538, %p539
    %p541 = scmp.ne.s32.totalorder %s529, %s530
    %p542 = scmp.eq.s32.totalorder %s39, 3
    %p543 = por %p541, %p542
    %p545 = scmp.ne.s32.totalorder %s530, %s544
    %p546 = scmp.eq.s32.totalorder %s39, 0
    %p547 = por %p545, %p546
    %s549 = sadd.s32 %s548, 1
    %p552 = scmp.eq.s32.totalorder %s33, 3
    %p553 = scmp.ne.s32.totalorder %s548, %s550
    %p554 = scmp.eq.s32.totalorder %s33, 0
    %p555 = por %p553, %p554
    %p556 = scmp.ne.s32.totalorder %s548, %s550
    %p557 = scmp.eq.s32.totalorder %s38, 3
    %p558 = por %p556, %p557
    %p559 = scmp.ne.s32.totalorder %s550, %s551
    %p560 = scmp.eq.s32.totalorder %s38, 0
    %p561 = por %p559, %p560
    %p562 = scmp.ne.s32.totalorder %s550, %s551
    %p563 = scmp.eq.s32.totalorder %s39, 3
    %p564 = por %p562, %p563
    %p566 = scmp.ne.s32.totalorder %s551, %s565
    %p567 = scmp.eq.s32.totalorder %s39, 0
    %p568 = por %p566, %p567
    %s570 = sadd.s32 %s569, 1
    %p573 = scmp.eq.s32.totalorder %s33, 3
    %p574 = scmp.ne.s32.totalorder %s569, %s571
    %p575 = scmp.eq.s32.totalorder %s33, 0
    %p576 = por %p574, %p575
    %p577 = scmp.ne.s32.totalorder %s569, %s571
    %p578 = scmp.eq.s32.totalorder %s38, 3
    %p579 = por %p577, %p578
    %p580 = scmp.ne.s32.totalorder %s571, %s572
    %p581 = scmp.eq.s32.totalorder %s38, 0
    %p582 = por %p580, %p581
    %p583 = scmp.ne.s32.totalorder %s571, %s572
    %p584 = scmp.eq.s32.totalorder %s39, 3
    %p585 = por %p583, %p584
    %p587 = scmp.ne.s32.totalorder %s572, %s586
    %p588 = scmp.eq.s32.totalorder %s39, 0
    %p589 = por %p587, %p588
    %s591 = sadd.s32 %s590, 1
    %p594 = scmp.eq.s32.totalorder %s33, 3
    %p595 = scmp.ne.s32.totalorder %s590, %s592
    %p596 = scmp.eq.s32.totalorder %s33, 0
    %p597 = por %p595, %p596
    %p598 = scmp.ne.s32.totalorder %s590, %s592
    %p599 = scmp.eq.s32.totalorder %s38, 3
    %p600 = por %p598, %p599
    %p601 = scmp.ne.s32.totalorder %s592, %s593
    %p602 = scmp.eq.s32.totalorder %s38, 0
    %p603 = por %p601, %p602
    %p604 = scmp.ne.s32.totalorder %s592, %s593
    %p605 = scmp.eq.s32.totalorder %s39, 3
    %p606 = por %p604, %p605
    %p608 = scmp.ne.s32.totalorder %s593, %s607
    %p609 = scmp.eq.s32.totalorder %s39, 0
    %p610 = por %p608, %p609
    %s612 = sadd.s32 %s611, 1
    %p615 = scmp.eq.s32.totalorder %s33, 3
    %p616 = scmp.ne.s32.totalorder %s611, %s613
    %p617 = scmp.eq.s32.totalorder %s33, 0
    %p618 = por %p616, %p617
    %p619 = scmp.ne.s32.totalorder %s611, %s613
    %p620 = scmp.eq.s32.totalorder %s38, 3
    %p621 = por %p619, %p620
    %p622 = scmp.ne.s32.totalorder %s613, %s614
    %p623 = scmp.eq.s32.totalorder %s38, 0
    %p624 = por %p622, %p623
    %p625 = scmp.ne.s32.totalorder %s613, %s614
    %p626 = scmp.eq.s32.totalorder %s39, 3
    %p627 = por %p625, %p626
    %p629 = scmp.ne.s32.totalorder %s614, %s628
    %p630 = scmp.eq.s32.totalorder %s39, 0
    %p631 = por %p629, %p630
    %s632 = ssub.s32 %s40, %s52
    %s633 = ssub.s32 %s41, %s48
    %s634 = sor.u32 %s632, %s633
    %p635 = scmp.eq.s32.totalorder %s634, 0
    %s637 = sadd.s32 %s636, 1
    %s638 = scalar_select %p635, %s636, %s637
    %p641 = pneg %p635
    %p642 = scmp.eq.s32.totalorder %s33, 3
    %p643 = por %p641, %p642
    %p644 = scmp.ne.s32.totalorder %s636, %s639
    %p645 = scmp.eq.s32.totalorder %s33, 0
    %p646 = por %p644, %p645
    %p647 = scmp.ne.s32.totalorder %s636, %s639
    %p648 = scmp.eq.s32.totalorder %s38, 3
    %p649 = por %p647, %p648
    %p650 = scmp.ne.s32.totalorder %s639, %s640
    %p651 = scmp.eq.s32.totalorder %s38, 0
    %p652 = por %p650, %p651
    %p653 = scmp.ne.s32.totalorder %s639, %s640
    %p654 = scmp.eq.s32.totalorder %s39, 3
    %p655 = por %p653, %p654
    %p657 = scmp.ne.s32.totalorder %s640, %s656
    %p658 = scmp.eq.s32.totalorder %s39, 0
    %p659 = por %p657, %p658
    %p660 = scmp.le.s32.totalorder 1, %s33
    %p661 = scmp.lt.s32.totalorder %s33, 5
    %p662 = pnand %p660, %p661
    %p663 = pneg %p662
    // Predicated region
    $region9: #{basic_rfb_a_forward.1} parent=5 // pred_check
      _
    $region10: #{basic_rfb_a_forward.1} parent=5 // pred_check_branch
      %665 = sbr.rel (%p662) target = $region12
    $region11: #{basic_rfb_a_forward.1} parent=5 // pred_region
      %s666 = ssub.s32 %s33, 1
      // Predicated region
      $region13: #{basic_rfb_a_forward.1} parent=11 // pred_check
        %p667 = pneg %p120
      $region14: #{basic_rfb_a_forward.1} parent=11 // pred_check_branch
        %669 = sbr.rel (%p667) target = $region16
      $region15: #{basic_rfb_a_forward.1} parent=11 // pred_region
        _
      $region16: #{basic_rfb_a_forward.1} parent=11 // pred_fallthru
        _
      // Predicated region
      $region17: #{basic_rfb_a_forward.1} parent=11 // pred_check
        %p670 = pneg %p141
      $region18: #{basic_rfb_a_forward.1} parent=11 // pred_check_branch
        %672 = sbr.rel (%p670) target = $region20
      $region19: #{basic_rfb_a_forward.1} parent=11 // pred_region
        _
      $region20: #{basic_rfb_a_forward.1} parent=11 // pred_fallthru
        _
      // Predicated region
      $region21: #{basic_rfb_a_forward.1} parent=11 // pred_check
        %p673 = pneg %p162
      $region22: #{basic_rfb_a_forward.1} parent=11 // pred_check_branch
        %675 = sbr.rel (%p673) target = $region24
      $region23: #{basic_rfb_a_forward.1} parent=11 // pred_region
        _
      $region24: #{basic_rfb_a_forward.1} parent=11 // pred_fallthru
        _
      // Predicated region
      $region25: #{basic_rfb_a_forward.1} parent=11 // pred_check
        %p676 = pneg %p183
      $region26: #{basic_rfb_a_forward.1} parent=11 // pred_check_branch
        %678 = sbr.rel (%p676) target = $region28
      $region27: #{basic_rfb_a_forward.1} parent=11 // pred_region
        _
      $region28: #{basic_rfb_a_forward.1} parent=11 // pred_fallthru
        _
      // Predicated region
      $region29: #{basic_rfb_a_forward.1} parent=11 // pred_check
        %p679 = pneg %p204
      $region30: #{basic_rfb_a_forward.1} parent=11 // pred_check_branch
        %681 = sbr.rel (%p679) target = $region32
      $region31: #{basic_rfb_a_forward.1} parent=11 // pred_region
        _
      $region32: #{basic_rfb_a_forward.1} parent=11 // pred_fallthru
        _
      // Predicated region
      $region33: #{basic_rfb_a_forward.1} parent=11 // pred_check
        %p682 = pneg %p225
      $region34: #{basic_rfb_a_forward.1} parent=11 // pred_check_branch
        %684 = sbr.rel (%p682) target = $region36
      $region35: #{basic_rfb_a_forward.1} parent=11 // pred_region
        _
      $region36: #{basic_rfb_a_forward.1} parent=11 // pred_fallthru
        _
      // Predicated region
      $region37: #{basic_rfb_a_forward.1} parent=11 // pred_check
        %p685 = pneg %p246
      $region38: #{basic_rfb_a_forward.1} parent=11 // pred_check_branch
        %687 = sbr.rel (%p685) target = $region40
      $region39: #{basic_rfb_a_forward.1} parent=11 // pred_region
        _
      $region40: #{basic_rfb_a_forward.1} parent=11 // pred_fallthru
        _
      // Predicated region
      $region41: #{basic_rfb_a_forward.1} parent=11 // pred_check
        %p688 = pneg %p267
      $region42: #{basic_rfb_a_forward.1} parent=11 // pred_check_branch
        %690 = sbr.rel (%p688) target = $region44
      $region43: #{basic_rfb_a_forward.1} parent=11 // pred_region
        _
      $region44: #{basic_rfb_a_forward.1} parent=11 // pred_fallthru
        _
      // Predicated region
      $region45: #{basic_rfb_a_forward.1} parent=11 // pred_check
        %p691 = pneg %p288
      $region46: #{basic_rfb_a_forward.1} parent=11 // pred_check_branch
        %693 = sbr.rel (%p691) target = $region48
      $region47: #{basic_rfb_a_forward.1} parent=11 // pred_region
        _
      $region48: #{basic_rfb_a_forward.1} parent=11 // pred_fallthru
        _
      // Predicated region
      $region49: #{basic_rfb_a_forward.1} parent=11 // pred_check
        %p694 = pneg %p309
      $region50: #{basic_rfb_a_forward.1} parent=11 // pred_check_branch
        %696 = sbr.rel (%p694) target = $region52
      $region51: #{basic_rfb_a_forward.1} parent=11 // pred_region
        _
      $region52: #{basic_rfb_a_forward.1} parent=11 // pred_fallthru
        _
      // Predicated region
      $region53: #{basic_rfb_a_forward.1} parent=11 // pred_check
        %p697 = pneg %p330
      $region54: #{basic_rfb_a_forward.1} parent=11 // pred_check_branch
        %699 = sbr.rel (%p697) target = $region56
      $region55: #{basic_rfb_a_forward.1} parent=11 // pred_region
        _
      $region56: #{basic_rfb_a_forward.1} parent=11 // pred_fallthru
        _
      // Predicated region
      $region57: #{basic_rfb_a_forward.1} parent=11 // pred_check
        %p700 = pneg %p351
      $region58: #{basic_rfb_a_forward.1} parent=11 // pred_check_branch
        %702 = sbr.rel (%p700) target = $region60
      $region59: #{basic_rfb_a_forward.1} parent=11 // pred_region
        _
      $region60: #{basic_rfb_a_forward.1} parent=11 // pred_fallthru
        _
      // Predicated region
      $region61: #{basic_rfb_a_forward.1} parent=11 // pred_check
        %p703 = pneg %p372
      $region62: #{basic_rfb_a_forward.1} parent=11 // pred_check_branch
        %705 = sbr.rel (%p703) target = $region64
      $region63: #{basic_rfb_a_forward.1} parent=11 // pred_region
        _
      $region64: #{basic_rfb_a_forward.1} parent=11 // pred_fallthru
        _
      // Predicated region
      $region65: #{basic_rfb_a_forward.1} parent=11 // pred_check
        %p706 = pneg %p393
      $region66: #{basic_rfb_a_forward.1} parent=11 // pred_check_branch
        %708 = sbr.rel (%p706) target = $region68
      $region67: #{basic_rfb_a_forward.1} parent=11 // pred_region
        _
      $region68: #{basic_rfb_a_forward.1} parent=11 // pred_fallthru
        _
      // Predicated region
      $region69: #{basic_rfb_a_forward.1} parent=11 // pred_check
        %p709 = pneg %p414
      $region70: #{basic_rfb_a_forward.1} parent=11 // pred_check_branch
        %711 = sbr.rel (%p709) target = $region72
      $region71: #{basic_rfb_a_forward.1} parent=11 // pred_region
        _
      $region72: #{basic_rfb_a_forward.1} parent=11 // pred_fallthru
        _
      // Predicated region
      $region73: #{basic_rfb_a_forward.1} parent=11 // pred_check
        %p712 = pneg %p435
      $region74: #{basic_rfb_a_forward.1} parent=11 // pred_check_branch
        %714 = sbr.rel (%p712) target = $region76
      $region75: #{basic_rfb_a_forward.1} parent=11 // pred_region
        _
      $region76: #{basic_rfb_a_forward.1} parent=11 // pred_fallthru
        _
      // Predicated region
      $region77: #{basic_rfb_a_forward.1} parent=11 // pred_check
        %p715 = pneg %p456
      $region78: #{basic_rfb_a_forward.1} parent=11 // pred_check_branch
        %717 = sbr.rel (%p715) target = $region80
      $region79: #{basic_rfb_a_forward.1} parent=11 // pred_region
        _
      $region80: #{basic_rfb_a_forward.1} parent=11 // pred_fallthru
        _
      // Predicated region
      $region81: #{basic_rfb_a_forward.1} parent=11 // pred_check
        %p718 = pneg %p477
      $region82: #{basic_rfb_a_forward.1} parent=11 // pred_check_branch
        %720 = sbr.rel (%p718) target = $region84
      $region83: #{basic_rfb_a_forward.1} parent=11 // pred_region
        _
      $region84: #{basic_rfb_a_forward.1} parent=11 // pred_fallthru
        _
      // Predicated region
      $region85: #{basic_rfb_a_forward.1} parent=11 // pred_check
        %p721 = pneg %p498
      $region86: #{basic_rfb_a_forward.1} parent=11 // pred_check_branch
        %723 = sbr.rel (%p721) target = $region88
      $region87: #{basic_rfb_a_forward.1} parent=11 // pred_region
        _
      $region88: #{basic_rfb_a_forward.1} parent=11 // pred_fallthru
        _
      // Predicated region
      $region89: #{basic_rfb_a_forward.1} parent=11 // pred_check
        %p724 = pneg %p519
      $region90: #{basic_rfb_a_forward.1} parent=11 // pred_check_branch
        %726 = sbr.rel (%p724) target = $region92
      $region91: #{basic_rfb_a_forward.1} parent=11 // pred_region
        _
      $region92: #{basic_rfb_a_forward.1} parent=11 // pred_fallthru
        _
      // Predicated region
      $region93: #{basic_rfb_a_forward.1} parent=11 // pred_check
        %p727 = pneg %p540
      $region94: #{basic_rfb_a_forward.1} parent=11 // pred_check_branch
        %729 = sbr.rel (%p727) target = $region96
      $region95: #{basic_rfb_a_forward.1} parent=11 // pred_region
        _
      $region96: #{basic_rfb_a_forward.1} parent=11 // pred_fallthru
        _
      // Predicated region
      $region97: #{basic_rfb_a_forward.1} parent=11 // pred_check
        %p730 = pneg %p561
      $region98: #{basic_rfb_a_forward.1} parent=11 // pred_check_branch
        %732 = sbr.rel (%p730) target = $region100
      $region99: #{basic_rfb_a_forward.1} parent=11 // pred_region
        _
      $region100: #{basic_rfb_a_forward.1} parent=11 // pred_fallthru
        _
      // Predicated region
      $region101: #{basic_rfb_a_forward.1} parent=11 // pred_check
        %p733 = pneg %p582
      $region102: #{basic_rfb_a_forward.1} parent=11 // pred_check_branch
        %735 = sbr.rel (%p733) target = $region104
      $region103: #{basic_rfb_a_forward.1} parent=11 // pred_region
        _
      $region104: #{basic_rfb_a_forward.1} parent=11 // pred_fallthru
        _
      // Predicated region
      $region105: #{basic_rfb_a_forward.1} parent=11 // pred_check
        %p736 = pneg %p603
      $region106: #{basic_rfb_a_forward.1} parent=11 // pred_check_branch
        %738 = sbr.rel (%p736) target = $region108
      $region107: #{basic_rfb_a_forward.1} parent=11 // pred_region
        _
      $region108: #{basic_rfb_a_forward.1} parent=11 // pred_fallthru
        _
      // Predicated region
      $region109: #{basic_rfb_a_forward.1} parent=11 // pred_check
        %p739 = pneg %p624
      $region110: #{basic_rfb_a_forward.1} parent=11 // pred_check_branch
        %741 = sbr.rel (%p739) target = $region112
      $region111: #{basic_rfb_a_forward.1} parent=11 // pred_region
        _
      $region112: #{basic_rfb_a_forward.1} parent=11 // pred_fallthru
        _
    $region12: #{basic_rfb_a_forward.1} parent=5 // pred_fallthru
      _
    %p742 = scmp.lt.s32.totalorder %s33, 4
    // Predicated region
    $region113: #{basic_rfb_a_forward.1} parent=5 // pred_check
      %p743 = pneg %p742
    $region114: #{basic_rfb_a_forward.1} parent=5 // pred_check_branch
      %745 = sbr.rel (%p743) target = $region116
    $region115: #{basic_rfb_a_forward.1} parent=5 // pred_region
      // Predicated region
      $region117: #{basic_rfb_a_forward.1} parent=115 // pred_check
        %p746 = pneg %p67
      $region118: #{basic_rfb_a_forward.1} parent=115 // pred_check_branch
        %748 = sbr.rel (%p746) target = $region120
      $region119: #{basic_rfb_a_forward.1} parent=115 // pred_region
        %p749 = scmp.lt.s32.totalorder %s40, 1
        %s750 = scalar_select %p749, %s40, 1
        %p751 = scmp.lt.s32.totalorder %s41, 1
        %s752 = scalar_select %p751, %s41, 1
        %s753 = smul.addr %s752, 10
        %s754 = smul.addr %s750, 20
        %s755 = sadd.s32 %s753, %s754
        %s756 = smul.addr %s755, 4
        %s757 = scalar_lea.vmem %s0, %s756
      $region120: #{basic_rfb_a_forward.1} parent=115 // pred_fallthru
        _
      // Predicated region
      $region121: #{basic_rfb_a_forward.1} parent=115 // pred_check
        %p758 = pneg %p93
      $region122: #{basic_rfb_a_forward.1} parent=115 // pred_check_branch
        %760 = sbr.rel (%p758) target = $region124
      $region123: #{basic_rfb_a_forward.1} parent=115 // pred_region
        %p761 = scmp.lt.s32.totalorder %s41, 1
        %s762 = scalar_select %p761, %s41, 1
        %s763 = smul.addr %s762, 5
        %s764 = scalar_lea.vmem %s1, %s763
      $region124: #{basic_rfb_a_forward.1} parent=115 // pred_fallthru
        _
    $region116: #{basic_rfb_a_forward.1} parent=5 // pred_fallthru
      _
    %p765 = scmp.le.s32.totalorder 1, %s33
    %p766 = scmp.lt.s32.totalorder %s33, 5
    %p767 = pnand %p765, %p766
    %p768 = pneg %p767
    // Predicated region
    $region125: #{basic_rfb_a_forward.1} parent=5 // pred_check
      _
    $region126: #{basic_rfb_a_forward.1} parent=5 // pred_check_branch
      %770 = sbr.rel (%p767) target = $region128
    $region127: #{basic_rfb_a_forward.1} parent=5 // pred_region
      %s771 = ssub.s32 %s33, 1
      %p772 = scmp.lt.s32.totalorder %s42, 1
      %s773 = scalar_select %p772, %s42, 1
      %p774 = scmp.lt.s32.totalorder %s43, 1
      %s775 = scalar_select %p774, %s43, 1
      %s776 = smul.addr %s775, 10
      %s777 = smul.addr %s773, 20
      %s778 = sadd.s32 %s776, %s777
      %s779 = smul.addr %s778, 4
      %s780 = scalar_lea.vmem %s0, %s779
      %p781 = pneg %p73
      %p782 = pneg %p70
      %p783 = scmp.lt.s32.totalorder %s43, 1
      %s784 = scalar_select %p783, %s43, 1
      %s785 = smul.addr %s784, 5
      %s786 = scalar_lea.vmem %s1, %s785
      %p787 = pneg %p99
      %p788 = pneg %p96
      %p789 = pneg %p120
      %p790 = pneg %p117
      %p791 = pneg %p141
      %p792 = pneg %p138
      %p793 = pneg %p162
      %p794 = pneg %p159
      %p795 = pneg %p183
      %p796 = pneg %p180
      %p797 = pneg %p204
      %p798 = pneg %p201
      %p799 = pneg %p225
      %p800 = pneg %p222
      %p801 = pneg %p246
      %p802 = pneg %p243
      %p803 = pneg %p267
      %p804 = pneg %p264
      %p805 = pneg %p288
      %p806 = pneg %p285
      %p807 = pneg %p309
      %p808 = pneg %p306
      %p809 = pneg %p330
      %p810 = pneg %p327
      %p811 = pneg %p351
      %p812 = pneg %p348
      %p813 = pneg %p372
      %p814 = pneg %p369
      %p815 = pneg %p393
      %p816 = pneg %p390
      %p817 = pneg %p414
      %p818 = pneg %p411
      %p819 = pneg %p435
      %p820 = pneg %p432
      %p821 = pneg %p456
      %p822 = pneg %p453
      %p823 = pneg %p477
      %p824 = pneg %p474
      %p825 = pneg %p498
      %p826 = pneg %p495
      %p827 = pneg %p519
      %p828 = pneg %p516
      %p829 = pneg %p540
      %p830 = pneg %p537
      %p831 = pneg %p561
      %p832 = pneg %p558
      %p833 = pneg %p582
      %p834 = pneg %p579
      %p835 = pneg %p603
      %p836 = pneg %p600
      %p837 = pneg %p624
      %p838 = pneg %p621
      %p839 = pneg %p652
      %p840 = pneg %p649
      %p841 = scmp.lt.s32.totalorder %s42, 1
      %s842 = scalar_select %p841, %s42, 1
      %p843 = scmp.lt.s32.totalorder %s43, 1
      %s844 = scalar_select %p843, %s43, 1
      %s845 = smul.addr %s844, 10
      %s846 = smul.addr %s842, 20
      %s847 = sadd.s32 %s845, %s846
      %s848 = smul.addr %s847, 4
      %s849 = scalar_lea.vmem %s27, %s848
      %p850 = scmp.lt.s32.totalorder %s42, 1
      %s851 = scalar_select %p850, %s42, 1
      %p852 = scmp.lt.s32.totalorder %s43, 1
      %s853 = scalar_select %p852, %s43, 1
      %s854 = smul.addr %s853, 10
      %s855 = smul.addr %s851, 20
      %s856 = sadd.s32 %s854, %s855
      %s857 = smul.addr %s856, 4
      %s858 = scalar_lea.vmem %s0, %s857
      %p859 = scmp.lt.s32.totalorder %s43, 1
      %s860 = scalar_select %p859, %s43, 1
      %s861 = smul.addr %s860, 5
      %s862 = scalar_lea.vmem %s1, %s861
      %p863 = scmp.lt.s32.totalorder %s42, 1
      %s864 = scalar_select %p863, %s42, 1
      %p865 = scmp.lt.s32.totalorder %s43, 1
      %s866 = scalar_select %p865, %s43, 1
      %s867 = smul.addr %s866, 10
      %s868 = smul.addr %s864, 20
      %s869 = sadd.s32 %s867, %s868
      %s870 = smul.addr %s869, 4
      %s871 = scalar_lea.vmem %s27, %s870
      %v873 = vld [vmem:[%s862] sm:$0x1f]
      %v874 = vld [vmem:[%s858] sm:$0xff]
      %v875 = vld [vmem:[%s858 + $0x8] sm:$0xff]
      %v876 = vld [vmem:[%s858 + $0x10] sm:$0xf]
      %v877 = vld [vmem:[%s858 + $0x14] sm:$0xff]
      %v878 = vld [vmem:[%s858 + $0x1c] sm:$0xff]
      %v879 = vld [vmem:[%s858 + $0x24] sm:$0xf]
      %880 = vst [vmem:[#allocation2] sm:$0xff] 0
      %881 = vst [vmem:[#allocation2 + $0x8] sm:$0xff] 0
      %882 = vst [vmem:[#allocation2 + $0x10] sm:$0xff] 0
      %883 = vst [vmem:[#allocation2 + $0x18] sm:$0xff] 0
      %884 = vst [vmem:[#allocation2 + $0x20] sm:$0xf] 0
      %885 = vst [vmem:[#allocation2 + $0x24] sm:$0xff] 0
      %886 = vst [vmem:[#allocation2 + $0x2c] sm:$0xff] 0
      %887 = vst [vmem:[#allocation2 + $0x34] sm:$0xff] 0
      %888 = vst [vmem:[#allocation2 + $0x3c] sm:$0xff] 0
      %889 = vst [vmem:[#allocation2 + $0x44] sm:$0xf] 0
      %v890 = vld [vmem:[%s2] sm:$0xf]
      %v891 = vld [vmem:[%s2 + $0x4] sm:$0xf]
      %v892 = vld [vmem:[%s2 + $0x8] sm:$0xf]
      %v893 = vld [vmem:[%s2 + $0xc] sm:$0xf]
      %v894 = vld [vmem:[%s2 + $0x10] sm:$0xf]
      %v895 = vld [vmem:[%s2 + $0x14] sm:$0xf]
      %v896 = vld [vmem:[%s2 + $0x18] sm:$0xf]
      %v897 = vld [vmem:[%s2 + $0x1c] sm:$0xf]
      %v898 = vld [vmem:[%s3] sm:$0xff]
      %v899 = vld [vmem:[%s3 + $0x8] sm:$0xff]
      %v900 = vld [vmem:[%s3 + $0x10] sm:$0xff]
      %v901 = vld [vmem:[%s3 + $0x18] sm:$0xff]
      %v902 = vld [vmem:[%s3 + $0x20] sm:$0xff]
      %v903 = vld [vmem:[%s3 + $0x28] sm:$0xff]
      %v904 = vld [vmem:[%s3 + $0x30] sm:$0xff]
      %v905 = vld [vmem:[%s3 + $0x38] sm:$0xff]
      %907 = vset.pattern.permute.xlu0 0
      %908 = vperm.xlu0 %907, %v898
      %v909 = vpop.permute.xlu0 %908
      %912 = vset.pattern.permute.xlu0 0
      %913 = vperm.xlu0 %912, %v899
      %v914 = vpop.permute.xlu0 %913
      %917 = vset.pattern.permute.xlu0 0
      %918 = vperm.xlu0 %917, %v900
      %v919 = vpop.permute.xlu0 %918
      %922 = vset.pattern.permute.xlu0 0
      %923 = vperm.xlu0 %922, %v901
      %v924 = vpop.permute.xlu0 %923
      %927 = vset.pattern.permute.xlu0 0
      %928 = vperm.xlu0 %927, %v902
      %v929 = vpop.permute.xlu0 %928
      %932 = vset.pattern.permute.xlu0 0
      %933 = vperm.xlu0 %932, %v903
      %v934 = vpop.permute.xlu0 %933
      %937 = vset.pattern.permute.xlu0 0
      %938 = vperm.xlu0 %937, %v904
      %v939 = vpop.permute.xlu0 %938
      %942 = vset.pattern.permute.xlu0 0
      %943 = vperm.xlu0 %942, %v905
      %v944 = vpop.permute.xlu0 %943
      %v954 = vunpack.c.l.b16 %v890
      %v955 = vunpack.c.l.b16 %v891
      %v956 = vunpack.c.l.b16 %v892
      %v957 = vunpack.c.l.b16 %v893
      %v958 = vunpack.c.l.b16 %v894
      %v959 = vunpack.c.l.b16 %v895
      %v960 = vunpack.c.l.b16 %v896
      %v961 = vunpack.c.l.b16 %v897
      %v962 = vpack.c.b16 %v955, %v954
      %v963 = vpack.c.b16 %v957, %v956
      %v964 = vpack.c.b16 %v959, %v958
      %v965 = vpack.c.b16 %v961, %v960
      %v972 = vunpack.c.l.b16 %v874
      %v973 = vunpack.c.h.b16 %v874
      %v974 = vunpack.c.l.b16 %v875
      %v975 = vunpack.c.h.b16 %v875
      %v976 = vunpack.c.l.b16 %v876
      %v977 = vunpack.c.l.b16 %v877
      %v978 = vunpack.c.h.b16 %v877
      %v979 = vunpack.c.l.b16 %v878
      %v980 = vunpack.c.h.b16 %v878
      %v981 = vunpack.c.l.b16 %v879
      %v982 = vpack.c.b16 %v977, %v972
      %v983 = vpack.c.b16 %v978, %v973
      %v984 = vpack.c.b16 %v979, %v974
      %v985 = vpack.c.b16 %v980, %v975
      %v986 = vpack.c.b16 %v981, %v976
      %vm992 = vcmask 130048
      %v994 = vsel %vm992, %v962, 0
      %v997 = vsel %vm992, %v963, 0
      %v1000 = vsel %vm992, %v964, 0
      %v1003 = vsel %vm992, %v965, 0
      %1005 = vmatprep.subr.bf16.mxu0 0
      %1006 = vmatpush1.bf16.msra.mxu0 0
      %1007 = vmatprep.subr.bf16.mxu0 0
      %1008 = vmatpush1.bf16.msra.mxu0 0
      %1009 = vmatprep.subr.bf16.mxu0 0
      %1010 = vmatpush1.bf16.msra.mxu0 0
      %1011 = vmatprep.subr.bf16.mxu0 0
      %1012 = vmatpush1.bf16.msra.mxu0 0
      %1013 = vmatprep.subr.bf16.mxu0 0
      %1014 = vmatpush1.bf16.msra.mxu0 0
      %1015 = vmatprep.subr.bf16.mxu0 0
      %1016 = vmatpush1.bf16.msra.mxu0 0
      %1017 = vmatprep.subr.bf16.mxu0 0
      %1018 = vmatpush1.bf16.msra.mxu0 0
      %1019 = vmatprep.subr.bf16.mxu0 %v983
      %1020 = vmatpush1.bf16.msra.mxu0 %v982
      %1021 = vmatprep.subr.bf16.mxu0 0
      %1022 = vmatpush2.bf16.msra.mxu0 0
      %1023 = vmatprep.subr.bf16.mxu0 0
      %1024 = vmatpush2.bf16.msra.mxu0 0
      %1025 = vmatprep.subr.bf16.mxu0 0
      %1026 = vmatpush2.bf16.msra.mxu0 0
      %1027 = vmatprep.subr.bf16.mxu0 0
      %1028 = vmatpush2.bf16.msra.mxu0 0
      %1029 = vmatprep.subr.bf16.mxu0 0
      %1030 = vmatpush2.bf16.msra.mxu0 0
      %1031 = vmatprep.subr.bf16.mxu0 0
      %1032 = vmatpush2.bf16.msra.mxu0 0
      %1033 = vmatprep.subr.bf16.mxu0 0
      %1034 = vmatpush2.bf16.msra.mxu0 0
      %1035 = vmatprep.subr.bf16.mxu0 0
      %1036 = vmatpush2.bf16.msra.mxu0 0
      %1037 = vmatprep.mubr.bf16.mxu0 0
      %1038 = vmatmul.mubr.bf16.gmra.mxu0 %v994
      %v1039 = vpop.f32.mrf.mxu0
      %v1040 = vadd.f32 %v909, %v1039
      %v1041 = vpop.f32.mrf.mxu0
      %v1042 = vadd.f32 %v909, %v1041
      %v1043 = vpop.f32.mrf.mxu0
      %v1044 = vadd.f32 %v914, %v1043
      %v1045 = vpop.f32.mrf.mxu0
      %v1046 = vadd.f32 %v914, %v1045
      %1047 = vmatprep.mubr.bf16.mxu0 0
      %1048 = vmatmul.mubr.bf16.gmra.mxu0 %v997
      %v1049 = vpop.f32.mrf.mxu0
      %v1050 = vadd.f32 %v919, %v1049
      %v1051 = vpop.f32.mrf.mxu0
      %v1052 = vadd.f32 %v919, %v1051
      %v1053 = vpop.f32.mrf.mxu0
      %v1054 = vadd.f32 %v924, %v1053
      %v1055 = vpop.f32.mrf.mxu0
      %v1056 = vadd.f32 %v924, %v1055
      %1057 = vmatprep.mubr.bf16.mxu0 0
      %1058 = vmatmul.mubr.bf16.gmra.mxu0 %v1000
      %v1059 = vpop.f32.mrf.mxu0
      %v1060 = vadd.f32 %v929, %v1059
      %v1061 = vpop.f32.mrf.mxu0
      %v1062 = vadd.f32 %v929, %v1061
      %v1063 = vpop.f32.mrf.mxu0
      %v1064 = vadd.f32 %v934, %v1063
      %v1065 = vpop.f32.mrf.mxu0
      %v1066 = vadd.f32 %v934, %v1065
      %1067 = vmatprep.mubr.bf16.mxu0 0
      %1068 = vmatmul.mubr.bf16.gmra.mxu0 %v1003
      %v1069 = vpop.f32.mrf.mxu0
      %v1070 = vadd.f32 %v939, %v1069
      %v1071 = vpop.f32.mrf.mxu0
      %v1072 = vadd.f32 %v939, %v1071
      %v1073 = vpop.f32.mrf.mxu0
      %v1074 = vadd.f32 %v944, %v1073
      %v1075 = vpop.f32.mrf.mxu0
      %v1076 = vadd.f32 %v944, %v1075
      %1077 = vdwg.mxu0
      %1078 = vmatprep.subr.bf16.mxu0 0
      %1079 = vmatpush1.bf16.msra.mxu0 0
      %1080 = vmatprep.subr.bf16.mxu0 0
      %1081 = vmatpush1.bf16.msra.mxu0 0
      %1082 = vmatprep.subr.bf16.mxu0 0
      %1083 = vmatpush1.bf16.msra.mxu0 0
      %1084 = vmatprep.subr.bf16.mxu0 0
      %1085 = vmatpush1.bf16.msra.mxu0 0
      %1086 = vmatprep.subr.bf16.mxu0 0
      %1087 = vmatpush1.bf16.msra.mxu0 0
      %1088 = vmatprep.subr.bf16.mxu0 0
      %1089 = vmatpush1.bf16.msra.mxu0 0
      %1090 = vmatprep.subr.bf16.mxu0 0
      %1091 = vmatpush1.bf16.msra.mxu0 0
      %1092 = vmatprep.subr.bf16.mxu0 %v985
      %1093 = vmatpush1.bf16.msra.mxu0 %v984
      %1094 = vmatprep.subr.bf16.mxu0 0
      %1095 = vmatpush2.bf16.msra.mxu0 0
      %1096 = vmatprep.subr.bf16.mxu0 0
      %1097 = vmatpush2.bf16.msra.mxu0 0
      %1098 = vmatprep.subr.bf16.mxu0 0
      %1099 = vmatpush2.bf16.msra.mxu0 0
      %1100 = vmatprep.subr.bf16.mxu0 0
      %1101 = vmatpush2.bf16.msra.mxu0 0
      %1102 = vmatprep.subr.bf16.mxu0 0
      %1103 = vmatpush2.bf16.msra.mxu0 0
      %1104 = vmatprep.subr.bf16.mxu0 0
      %1105 = vmatpush2.bf16.msra.mxu0 0
      %1106 = vmatprep.subr.bf16.mxu0 0
      %1107 = vmatpush2.bf16.msra.mxu0 0
      %1108 = vmatprep.subr.bf16.mxu0 0
      %1109 = vmatpush2.bf16.msra.mxu0 0
      %1110 = vmatprep.mubr.bf16.mxu0 0
      %1111 = vmatmul.mubr.bf16.gmra.mxu0 %v994
      %v1112 = vpop.f32.mrf.mxu0
      %v1113 = vadd.f32 %v909, %v1112
      %v1114 = vpop.f32.mrf.mxu0
      %v1115 = vadd.f32 %v909, %v1114
      %v1116 = vpop.f32.mrf.mxu0
      %v1117 = vadd.f32 %v914, %v1116
      %v1118 = vpop.f32.mrf.mxu0
      %v1119 = vadd.f32 %v914, %v1118
      %1120 = vmatprep.mubr.bf16.mxu0 0
      %1121 = vmatmul.mubr.bf16.gmra.mxu0 %v997
      %v1122 = vpop.f32.mrf.mxu0
      %v1123 = vadd.f32 %v919, %v1122
      %v1124 = vpop.f32.mrf.mxu0
      %v1125 = vadd.f32 %v919, %v1124
      %v1126 = vpop.f32.mrf.mxu0
      %v1127 = vadd.f32 %v924, %v1126
      %v1128 = vpop.f32.mrf.mxu0
      %v1129 = vadd.f32 %v924, %v1128
      %1130 = vmatprep.mubr.bf16.mxu0 0
      %1131 = vmatmul.mubr.bf16.gmra.mxu0 %v1000
      %v1132 = vpop.f32.mrf.mxu0
      %v1133 = vadd.f32 %v929, %v1132
      %v1134 = vpop.f32.mrf.mxu0
      %v1135 = vadd.f32 %v929, %v1134
      %v1136 = vpop.f32.mrf.mxu0
      %v1137 = vadd.f32 %v934, %v1136
      %v1138 = vpop.f32.mrf.mxu0
      %v1139 = vadd.f32 %v934, %v1138
      %1140 = vmatprep.mubr.bf16.mxu0 0
      %1141 = vmatmul.mubr.bf16.gmra.mxu0 %v1003
      %v1142 = vpop.f32.mrf.mxu0
      %v1143 = vadd.f32 %v939, %v1142
      %v1144 = vpop.f32.mrf.mxu0
      %v1145 = vadd.f32 %v939, %v1144
      %v1146 = vpop.f32.mrf.mxu0
      %v1147 = vadd.f32 %v944, %v1146
      %v1148 = vpop.f32.mrf.mxu0
      %v1149 = vadd.f32 %v944, %v1148
      %1150 = vdwg.mxu0
      %1151 = vmatprep.subr.bf16.mxu0 0
      %1152 = vmatpush1.bf16.msra.mxu0 0
      %1153 = vmatprep.subr.bf16.mxu0 0
      %1154 = vmatpush1.bf16.msra.mxu0 0
      %1155 = vmatprep.subr.bf16.mxu0 0
      %1156 = vmatpush1.bf16.msra.mxu0 0
      %1157 = vmatprep.subr.bf16.mxu0 0
      %1158 = vmatpush1.bf16.msra.mxu0 0
      %1159 = vmatprep.subr.bf16.mxu0 0
      %1160 = vmatpush1.bf16.msra.mxu0 0
      %1161 = vmatprep.subr.bf16.mxu0 0
      %1162 = vmatpush1.bf16.msra.mxu0 0
      %1163 = vmatprep.subr.bf16.mxu0 0
      %1164 = vmatpush1.bf16.msra.mxu0 0
      %1165 = vmatprep.subr.bf16.mxu0 0
      %1166 = vmatpush1.bf16.msra.mxu0 %v986
      %1167 = vmatprep.subr.bf16.mxu0 0
      %1168 = vmatpush2.bf16.msra.mxu0 0
      %1169 = vmatprep.subr.bf16.mxu0 0
      %1170 = vmatpush2.bf16.msra.mxu0 0
      %1171 = vmatprep.subr.bf16.mxu0 0
      %1172 = vmatpush2.bf16.msra.mxu0 0
      %1173 = vmatprep.subr.bf16.mxu0 0
      %1174 = vmatpush2.bf16.msra.mxu0 0
      %1175 = vmatprep.subr.bf16.mxu0 0
      %1176 = vmatpush2.bf16.msra.mxu0 0
      %1177 = vmatprep.subr.bf16.mxu0 0
      %1178 = vmatpush2.bf16.msra.mxu0 0
      %1179 = vmatprep.subr.bf16.mxu0 0
      %1180 = vmatpush2.bf16.msra.mxu0 0
      %1181 = vmatprep.subr.bf16.mxu0 0
      %1182 = vmatpush2.bf16.msra.mxu0 0
      %1183 = vmatprep.mubr.bf16.mxu0 0
      %1184 = vmatmul.mubr.bf16.gmra.mxu0 %v994
      %v1185 = vpop.f32.mrf.mxu0
      %v1186 = vadd.f32 %v909, %v1185
      %v1187 = vpop.f32.mrf.mxu0
      %v1188 = vpop.f32.mrf.mxu0
      %v1189 = vadd.f32 %v914, %v1188
      %v1190 = vpop.f32.mrf.mxu0
      %1191 = vmatprep.mubr.bf16.mxu0 0
      %1192 = vmatmul.mubr.bf16.gmra.mxu0 %v997
      %v1193 = vpop.f32.mrf.mxu0
      %v1194 = vadd.f32 %v919, %v1193
      %v1195 = vpop.f32.mrf.mxu0
      %v1196 = vpop.f32.mrf.mxu0
      %v1197 = vadd.f32 %v924, %v1196
      %v1198 = vpop.f32.mrf.mxu0
      %1199 = vmatprep.mubr.bf16.mxu0 0
      %1200 = vmatmul.mubr.bf16.gmra.mxu0 %v1000
      %v1201 = vpop.f32.mrf.mxu0
      %v1202 = vadd.f32 %v929, %v1201
      %v1203 = vpop.f32.mrf.mxu0
      %v1204 = vpop.f32.mrf.mxu0
      %v1205 = vadd.f32 %v934, %v1204
      %v1206 = vpop.f32.mrf.mxu0
      %1207 = vmatprep.mubr.bf16.mxu0 0
      %1208 = vmatmul.mubr.bf16.gmra.mxu0 %v1003
      %v1209 = vpop.f32.mrf.mxu0
      %v1210 = vadd.f32 %v939, %v1209
      %v1211 = vpop.f32.mrf.mxu0
      %v1212 = vpop.f32.mrf.mxu0
      %v1213 = vadd.f32 %v944, %v1212
      %v1214 = vpop.f32.mrf.mxu0
      %1215 = vdwg.mxu0
      %v1216 = vmax.f32 %v1040, 0.0
      %v1217 = vmax.f32 %v1042, 0.0
      %v1218 = vmax.f32 %v1113, 0.0
      %v1219 = vmax.f32 %v1115, 0.0
      %v1220 = vmax.f32 %v1186, 0.0
      %v1221 = vmax.f32 %v1044, 0.0
      %v1222 = vmax.f32 %v1046, 0.0
      %v1223 = vmax.f32 %v1117, 0.0
      %v1224 = vmax.f32 %v1119, 0.0
      %v1225 = vmax.f32 %v1189, 0.0
      %v1227 = vlaneseq
      %v1228 = vshrl.u32 %v1227, 7
      %v1229 = vsub.s32 0, %v1228
      %v1230 = vrot.slane %v873, %v1229
      %v1231 = vlaneseq
      %v1232 = vshrl.u32 %v1231, 7
      %v1233 = vsub.s32 1, %v1232
      %v1234 = vrot.slane %v873, %v1233
      %v1235 = vlaneseq
      %v1236 = vshrl.u32 %v1235, 7
      %v1237 = vsub.s32 2, %v1236
      %v1238 = vrot.slane %v873, %v1237
      %v1239 = vlaneseq
      %v1240 = vshrl.u32 %v1239, 7
      %v1241 = vsub.s32 3, %v1240
      %v1242 = vrot.slane %v873, %v1241
      %v1243 = vlaneseq
      %v1244 = vshrl.u32 %v1243, 7
      %v1245 = vsub.s32 4, %v1244
      %v1246 = vrot.slane %v873, %v1245
      %v1252 = vmul.f32 %v1216, %v1230
      %v1253 = vmul.f32 %v1217, %v1234
      %v1254 = vmul.f32 %v1218, %v1238
      %v1255 = vmul.f32 %v1219, %v1242
      %v1256 = vmul.f32 %v1220, %v1246
      %v1257 = vmul.f32 %v1221, %v1230
      %v1258 = vmul.f32 %v1222, %v1234
      %v1259 = vmul.f32 %v1223, %v1238
      %v1260 = vmul.f32 %v1224, %v1242
      %v1261 = vmul.f32 %v1225, %v1246
      %v1262 = vpack.c.bf16 %v1257, %v1252
      %v1263 = vpack.c.bf16 %v1258, %v1253
      %v1264 = vpack.c.bf16 %v1259, %v1254
      %v1265 = vpack.c.bf16 %v1260, %v1255
      %v1266 = vpack.c.bf16 %v1261, %v1256
      %v1272 = vunpack.c.l.b16 %v1262
      %v1273 = vunpack.c.l.b16 %v1263
      %v1274 = vunpack.c.l.b16 %v1264
      %v1275 = vunpack.c.l.b16 %v1265
      %v1276 = vunpack.c.l.b16 %v1266
      %v1277 = vunpack.c.h.b16 %v1262
      %v1278 = vunpack.c.h.b16 %v1263
      %v1279 = vunpack.c.h.b16 %v1264
      %v1280 = vunpack.c.h.b16 %v1265
      %v1281 = vunpack.c.h.b16 %v1266
      %v1282 = vpack.c.b16 %v1273, %v1272
      %v1283 = vpack.c.b16 %v1275, %v1274
      %v1284 = vpack.c.b16 %v1276, %v1276
      %v1285 = vpack.c.b16 %v1278, %v1277
      %v1286 = vpack.c.b16 %v1280, %v1279
      %v1287 = vpack.c.b16 %v1281, %v1281
      %1294 = vst [vmem:[#allocation2 + $0x8] sm:$0xff] %v1282
      %1295 = vst [vmem:[#allocation2 + $0x10] sm:$0xff] %v1283
      %1296 = vst [vmem:[#allocation2 + $0x18] sm:$0xf] %v1284
      %1297 = vst [vmem:[#allocation2 + $0x2c] sm:$0xff] %v1285
      %1298 = vst [vmem:[#allocation2 + $0x34] sm:$0xff] %v1286
      %1299 = vst [vmem:[#allocation2 + $0x3c] sm:$0xf] %v1287
      %v1300 = vld [vmem:[#allocation2 + $0x4] sm:$0xff]
      %v1301 = vld [vmem:[#allocation2 + $0xc] sm:$0xff]
      %v1302 = vld [vmem:[#allocation2 + $0x14] sm:$0xff]
      %v1303 = vld [vmem:[#allocation2 + $0x28] sm:$0xff]
      %v1304 = vld [vmem:[#allocation2 + $0x30] sm:$0xff]
      %v1305 = vld [vmem:[#allocation2 + $0x38] sm:$0xff]
      %v1306 = vld [vmem:[#allocation2 + $0x8] sm:$0xff]
      %v1307 = vld [vmem:[#allocation2 + $0x10] sm:$0xff]
      %v1308 = vld [vmem:[#allocation2 + $0x18] sm:$0xf]
      %v1309 = vld [vmem:[#allocation2 + $0x2c] sm:$0xff]
      %v1310 = vld [vmem:[#allocation2 + $0x34] sm:$0xff]
      %v1311 = vld [vmem:[#allocation2 + $0x3c] sm:$0xf]
      %v1312 = vld [vmem:[#allocation2 + $0x18] sm:$0xff]
      %v1313 = vld [vmem:[#allocation2 + $0x3c] sm:$0xff]
      %v1320 = vunpack.c.l.b16 %v1300
      %v1321 = vunpack.c.h.b16 %v1300
      %v1322 = vunpack.c.l.b16 %v1301
      %v1323 = vunpack.c.h.b16 %v1301
      %v1324 = vunpack.c.l.b16 %v1302
      %v1325 = vunpack.c.h.b16 %v1302
      %v1326 = vunpack.c.l.b16 %v1303
      %v1327 = vunpack.c.h.b16 %v1303
      %v1328 = vunpack.c.l.b16 %v1304
      %v1329 = vunpack.c.h.b16 %v1304
      %v1330 = vunpack.c.l.b16 %v1305
      %v1331 = vunpack.c.h.b16 %v1305
      %v1332 = vpack.c.b16 %v1326, %v1320
      %v1333 = vpack.c.b16 %v1327, %v1321
      %v1334 = vpack.c.b16 %v1328, %v1322
      %v1335 = vpack.c.b16 %v1329, %v1323
      %v1336 = vpack.c.b16 %v1330, %v1324
      %v1337 = vpack.c.b16 %v1331, %v1325
      %1338 = vrot.lane.b32.xlu0 %v1332, 127
      %v1339 = vpop.permute.xlu0 %1338
      %1340 = vrot.lane.b32.xlu0 %v1333, 127
      %v1341 = vpop.permute.xlu0 %1340
      %1342 = vrot.lane.b32.xlu0 %v1334, 127
      %v1343 = vpop.permute.xlu0 %1342
      %1344 = vrot.lane.b32.xlu0 %v1335, 127
      %v1345 = vpop.permute.xlu0 %1344
      %1346 = vrot.lane.b32.xlu0 %v1336, 127
      %v1347 = vpop.permute.xlu0 %1346
      %1348 = vrot.lane.b32.xlu0 %v1337, 127
      %v1349 = vpop.permute.xlu0 %1348
      %vm1350 = vcmask 1039360
      %v1351 = vsel %vm1350, %v1339, %v1341
      %v1352 = vsel %vm1350, %v1341, %v1343
      %v1353 = vsel %vm1350, %v1343, %v1345
      %v1354 = vsel %vm1350, %v1345, %v1347
      %v1355 = vsel %vm1350, %v1347, %v1349
      %1356 = vrot.lane.b32.xlu0 %v1332, 126
      %v1357 = vpop.permute.xlu0 %1356
      %1358 = vrot.lane.b32.xlu0 %v1333, 126
      %v1359 = vpop.permute.xlu0 %1358
      %1360 = vrot.lane.b32.xlu0 %v1334, 126
      %v1361 = vpop.permute.xlu0 %1360
      %1362 = vrot.lane.b32.xlu0 %v1335, 126
      %v1363 = vpop.permute.xlu0 %1362
      %1364 = vrot.lane.b32.xlu0 %v1336, 126
      %v1365 = vpop.permute.xlu0 %1364
      %1366 = vrot.lane.b32.xlu0 %v1337, 126
      %v1367 = vpop.permute.xlu0 %1366
      %vm1368 = vcmask 1031168
      %v1369 = vsel %vm1368, %v1357, %v1359
      %v1370 = vsel %vm1368, %v1359, %v1361
      %v1371 = vsel %vm1368, %v1361, %v1363
      %v1372 = vsel %vm1368, %v1363, %v1365
      %v1373 = vsel %vm1368, %v1365, %v1367
      %1374 = vrot.lane.b32.xlu0 %v1332, 102
      %v1375 = vpop.permute.xlu0 %1374
      %1376 = vrot.lane.b32.xlu0 %v1333, 102
      %v1377 = vpop.permute.xlu0 %1376
      %1378 = vrot.lane.b32.xlu0 %v1334, 102
      %v1379 = vpop.permute.xlu0 %1378
      %1380 = vrot.lane.b32.xlu0 %v1335, 102
      %v1381 = vpop.permute.xlu0 %1380
      %1382 = vrot.lane.b32.xlu0 %v1336, 102
      %v1383 = vpop.permute.xlu0 %1382
      %1384 = vrot.lane.b32.xlu0 %v1337, 102
      %v1385 = vpop.permute.xlu0 %1384
      %vm1386 = vcmask 834560
      %v1387 = vsel %vm1386, %v1375, %v1377
      %v1388 = vsel %vm1386, %v1377, %v1379
      %v1389 = vsel %vm1386, %v1379, %v1381
      %v1390 = vsel %vm1386, %v1381, %v1383
      %v1391 = vsel %vm1386, %v1383, %v1385
      %v1398 = vunpack.c.l.b16 %v1306
      %v1399 = vunpack.c.h.b16 %v1306
      %v1400 = vunpack.c.l.b16 %v1307
      %v1401 = vunpack.c.h.b16 %v1307
      %v1402 = vunpack.c.l.b16 %v1308
      %v1403 = vunpack.c.l.b16 %v1309
      %v1404 = vunpack.c.h.b16 %v1309
      %v1405 = vunpack.c.l.b16 %v1310
      %v1406 = vunpack.c.h.b16 %v1310
      %v1407 = vunpack.c.l.b16 %v1311
      %v1408 = vpack.c.b16 %v1403, %v1398
      %v1409 = vpack.c.b16 %v1404, %v1399
      %v1410 = vpack.c.b16 %v1405, %v1400
      %v1411 = vpack.c.b16 %v1406, %v1401
      %v1412 = vpack.c.b16 %v1407, %v1402
      %1413 = vrot.lane.b32.xlu0 %v1408, 101
      %v1414 = vpop.permute.xlu0 %1413
      %1415 = vrot.lane.b32.xlu0 %v1409, 101
      %v1416 = vpop.permute.xlu0 %1415
      %1417 = vrot.lane.b32.xlu0 %v1410, 101
      %v1418 = vpop.permute.xlu0 %1417
      %1419 = vrot.lane.b32.xlu0 %v1411, 101
      %v1420 = vpop.permute.xlu0 %1419
      %1421 = vrot.lane.b32.xlu0 %v1412, 101
      %v1422 = vpop.permute.xlu0 %1421
      %vm1423 = vcmask 826368
      %v1424 = vsel %vm1423, %v1414, %v1416
      %v1425 = vsel %vm1423, %v1416, %v1418
      %v1426 = vsel %vm1423, %v1418, %v1420
      %v1427 = vsel %vm1423, %v1420, %v1422
      %v1430 = vunpack.c.l.b16 %v1312
      %v1431 = vunpack.c.h.b16 %v1312
      %v1432 = vunpack.c.l.b16 %v1313
      %v1433 = vunpack.c.h.b16 %v1313
      %v1434 = vpack.c.b16 %v1432, %v1430
      %v1435 = vpack.c.b16 %v1433, %v1431
      %1436 = vrot.lane.b32.xlu0 %v1408, 100
      %v1437 = vpop.permute.xlu0 %1436
      %1438 = vrot.lane.b32.xlu0 %v1409, 100
      %v1439 = vpop.permute.xlu0 %1438
      %1440 = vrot.lane.b32.xlu0 %v1410, 100
      %v1441 = vpop.permute.xlu0 %1440
      %1442 = vrot.lane.b32.xlu0 %v1411, 100
      %v1443 = vpop.permute.xlu0 %1442
      %1444 = vrot.lane.b32.xlu0 %v1434, 100
      %v1445 = vpop.permute.xlu0 %1444
      %1446 = vrot.lane.b32.xlu0 %v1435, 100
      %v1447 = vpop.permute.xlu0 %1446
      %vm1448 = vcmask 818176
      %v1449 = vsel %vm1448, %v1437, %v1439
      %v1450 = vsel %vm1448, %v1439, %v1441
      %v1451 = vsel %vm1448, %v1441, %v1443
      %v1452 = vsel %vm1448, %v1443, %v1445
      %v1453 = vsel %vm1448, %v1445, %v1447
      %1454 = vrot.lane.b32.xlu0 %v1408, 76
      %v1455 = vpop.permute.xlu0 %1454
      %1456 = vrot.lane.b32.xlu0 %v1409, 76
      %v1457 = vpop.permute.xlu0 %1456
      %1458 = vrot.lane.b32.xlu0 %v1410, 76
      %v1459 = vpop.permute.xlu0 %1458
      %1460 = vrot.lane.b32.xlu0 %v1411, 76
      %v1461 = vpop.permute.xlu0 %1460
      %1462 = vrot.lane.b32.xlu0 %v1434, 76
      %v1463 = vpop.permute.xlu0 %1462
      %1464 = vrot.lane.b32.xlu0 %v1435, 76
      %v1465 = vpop.permute.xlu0 %1464
      %vm1466 = vcmask 621568
      %v1467 = vsel %vm1466, %v1455, %v1457
      %v1468 = vsel %vm1466, %v1457, %v1459
      %v1469 = vsel %vm1466, %v1459, %v1461
      %v1470 = vsel %vm1466, %v1461, %v1463
      %v1471 = vsel %vm1466, %v1463, %v1465
      %1472 = vrot.lane.b32.xlu0 %v1408, 75
      %v1473 = vpop.permute.xlu0 %1472
      %1474 = vrot.lane.b32.xlu0 %v1409, 75
      %v1475 = vpop.permute.xlu0 %1474
      %1476 = vrot.lane.b32.xlu0 %v1410, 75
      %v1477 = vpop.permute.xlu0 %1476
      %1478 = vrot.lane.b32.xlu0 %v1411, 75
      %v1479 = vpop.permute.xlu0 %1478
      %1480 = vrot.lane.b32.xlu0 %v1434, 75
      %v1481 = vpop.permute.xlu0 %1480
      %1482 = vrot.lane.b32.xlu0 %v1435, 75
      %v1483 = vpop.permute.xlu0 %1482
      %vm1484 = vcmask 613376
      %v1485 = vsel %vm1484, %v1473, %v1475
      %v1486 = vsel %vm1484, %v1475, %v1477
      %v1487 = vsel %vm1484, %v1477, %v1479
      %v1488 = vsel %vm1484, %v1479, %v1481
      %v1489 = vsel %vm1484, %v1481, %v1483
      %1490 = vrot.lane.b32.xlu0 %v1408, 74
      %v1491 = vpop.permute.xlu0 %1490
      %1492 = vrot.lane.b32.xlu0 %v1409, 74
      %v1493 = vpop.permute.xlu0 %1492
      %1494 = vrot.lane.b32.xlu0 %v1410, 74
      %v1495 = vpop.permute.xlu0 %1494
      %1496 = vrot.lane.b32.xlu0 %v1411, 74
      %v1497 = vpop.permute.xlu0 %1496
      %1498 = vrot.lane.b32.xlu0 %v1434, 74
      %v1499 = vpop.permute.xlu0 %1498
      %1500 = vrot.lane.b32.xlu0 %v1435, 74
      %v1501 = vpop.permute.xlu0 %1500
      %vm1502 = vcmask 605184
      %v1503 = vsel %vm1502, %v1491, %v1493
      %v1504 = vsel %vm1502, %v1493, %v1495
      %v1505 = vsel %vm1502, %v1495, %v1497
      %v1506 = vsel %vm1502, %v1497, %v1499
      %v1507 = vsel %vm1502, %v1499, %v1501
      %v1508 = vld [vmem:[%s4] sm:$0xff]
      %v1509 = vld [vmem:[%s4 + $0x8] sm:$0xff]
      %v1510 = vld [vmem:[%s5] sm:$0xff]
      %v1511 = vld [vmem:[%s5 + $0x8] sm:$0xff]
      %1513 = vset.pattern.permute.xlu0 0
      %1514 = vperm.xlu0 %1513, %v1510
      %v1515 = vpop.permute.xlu0 %1514
      %1518 = vset.pattern.permute.xlu0 0
      %1519 = vperm.xlu0 %1518, %v1511
      %v1520 = vpop.permute.xlu0 %1519
      %v1524 = vunpack.c.l.b16 %v1508
      %v1525 = vunpack.c.h.b16 %v1508
      %v1526 = vunpack.c.l.b16 %v1509
      %v1527 = vunpack.c.h.b16 %v1509
      %v1528 = vpack.c.b16 %v1526, %v1524
      %v1529 = vpack.c.b16 %v1527, %v1525
      %1531 = vrot.lane.b32.xlu0 %v1332, 27
      %v1532 = vpop.permute.xlu0 %1531
      %1533 = vrot.lane.b32.xlu0 %v1333, 27
      %v1534 = vpop.permute.xlu0 %1533
      %1535 = vrot.lane.b32.xlu0 %v1334, 27
      %v1536 = vpop.permute.xlu0 %1535
      %1537 = vrot.lane.b32.xlu0 %v1335, 27
      %v1538 = vpop.permute.xlu0 %1537
      %1539 = vrot.lane.b32.xlu0 %v1336, 27
      %v1540 = vpop.permute.xlu0 %1539
      %1541 = vrot.lane.b32.xlu0 %v1337, 27
      %v1542 = vpop.permute.xlu0 %1541
      %1543 = vrot.lane.b32.xlu0 %v1351, 27
      %v1544 = vpop.permute.xlu0 %1543
      %1545 = vrot.lane.b32.xlu0 %v1352, 27
      %v1546 = vpop.permute.xlu0 %1545
      %1547 = vrot.lane.b32.xlu0 %v1353, 27
      %v1548 = vpop.permute.xlu0 %1547
      %1549 = vrot.lane.b32.xlu0 %v1354, 27
      %v1550 = vpop.permute.xlu0 %1549
      %1551 = vrot.lane.b32.xlu0 %v1355, 27
      %v1552 = vpop.permute.xlu0 %1551
      %1553 = vrot.lane.b32.xlu0 %v1349, 27
      %v1554 = vpop.permute.xlu0 %1553
      %1555 = vrot.lane.b32.xlu0 %v1369, 27
      %v1556 = vpop.permute.xlu0 %1555
      %1557 = vrot.lane.b32.xlu0 %v1370, 27
      %v1558 = vpop.permute.xlu0 %1557
      %1559 = vrot.lane.b32.xlu0 %v1371, 27
      %v1560 = vpop.permute.xlu0 %1559
      %1561 = vrot.lane.b32.xlu0 %v1372, 27
      %v1562 = vpop.permute.xlu0 %1561
      %1563 = vrot.lane.b32.xlu0 %v1373, 27
      %v1564 = vpop.permute.xlu0 %1563
      %1565 = vrot.lane.b32.xlu0 %v1367, 27
      %v1566 = vpop.permute.xlu0 %1565
      %1567 = vrot.lane.b32.xlu0 %v1387, 27
      %v1568 = vpop.permute.xlu0 %1567
      %1569 = vrot.lane.b32.xlu0 %v1388, 27
      %v1570 = vpop.permute.xlu0 %1569
      %1571 = vrot.lane.b32.xlu0 %v1389, 27
      %v1572 = vpop.permute.xlu0 %1571
      %1573 = vrot.lane.b32.xlu0 %v1390, 27
      %v1574 = vpop.permute.xlu0 %1573
      %1575 = vrot.lane.b32.xlu0 %v1391, 27
      %v1576 = vpop.permute.xlu0 %1575
      %1577 = vrot.lane.b32.xlu0 %v1385, 27
      %v1578 = vpop.permute.xlu0 %1577
      %1579 = vrot.lane.b32.xlu0 %v1414, 27
      %v1580 = vpop.permute.xlu0 %1579
      %1581 = vrot.lane.b32.xlu0 %v1424, 27
      %v1582 = vpop.permute.xlu0 %1581
      %1583 = vrot.lane.b32.xlu0 %v1425, 27
      %v1584 = vpop.permute.xlu0 %1583
      %1585 = vrot.lane.b32.xlu0 %v1426, 27
      %v1586 = vpop.permute.xlu0 %1585
      %1587 = vrot.lane.b32.xlu0 %v1427, 27
      %v1588 = vpop.permute.xlu0 %1587
      %1589 = vrot.lane.b32.xlu0 %v1422, 27
      %v1590 = vpop.permute.xlu0 %1589
      %1591 = vrot.lane.b32.xlu0 %v1437, 27
      %v1592 = vpop.permute.xlu0 %1591
      %1593 = vrot.lane.b32.xlu0 %v1449, 27
      %v1594 = vpop.permute.xlu0 %1593
      %1595 = vrot.lane.b32.xlu0 %v1450, 27
      %v1596 = vpop.permute.xlu0 %1595
      %1597 = vrot.lane.b32.xlu0 %v1451, 27
      %v1598 = vpop.permute.xlu0 %1597
      %1599 = vrot.lane.b32.xlu0 %v1452, 27
      %v1600 = vpop.permute.xlu0 %1599
      %1601 = vrot.lane.b32.xlu0 %v1453, 27
      %v1602 = vpop.permute.xlu0 %1601
      %1603 = vrot.lane.b32.xlu0 %v1455, 27
      %v1604 = vpop.permute.xlu0 %1603
      %1605 = vrot.lane.b32.xlu0 %v1467, 27
      %v1606 = vpop.permute.xlu0 %1605
      %1607 = vrot.lane.b32.xlu0 %v1468, 27
      %v1608 = vpop.permute.xlu0 %1607
      %1609 = vrot.lane.b32.xlu0 %v1469, 27
      %v1610 = vpop.permute.xlu0 %1609
      %1611 = vrot.lane.b32.xlu0 %v1470, 27
      %v1612 = vpop.permute.xlu0 %1611
      %1613 = vrot.lane.b32.xlu0 %v1471, 27
      %v1614 = vpop.permute.xlu0 %1613
      %1615 = vrot.lane.b32.xlu0 %v1473, 27
      %v1616 = vpop.permute.xlu0 %1615
      %1617 = vrot.lane.b32.xlu0 %v1485, 27
      %v1618 = vpop.permute.xlu0 %1617
      %1619 = vrot.lane.b32.xlu0 %v1486, 27
      %v1620 = vpop.permute.xlu0 %1619
      %1621 = vrot.lane.b32.xlu0 %v1487, 27
      %v1622 = vpop.permute.xlu0 %1621
      %1623 = vrot.lane.b32.xlu0 %v1488, 27
      %v1624 = vpop.permute.xlu0 %1623
      %1625 = vrot.lane.b32.xlu0 %v1489, 27
      %v1626 = vpop.permute.xlu0 %1625
      %1627 = vrot.lane.b32.xlu0 %v1491, 27
      %v1628 = vpop.permute.xlu0 %1627
      %1629 = vrot.lane.b32.xlu0 %v1503, 27
      %v1630 = vpop.permute.xlu0 %1629
      %1631 = vrot.lane.b32.xlu0 %v1504, 27
      %v1632 = vpop.permute.xlu0 %1631
      %1633 = vrot.lane.b32.xlu0 %v1505, 27
      %v1634 = vpop.permute.xlu0 %1633
      %1635 = vrot.lane.b32.xlu0 %v1506, 27
      %v1636 = vpop.permute.xlu0 %1635
      %1637 = vrot.lane.b32.xlu0 %v1507, 27
      %v1638 = vpop.permute.xlu0 %1637
      %vm1639 = vcmask 220160
      %v1640 = vsel %vm1639, %v1532, %v1534
      %v1641 = vsel %vm1639, %v1534, %v1536
      %v1642 = vsel %vm1639, %v1536, %v1538
      %v1643 = vsel %vm1639, %v1538, %v1540
      %v1644 = vsel %vm1639, %v1540, %v1542
      %v1645 = vsel %vm1639, %v1544, %v1546
      %v1646 = vsel %vm1639, %v1546, %v1548
      %v1647 = vsel %vm1639, %v1548, %v1550
      %v1648 = vsel %vm1639, %v1550, %v1552
      %v1649 = vsel %vm1639, %v1552, %v1554
      %v1650 = vsel %vm1639, %v1556, %v1558
      %v1651 = vsel %vm1639, %v1558, %v1560
      %v1652 = vsel %vm1639, %v1560, %v1562
      %v1653 = vsel %vm1639, %v1562, %v1564
      %v1654 = vsel %vm1639, %v1564, %v1566
      %v1655 = vsel %vm1639, %v1568, %v1570
      %v1656 = vsel %vm1639, %v1570, %v1572
      %v1657 = vsel %vm1639, %v1572, %v1574
      %v1658 = vsel %vm1639, %v1574, %v1576
      %v1659 = vsel %vm1639, %v1576, %v1578
      %v1660 = vsel %vm1639, %v1580, %v1582
      %v1661 = vsel %vm1639, %v1582, %v1584
      %v1662 = vsel %vm1639, %v1584, %v1586
      %v1663 = vsel %vm1639, %v1586, %v1588
      %v1664 = vsel %vm1639, %v1588, %v1590
      %v1665 = vsel %vm1639, %v1592, %v1594
      %v1666 = vsel %vm1639, %v1594, %v1596
      %v1667 = vsel %vm1639, %v1596, %v1598
      %v1668 = vsel %vm1639, %v1598, %v1600
      %v1669 = vsel %vm1639, %v1600, %v1602
      %v1670 = vsel %vm1639, %v1604, %v1606
      %v1671 = vsel %vm1639, %v1606, %v1608
      %v1672 = vsel %vm1639, %v1608, %v1610
      %v1673 = vsel %vm1639, %v1610, %v1612
      %v1674 = vsel %vm1639, %v1612, %v1614
      %v1675 = vsel %vm1639, %v1616, %v1618
      %v1676 = vsel %vm1639, %v1618, %v1620
      %v1677 = vsel %vm1639, %v1620, %v1622
      %v1678 = vsel %vm1639, %v1622, %v1624
      %v1679 = vsel %vm1639, %v1624, %v1626
      %v1680 = vsel %vm1639, %v1628, %v1630
      %v1681 = vsel %vm1639, %v1630, %v1632
      %v1682 = vsel %vm1639, %v1632, %v1634
      %v1683 = vsel %vm1639, %v1634, %v1636
      %v1684 = vsel %vm1639, %v1636, %v1638
      %v1731 = vsel %vm992, %v1529, 0
      %1733 = vmatprep.subr.bf16.mxu0 %v1676
      %1734 = vmatpush1.bf16.msra.mxu0 %v1675
      %1735 = vmatprep.subr.bf16.mxu0 %v1671
      %1736 = vmatpush1.bf16.msra.mxu0 %v1670
      %1737 = vmatprep.subr.bf16.mxu0 %v1666
      %1738 = vmatpush1.bf16.msra.mxu0 %v1665
      %1739 = vmatprep.subr.bf16.mxu0 %v1661
      %1740 = vmatpush1.bf16.msra.mxu0 %v1660
      %1741 = vmatprep.subr.bf16.mxu0 %v1656
      %1742 = vmatpush1.bf16.msra.mxu0 %v1655
      %1743 = vmatprep.subr.bf16.mxu0 %v1651
      %1744 = vmatpush1.bf16.msra.mxu0 %v1650
      %1745 = vmatprep.subr.bf16.mxu0 %v1646
      %1746 = vmatpush1.bf16.msra.mxu0 %v1645
      %1747 = vmatprep.subr.bf16.mxu0 %v1641
      %1748 = vmatpush1.bf16.msra.mxu0 %v1640
      %1749 = vmatprep.subr.bf16.mxu0 0
      %1750 = vmatpush2.bf16.msra.mxu0 0
      %1751 = vmatprep.subr.bf16.mxu0 0
      %1752 = vmatpush2.bf16.msra.mxu0 0
      %1753 = vmatprep.subr.bf16.mxu0 0
      %1754 = vmatpush2.bf16.msra.mxu0 0
      %1755 = vmatprep.subr.bf16.mxu0 0
      %1756 = vmatpush2.bf16.msra.mxu0 0
      %1757 = vmatprep.subr.bf16.mxu0 0
      %1758 = vmatpush2.bf16.msra.mxu0 0
      %1759 = vmatprep.subr.bf16.mxu0 0
      %1760 = vmatpush2.bf16.msra.mxu0 0
      %1761 = vmatprep.subr.bf16.mxu0 0
      %1762 = vmatpush2.bf16.msra.mxu0 0
      %1763 = vmatprep.subr.bf16.mxu0 %v1681
      %1764 = vmatpush2.bf16.msra.mxu0 %v1680
      %1765 = vmatprep.mubr.bf16.mxu0 %v1731
      %1766 = vmatmul.mubr.bf16.gmra.mxu0 %v1528
      %v1767 = vpop.f32.mrf.mxu0
      %v1768 = vadd.f32 %v1515, %v1767
      %v1769 = vpop.f32.mrf.mxu0
      %v1770 = vadd.f32 %v1515, %v1769
      %v1771 = vpop.f32.mrf.mxu0
      %v1772 = vadd.f32 %v1520, %v1771
      %v1773 = vpop.f32.mrf.mxu0
      %v1774 = vadd.f32 %v1520, %v1773
      %1775 = vdwg.mxu0
      %1776 = vmatprep.subr.bf16.mxu0 %v1678
      %1777 = vmatpush1.bf16.msra.mxu0 %v1677
      %1778 = vmatprep.subr.bf16.mxu0 %v1673
      %1779 = vmatpush1.bf16.msra.mxu0 %v1672
      %1780 = vmatprep.subr.bf16.mxu0 %v1668
      %1781 = vmatpush1.bf16.msra.mxu0 %v1667
      %1782 = vmatprep.subr.bf16.mxu0 %v1663
      %1783 = vmatpush1.bf16.msra.mxu0 %v1662
      %1784 = vmatprep.subr.bf16.mxu0 %v1658
      %1785 = vmatpush1.bf16.msra.mxu0 %v1657
      %1786 = vmatprep.subr.bf16.mxu0 %v1653
      %1787 = vmatpush1.bf16.msra.mxu0 %v1652
      %1788 = vmatprep.subr.bf16.mxu0 %v1648
      %1789 = vmatpush1.bf16.msra.mxu0 %v1647
      %1790 = vmatprep.subr.bf16.mxu0 %v1643
      %1791 = vmatpush1.bf16.msra.mxu0 %v1642
      %1792 = vmatprep.subr.bf16.mxu0 0
      %1793 = vmatpush2.bf16.msra.mxu0 0
      %1794 = vmatprep.subr.bf16.mxu0 0
      %1795 = vmatpush2.bf16.msra.mxu0 0
      %1796 = vmatprep.subr.bf16.mxu0 0
      %1797 = vmatpush2.bf16.msra.mxu0 0
      %1798 = vmatprep.subr.bf16.mxu0 0
      %1799 = vmatpush2.bf16.msra.mxu0 0
      %1800 = vmatprep.subr.bf16.mxu0 0
      %1801 = vmatpush2.bf16.msra.mxu0 0
      %1802 = vmatprep.subr.bf16.mxu0 0
      %1803 = vmatpush2.bf16.msra.mxu0 0
      %1804 = vmatprep.subr.bf16.mxu0 0
      %1805 = vmatpush2.bf16.msra.mxu0 0
      %1806 = vmatprep.subr.bf16.mxu0 %v1683
      %1807 = vmatpush2.bf16.msra.mxu0 %v1682
      %1808 = vmatprep.mubr.bf16.mxu0 %v1731
      %1809 = vmatmul.mubr.bf16.gmra.mxu0 %v1528
      %v1810 = vpop.f32.mrf.mxu0
      %v1811 = vadd.f32 %v1515, %v1810
      %v1812 = vpop.f32.mrf.mxu0
      %v1813 = vadd.f32 %v1515, %v1812
      %v1814 = vpop.f32.mrf.mxu0
      %v1815 = vadd.f32 %v1520, %v1814
      %v1816 = vpop.f32.mrf.mxu0
      %v1817 = vadd.f32 %v1520, %v1816
      %1818 = vdwg.mxu0
      %1819 = vmatprep.subr.bf16.mxu0 0
      %1820 = vmatpush1.bf16.msra.mxu0 %v1679
      %1821 = vmatprep.subr.bf16.mxu0 0
      %1822 = vmatpush1.bf16.msra.mxu0 %v1674
      %1823 = vmatprep.subr.bf16.mxu0 0
      %1824 = vmatpush1.bf16.msra.mxu0 %v1669
      %1825 = vmatprep.subr.bf16.mxu0 0
      %1826 = vmatpush1.bf16.msra.mxu0 %v1664
      %1827 = vmatprep.subr.bf16.mxu0 0
      %1828 = vmatpush1.bf16.msra.mxu0 %v1659
      %1829 = vmatprep.subr.bf16.mxu0 0
      %1830 = vmatpush1.bf16.msra.mxu0 %v1654
      %1831 = vmatprep.subr.bf16.mxu0 0
      %1832 = vmatpush1.bf16.msra.mxu0 %v1649
      %1833 = vmatprep.subr.bf16.mxu0 0
      %1834 = vmatpush1.bf16.msra.mxu0 %v1644
      %1835 = vmatprep.subr.bf16.mxu0 0
      %1836 = vmatpush2.bf16.msra.mxu0 0
      %1837 = vmatprep.subr.bf16.mxu0 0
      %1838 = vmatpush2.bf16.msra.mxu0 0
      %1839 = vmatprep.subr.bf16.mxu0 0
      %1840 = vmatpush2.bf16.msra.mxu0 0
      %1841 = vmatprep.subr.bf16.mxu0 0
      %1842 = vmatpush2.bf16.msra.mxu0 0
      %1843 = vmatprep.subr.bf16.mxu0 0
      %1844 = vmatpush2.bf16.msra.mxu0 0
      %1845 = vmatprep.subr.bf16.mxu0 0
      %1846 = vmatpush2.bf16.msra.mxu0 0
      %1847 = vmatprep.subr.bf16.mxu0 0
      %1848 = vmatpush2.bf16.msra.mxu0 0
      %1849 = vmatprep.subr.bf16.mxu0 0
      %1850 = vmatpush2.bf16.msra.mxu0 %v1684
      %1851 = vmatprep.mubr.bf16.mxu0 %v1731
      %1852 = vmatmul.mubr.bf16.gmra.mxu0 %v1528
      %v1853 = vpop.f32.mrf.mxu0
      %v1854 = vadd.f32 %v1515, %v1853
      %v1855 = vpop.f32.mrf.mxu0
      %v1856 = vpop.f32.mrf.mxu0
      %v1857 = vadd.f32 %v1520, %v1856
      %v1858 = vpop.f32.mrf.mxu0
      %1859 = vdwg.mxu0
      %v1860 = vld [vmem:[%s20] sm:$0xf]
      %v1861 = vld [vmem:[%s20 + $0x4] sm:$0xf]
      %v1862 = vpack.c.bf16 %v1772, %v1768
      %v1863 = vpack.c.bf16 %v1774, %v1770
      %v1864 = vpack.c.bf16 %v1815, %v1811
      %v1865 = vpack.c.bf16 %v1817, %v1813
      %v1866 = vpack.c.bf16 %v1857, %v1854
      %v1867 = vmax.f32 %v1050, 0.0
      %v1868 = vmax.f32 %v1052, 0.0
      %v1869 = vmax.f32 %v1123, 0.0
      %v1870 = vmax.f32 %v1125, 0.0
      %v1871 = vmax.f32 %v1194, 0.0
      %v1872 = vmax.f32 %v1054, 0.0
      %v1873 = vmax.f32 %v1056, 0.0
      %v1874 = vmax.f32 %v1127, 0.0
      %v1875 = vmax.f32 %v1129, 0.0
      %v1876 = vmax.f32 %v1197, 0.0
      %v1877 = vmul.f32 %v1867, %v1230
      %v1878 = vmul.f32 %v1868, %v1234
      %v1879 = vmul.f32 %v1869, %v1238
      %v1880 = vmul.f32 %v1870, %v1242
      %v1881 = vmul.f32 %v1871, %v1246
      %v1882 = vmul.f32 %v1872, %v1230
      %v1883 = vmul.f32 %v1873, %v1234
      %v1884 = vmul.f32 %v1874, %v1238
      %v1885 = vmul.f32 %v1875, %v1242
      %v1886 = vmul.f32 %v1876, %v1246
      %v1887 = vpack.c.bf16 %v1882, %v1877
      %v1888 = vpack.c.bf16 %v1883, %v1878
      %v1889 = vpack.c.bf16 %v1884, %v1879
      %v1890 = vpack.c.bf16 %v1885, %v1880
      %v1891 = vpack.c.bf16 %v1886, %v1881
      %v1897 = vunpack.c.l.b16 %v1887
      %v1898 = vunpack.c.l.b16 %v1888
      %v1899 = vunpack.c.l.b16 %v1889
      %v1900 = vunpack.c.l.b16 %v1890
      %v1901 = vunpack.c.l.b16 %v1891
      %v1902 = vunpack.c.h.b16 %v1887
      %v1903 = vunpack.c.h.b16 %v1888
      %v1904 = vunpack.c.h.b16 %v1889
      %v1905 = vunpack.c.h.b16 %v1890
      %v1906 = vunpack.c.h.b16 %v1891
      %v1907 = vpack.c.b16 %v1898, %v1897
      %v1908 = vpack.c.b16 %v1900, %v1899
      %v1909 = vpack.c.b16 %v1901, %v1901
      %v1910 = vpack.c.b16 %v1903, %v1902
      %v1911 = vpack.c.b16 %v1905, %v1904
      %v1912 = vpack.c.b16 %v1906, %v1906
      %1919 = vst [vmem:[#allocation2 + $0x8] sm:$0xff] %v1907
      %1920 = vst [vmem:[#allocation2 + $0x10] sm:$0xff] %v1908
      %1921 = vst [vmem:[#allocation2 + $0x18] sm:$0xf] %v1909
      %1922 = vst [vmem:[#allocation2 + $0x2c] sm:$0xff] %v1910
      %1923 = vst [vmem:[#allocation2 + $0x34] sm:$0xff] %v1911
      %1924 = vst [vmem:[#allocation2 + $0x3c] sm:$0xf] %v1912
      %v1925 = vld [vmem:[#allocation2 + $0x4] sm:$0xff]
      %v1926 = vld [vmem:[#allocation2 + $0xc] sm:$0xff]
      %v1927 = vld [vmem:[#allocation2 + $0x14] sm:$0xff]
      %v1928 = vld [vmem:[#allocation2 + $0x28] sm:$0xff]
      %v1929 = vld [vmem:[#allocation2 + $0x30] sm:$0xff]
      %v1930 = vld [vmem:[#allocation2 + $0x38] sm:$0xff]
      %v1931 = vld [vmem:[#allocation2 + $0x8] sm:$0xff]
      %v1932 = vld [vmem:[#allocation2 + $0x10] sm:$0xff]
      %v1933 = vld [vmem:[#allocation2 + $0x18] sm:$0xf]
      %v1934 = vld [vmem:[#allocation2 + $0x2c] sm:$0xff]
      %v1935 = vld [vmem:[#allocation2 + $0x34] sm:$0xff]
      %v1936 = vld [vmem:[#allocation2 + $0x3c] sm:$0xf]
      %v1937 = vld [vmem:[#allocation2 + $0x18] sm:$0xff]
      %v1938 = vld [vmem:[#allocation2 + $0x3c] sm:$0xff]
      %v1945 = vunpack.c.l.b16 %v1925
      %v1946 = vunpack.c.h.b16 %v1925
      %v1947 = vunpack.c.l.b16 %v1926
      %v1948 = vunpack.c.h.b16 %v1926
      %v1949 = vunpack.c.l.b16 %v1927
      %v1950 = vunpack.c.h.b16 %v1927
      %v1951 = vunpack.c.l.b16 %v1928
      %v1952 = vunpack.c.h.b16 %v1928
      %v1953 = vunpack.c.l.b16 %v1929
      %v1954 = vunpack.c.h.b16 %v1929
      %v1955 = vunpack.c.l.b16 %v1930
      %v1956 = vunpack.c.h.b16 %v1930
      %v1957 = vpack.c.b16 %v1951, %v1945
      %v1958 = vpack.c.b16 %v1952, %v1946
      %v1959 = vpack.c.b16 %v1953, %v1947
      %v1960 = vpack.c.b16 %v1954, %v1948
      %v1961 = vpack.c.b16 %v1955, %v1949
      %v1962 = vpack.c.b16 %v1956, %v1950
      %v1969 = vunpack.c.l.b16 %v1931
      %v1970 = vunpack.c.h.b16 %v1931
      %v1971 = vunpack.c.l.b16 %v1932
      %v1972 = vunpack.c.h.b16 %v1932
      %v1973 = vunpack.c.l.b16 %v1933
      %v1974 = vunpack.c.l.b16 %v1934
      %v1975 = vunpack.c.h.b16 %v1934
      %v1976 = vunpack.c.l.b16 %v1935
      %v1977 = vunpack.c.h.b16 %v1935
      %v1978 = vunpack.c.l.b16 %v1936
      %v1979 = vpack.c.b16 %v1974, %v1969
      %v1980 = vpack.c.b16 %v1975, %v1970
      %v1981 = vpack.c.b16 %v1976, %v1971
      %v1982 = vpack.c.b16 %v1977, %v1972
      %v1983 = vpack.c.b16 %v1978, %v1973
      %1984 = vrot.lane.b32.xlu0 %v1979, 102
      %v1985 = vpop.permute.xlu0 %1984
      %1986 = vrot.lane.b32.xlu0 %v1980, 102
      %v1987 = vpop.permute.xlu0 %1986
      %1988 = vrot.lane.b32.xlu0 %v1981, 102
      %v1989 = vpop.permute.xlu0 %1988
      %1990 = vrot.lane.b32.xlu0 %v1982, 102
      %v1991 = vpop.permute.xlu0 %1990
      %1992 = vrot.lane.b32.xlu0 %v1983, 102
      %v1993 = vpop.permute.xlu0 %1992
      %v1994 = vsel %vm1386, %v1985, %v1987
      %v1995 = vsel %vm1386, %v1987, %v1989
      %v1996 = vsel %vm1386, %v1989, %v1991
      %v1997 = vsel %vm1386, %v1991, %v1993
      %v2000 = vunpack.c.l.b16 %v1937
      %v2001 = vunpack.c.h.b16 %v1937
      %v2002 = vunpack.c.l.b16 %v1938
      %v2003 = vunpack.c.h.b16 %v1938
      %v2004 = vpack.c.b16 %v2002, %v2000
      %v2005 = vpack.c.b16 %v2003, %v2001
      %2006 = vrot.lane.b32.xlu0 %v1979, 76
      %v2007 = vpop.permute.xlu0 %2006
      %2008 = vrot.lane.b32.xlu0 %v1980, 76
      %v2009 = vpop.permute.xlu0 %2008
      %2010 = vrot.lane.b32.xlu0 %v1981, 76
      %v2011 = vpop.permute.xlu0 %2010
      %2012 = vrot.lane.b32.xlu0 %v1982, 76
      %v2013 = vpop.permute.xlu0 %2012
      %2014 = vrot.lane.b32.xlu0 %v2004, 76
      %v2015 = vpop.permute.xlu0 %2014
      %2016 = vrot.lane.b32.xlu0 %v2005, 76
      %v2017 = vpop.permute.xlu0 %2016
      %v2018 = vsel %vm1466, %v2007, %v2009
      %v2019 = vsel %vm1466, %v2009, %v2011
      %v2020 = vsel %vm1466, %v2011, %v2013
      %v2021 = vsel %vm1466, %v2013, %v2015
      %v2022 = vsel %vm1466, %v2015, %v2017
      %v2023 = vld [vmem:[%s6] sm:$0xf]
      %v2024 = vld [vmem:[%s6 + $0x4] sm:$0xf]
      %v2025 = vld [vmem:[%s7] sm:$0xff]
      %v2026 = vld [vmem:[%s7 + $0x8] sm:$0xff]
      %2028 = vset.pattern.permute.xlu0 0
      %2029 = vperm.xlu0 %2028, %v2025
      %v2030 = vpop.permute.xlu0 %2029
      %2033 = vset.pattern.permute.xlu0 0
      %2034 = vperm.xlu0 %2033, %v2026
      %v2035 = vpop.permute.xlu0 %2034
      %v2039 = vunpack.c.l.b16 %v2023
      %v2040 = vunpack.c.l.b16 %v2024
      %v2041 = vpack.c.b16 %v2040, %v2039
      %2042 = vrot.lane.b32.xlu0 %v1957, 26
      %v2043 = vpop.permute.xlu0 %2042
      %2044 = vrot.lane.b32.xlu0 %v1958, 26
      %v2045 = vpop.permute.xlu0 %2044
      %2046 = vrot.lane.b32.xlu0 %v1959, 26
      %v2047 = vpop.permute.xlu0 %2046
      %2048 = vrot.lane.b32.xlu0 %v1960, 26
      %v2049 = vpop.permute.xlu0 %2048
      %2050 = vrot.lane.b32.xlu0 %v1961, 26
      %v2051 = vpop.permute.xlu0 %2050
      %2052 = vrot.lane.b32.xlu0 %v1962, 26
      %v2053 = vpop.permute.xlu0 %2052
      %2054 = vrot.lane.b32.xlu0 %v1985, 26
      %v2055 = vpop.permute.xlu0 %2054
      %2056 = vrot.lane.b32.xlu0 %v1994, 26
      %v2057 = vpop.permute.xlu0 %2056
      %2058 = vrot.lane.b32.xlu0 %v1995, 26
      %v2059 = vpop.permute.xlu0 %2058
      %2060 = vrot.lane.b32.xlu0 %v1996, 26
      %v2061 = vpop.permute.xlu0 %2060
      %2062 = vrot.lane.b32.xlu0 %v1997, 26
      %v2063 = vpop.permute.xlu0 %2062
      %2064 = vrot.lane.b32.xlu0 %v1993, 26
      %v2065 = vpop.permute.xlu0 %2064
      %2066 = vrot.lane.b32.xlu0 %v2007, 26
      %v2067 = vpop.permute.xlu0 %2066
      %2068 = vrot.lane.b32.xlu0 %v2018, 26
      %v2069 = vpop.permute.xlu0 %2068
      %2070 = vrot.lane.b32.xlu0 %v2019, 26
      %v2071 = vpop.permute.xlu0 %2070
      %2072 = vrot.lane.b32.xlu0 %v2020, 26
      %v2073 = vpop.permute.xlu0 %2072
      %2074 = vrot.lane.b32.xlu0 %v2021, 26
      %v2075 = vpop.permute.xlu0 %2074
      %2076 = vrot.lane.b32.xlu0 %v2022, 26
      %v2077 = vpop.permute.xlu0 %2076
      %vm2078 = vcmask 211968
      %v2079 = vsel %vm2078, %v2043, %v2045
      %v2080 = vsel %vm2078, %v2045, %v2047
      %v2081 = vsel %vm2078, %v2047, %v2049
      %v2082 = vsel %vm2078, %v2049, %v2051
      %v2083 = vsel %vm2078, %v2051, %v2053
      %v2084 = vsel %vm2078, %v2055, %v2057
      %v2085 = vsel %vm2078, %v2057, %v2059
      %v2086 = vsel %vm2078, %v2059, %v2061
      %v2087 = vsel %vm2078, %v2061, %v2063
      %v2088 = vsel %vm2078, %v2063, %v2065
      %v2089 = vsel %vm2078, %v2067, %v2069
      %v2090 = vsel %vm2078, %v2069, %v2071
      %v2091 = vsel %vm2078, %v2071, %v2073
      %v2092 = vsel %vm2078, %v2073, %v2075
      %v2093 = vsel %vm2078, %v2075, %v2077
      %vm2109 = vcmask 392192
      %v2111 = vsel %vm2109, %v2041, 0
      %2113 = vmatprep.subr.bf16.mxu0 0
      %2114 = vmatpush1.bf16.msra.mxu0 0
      %2115 = vmatprep.subr.bf16.mxu0 0
      %2116 = vmatpush1.bf16.msra.mxu0 0
      %2117 = vmatprep.subr.bf16.mxu0 0
      %2118 = vmatpush1.bf16.msra.mxu0 0
      %2119 = vmatprep.subr.bf16.mxu0 0
      %2120 = vmatpush1.bf16.msra.mxu0 0
      %2121 = vmatprep.subr.bf16.mxu0 0
      %2122 = vmatpush1.bf16.msra.mxu0 0
      %2123 = vmatprep.subr.bf16.mxu0 %v2090
      %2124 = vmatpush1.bf16.msra.mxu0 %v2089
      %2125 = vmatprep.subr.bf16.mxu0 %v2085
      %2126 = vmatpush1.bf16.msra.mxu0 %v2084
      %2127 = vmatprep.subr.bf16.mxu0 %v2080
      %2128 = vmatpush1.bf16.msra.mxu0 %v2079
      %2129 = vmatprep.subr.bf16.mxu0 0
      %2130 = vmatpush2.bf16.msra.mxu0 0
      %2131 = vmatprep.subr.bf16.mxu0 0
      %2132 = vmatpush2.bf16.msra.mxu0 0
      %2133 = vmatprep.subr.bf16.mxu0 0
      %2134 = vmatpush2.bf16.msra.mxu0 0
      %2135 = vmatprep.subr.bf16.mxu0 0
      %2136 = vmatpush2.bf16.msra.mxu0 0
      %2137 = vmatprep.subr.bf16.mxu0 0
      %2138 = vmatpush2.bf16.msra.mxu0 0
      %2139 = vmatprep.subr.bf16.mxu0 0
      %2140 = vmatpush2.bf16.msra.mxu0 0
      %2141 = vmatprep.subr.bf16.mxu0 0
      %2142 = vmatpush2.bf16.msra.mxu0 0
      %2143 = vmatprep.subr.bf16.mxu0 0
      %2144 = vmatpush2.bf16.msra.mxu0 0
      %2145 = vmatprep.mubr.bf16.mxu0 0
      %2146 = vmatmul.mubr.bf16.gmra.mxu0 %v2111
      %v2147 = vpop.f32.mrf.mxu0
      %v2148 = vadd.f32 %v2030, %v2147
      %v2149 = vpop.f32.mrf.mxu0
      %v2150 = vadd.f32 %v2030, %v2149
      %v2151 = vpop.f32.mrf.mxu0
      %v2152 = vadd.f32 %v2035, %v2151
      %v2153 = vpop.f32.mrf.mxu0
      %v2154 = vadd.f32 %v2035, %v2153
      %2155 = vdwg.mxu0
      %2156 = vmatprep.subr.bf16.mxu0 0
      %2157 = vmatpush1.bf16.msra.mxu0 0
      %2158 = vmatprep.subr.bf16.mxu0 0
      %2159 = vmatpush1.bf16.msra.mxu0 0
      %2160 = vmatprep.subr.bf16.mxu0 0
      %2161 = vmatpush1.bf16.msra.mxu0 0
      %2162 = vmatprep.subr.bf16.mxu0 0
      %2163 = vmatpush1.bf16.msra.mxu0 0
      %2164 = vmatprep.subr.bf16.mxu0 0
      %2165 = vmatpush1.bf16.msra.mxu0 0
      %2166 = vmatprep.subr.bf16.mxu0 %v2092
      %2167 = vmatpush1.bf16.msra.mxu0 %v2091
      %2168 = vmatprep.subr.bf16.mxu0 %v2087
      %2169 = vmatpush1.bf16.msra.mxu0 %v2086
      %2170 = vmatprep.subr.bf16.mxu0 %v2082
      %2171 = vmatpush1.bf16.msra.mxu0 %v2081
      %2172 = vmatprep.subr.bf16.mxu0 0
      %2173 = vmatpush2.bf16.msra.mxu0 0
      %2174 = vmatprep.subr.bf16.mxu0 0
      %2175 = vmatpush2.bf16.msra.mxu0 0
      %2176 = vmatprep.subr.bf16.mxu0 0
      %2177 = vmatpush2.bf16.msra.mxu0 0
      %2178 = vmatprep.subr.bf16.mxu0 0
      %2179 = vmatpush2.bf16.msra.mxu0 0
      %2180 = vmatprep.subr.bf16.mxu0 0
      %2181 = vmatpush2.bf16.msra.mxu0 0
      %2182 = vmatprep.subr.bf16.mxu0 0
      %2183 = vmatpush2.bf16.msra.mxu0 0
      %2184 = vmatprep.subr.bf16.mxu0 0
      %2185 = vmatpush2.bf16.msra.mxu0 0
      %2186 = vmatprep.subr.bf16.mxu0 0
      %2187 = vmatpush2.bf16.msra.mxu0 0
      %2188 = vmatprep.mubr.bf16.mxu0 0
      %2189 = vmatmul.mubr.bf16.gmra.mxu0 %v2111
      %v2190 = vpop.f32.mrf.mxu0
      %v2191 = vadd.f32 %v2030, %v2190
      %v2192 = vpop.f32.mrf.mxu0
      %v2193 = vadd.f32 %v2030, %v2192
      %v2194 = vpop.f32.mrf.mxu0
      %v2195 = vadd.f32 %v2035, %v2194
      %v2196 = vpop.f32.mrf.mxu0
      %v2197 = vadd.f32 %v2035, %v2196
      %2198 = vdwg.mxu0
      %2199 = vmatprep.subr.bf16.mxu0 0
      %2200 = vmatpush1.bf16.msra.mxu0 0
      %2201 = vmatprep.subr.bf16.mxu0 0
      %2202 = vmatpush1.bf16.msra.mxu0 0
      %2203 = vmatprep.subr.bf16.mxu0 0
      %2204 = vmatpush1.bf16.msra.mxu0 0
      %2205 = vmatprep.subr.bf16.mxu0 0
      %2206 = vmatpush1.bf16.msra.mxu0 0
      %2207 = vmatprep.subr.bf16.mxu0 0
      %2208 = vmatpush1.bf16.msra.mxu0 0
      %2209 = vmatprep.subr.bf16.mxu0 0
      %2210 = vmatpush1.bf16.msra.mxu0 %v2093
      %2211 = vmatprep.subr.bf16.mxu0 0
      %2212 = vmatpush1.bf16.msra.mxu0 %v2088
      %2213 = vmatprep.subr.bf16.mxu0 0
      %2214 = vmatpush1.bf16.msra.mxu0 %v2083
      %2215 = vmatprep.subr.bf16.mxu0 0
      %2216 = vmatpush2.bf16.msra.mxu0 0
      %2217 = vmatprep.subr.bf16.mxu0 0
      %2218 = vmatpush2.bf16.msra.mxu0 0
      %2219 = vmatprep.subr.bf16.mxu0 0
      %2220 = vmatpush2.bf16.msra.mxu0 0
      %2221 = vmatprep.subr.bf16.mxu0 0
      %2222 = vmatpush2.bf16.msra.mxu0 0
      %2223 = vmatprep.subr.bf16.mxu0 0
      %2224 = vmatpush2.bf16.msra.mxu0 0
      %2225 = vmatprep.subr.bf16.mxu0 0
      %2226 = vmatpush2.bf16.msra.mxu0 0
      %2227 = vmatprep.subr.bf16.mxu0 0
      %2228 = vmatpush2.bf16.msra.mxu0 0
      %2229 = vmatprep.subr.bf16.mxu0 0
      %2230 = vmatpush2.bf16.msra.mxu0 0
      %2231 = vmatprep.mubr.bf16.mxu0 0
      %2232 = vmatmul.mubr.bf16.gmra.mxu0 %v2111
      %v2233 = vpop.f32.mrf.mxu0
      %v2234 = vadd.f32 %v2030, %v2233
      %v2235 = vpop.f32.mrf.mxu0
      %v2236 = vpop.f32.mrf.mxu0
      %v2237 = vadd.f32 %v2035, %v2236
      %v2238 = vpop.f32.mrf.mxu0
      %2239 = vdwg.mxu0
      %v2240 = vmax.f32 %v2148, 0.0
      %v2241 = vmax.f32 %v2150, 0.0
      %v2242 = vmax.f32 %v2191, 0.0
      %v2243 = vmax.f32 %v2193, 0.0
      %v2244 = vmax.f32 %v2234, 0.0
      %v2245 = vmax.f32 %v2152, 0.0
      %v2246 = vmax.f32 %v2154, 0.0
      %v2247 = vmax.f32 %v2195, 0.0
      %v2248 = vmax.f32 %v2197, 0.0
      %v2249 = vmax.f32 %v2237, 0.0
      %v2250 = vmul.f32 %v2240, %v1230
      %v2251 = vmul.f32 %v2241, %v1234
      %v2252 = vmul.f32 %v2242, %v1238
      %v2253 = vmul.f32 %v2243, %v1242
      %v2254 = vmul.f32 %v2244, %v1246
      %v2255 = vmul.f32 %v2245, %v1230
      %v2256 = vmul.f32 %v2246, %v1234
      %v2257 = vmul.f32 %v2247, %v1238
      %v2258 = vmul.f32 %v2248, %v1242
      %v2259 = vmul.f32 %v2249, %v1246
      %v2260 = vpack.c.bf16 %v2255, %v2250
      %v2261 = vpack.c.bf16 %v2256, %v2251
      %v2262 = vpack.c.bf16 %v2257, %v2252
      %v2263 = vpack.c.bf16 %v2258, %v2253
      %v2264 = vpack.c.bf16 %v2259, %v2254
      %v2270 = vunpack.c.l.b16 %v2260
      %v2271 = vunpack.c.l.b16 %v2261
      %v2272 = vunpack.c.l.b16 %v2262
      %v2273 = vunpack.c.l.b16 %v2263
      %v2274 = vunpack.c.l.b16 %v2264
      %v2275 = vunpack.c.h.b16 %v2260
      %v2276 = vunpack.c.h.b16 %v2261
      %v2277 = vunpack.c.h.b16 %v2262
      %v2278 = vunpack.c.h.b16 %v2263
      %v2279 = vunpack.c.h.b16 %v2264
      %v2280 = vpack.c.b16 %v2271, %v2270
      %v2281 = vpack.c.b16 %v2273, %v2272
      %v2282 = vpack.c.b16 %v2274, %v2274
      %v2283 = vpack.c.b16 %v2276, %v2275
      %v2284 = vpack.c.b16 %v2278, %v2277
      %v2285 = vpack.c.b16 %v2279, %v2279
      %2292 = vst [vmem:[#allocation2 + $0x8] sm:$0xff] %v2280
      %2293 = vst [vmem:[#allocation2 + $0x10] sm:$0xff] %v2281
      %2294 = vst [vmem:[#allocation2 + $0x18] sm:$0xf] %v2282
      %2295 = vst [vmem:[#allocation2 + $0x2c] sm:$0xff] %v2283
      %2296 = vst [vmem:[#allocation2 + $0x34] sm:$0xff] %v2284
      %2297 = vst [vmem:[#allocation2 + $0x3c] sm:$0xf] %v2285
      %v2298 = vld [vmem:[#allocation2 + $0x4] sm:$0xff]
      %v2299 = vld [vmem:[#allocation2 + $0xc] sm:$0xff]
      %v2300 = vld [vmem:[#allocation2 + $0x14] sm:$0xff]
      %v2301 = vld [vmem:[#allocation2 + $0x28] sm:$0xff]
      %v2302 = vld [vmem:[#allocation2 + $0x30] sm:$0xff]
      %v2303 = vld [vmem:[#allocation2 + $0x38] sm:$0xff]
      %v2304 = vld [vmem:[#allocation2 + $0x8] sm:$0xff]
      %v2305 = vld [vmem:[#allocation2 + $0x10] sm:$0xff]
      %v2306 = vld [vmem:[#allocation2 + $0x18] sm:$0xf]
      %v2307 = vld [vmem:[#allocation2 + $0x2c] sm:$0xff]
      %v2308 = vld [vmem:[#allocation2 + $0x34] sm:$0xff]
      %v2309 = vld [vmem:[#allocation2 + $0x3c] sm:$0xf]
      %v2310 = vld [vmem:[#allocation2 + $0x18] sm:$0xff]
      %v2311 = vld [vmem:[#allocation2 + $0x3c] sm:$0xff]
      %v2318 = vunpack.c.l.b16 %v2298
      %v2319 = vunpack.c.h.b16 %v2298
      %v2320 = vunpack.c.l.b16 %v2299
      %v2321 = vunpack.c.h.b16 %v2299
      %v2322 = vunpack.c.l.b16 %v2300
      %v2323 = vunpack.c.h.b16 %v2300
      %v2324 = vunpack.c.l.b16 %v2301
      %v2325 = vunpack.c.h.b16 %v2301
      %v2326 = vunpack.c.l.b16 %v2302
      %v2327 = vunpack.c.h.b16 %v2302
      %v2328 = vunpack.c.l.b16 %v2303
      %v2329 = vunpack.c.h.b16 %v2303
      %v2330 = vpack.c.b16 %v2324, %v2318
      %v2331 = vpack.c.b16 %v2325, %v2319
      %v2332 = vpack.c.b16 %v2326, %v2320
      %v2333 = vpack.c.b16 %v2327, %v2321
      %v2334 = vpack.c.b16 %v2328, %v2322
      %v2335 = vpack.c.b16 %v2329, %v2323
      %2336 = vrot.lane.b32.xlu0 %v2330, 125
      %v2337 = vpop.permute.xlu0 %2336
      %2338 = vrot.lane.b32.xlu0 %v2331, 125
      %v2339 = vpop.permute.xlu0 %2338
      %2340 = vrot.lane.b32.xlu0 %v2332, 125
      %v2341 = vpop.permute.xlu0 %2340
      %2342 = vrot.lane.b32.xlu0 %v2333, 125
      %v2343 = vpop.permute.xlu0 %2342
      %2344 = vrot.lane.b32.xlu0 %v2334, 125
      %v2345 = vpop.permute.xlu0 %2344
      %2346 = vrot.lane.b32.xlu0 %v2335, 125
      %v2347 = vpop.permute.xlu0 %2346
      %vm2348 = vcmask 1022976
      %v2349 = vsel %vm2348, %v2337, %v2339
      %v2350 = vsel %vm2348, %v2339, %v2341
      %v2351 = vsel %vm2348, %v2341, %v2343
      %v2352 = vsel %vm2348, %v2343, %v2345
      %v2353 = vsel %vm2348, %v2345, %v2347
      %2354 = vrot.lane.b32.xlu0 %v2330, 122
      %v2355 = vpop.permute.xlu0 %2354
      %2356 = vrot.lane.b32.xlu0 %v2331, 122
      %v2357 = vpop.permute.xlu0 %2356
      %2358 = vrot.lane.b32.xlu0 %v2332, 122
      %v2359 = vpop.permute.xlu0 %2358
      %2360 = vrot.lane.b32.xlu0 %v2333, 122
      %v2361 = vpop.permute.xlu0 %2360
      %2362 = vrot.lane.b32.xlu0 %v2334, 122
      %v2363 = vpop.permute.xlu0 %2362
      %2364 = vrot.lane.b32.xlu0 %v2335, 122
      %v2365 = vpop.permute.xlu0 %2364
      %vm2366 = vcmask 998400
      %v2367 = vsel %vm2366, %v2355, %v2357
      %v2368 = vsel %vm2366, %v2357, %v2359
      %v2369 = vsel %vm2366, %v2359, %v2361
      %v2370 = vsel %vm2366, %v2361, %v2363
      %v2371 = vsel %vm2366, %v2363, %v2365
      %2372 = vrot.lane.b32.xlu0 %v2330, 50
      %v2373 = vpop.permute.xlu0 %2372
      %2374 = vrot.lane.b32.xlu0 %v2331, 50
      %v2375 = vpop.permute.xlu0 %2374
      %2376 = vrot.lane.b32.xlu0 %v2332, 50
      %v2377 = vpop.permute.xlu0 %2376
      %2378 = vrot.lane.b32.xlu0 %v2333, 50
      %v2379 = vpop.permute.xlu0 %2378
      %2380 = vrot.lane.b32.xlu0 %v2334, 50
      %v2381 = vpop.permute.xlu0 %2380
      %2382 = vrot.lane.b32.xlu0 %v2335, 50
      %v2383 = vpop.permute.xlu0 %2382
      %vm2384 = vcmask 408576
      %v2385 = vsel %vm2384, %v2373, %v2375
      %v2386 = vsel %vm2384, %v2375, %v2377
      %v2387 = vsel %vm2384, %v2377, %v2379
      %v2388 = vsel %vm2384, %v2379, %v2381
      %v2389 = vsel %vm2384, %v2381, %v2383
      %v2396 = vunpack.c.l.b16 %v2304
      %v2397 = vunpack.c.h.b16 %v2304
      %v2398 = vunpack.c.l.b16 %v2305
      %v2399 = vunpack.c.h.b16 %v2305
      %v2400 = vunpack.c.l.b16 %v2306
      %v2401 = vunpack.c.l.b16 %v2307
      %v2402 = vunpack.c.h.b16 %v2307
      %v2403 = vunpack.c.l.b16 %v2308
      %v2404 = vunpack.c.h.b16 %v2308
      %v2405 = vunpack.c.l.b16 %v2309
      %v2406 = vpack.c.b16 %v2401, %v2396
      %v2407 = vpack.c.b16 %v2402, %v2397
      %v2408 = vpack.c.b16 %v2403, %v2398
      %v2409 = vpack.c.b16 %v2404, %v2399
      %v2410 = vpack.c.b16 %v2405, %v2400
      %2411 = vrot.lane.b32.xlu0 %v2406, 47
      %v2412 = vpop.permute.xlu0 %2411
      %2413 = vrot.lane.b32.xlu0 %v2407, 47
      %v2414 = vpop.permute.xlu0 %2413
      %2415 = vrot.lane.b32.xlu0 %v2408, 47
      %v2416 = vpop.permute.xlu0 %2415
      %2417 = vrot.lane.b32.xlu0 %v2409, 47
      %v2418 = vpop.permute.xlu0 %2417
      %2419 = vrot.lane.b32.xlu0 %v2410, 47
      %v2420 = vpop.permute.xlu0 %2419
      %vm2421 = vcmask 384000
      %v2422 = vsel %vm2421, %v2412, %v2414
      %v2423 = vsel %vm2421, %v2414, %v2416
      %v2424 = vsel %vm2421, %v2416, %v2418
      %v2425 = vsel %vm2421, %v2418, %v2420
      %v2428 = vunpack.c.l.b16 %v2310
      %v2429 = vunpack.c.h.b16 %v2310
      %v2430 = vunpack.c.l.b16 %v2311
      %v2431 = vunpack.c.h.b16 %v2311
      %v2432 = vpack.c.b16 %v2430, %v2428
      %v2433 = vpack.c.b16 %v2431, %v2429
      %2434 = vrot.lane.b32.xlu0 %v2406, 44
      %v2435 = vpop.permute.xlu0 %2434
      %2436 = vrot.lane.b32.xlu0 %v2407, 44
      %v2437 = vpop.permute.xlu0 %2436
      %2438 = vrot.lane.b32.xlu0 %v2408, 44
      %v2439 = vpop.permute.xlu0 %2438
      %2440 = vrot.lane.b32.xlu0 %v2409, 44
      %v2441 = vpop.permute.xlu0 %2440
      %2442 = vrot.lane.b32.xlu0 %v2432, 44
      %v2443 = vpop.permute.xlu0 %2442
      %2444 = vrot.lane.b32.xlu0 %v2433, 44
      %v2445 = vpop.permute.xlu0 %2444
      %vm2446 = vcmask 359424
      %v2447 = vsel %vm2446, %v2435, %v2437
      %v2448 = vsel %vm2446, %v2437, %v2439
      %v2449 = vsel %vm2446, %v2439, %v2441
      %v2450 = vsel %vm2446, %v2441, %v2443
      %v2451 = vsel %vm2446, %v2443, %v2445
      %2452 = vrot.lane.b32.xlu0 %v2406, 100
      %v2453 = vpop.permute.xlu0 %2452
      %2454 = vrot.lane.b32.xlu0 %v2407, 100
      %v2455 = vpop.permute.xlu0 %2454
      %2456 = vrot.lane.b32.xlu0 %v2408, 100
      %v2457 = vpop.permute.xlu0 %2456
      %2458 = vrot.lane.b32.xlu0 %v2409, 100
      %v2459 = vpop.permute.xlu0 %2458
      %2460 = vrot.lane.b32.xlu0 %v2432, 100
      %v2461 = vpop.permute.xlu0 %2460
      %2462 = vrot.lane.b32.xlu0 %v2433, 100
      %v2463 = vpop.permute.xlu0 %2462
      %v2464 = vsel %vm1448, %v2453, %v2455
      %v2465 = vsel %vm1448, %v2455, %v2457
      %v2466 = vsel %vm1448, %v2457, %v2459
      %v2467 = vsel %vm1448, %v2459, %v2461
      %v2468 = vsel %vm1448, %v2461, %v2463
      %2469 = vrot.lane.b32.xlu0 %v2406, 97
      %v2470 = vpop.permute.xlu0 %2469
      %2471 = vrot.lane.b32.xlu0 %v2407, 97
      %v2472 = vpop.permute.xlu0 %2471
      %2473 = vrot.lane.b32.xlu0 %v2408, 97
      %v2474 = vpop.permute.xlu0 %2473
      %2475 = vrot.lane.b32.xlu0 %v2409, 97
      %v2476 = vpop.permute.xlu0 %2475
      %2477 = vrot.lane.b32.xlu0 %v2432, 97
      %v2478 = vpop.permute.xlu0 %2477
      %2479 = vrot.lane.b32.xlu0 %v2433, 97
      %v2480 = vpop.permute.xlu0 %2479
      %vm2481 = vcmask 793600
      %v2482 = vsel %vm2481, %v2470, %v2472
      %v2483 = vsel %vm2481, %v2472, %v2474
      %v2484 = vsel %vm2481, %v2474, %v2476
      %v2485 = vsel %vm2481, %v2476, %v2478
      %v2486 = vsel %vm2481, %v2478, %v2480
      %2487 = vrot.lane.b32.xlu0 %v2406, 94
      %v2488 = vpop.permute.xlu0 %2487
      %2489 = vrot.lane.b32.xlu0 %v2407, 94
      %v2490 = vpop.permute.xlu0 %2489
      %2491 = vrot.lane.b32.xlu0 %v2408, 94
      %v2492 = vpop.permute.xlu0 %2491
      %2493 = vrot.lane.b32.xlu0 %v2409, 94
      %v2494 = vpop.permute.xlu0 %2493
      %2495 = vrot.lane.b32.xlu0 %v2432, 94
      %v2496 = vpop.permute.xlu0 %2495
      %2497 = vrot.lane.b32.xlu0 %v2433, 94
      %v2498 = vpop.permute.xlu0 %2497
      %vm2499 = vcmask 769024
      %v2500 = vsel %vm2499, %v2488, %v2490
      %v2501 = vsel %vm2499, %v2490, %v2492
      %v2502 = vsel %vm2499, %v2492, %v2494
      %v2503 = vsel %vm2499, %v2494, %v2496
      %v2504 = vsel %vm2499, %v2496, %v2498
      %v2505 = vld [vmem:[%s8] sm:$0xff]
      %v2506 = vld [vmem:[%s8 + $0x8] sm:$0xff]
      %v2507 = vld [vmem:[%s9] sm:$0xff]
      %v2508 = vld [vmem:[%s9 + $0x8] sm:$0xff]
      %2510 = vset.pattern.permute.xlu0 0
      %2511 = vperm.xlu0 %2510, %v2507
      %v2512 = vpop.permute.xlu0 %2511
      %2515 = vset.pattern.permute.xlu0 0
      %2516 = vperm.xlu0 %2515, %v2508
      %v2517 = vpop.permute.xlu0 %2516
      %v2521 = vunpack.c.l.b16 %v2505
      %v2522 = vunpack.c.h.b16 %v2505
      %v2523 = vunpack.c.l.b16 %v2506
      %v2524 = vunpack.c.h.b16 %v2506
      %v2525 = vpack.c.b16 %v2523, %v2521
      %v2526 = vpack.c.b16 %v2524, %v2522
      %2528 = vrot.lane.b32.xlu0 %v2330, 81
      %v2529 = vpop.permute.xlu0 %2528
      %2530 = vrot.lane.b32.xlu0 %v2331, 81
      %v2531 = vpop.permute.xlu0 %2530
      %2532 = vrot.lane.b32.xlu0 %v2332, 81
      %v2533 = vpop.permute.xlu0 %2532
      %2534 = vrot.lane.b32.xlu0 %v2333, 81
      %v2535 = vpop.permute.xlu0 %2534
      %2536 = vrot.lane.b32.xlu0 %v2334, 81
      %v2537 = vpop.permute.xlu0 %2536
      %2538 = vrot.lane.b32.xlu0 %v2335, 81
      %v2539 = vpop.permute.xlu0 %2538
      %2540 = vrot.lane.b32.xlu0 %v2349, 81
      %v2541 = vpop.permute.xlu0 %2540
      %2542 = vrot.lane.b32.xlu0 %v2350, 81
      %v2543 = vpop.permute.xlu0 %2542
      %2544 = vrot.lane.b32.xlu0 %v2351, 81
      %v2545 = vpop.permute.xlu0 %2544
      %2546 = vrot.lane.b32.xlu0 %v2352, 81
      %v2547 = vpop.permute.xlu0 %2546
      %2548 = vrot.lane.b32.xlu0 %v2353, 81
      %v2549 = vpop.permute.xlu0 %2548
      %2550 = vrot.lane.b32.xlu0 %v2347, 81
      %v2551 = vpop.permute.xlu0 %2550
      %2552 = vrot.lane.b32.xlu0 %v2367, 81
      %v2553 = vpop.permute.xlu0 %2552
      %2554 = vrot.lane.b32.xlu0 %v2368, 81
      %v2555 = vpop.permute.xlu0 %2554
      %2556 = vrot.lane.b32.xlu0 %v2369, 81
      %v2557 = vpop.permute.xlu0 %2556
      %2558 = vrot.lane.b32.xlu0 %v2370, 81
      %v2559 = vpop.permute.xlu0 %2558
      %2560 = vrot.lane.b32.xlu0 %v2371, 81
      %v2561 = vpop.permute.xlu0 %2560
      %2562 = vrot.lane.b32.xlu0 %v2365, 81
      %v2563 = vpop.permute.xlu0 %2562
      %2564 = vrot.lane.b32.xlu0 %v2385, 81
      %v2565 = vpop.permute.xlu0 %2564
      %2566 = vrot.lane.b32.xlu0 %v2386, 81
      %v2567 = vpop.permute.xlu0 %2566
      %2568 = vrot.lane.b32.xlu0 %v2387, 81
      %v2569 = vpop.permute.xlu0 %2568
      %2570 = vrot.lane.b32.xlu0 %v2388, 81
      %v2571 = vpop.permute.xlu0 %2570
      %2572 = vrot.lane.b32.xlu0 %v2389, 81
      %v2573 = vpop.permute.xlu0 %2572
      %2574 = vrot.lane.b32.xlu0 %v2383, 81
      %v2575 = vpop.permute.xlu0 %2574
      %2576 = vrot.lane.b32.xlu0 %v2412, 81
      %v2577 = vpop.permute.xlu0 %2576
      %2578 = vrot.lane.b32.xlu0 %v2422, 81
      %v2579 = vpop.permute.xlu0 %2578
      %2580 = vrot.lane.b32.xlu0 %v2423, 81
      %v2581 = vpop.permute.xlu0 %2580
      %2582 = vrot.lane.b32.xlu0 %v2424, 81
      %v2583 = vpop.permute.xlu0 %2582
      %2584 = vrot.lane.b32.xlu0 %v2425, 81
      %v2585 = vpop.permute.xlu0 %2584
      %2586 = vrot.lane.b32.xlu0 %v2420, 81
      %v2587 = vpop.permute.xlu0 %2586
      %2588 = vrot.lane.b32.xlu0 %v2435, 81
      %v2589 = vpop.permute.xlu0 %2588
      %2590 = vrot.lane.b32.xlu0 %v2447, 81
      %v2591 = vpop.permute.xlu0 %2590
      %2592 = vrot.lane.b32.xlu0 %v2448, 81
      %v2593 = vpop.permute.xlu0 %2592
      %2594 = vrot.lane.b32.xlu0 %v2449, 81
      %v2595 = vpop.permute.xlu0 %2594
      %2596 = vrot.lane.b32.xlu0 %v2450, 81
      %v2597 = vpop.permute.xlu0 %2596
      %2598 = vrot.lane.b32.xlu0 %v2451, 81
      %v2599 = vpop.permute.xlu0 %2598
      %2600 = vrot.lane.b32.xlu0 %v2464, 81
      %v2601 = vpop.permute.xlu0 %2600
      %2602 = vrot.lane.b32.xlu0 %v2465, 81
      %v2603 = vpop.permute.xlu0 %2602
      %2604 = vrot.lane.b32.xlu0 %v2466, 81
      %v2605 = vpop.permute.xlu0 %2604
      %2606 = vrot.lane.b32.xlu0 %v2467, 81
      %v2607 = vpop.permute.xlu0 %2606
      %2608 = vrot.lane.b32.xlu0 %v2468, 81
      %v2609 = vpop.permute.xlu0 %2608
      %2610 = vrot.lane.b32.xlu0 %v2463, 81
      %v2611 = vpop.permute.xlu0 %2610
      %2612 = vrot.lane.b32.xlu0 %v2482, 81
      %v2613 = vpop.permute.xlu0 %2612
      %2614 = vrot.lane.b32.xlu0 %v2483, 81
      %v2615 = vpop.permute.xlu0 %2614
      %2616 = vrot.lane.b32.xlu0 %v2484, 81
      %v2617 = vpop.permute.xlu0 %2616
      %2618 = vrot.lane.b32.xlu0 %v2485, 81
      %v2619 = vpop.permute.xlu0 %2618
      %2620 = vrot.lane.b32.xlu0 %v2486, 81
      %v2621 = vpop.permute.xlu0 %2620
      %2622 = vrot.lane.b32.xlu0 %v2480, 81
      %v2623 = vpop.permute.xlu0 %2622
      %2624 = vrot.lane.b32.xlu0 %v2500, 81
      %v2625 = vpop.permute.xlu0 %2624
      %2626 = vrot.lane.b32.xlu0 %v2501, 81
      %v2627 = vpop.permute.xlu0 %2626
      %2628 = vrot.lane.b32.xlu0 %v2502, 81
      %v2629 = vpop.permute.xlu0 %2628
      %2630 = vrot.lane.b32.xlu0 %v2503, 81
      %v2631 = vpop.permute.xlu0 %2630
      %2632 = vrot.lane.b32.xlu0 %v2504, 81
      %v2633 = vpop.permute.xlu0 %2632
      %2634 = vrot.lane.b32.xlu0 %v2498, 81
      %v2635 = vpop.permute.xlu0 %2634
      %vm2636 = vcmask 662528
      %v2637 = vsel %vm2636, %v2529, %v2531
      %v2638 = vsel %vm2636, %v2531, %v2533
      %v2639 = vsel %vm2636, %v2533, %v2535
      %v2640 = vsel %vm2636, %v2535, %v2537
      %v2641 = vsel %vm2636, %v2537, %v2539
      %v2642 = vsel %vm2636, %v2541, %v2543
      %v2643 = vsel %vm2636, %v2543, %v2545
      %v2644 = vsel %vm2636, %v2545, %v2547
      %v2645 = vsel %vm2636, %v2547, %v2549
      %v2646 = vsel %vm2636, %v2549, %v2551
      %v2647 = vsel %vm2636, %v2553, %v2555
      %v2648 = vsel %vm2636, %v2555, %v2557
      %v2649 = vsel %vm2636, %v2557, %v2559
      %v2650 = vsel %vm2636, %v2559, %v2561
      %v2651 = vsel %vm2636, %v2561, %v2563
      %v2652 = vsel %vm2636, %v2565, %v2567
      %v2653 = vsel %vm2636, %v2567, %v2569
      %v2654 = vsel %vm2636, %v2569, %v2571
      %v2655 = vsel %vm2636, %v2571, %v2573
      %v2656 = vsel %vm2636, %v2573, %v2575
      %v2657 = vsel %vm2636, %v2577, %v2579
      %v2658 = vsel %vm2636, %v2579, %v2581
      %v2659 = vsel %vm2636, %v2581, %v2583
      %v2660 = vsel %vm2636, %v2583, %v2585
      %v2661 = vsel %vm2636, %v2585, %v2587
      %v2662 = vsel %vm2636, %v2589, %v2591
      %v2663 = vsel %vm2636, %v2591, %v2593
      %v2664 = vsel %vm2636, %v2593, %v2595
      %v2665 = vsel %vm2636, %v2595, %v2597
      %v2666 = vsel %vm2636, %v2597, %v2599
      %v2667 = vsel %vm2636, %v2601, %v2603
      %v2668 = vsel %vm2636, %v2603, %v2605
      %v2669 = vsel %vm2636, %v2605, %v2607
      %v2670 = vsel %vm2636, %v2607, %v2609
      %v2671 = vsel %vm2636, %v2609, %v2611
      %v2672 = vsel %vm2636, %v2613, %v2615
      %v2673 = vsel %vm2636, %v2615, %v2617
      %v2674 = vsel %vm2636, %v2617, %v2619
      %v2675 = vsel %vm2636, %v2619, %v2621
      %v2676 = vsel %vm2636, %v2621, %v2623
      %v2677 = vsel %vm2636, %v2625, %v2627
      %v2678 = vsel %vm2636, %v2627, %v2629
      %v2679 = vsel %vm2636, %v2629, %v2631
      %v2680 = vsel %vm2636, %v2631, %v2633
      %v2681 = vsel %vm2636, %v2633, %v2635
      %v2728 = vsel %vm992, %v2526, 0
      %2730 = vmatprep.subr.bf16.mxu0 %v2673
      %2731 = vmatpush1.bf16.msra.mxu0 %v2672
      %2732 = vmatprep.subr.bf16.mxu0 %v2668
      %2733 = vmatpush1.bf16.msra.mxu0 %v2667
      %2734 = vmatprep.subr.bf16.mxu0 %v2663
      %2735 = vmatpush1.bf16.msra.mxu0 %v2662
      %2736 = vmatprep.subr.bf16.mxu0 %v2658
      %2737 = vmatpush1.bf16.msra.mxu0 %v2657
      %2738 = vmatprep.subr.bf16.mxu0 %v2653
      %2739 = vmatpush1.bf16.msra.mxu0 %v2652
      %2740 = vmatprep.subr.bf16.mxu0 %v2648
      %2741 = vmatpush1.bf16.msra.mxu0 %v2647
      %2742 = vmatprep.subr.bf16.mxu0 %v2643
      %2743 = vmatpush1.bf16.msra.mxu0 %v2642
      %2744 = vmatprep.subr.bf16.mxu0 %v2638
      %2745 = vmatpush1.bf16.msra.mxu0 %v2637
      %2746 = vmatprep.subr.bf16.mxu0 0
      %2747 = vmatpush2.bf16.msra.mxu0 0
      %2748 = vmatprep.subr.bf16.mxu0 0
      %2749 = vmatpush2.bf16.msra.mxu0 0
      %2750 = vmatprep.subr.bf16.mxu0 0
      %2751 = vmatpush2.bf16.msra.mxu0 0
      %2752 = vmatprep.subr.bf16.mxu0 0
      %2753 = vmatpush2.bf16.msra.mxu0 0
      %2754 = vmatprep.subr.bf16.mxu0 0
      %2755 = vmatpush2.bf16.msra.mxu0 0
      %2756 = vmatprep.subr.bf16.mxu0 0
      %2757 = vmatpush2.bf16.msra.mxu0 0
      %2758 = vmatprep.subr.bf16.mxu0 0
      %2759 = vmatpush2.bf16.msra.mxu0 0
      %2760 = vmatprep.subr.bf16.mxu0 %v2678
      %2761 = vmatpush2.bf16.msra.mxu0 %v2677
      %2762 = vmatprep.mubr.bf16.mxu0 %v2728
      %2763 = vmatmul.mubr.bf16.gmra.mxu0 %v2525
      %v2764 = vpop.f32.mrf.mxu0
      %v2765 = vadd.f32 %v2512, %v2764
      %v2766 = vpop.f32.mrf.mxu0
      %v2767 = vadd.f32 %v2512, %v2766
      %v2768 = vpop.f32.mrf.mxu0
      %v2769 = vadd.f32 %v2517, %v2768
      %v2770 = vpop.f32.mrf.mxu0
      %v2771 = vadd.f32 %v2517, %v2770
      %2772 = vdwg.mxu0
      %2773 = vmatprep.subr.bf16.mxu0 %v2675
      %2774 = vmatpush1.bf16.msra.mxu0 %v2674
      %2775 = vmatprep.subr.bf16.mxu0 %v2670
      %2776 = vmatpush1.bf16.msra.mxu0 %v2669
      %2777 = vmatprep.subr.bf16.mxu0 %v2665
      %2778 = vmatpush1.bf16.msra.mxu0 %v2664
      %2779 = vmatprep.subr.bf16.mxu0 %v2660
      %2780 = vmatpush1.bf16.msra.mxu0 %v2659
      %2781 = vmatprep.subr.bf16.mxu0 %v2655
      %2782 = vmatpush1.bf16.msra.mxu0 %v2654
      %2783 = vmatprep.subr.bf16.mxu0 %v2650
      %2784 = vmatpush1.bf16.msra.mxu0 %v2649
      %2785 = vmatprep.subr.bf16.mxu0 %v2645
      %2786 = vmatpush1.bf16.msra.mxu0 %v2644
      %2787 = vmatprep.subr.bf16.mxu0 %v2640
      %2788 = vmatpush1.bf16.msra.mxu0 %v2639
      %2789 = vmatprep.subr.bf16.mxu0 0
      %2790 = vmatpush2.bf16.msra.mxu0 0
      %2791 = vmatprep.subr.bf16.mxu0 0
      %2792 = vmatpush2.bf16.msra.mxu0 0
      %2793 = vmatprep.subr.bf16.mxu0 0
      %2794 = vmatpush2.bf16.msra.mxu0 0
      %2795 = vmatprep.subr.bf16.mxu0 0
      %2796 = vmatpush2.bf16.msra.mxu0 0
      %2797 = vmatprep.subr.bf16.mxu0 0
      %2798 = vmatpush2.bf16.msra.mxu0 0
      %2799 = vmatprep.subr.bf16.mxu0 0
      %2800 = vmatpush2.bf16.msra.mxu0 0
      %2801 = vmatprep.subr.bf16.mxu0 0
      %2802 = vmatpush2.bf16.msra.mxu0 0
      %2803 = vmatprep.subr.bf16.mxu0 %v2680
      %2804 = vmatpush2.bf16.msra.mxu0 %v2679
      %2805 = vmatprep.mubr.bf16.mxu0 %v2728
      %2806 = vmatmul.mubr.bf16.gmra.mxu0 %v2525
      %v2807 = vpop.f32.mrf.mxu0
      %v2808 = vadd.f32 %v2512, %v2807
      %v2809 = vpop.f32.mrf.mxu0
      %v2810 = vadd.f32 %v2512, %v2809
      %v2811 = vpop.f32.mrf.mxu0
      %v2812 = vadd.f32 %v2517, %v2811
      %v2813 = vpop.f32.mrf.mxu0
      %v2814 = vadd.f32 %v2517, %v2813
      %2815 = vdwg.mxu0
      %2816 = vmatprep.subr.bf16.mxu0 0
      %2817 = vmatpush1.bf16.msra.mxu0 %v2676
      %2818 = vmatprep.subr.bf16.mxu0 0
      %2819 = vmatpush1.bf16.msra.mxu0 %v2671
      %2820 = vmatprep.subr.bf16.mxu0 0
      %2821 = vmatpush1.bf16.msra.mxu0 %v2666
      %2822 = vmatprep.subr.bf16.mxu0 0
      %2823 = vmatpush1.bf16.msra.mxu0 %v2661
      %2824 = vmatprep.subr.bf16.mxu0 0
      %2825 = vmatpush1.bf16.msra.mxu0 %v2656
      %2826 = vmatprep.subr.bf16.mxu0 0
      %2827 = vmatpush1.bf16.msra.mxu0 %v2651
      %2828 = vmatprep.subr.bf16.mxu0 0
      %2829 = vmatpush1.bf16.msra.mxu0 %v2646
      %2830 = vmatprep.subr.bf16.mxu0 0
      %2831 = vmatpush1.bf16.msra.mxu0 %v2641
      %2832 = vmatprep.subr.bf16.mxu0 0
      %2833 = vmatpush2.bf16.msra.mxu0 0
      %2834 = vmatprep.subr.bf16.mxu0 0
      %2835 = vmatpush2.bf16.msra.mxu0 0
      %2836 = vmatprep.subr.bf16.mxu0 0
      %2837 = vmatpush2.bf16.msra.mxu0 0
      %2838 = vmatprep.subr.bf16.mxu0 0
      %2839 = vmatpush2.bf16.msra.mxu0 0
      %2840 = vmatprep.subr.bf16.mxu0 0
      %2841 = vmatpush2.bf16.msra.mxu0 0
      %2842 = vmatprep.subr.bf16.mxu0 0
      %2843 = vmatpush2.bf16.msra.mxu0 0
      %2844 = vmatprep.subr.bf16.mxu0 0
      %2845 = vmatpush2.bf16.msra.mxu0 0
      %2846 = vmatprep.subr.bf16.mxu0 0
      %2847 = vmatpush2.bf16.msra.mxu0 %v2681
      %2848 = vmatprep.mubr.bf16.mxu0 %v2728
      %2849 = vmatmul.mubr.bf16.gmra.mxu0 %v2525
      %v2850 = vpop.f32.mrf.mxu0
      %v2851 = vadd.f32 %v2512, %v2850
      %v2852 = vpop.f32.mrf.mxu0
      %v2853 = vpop.f32.mrf.mxu0
      %v2854 = vadd.f32 %v2517, %v2853
      %v2855 = vpop.f32.mrf.mxu0
      %2856 = vdwg.mxu0
      %v2857 = vld [vmem:[%s21] sm:$0xf]
      %v2858 = vld [vmem:[%s21 + $0x4] sm:$0xf]
      %v2859 = vpack.c.bf16 %v2769, %v2765
      %v2860 = vpack.c.bf16 %v2771, %v2767
      %v2861 = vpack.c.bf16 %v2812, %v2808
      %v2862 = vpack.c.bf16 %v2814, %v2810
      %v2863 = vpack.c.bf16 %v2854, %v2851
      %v2866 = vunpack.c.l.b16 %v2857
      %v2867 = vunpack.c.l.b16 %v2858
      %v2868 = vpack.c.b16 %v2867, %v2866
      %v2870 = vsel %vm992, %v2868, 0
      %2872 = vmatprep.subr.bf16.mxu0 0
      %2873 = vmatpush1.bf16.msra.mxu0 0
      %2874 = vmatprep.subr.bf16.mxu0 0
      %2875 = vmatpush1.bf16.msra.mxu0 0
      %2876 = vmatprep.subr.bf16.mxu0 0
      %2877 = vmatpush1.bf16.msra.mxu0 0
      %2878 = vmatprep.subr.bf16.mxu0 0
      %2879 = vmatpush1.bf16.msra.mxu0 0
      %2880 = vmatprep.subr.bf16.mxu0 0
      %2881 = vmatpush1.bf16.msra.mxu0 0
      %2882 = vmatprep.subr.bf16.mxu0 0
      %2883 = vmatpush1.bf16.msra.mxu0 0
      %2884 = vmatprep.subr.bf16.mxu0 0
      %2885 = vmatpush1.bf16.msra.mxu0 0
      %2886 = vmatprep.subr.bf16.mxu0 %v2860
      %2887 = vmatpush1.bf16.msra.mxu0 %v2859
      %2888 = vmatprep.subr.bf16.mxu0 0
      %2889 = vmatpush2.bf16.msra.mxu0 0
      %2890 = vmatprep.subr.bf16.mxu0 0
      %2891 = vmatpush2.bf16.msra.mxu0 0
      %2892 = vmatprep.subr.bf16.mxu0 0
      %2893 = vmatpush2.bf16.msra.mxu0 0
      %2894 = vmatprep.subr.bf16.mxu0 0
      %2895 = vmatpush2.bf16.msra.mxu0 0
      %2896 = vmatprep.subr.bf16.mxu0 0
      %2897 = vmatpush2.bf16.msra.mxu0 0
      %2898 = vmatprep.subr.bf16.mxu0 0
      %2899 = vmatpush2.bf16.msra.mxu0 0
      %2900 = vmatprep.subr.bf16.mxu0 0
      %2901 = vmatpush2.bf16.msra.mxu0 0
      %2902 = vmatprep.subr.bf16.mxu0 0
      %2903 = vmatpush2.bf16.msra.mxu0 0
      %2904 = vmatprep.mubr.bf16.mxu0 0
      %2905 = vmatmul.mubr.bf16.gmra.mxu0 %v2870
      %v2906 = vpop.f32.mrf.mxu0
      %v2907 = vadd.f32 0.0, %v2906
      %v2908 = vpop.f32.mrf.mxu0
      %v2909 = vadd.f32 0.0, %v2908
      %v2910 = vpop.f32.mrf.mxu0
      %v2911 = vadd.f32 0.0, %v2910
      %v2912 = vpop.f32.mrf.mxu0
      %v2913 = vadd.f32 0.0, %v2912
      %2914 = vdwg.mxu0
      %2915 = vmatprep.subr.bf16.mxu0 0
      %2916 = vmatpush1.bf16.msra.mxu0 0
      %2917 = vmatprep.subr.bf16.mxu0 0
      %2918 = vmatpush1.bf16.msra.mxu0 0
      %2919 = vmatprep.subr.bf16.mxu0 0
      %2920 = vmatpush1.bf16.msra.mxu0 0
      %2921 = vmatprep.subr.bf16.mxu0 0
      %2922 = vmatpush1.bf16.msra.mxu0 0
      %2923 = vmatprep.subr.bf16.mxu0 0
      %2924 = vmatpush1.bf16.msra.mxu0 0
      %2925 = vmatprep.subr.bf16.mxu0 0
      %2926 = vmatpush1.bf16.msra.mxu0 0
      %2927 = vmatprep.subr.bf16.mxu0 0
      %2928 = vmatpush1.bf16.msra.mxu0 0
      %2929 = vmatprep.subr.bf16.mxu0 %v2862
      %2930 = vmatpush1.bf16.msra.mxu0 %v2861
      %2931 = vmatprep.subr.bf16.mxu0 0
      %2932 = vmatpush2.bf16.msra.mxu0 0
      %2933 = vmatprep.subr.bf16.mxu0 0
      %2934 = vmatpush2.bf16.msra.mxu0 0
      %2935 = vmatprep.subr.bf16.mxu0 0
      %2936 = vmatpush2.bf16.msra.mxu0 0
      %2937 = vmatprep.subr.bf16.mxu0 0
      %2938 = vmatpush2.bf16.msra.mxu0 0
      %2939 = vmatprep.subr.bf16.mxu0 0
      %2940 = vmatpush2.bf16.msra.mxu0 0
      %2941 = vmatprep.subr.bf16.mxu0 0
      %2942 = vmatpush2.bf16.msra.mxu0 0
      %2943 = vmatprep.subr.bf16.mxu0 0
      %2944 = vmatpush2.bf16.msra.mxu0 0
      %2945 = vmatprep.subr.bf16.mxu0 0
      %2946 = vmatpush2.bf16.msra.mxu0 0
      %2947 = vmatprep.mubr.bf16.mxu0 0
      %2948 = vmatmul.mubr.bf16.gmra.mxu0 %v2870
      %v2949 = vpop.f32.mrf.mxu0
      %v2950 = vadd.f32 0.0, %v2949
      %v2951 = vpop.f32.mrf.mxu0
      %v2952 = vadd.f32 0.0, %v2951
      %v2953 = vpop.f32.mrf.mxu0
      %v2954 = vadd.f32 0.0, %v2953
      %v2955 = vpop.f32.mrf.mxu0
      %v2956 = vadd.f32 0.0, %v2955
      %2957 = vdwg.mxu0
      %2958 = vmatprep.subr.bf16.mxu0 0
      %2959 = vmatpush1.bf16.msra.mxu0 0
      %2960 = vmatprep.subr.bf16.mxu0 0
      %2961 = vmatpush1.bf16.msra.mxu0 0
      %2962 = vmatprep.subr.bf16.mxu0 0
      %2963 = vmatpush1.bf16.msra.mxu0 0
      %2964 = vmatprep.subr.bf16.mxu0 0
      %2965 = vmatpush1.bf16.msra.mxu0 0
      %2966 = vmatprep.subr.bf16.mxu0 0
      %2967 = vmatpush1.bf16.msra.mxu0 0
      %2968 = vmatprep.subr.bf16.mxu0 0
      %2969 = vmatpush1.bf16.msra.mxu0 0
      %2970 = vmatprep.subr.bf16.mxu0 0
      %2971 = vmatpush1.bf16.msra.mxu0 0
      %2972 = vmatprep.subr.bf16.mxu0 0
      %2973 = vmatpush1.bf16.msra.mxu0 %v2863
      %2974 = vmatprep.subr.bf16.mxu0 0
      %2975 = vmatpush2.bf16.msra.mxu0 0
      %2976 = vmatprep.subr.bf16.mxu0 0
      %2977 = vmatpush2.bf16.msra.mxu0 0
      %2978 = vmatprep.subr.bf16.mxu0 0
      %2979 = vmatpush2.bf16.msra.mxu0 0
      %2980 = vmatprep.subr.bf16.mxu0 0
      %2981 = vmatpush2.bf16.msra.mxu0 0
      %2982 = vmatprep.subr.bf16.mxu0 0
      %2983 = vmatpush2.bf16.msra.mxu0 0
      %2984 = vmatprep.subr.bf16.mxu0 0
      %2985 = vmatpush2.bf16.msra.mxu0 0
      %2986 = vmatprep.subr.bf16.mxu0 0
      %2987 = vmatpush2.bf16.msra.mxu0 0
      %2988 = vmatprep.subr.bf16.mxu0 0
      %2989 = vmatpush2.bf16.msra.mxu0 0
      %2990 = vmatprep.mubr.bf16.mxu0 0
      %2991 = vmatmul.mubr.bf16.gmra.mxu0 %v2870
      %v2992 = vpop.f32.mrf.mxu0
      %v2993 = vadd.f32 0.0, %v2992
      %v2994 = vpop.f32.mrf.mxu0
      %v2995 = vpop.f32.mrf.mxu0
      %v2996 = vadd.f32 0.0, %v2995
      %v2997 = vpop.f32.mrf.mxu0
      %2998 = vdwg.mxu0
      %v3001 = vunpack.c.l.b16 %v1860
      %v3002 = vunpack.c.l.b16 %v1861
      %v3003 = vpack.c.b16 %v3002, %v3001
      %v3005 = vsel %vm992, %v3003, 0
      %3007 = vmatprep.subr.bf16.mxu0 0
      %3008 = vmatpush1.bf16.msra.mxu0 0
      %3009 = vmatprep.subr.bf16.mxu0 0
      %3010 = vmatpush1.bf16.msra.mxu0 0
      %3011 = vmatprep.subr.bf16.mxu0 0
      %3012 = vmatpush1.bf16.msra.mxu0 0
      %3013 = vmatprep.subr.bf16.mxu0 0
      %3014 = vmatpush1.bf16.msra.mxu0 0
      %3015 = vmatprep.subr.bf16.mxu0 0
      %3016 = vmatpush1.bf16.msra.mxu0 0
      %3017 = vmatprep.subr.bf16.mxu0 0
      %3018 = vmatpush1.bf16.msra.mxu0 0
      %3019 = vmatprep.subr.bf16.mxu0 0
      %3020 = vmatpush1.bf16.msra.mxu0 0
      %3021 = vmatprep.subr.bf16.mxu0 %v1863
      %3022 = vmatpush1.bf16.msra.mxu0 %v1862
      %3023 = vmatprep.subr.bf16.mxu0 0
      %3024 = vmatpush2.bf16.msra.mxu0 0
      %3025 = vmatprep.subr.bf16.mxu0 0
      %3026 = vmatpush2.bf16.msra.mxu0 0
      %3027 = vmatprep.subr.bf16.mxu0 0
      %3028 = vmatpush2.bf16.msra.mxu0 0
      %3029 = vmatprep.subr.bf16.mxu0 0
      %3030 = vmatpush2.bf16.msra.mxu0 0
      %3031 = vmatprep.subr.bf16.mxu0 0
      %3032 = vmatpush2.bf16.msra.mxu0 0
      %3033 = vmatprep.subr.bf16.mxu0 0
      %3034 = vmatpush2.bf16.msra.mxu0 0
      %3035 = vmatprep.subr.bf16.mxu0 0
      %3036 = vmatpush2.bf16.msra.mxu0 0
      %3037 = vmatprep.subr.bf16.mxu0 0
      %3038 = vmatpush2.bf16.msra.mxu0 0
      %3039 = vmatprep.mubr.bf16.mxu0 0
      %3040 = vmatmul.mubr.bf16.gmra.mxu0 %v3005
      %v3041 = vpop.f32.mrf.mxu0
      %v3042 = vadd.f32 %v2907, %v3041
      %v3043 = vpop.f32.mrf.mxu0
      %v3044 = vadd.f32 %v2909, %v3043
      %v3045 = vpop.f32.mrf.mxu0
      %v3046 = vadd.f32 %v2911, %v3045
      %v3047 = vpop.f32.mrf.mxu0
      %v3048 = vadd.f32 %v2913, %v3047
      %3049 = vdwg.mxu0
      %3050 = vmatprep.subr.bf16.mxu0 0
      %3051 = vmatpush1.bf16.msra.mxu0 0
      %3052 = vmatprep.subr.bf16.mxu0 0
      %3053 = vmatpush1.bf16.msra.mxu0 0
      %3054 = vmatprep.subr.bf16.mxu0 0
      %3055 = vmatpush1.bf16.msra.mxu0 0
      %3056 = vmatprep.subr.bf16.mxu0 0
      %3057 = vmatpush1.bf16.msra.mxu0 0
      %3058 = vmatprep.subr.bf16.mxu0 0
      %3059 = vmatpush1.bf16.msra.mxu0 0
      %3060 = vmatprep.subr.bf16.mxu0 0
      %3061 = vmatpush1.bf16.msra.mxu0 0
      %3062 = vmatprep.subr.bf16.mxu0 0
      %3063 = vmatpush1.bf16.msra.mxu0 0
      %3064 = vmatprep.subr.bf16.mxu0 %v1865
      %3065 = vmatpush1.bf16.msra.mxu0 %v1864
      %3066 = vmatprep.subr.bf16.mxu0 0
      %3067 = vmatpush2.bf16.msra.mxu0 0
      %3068 = vmatprep.subr.bf16.mxu0 0
      %3069 = vmatpush2.bf16.msra.mxu0 0
      %3070 = vmatprep.subr.bf16.mxu0 0
      %3071 = vmatpush2.bf16.msra.mxu0 0
      %3072 = vmatprep.subr.bf16.mxu0 0
      %3073 = vmatpush2.bf16.msra.mxu0 0
      %3074 = vmatprep.subr.bf16.mxu0 0
      %3075 = vmatpush2.bf16.msra.mxu0 0
      %3076 = vmatprep.subr.bf16.mxu0 0
      %3077 = vmatpush2.bf16.msra.mxu0 0
      %3078 = vmatprep.subr.bf16.mxu0 0
      %3079 = vmatpush2.bf16.msra.mxu0 0
      %3080 = vmatprep.subr.bf16.mxu0 0
      %3081 = vmatpush2.bf16.msra.mxu0 0
      %3082 = vmatprep.mubr.bf16.mxu0 0
      %3083 = vmatmul.mubr.bf16.gmra.mxu0 %v3005
      %v3084 = vpop.f32.mrf.mxu0
      %v3085 = vadd.f32 %v2950, %v3084
      %v3086 = vpop.f32.mrf.mxu0
      %v3087 = vadd.f32 %v2952, %v3086
      %v3088 = vpop.f32.mrf.mxu0
      %v3089 = vadd.f32 %v2954, %v3088
      %v3090 = vpop.f32.mrf.mxu0
      %v3091 = vadd.f32 %v2956, %v3090
      %3092 = vdwg.mxu0
      %3093 = vmatprep.subr.bf16.mxu0 0
      %3094 = vmatpush1.bf16.msra.mxu0 0
      %3095 = vmatprep.subr.bf16.mxu0 0
      %3096 = vmatpush1.bf16.msra.mxu0 0
      %3097 = vmatprep.subr.bf16.mxu0 0
      %3098 = vmatpush1.bf16.msra.mxu0 0
      %3099 = vmatprep.subr.bf16.mxu0 0
      %3100 = vmatpush1.bf16.msra.mxu0 0
      %3101 = vmatprep.subr.bf16.mxu0 0
      %3102 = vmatpush1.bf16.msra.mxu0 0
      %3103 = vmatprep.subr.bf16.mxu0 0
      %3104 = vmatpush1.bf16.msra.mxu0 0
      %3105 = vmatprep.subr.bf16.mxu0 0
      %3106 = vmatpush1.bf16.msra.mxu0 0
      %3107 = vmatprep.subr.bf16.mxu0 0
      %3108 = vmatpush1.bf16.msra.mxu0 %v1866
      %3109 = vmatprep.subr.bf16.mxu0 0
      %3110 = vmatpush2.bf16.msra.mxu0 0
      %3111 = vmatprep.subr.bf16.mxu0 0
      %3112 = vmatpush2.bf16.msra.mxu0 0
      %3113 = vmatprep.subr.bf16.mxu0 0
      %3114 = vmatpush2.bf16.msra.mxu0 0
      %3115 = vmatprep.subr.bf16.mxu0 0
      %3116 = vmatpush2.bf16.msra.mxu0 0
      %3117 = vmatprep.subr.bf16.mxu0 0
      %3118 = vmatpush2.bf16.msra.mxu0 0
      %3119 = vmatprep.subr.bf16.mxu0 0
      %3120 = vmatpush2.bf16.msra.mxu0 0
      %3121 = vmatprep.subr.bf16.mxu0 0
      %3122 = vmatpush2.bf16.msra.mxu0 0
      %3123 = vmatprep.subr.bf16.mxu0 0
      %3124 = vmatpush2.bf16.msra.mxu0 0
      %3125 = vmatprep.mubr.bf16.mxu0 0
      %3126 = vmatmul.mubr.bf16.gmra.mxu0 %v3005
      %v3127 = vpop.f32.mrf.mxu0
      %v3128 = vadd.f32 %v2993, %v3127
      %v3129 = vpop.f32.mrf.mxu0
      %v3130 = vpop.f32.mrf.mxu0
      %v3131 = vadd.f32 %v2996, %v3130
      %v3132 = vpop.f32.mrf.mxu0
      %3133 = vdwg.mxu0
      %v3134 = vmax.f32 %v1060, 0.0
      %v3135 = vmax.f32 %v1062, 0.0
      %v3136 = vmax.f32 %v1133, 0.0
      %v3137 = vmax.f32 %v1135, 0.0
      %v3138 = vmax.f32 %v1202, 0.0
      %v3139 = vmax.f32 %v1064, 0.0
      %v3140 = vmax.f32 %v1066, 0.0
      %v3141 = vmax.f32 %v1137, 0.0
      %v3142 = vmax.f32 %v1139, 0.0
      %v3143 = vmax.f32 %v1205, 0.0
      %v3144 = vmul.f32 %v3134, %v1230
      %v3145 = vmul.f32 %v3135, %v1234
      %v3146 = vmul.f32 %v3136, %v1238
      %v3147 = vmul.f32 %v3137, %v1242
      %v3148 = vmul.f32 %v3138, %v1246
      %v3149 = vmul.f32 %v3139, %v1230
      %v3150 = vmul.f32 %v3140, %v1234
      %v3151 = vmul.f32 %v3141, %v1238
      %v3152 = vmul.f32 %v3142, %v1242
      %v3153 = vmul.f32 %v3143, %v1246
      %v3154 = vpack.c.bf16 %v3149, %v3144
      %v3155 = vpack.c.bf16 %v3150, %v3145
      %v3156 = vpack.c.bf16 %v3151, %v3146
      %v3157 = vpack.c.bf16 %v3152, %v3147
      %v3158 = vpack.c.bf16 %v3153, %v3148
      %v3164 = vunpack.c.l.b16 %v3154
      %v3165 = vunpack.c.l.b16 %v3155
      %v3166 = vunpack.c.l.b16 %v3156
      %v3167 = vunpack.c.l.b16 %v3157
      %v3168 = vunpack.c.l.b16 %v3158
      %v3169 = vunpack.c.h.b16 %v3154
      %v3170 = vunpack.c.h.b16 %v3155
      %v3171 = vunpack.c.h.b16 %v3156
      %v3172 = vunpack.c.h.b16 %v3157
      %v3173 = vunpack.c.h.b16 %v3158
      %v3174 = vpack.c.b16 %v3165, %v3164
      %v3175 = vpack.c.b16 %v3167, %v3166
      %v3176 = vpack.c.b16 %v3168, %v3168
      %v3177 = vpack.c.b16 %v3170, %v3169
      %v3178 = vpack.c.b16 %v3172, %v3171
      %v3179 = vpack.c.b16 %v3173, %v3173
      %3186 = vst [vmem:[#allocation2 + $0x8] sm:$0xff] %v3174
      %3187 = vst [vmem:[#allocation2 + $0x10] sm:$0xff] %v3175
      %3188 = vst [vmem:[#allocation2 + $0x18] sm:$0xf] %v3176
      %3189 = vst [vmem:[#allocation2 + $0x2c] sm:$0xff] %v3177
      %3190 = vst [vmem:[#allocation2 + $0x34] sm:$0xff] %v3178
      %3191 = vst [vmem:[#allocation2 + $0x3c] sm:$0xf] %v3179
      %v3192 = vld [vmem:[#allocation2 + $0x4] sm:$0xff]
      %v3193 = vld [vmem:[#allocation2 + $0xc] sm:$0xff]
      %v3194 = vld [vmem:[#allocation2 + $0x14] sm:$0xff]
      %v3195 = vld [vmem:[#allocation2 + $0x28] sm:$0xff]
      %v3196 = vld [vmem:[#allocation2 + $0x30] sm:$0xff]
      %v3197 = vld [vmem:[#allocation2 + $0x38] sm:$0xff]
      %v3198 = vld [vmem:[#allocation2 + $0x8] sm:$0xff]
      %v3199 = vld [vmem:[#allocation2 + $0x10] sm:$0xff]
      %v3200 = vld [vmem:[#allocation2 + $0x18] sm:$0xf]
      %v3201 = vld [vmem:[#allocation2 + $0x2c] sm:$0xff]
      %v3202 = vld [vmem:[#allocation2 + $0x34] sm:$0xff]
      %v3203 = vld [vmem:[#allocation2 + $0x3c] sm:$0xf]
      %v3204 = vld [vmem:[#allocation2 + $0x18] sm:$0xff]
      %v3205 = vld [vmem:[#allocation2 + $0x3c] sm:$0xff]
      %v3212 = vunpack.c.l.b16 %v3192
      %v3213 = vunpack.c.h.b16 %v3192
      %v3214 = vunpack.c.l.b16 %v3193
      %v3215 = vunpack.c.h.b16 %v3193
      %v3216 = vunpack.c.l.b16 %v3194
      %v3217 = vunpack.c.h.b16 %v3194
      %v3218 = vunpack.c.l.b16 %v3195
      %v3219 = vunpack.c.h.b16 %v3195
      %v3220 = vunpack.c.l.b16 %v3196
      %v3221 = vunpack.c.h.b16 %v3196
      %v3222 = vunpack.c.l.b16 %v3197
      %v3223 = vunpack.c.h.b16 %v3197
      %v3224 = vpack.c.b16 %v3218, %v3212
      %v3225 = vpack.c.b16 %v3219, %v3213
      %v3226 = vpack.c.b16 %v3220, %v3214
      %v3227 = vpack.c.b16 %v3221, %v3215
      %v3228 = vpack.c.b16 %v3222, %v3216
      %v3229 = vpack.c.b16 %v3223, %v3217
      %v3236 = vunpack.c.l.b16 %v3198
      %v3237 = vunpack.c.h.b16 %v3198
      %v3238 = vunpack.c.l.b16 %v3199
      %v3239 = vunpack.c.h.b16 %v3199
      %v3240 = vunpack.c.l.b16 %v3200
      %v3241 = vunpack.c.l.b16 %v3201
      %v3242 = vunpack.c.h.b16 %v3201
      %v3243 = vunpack.c.l.b16 %v3202
      %v3244 = vunpack.c.h.b16 %v3202
      %v3245 = vunpack.c.l.b16 %v3203
      %v3246 = vpack.c.b16 %v3241, %v3236
      %v3247 = vpack.c.b16 %v3242, %v3237
      %v3248 = vpack.c.b16 %v3243, %v3238
      %v3249 = vpack.c.b16 %v3244, %v3239
      %v3250 = vpack.c.b16 %v3245, %v3240
      %3251 = vrot.lane.b32.xlu0 %v3246, 127
      %v3252 = vpop.permute.xlu0 %3251
      %3253 = vrot.lane.b32.xlu0 %v3247, 127
      %v3254 = vpop.permute.xlu0 %3253
      %3255 = vrot.lane.b32.xlu0 %v3248, 127
      %v3256 = vpop.permute.xlu0 %3255
      %3257 = vrot.lane.b32.xlu0 %v3249, 127
      %v3258 = vpop.permute.xlu0 %3257
      %3259 = vrot.lane.b32.xlu0 %v3250, 127
      %v3260 = vpop.permute.xlu0 %3259
      %v3261 = vsel %vm1350, %v3252, %v3254
      %v3262 = vsel %vm1350, %v3254, %v3256
      %v3263 = vsel %vm1350, %v3256, %v3258
      %v3264 = vsel %vm1350, %v3258, %v3260
      %v3267 = vunpack.c.l.b16 %v3204
      %v3268 = vunpack.c.h.b16 %v3204
      %v3269 = vunpack.c.l.b16 %v3205
      %v3270 = vunpack.c.h.b16 %v3205
      %v3271 = vpack.c.b16 %v3269, %v3267
      %v3272 = vpack.c.b16 %v3270, %v3268
      %3273 = vrot.lane.b32.xlu0 %v3246, 126
      %v3274 = vpop.permute.xlu0 %3273
      %3275 = vrot.lane.b32.xlu0 %v3247, 126
      %v3276 = vpop.permute.xlu0 %3275
      %3277 = vrot.lane.b32.xlu0 %v3248, 126
      %v3278 = vpop.permute.xlu0 %3277
      %3279 = vrot.lane.b32.xlu0 %v3249, 126
      %v3280 = vpop.permute.xlu0 %3279
      %3281 = vrot.lane.b32.xlu0 %v3271, 126
      %v3282 = vpop.permute.xlu0 %3281
      %3283 = vrot.lane.b32.xlu0 %v3272, 126
      %v3284 = vpop.permute.xlu0 %3283
      %v3285 = vsel %vm1368, %v3274, %v3276
      %v3286 = vsel %vm1368, %v3276, %v3278
      %v3287 = vsel %vm1368, %v3278, %v3280
      %v3288 = vsel %vm1368, %v3280, %v3282
      %v3289 = vsel %vm1368, %v3282, %v3284
      %v3290 = vld [vmem:[%s10] sm:$0xf]
      %v3291 = vld [vmem:[%s10 + $0x4] sm:$0xf]
      %v3292 = vld [vmem:[%s11] sm:$0xff]
      %v3293 = vld [vmem:[%s11 + $0x8] sm:$0xff]
      %3295 = vset.pattern.permute.xlu0 0
      %3296 = vperm.xlu0 %3295, %v3292
      %v3297 = vpop.permute.xlu0 %3296
      %3300 = vset.pattern.permute.xlu0 0
      %3301 = vperm.xlu0 %3300, %v3293
      %v3302 = vpop.permute.xlu0 %3301
      %v3306 = vunpack.c.l.b16 %v3290
      %v3307 = vunpack.c.l.b16 %v3291
      %v3308 = vpack.c.b16 %v3307, %v3306
      %3309 = vrot.lane.b32.xlu0 %v3224, 1
      %v3310 = vpop.permute.xlu0 %3309
      %3311 = vrot.lane.b32.xlu0 %v3225, 1
      %v3312 = vpop.permute.xlu0 %3311
      %3313 = vrot.lane.b32.xlu0 %v3226, 1
      %v3314 = vpop.permute.xlu0 %3313
      %3315 = vrot.lane.b32.xlu0 %v3227, 1
      %v3316 = vpop.permute.xlu0 %3315
      %3317 = vrot.lane.b32.xlu0 %v3228, 1
      %v3318 = vpop.permute.xlu0 %3317
      %3319 = vrot.lane.b32.xlu0 %v3229, 1
      %v3320 = vpop.permute.xlu0 %3319
      %3321 = vrot.lane.b32.xlu0 %v3252, 1
      %v3322 = vpop.permute.xlu0 %3321
      %3323 = vrot.lane.b32.xlu0 %v3261, 1
      %v3324 = vpop.permute.xlu0 %3323
      %3325 = vrot.lane.b32.xlu0 %v3262, 1
      %v3326 = vpop.permute.xlu0 %3325
      %3327 = vrot.lane.b32.xlu0 %v3263, 1
      %v3328 = vpop.permute.xlu0 %3327
      %3329 = vrot.lane.b32.xlu0 %v3264, 1
      %v3330 = vpop.permute.xlu0 %3329
      %3331 = vrot.lane.b32.xlu0 %v3260, 1
      %v3332 = vpop.permute.xlu0 %3331
      %3333 = vrot.lane.b32.xlu0 %v3274, 1
      %v3334 = vpop.permute.xlu0 %3333
      %3335 = vrot.lane.b32.xlu0 %v3285, 1
      %v3336 = vpop.permute.xlu0 %3335
      %3337 = vrot.lane.b32.xlu0 %v3286, 1
      %v3338 = vpop.permute.xlu0 %3337
      %3339 = vrot.lane.b32.xlu0 %v3287, 1
      %v3340 = vpop.permute.xlu0 %3339
      %3341 = vrot.lane.b32.xlu0 %v3288, 1
      %v3342 = vpop.permute.xlu0 %3341
      %3343 = vrot.lane.b32.xlu0 %v3289, 1
      %v3344 = vpop.permute.xlu0 %3343
      %vm3345 = vcmask 7168
      %v3346 = vsel %vm3345, %v3310, %v3312
      %v3347 = vsel %vm3345, %v3312, %v3314
      %v3348 = vsel %vm3345, %v3314, %v3316
      %v3349 = vsel %vm3345, %v3316, %v3318
      %v3350 = vsel %vm3345, %v3318, %v3320
      %v3351 = vsel %vm3345, %v3322, %v3324
      %v3352 = vsel %vm3345, %v3324, %v3326
      %v3353 = vsel %vm3345, %v3326, %v3328
      %v3354 = vsel %vm3345, %v3328, %v3330
      %v3355 = vsel %vm3345, %v3330, %v3332
      %v3356 = vsel %vm3345, %v3334, %v3336
      %v3357 = vsel %vm3345, %v3336, %v3338
      %v3358 = vsel %vm3345, %v3338, %v3340
      %v3359 = vsel %vm3345, %v3340, %v3342
      %v3360 = vsel %vm3345, %v3342, %v3344
      %v3377 = vsel %vm2109, %v3308, 0
      %3379 = vmatprep.subr.bf16.mxu0 0
      %3380 = vmatpush1.bf16.msra.mxu0 0
      %3381 = vmatprep.subr.bf16.mxu0 0
      %3382 = vmatpush1.bf16.msra.mxu0 0
      %3383 = vmatprep.subr.bf16.mxu0 0
      %3384 = vmatpush1.bf16.msra.mxu0 0
      %3385 = vmatprep.subr.bf16.mxu0 0
      %3386 = vmatpush1.bf16.msra.mxu0 0
      %3387 = vmatprep.subr.bf16.mxu0 0
      %3388 = vmatpush1.bf16.msra.mxu0 0
      %3389 = vmatprep.subr.bf16.mxu0 %v3357
      %3390 = vmatpush1.bf16.msra.mxu0 %v3356
      %3391 = vmatprep.subr.bf16.mxu0 %v3352
      %3392 = vmatpush1.bf16.msra.mxu0 %v3351
      %3393 = vmatprep.subr.bf16.mxu0 %v3347
      %3394 = vmatpush1.bf16.msra.mxu0 %v3346
      %3395 = vmatprep.subr.bf16.mxu0 0
      %3396 = vmatpush2.bf16.msra.mxu0 0
      %3397 = vmatprep.subr.bf16.mxu0 0
      %3398 = vmatpush2.bf16.msra.mxu0 0
      %3399 = vmatprep.subr.bf16.mxu0 0
      %3400 = vmatpush2.bf16.msra.mxu0 0
      %3401 = vmatprep.subr.bf16.mxu0 0
      %3402 = vmatpush2.bf16.msra.mxu0 0
      %3403 = vmatprep.subr.bf16.mxu0 0
      %3404 = vmatpush2.bf16.msra.mxu0 0
      %3405 = vmatprep.subr.bf16.mxu0 0
      %3406 = vmatpush2.bf16.msra.mxu0 0
      %3407 = vmatprep.subr.bf16.mxu0 0
      %3408 = vmatpush2.bf16.msra.mxu0 0
      %3409 = vmatprep.subr.bf16.mxu0 0
      %3410 = vmatpush2.bf16.msra.mxu0 0
      %3411 = vmatprep.mubr.bf16.mxu0 0
      %3412 = vmatmul.mubr.bf16.gmra.mxu0 %v3377
      %v3413 = vpop.f32.mrf.mxu0
      %v3414 = vadd.f32 %v3297, %v3413
      %v3415 = vpop.f32.mrf.mxu0
      %v3416 = vadd.f32 %v3297, %v3415
      %v3417 = vpop.f32.mrf.mxu0
      %v3418 = vadd.f32 %v3302, %v3417
      %v3419 = vpop.f32.mrf.mxu0
      %v3420 = vadd.f32 %v3302, %v3419
      %3421 = vdwg.mxu0
      %3422 = vmatprep.subr.bf16.mxu0 0
      %3423 = vmatpush1.bf16.msra.mxu0 0
      %3424 = vmatprep.subr.bf16.mxu0 0
      %3425 = vmatpush1.bf16.msra.mxu0 0
      %3426 = vmatprep.subr.bf16.mxu0 0
      %3427 = vmatpush1.bf16.msra.mxu0 0
      %3428 = vmatprep.subr.bf16.mxu0 0
      %3429 = vmatpush1.bf16.msra.mxu0 0
      %3430 = vmatprep.subr.bf16.mxu0 0
      %3431 = vmatpush1.bf16.msra.mxu0 0
      %3432 = vmatprep.subr.bf16.mxu0 %v3359
      %3433 = vmatpush1.bf16.msra.mxu0 %v3358
      %3434 = vmatprep.subr.bf16.mxu0 %v3354
      %3435 = vmatpush1.bf16.msra.mxu0 %v3353
      %3436 = vmatprep.subr.bf16.mxu0 %v3349
      %3437 = vmatpush1.bf16.msra.mxu0 %v3348
      %3438 = vmatprep.subr.bf16.mxu0 0
      %3439 = vmatpush2.bf16.msra.mxu0 0
      %3440 = vmatprep.subr.bf16.mxu0 0
      %3441 = vmatpush2.bf16.msra.mxu0 0
      %3442 = vmatprep.subr.bf16.mxu0 0
      %3443 = vmatpush2.bf16.msra.mxu0 0
      %3444 = vmatprep.subr.bf16.mxu0 0
      %3445 = vmatpush2.bf16.msra.mxu0 0
      %3446 = vmatprep.subr.bf16.mxu0 0
      %3447 = vmatpush2.bf16.msra.mxu0 0
      %3448 = vmatprep.subr.bf16.mxu0 0
      %3449 = vmatpush2.bf16.msra.mxu0 0
      %3450 = vmatprep.subr.bf16.mxu0 0
      %3451 = vmatpush2.bf16.msra.mxu0 0
      %3452 = vmatprep.subr.bf16.mxu0 0
      %3453 = vmatpush2.bf16.msra.mxu0 0
      %3454 = vmatprep.mubr.bf16.mxu0 0
      %3455 = vmatmul.mubr.bf16.gmra.mxu0 %v3377
      %v3456 = vpop.f32.mrf.mxu0
      %v3457 = vadd.f32 %v3297, %v3456
      %v3458 = vpop.f32.mrf.mxu0
      %v3459 = vadd.f32 %v3297, %v3458
      %v3460 = vpop.f32.mrf.mxu0
      %v3461 = vadd.f32 %v3302, %v3460
      %v3462 = vpop.f32.mrf.mxu0
      %v3463 = vadd.f32 %v3302, %v3462
      %3464 = vdwg.mxu0
      %3465 = vmatprep.subr.bf16.mxu0 0
      %3466 = vmatpush1.bf16.msra.mxu0 0
      %3467 = vmatprep.subr.bf16.mxu0 0
      %3468 = vmatpush1.bf16.msra.mxu0 0
      %3469 = vmatprep.subr.bf16.mxu0 0
      %3470 = vmatpush1.bf16.msra.mxu0 0
      %3471 = vmatprep.subr.bf16.mxu0 0
      %3472 = vmatpush1.bf16.msra.mxu0 0
      %3473 = vmatprep.subr.bf16.mxu0 0
      %3474 = vmatpush1.bf16.msra.mxu0 0
      %3475 = vmatprep.subr.bf16.mxu0 0
      %3476 = vmatpush1.bf16.msra.mxu0 %v3360
      %3477 = vmatprep.subr.bf16.mxu0 0
      %3478 = vmatpush1.bf16.msra.mxu0 %v3355
      %3479 = vmatprep.subr.bf16.mxu0 0
      %3480 = vmatpush1.bf16.msra.mxu0 %v3350
      %3481 = vmatprep.subr.bf16.mxu0 0
      %3482 = vmatpush2.bf16.msra.mxu0 0
      %3483 = vmatprep.subr.bf16.mxu0 0
      %3484 = vmatpush2.bf16.msra.mxu0 0
      %3485 = vmatprep.subr.bf16.mxu0 0
      %3486 = vmatpush2.bf16.msra.mxu0 0
      %3487 = vmatprep.subr.bf16.mxu0 0
      %3488 = vmatpush2.bf16.msra.mxu0 0
      %3489 = vmatprep.subr.bf16.mxu0 0
      %3490 = vmatpush2.bf16.msra.mxu0 0
      %3491 = vmatprep.subr.bf16.mxu0 0
      %3492 = vmatpush2.bf16.msra.mxu0 0
      %3493 = vmatprep.subr.bf16.mxu0 0
      %3494 = vmatpush2.bf16.msra.mxu0 0
      %3495 = vmatprep.subr.bf16.mxu0 0
      %3496 = vmatpush2.bf16.msra.mxu0 0
      %3497 = vmatprep.mubr.bf16.mxu0 0
      %3498 = vmatmul.mubr.bf16.gmra.mxu0 %v3377
      %v3499 = vpop.f32.mrf.mxu0
      %v3500 = vadd.f32 %v3297, %v3499
      %v3501 = vpop.f32.mrf.mxu0
      %v3502 = vpop.f32.mrf.mxu0
      %v3503 = vadd.f32 %v3302, %v3502
      %v3504 = vpop.f32.mrf.mxu0
      %3505 = vdwg.mxu0
      %v3506 = vmax.f32 %v3414, 0.0
      %v3507 = vmax.f32 %v3416, 0.0
      %v3508 = vmax.f32 %v3457, 0.0
      %v3509 = vmax.f32 %v3459, 0.0
      %v3510 = vmax.f32 %v3500, 0.0
      %v3511 = vmax.f32 %v3418, 0.0
      %v3512 = vmax.f32 %v3420, 0.0
      %v3513 = vmax.f32 %v3461, 0.0
      %v3514 = vmax.f32 %v3463, 0.0
      %v3515 = vmax.f32 %v3503, 0.0
      %v3516 = vmul.f32 %v3506, %v1230
      %v3517 = vmul.f32 %v3507, %v1234
      %v3518 = vmul.f32 %v3508, %v1238
      %v3519 = vmul.f32 %v3509, %v1242
      %v3520 = vmul.f32 %v3510, %v1246
      %v3521 = vmul.f32 %v3511, %v1230
      %v3522 = vmul.f32 %v3512, %v1234
      %v3523 = vmul.f32 %v3513, %v1238
      %v3524 = vmul.f32 %v3514, %v1242
      %v3525 = vmul.f32 %v3515, %v1246
      %v3526 = vpack.c.bf16 %v3521, %v3516
      %v3527 = vpack.c.bf16 %v3522, %v3517
      %v3528 = vpack.c.bf16 %v3523, %v3518
      %v3529 = vpack.c.bf16 %v3524, %v3519
      %v3530 = vpack.c.bf16 %v3525, %v3520
      %v3536 = vunpack.c.l.b16 %v3526
      %v3537 = vunpack.c.l.b16 %v3527
      %v3538 = vunpack.c.l.b16 %v3528
      %v3539 = vunpack.c.l.b16 %v3529
      %v3540 = vunpack.c.l.b16 %v3530
      %v3541 = vunpack.c.h.b16 %v3526
      %v3542 = vunpack.c.h.b16 %v3527
      %v3543 = vunpack.c.h.b16 %v3528
      %v3544 = vunpack.c.h.b16 %v3529
      %v3545 = vunpack.c.h.b16 %v3530
      %v3546 = vpack.c.b16 %v3537, %v3536
      %v3547 = vpack.c.b16 %v3539, %v3538
      %v3548 = vpack.c.b16 %v3540, %v3540
      %v3549 = vpack.c.b16 %v3542, %v3541
      %v3550 = vpack.c.b16 %v3544, %v3543
      %v3551 = vpack.c.b16 %v3545, %v3545
      %3558 = vst [vmem:[#allocation2 + $0x8] sm:$0xff] %v3546
      %3559 = vst [vmem:[#allocation2 + $0x10] sm:$0xff] %v3547
      %3560 = vst [vmem:[#allocation2 + $0x18] sm:$0xf] %v3548
      %3561 = vst [vmem:[#allocation2 + $0x2c] sm:$0xff] %v3549
      %3562 = vst [vmem:[#allocation2 + $0x34] sm:$0xff] %v3550
      %3563 = vst [vmem:[#allocation2 + $0x3c] sm:$0xf] %v3551
      %v3564 = vld [vmem:[#allocation2 + $0x4] sm:$0xff]
      %v3565 = vld [vmem:[#allocation2 + $0xc] sm:$0xff]
      %v3566 = vld [vmem:[#allocation2 + $0x14] sm:$0xff]
      %v3567 = vld [vmem:[#allocation2 + $0x28] sm:$0xff]
      %v3568 = vld [vmem:[#allocation2 + $0x30] sm:$0xff]
      %v3569 = vld [vmem:[#allocation2 + $0x38] sm:$0xff]
      %v3570 = vld [vmem:[#allocation2 + $0x8] sm:$0xff]
      %v3571 = vld [vmem:[#allocation2 + $0x10] sm:$0xff]
      %v3572 = vld [vmem:[#allocation2 + $0x18] sm:$0xf]
      %v3573 = vld [vmem:[#allocation2 + $0x2c] sm:$0xff]
      %v3574 = vld [vmem:[#allocation2 + $0x34] sm:$0xff]
      %v3575 = vld [vmem:[#allocation2 + $0x3c] sm:$0xf]
      %v3576 = vld [vmem:[#allocation2 + $0x18] sm:$0xff]
      %v3577 = vld [vmem:[#allocation2 + $0x3c] sm:$0xff]
      %v3584 = vunpack.c.l.b16 %v3564
      %v3585 = vunpack.c.h.b16 %v3564
      %v3586 = vunpack.c.l.b16 %v3565
      %v3587 = vunpack.c.h.b16 %v3565
      %v3588 = vunpack.c.l.b16 %v3566
      %v3589 = vunpack.c.h.b16 %v3566
      %v3590 = vunpack.c.l.b16 %v3567
      %v3591 = vunpack.c.h.b16 %v3567
      %v3592 = vunpack.c.l.b16 %v3568
      %v3593 = vunpack.c.h.b16 %v3568
      %v3594 = vunpack.c.l.b16 %v3569
      %v3595 = vunpack.c.h.b16 %v3569
      %v3596 = vpack.c.b16 %v3590, %v3584
      %v3597 = vpack.c.b16 %v3591, %v3585
      %v3598 = vpack.c.b16 %v3592, %v3586
      %v3599 = vpack.c.b16 %v3593, %v3587
      %v3600 = vpack.c.b16 %v3594, %v3588
      %v3601 = vpack.c.b16 %v3595, %v3589
      %3602 = vrot.lane.b32.xlu0 %v3596, 125
      %v3603 = vpop.permute.xlu0 %3602
      %3604 = vrot.lane.b32.xlu0 %v3597, 125
      %v3605 = vpop.permute.xlu0 %3604
      %3606 = vrot.lane.b32.xlu0 %v3598, 125
      %v3607 = vpop.permute.xlu0 %3606
      %3608 = vrot.lane.b32.xlu0 %v3599, 125
      %v3609 = vpop.permute.xlu0 %3608
      %3610 = vrot.lane.b32.xlu0 %v3600, 125
      %v3611 = vpop.permute.xlu0 %3610
      %3612 = vrot.lane.b32.xlu0 %v3601, 125
      %v3613 = vpop.permute.xlu0 %3612
      %v3614 = vsel %vm2348, %v3603, %v3605
      %v3615 = vsel %vm2348, %v3605, %v3607
      %v3616 = vsel %vm2348, %v3607, %v3609
      %v3617 = vsel %vm2348, %v3609, %v3611
      %v3618 = vsel %vm2348, %v3611, %v3613
      %3619 = vrot.lane.b32.xlu0 %v3596, 122
      %v3620 = vpop.permute.xlu0 %3619
      %3621 = vrot.lane.b32.xlu0 %v3597, 122
      %v3622 = vpop.permute.xlu0 %3621
      %3623 = vrot.lane.b32.xlu0 %v3598, 122
      %v3624 = vpop.permute.xlu0 %3623
      %3625 = vrot.lane.b32.xlu0 %v3599, 122
      %v3626 = vpop.permute.xlu0 %3625
      %3627 = vrot.lane.b32.xlu0 %v3600, 122
      %v3628 = vpop.permute.xlu0 %3627
      %3629 = vrot.lane.b32.xlu0 %v3601, 122
      %v3630 = vpop.permute.xlu0 %3629
      %v3631 = vsel %vm2366, %v3620, %v3622
      %v3632 = vsel %vm2366, %v3622, %v3624
      %v3633 = vsel %vm2366, %v3624, %v3626
      %v3634 = vsel %vm2366, %v3626, %v3628
      %v3635 = vsel %vm2366, %v3628, %v3630
      %3636 = vrot.lane.b32.xlu0 %v3596, 50
      %v3637 = vpop.permute.xlu0 %3636
      %3638 = vrot.lane.b32.xlu0 %v3597, 50
      %v3639 = vpop.permute.xlu0 %3638
      %3640 = vrot.lane.b32.xlu0 %v3598, 50
      %v3641 = vpop.permute.xlu0 %3640
      %3642 = vrot.lane.b32.xlu0 %v3599, 50
      %v3643 = vpop.permute.xlu0 %3642
      %3644 = vrot.lane.b32.xlu0 %v3600, 50
      %v3645 = vpop.permute.xlu0 %3644
      %3646 = vrot.lane.b32.xlu0 %v3601, 50
      %v3647 = vpop.permute.xlu0 %3646
      %v3648 = vsel %vm2384, %v3637, %v3639
      %v3649 = vsel %vm2384, %v3639, %v3641
      %v3650 = vsel %vm2384, %v3641, %v3643
      %v3651 = vsel %vm2384, %v3643, %v3645
      %v3652 = vsel %vm2384, %v3645, %v3647
      %v3659 = vunpack.c.l.b16 %v3570
      %v3660 = vunpack.c.h.b16 %v3570
      %v3661 = vunpack.c.l.b16 %v3571
      %v3662 = vunpack.c.h.b16 %v3571
      %v3663 = vunpack.c.l.b16 %v3572
      %v3664 = vunpack.c.l.b16 %v3573
      %v3665 = vunpack.c.h.b16 %v3573
      %v3666 = vunpack.c.l.b16 %v3574
      %v3667 = vunpack.c.h.b16 %v3574
      %v3668 = vunpack.c.l.b16 %v3575
      %v3669 = vpack.c.b16 %v3664, %v3659
      %v3670 = vpack.c.b16 %v3665, %v3660
      %v3671 = vpack.c.b16 %v3666, %v3661
      %v3672 = vpack.c.b16 %v3667, %v3662
      %v3673 = vpack.c.b16 %v3668, %v3663
      %3674 = vrot.lane.b32.xlu0 %v3669, 47
      %v3675 = vpop.permute.xlu0 %3674
      %3676 = vrot.lane.b32.xlu0 %v3670, 47
      %v3677 = vpop.permute.xlu0 %3676
      %3678 = vrot.lane.b32.xlu0 %v3671, 47
      %v3679 = vpop.permute.xlu0 %3678
      %3680 = vrot.lane.b32.xlu0 %v3672, 47
      %v3681 = vpop.permute.xlu0 %3680
      %3682 = vrot.lane.b32.xlu0 %v3673, 47
      %v3683 = vpop.permute.xlu0 %3682
      %v3684 = vsel %vm2421, %v3675, %v3677
      %v3685 = vsel %vm2421, %v3677, %v3679
      %v3686 = vsel %vm2421, %v3679, %v3681
      %v3687 = vsel %vm2421, %v3681, %v3683
      %v3690 = vunpack.c.l.b16 %v3576
      %v3691 = vunpack.c.h.b16 %v3576
      %v3692 = vunpack.c.l.b16 %v3577
      %v3693 = vunpack.c.h.b16 %v3577
      %v3694 = vpack.c.b16 %v3692, %v3690
      %v3695 = vpack.c.b16 %v3693, %v3691
      %3696 = vrot.lane.b32.xlu0 %v3669, 44
      %v3697 = vpop.permute.xlu0 %3696
      %3698 = vrot.lane.b32.xlu0 %v3670, 44
      %v3699 = vpop.permute.xlu0 %3698
      %3700 = vrot.lane.b32.xlu0 %v3671, 44
      %v3701 = vpop.permute.xlu0 %3700
      %3702 = vrot.lane.b32.xlu0 %v3672, 44
      %v3703 = vpop.permute.xlu0 %3702
      %3704 = vrot.lane.b32.xlu0 %v3694, 44
      %v3705 = vpop.permute.xlu0 %3704
      %3706 = vrot.lane.b32.xlu0 %v3695, 44
      %v3707 = vpop.permute.xlu0 %3706
      %v3708 = vsel %vm2446, %v3697, %v3699
      %v3709 = vsel %vm2446, %v3699, %v3701
      %v3710 = vsel %vm2446, %v3701, %v3703
      %v3711 = vsel %vm2446, %v3703, %v3705
      %v3712 = vsel %vm2446, %v3705, %v3707
      %3713 = vrot.lane.b32.xlu0 %v3669, 100
      %v3714 = vpop.permute.xlu0 %3713
      %3715 = vrot.lane.b32.xlu0 %v3670, 100
      %v3716 = vpop.permute.xlu0 %3715
      %3717 = vrot.lane.b32.xlu0 %v3671, 100
      %v3718 = vpop.permute.xlu0 %3717
      %3719 = vrot.lane.b32.xlu0 %v3672, 100
      %v3720 = vpop.permute.xlu0 %3719
      %3721 = vrot.lane.b32.xlu0 %v3694, 100
      %v3722 = vpop.permute.xlu0 %3721
      %3723 = vrot.lane.b32.xlu0 %v3695, 100
      %v3724 = vpop.permute.xlu0 %3723
      %v3725 = vsel %vm1448, %v3714, %v3716
      %v3726 = vsel %vm1448, %v3716, %v3718
      %v3727 = vsel %vm1448, %v3718, %v3720
      %v3728 = vsel %vm1448, %v3720, %v3722
      %v3729 = vsel %vm1448, %v3722, %v3724
      %3730 = vrot.lane.b32.xlu0 %v3669, 97
      %v3731 = vpop.permute.xlu0 %3730
      %3732 = vrot.lane.b32.xlu0 %v3670, 97
      %v3733 = vpop.permute.xlu0 %3732
      %3734 = vrot.lane.b32.xlu0 %v3671, 97
      %v3735 = vpop.permute.xlu0 %3734
      %3736 = vrot.lane.b32.xlu0 %v3672, 97
      %v3737 = vpop.permute.xlu0 %3736
      %3738 = vrot.lane.b32.xlu0 %v3694, 97
      %v3739 = vpop.permute.xlu0 %3738
      %3740 = vrot.lane.b32.xlu0 %v3695, 97
      %v3741 = vpop.permute.xlu0 %3740
      %v3742 = vsel %vm2481, %v3731, %v3733
      %v3743 = vsel %vm2481, %v3733, %v3735
      %v3744 = vsel %vm2481, %v3735, %v3737
      %v3745 = vsel %vm2481, %v3737, %v3739
      %v3746 = vsel %vm2481, %v3739, %v3741
      %3747 = vrot.lane.b32.xlu0 %v3669, 94
      %v3748 = vpop.permute.xlu0 %3747
      %3749 = vrot.lane.b32.xlu0 %v3670, 94
      %v3750 = vpop.permute.xlu0 %3749
      %3751 = vrot.lane.b32.xlu0 %v3671, 94
      %v3752 = vpop.permute.xlu0 %3751
      %3753 = vrot.lane.b32.xlu0 %v3672, 94
      %v3754 = vpop.permute.xlu0 %3753
      %3755 = vrot.lane.b32.xlu0 %v3694, 94
      %v3756 = vpop.permute.xlu0 %3755
      %3757 = vrot.lane.b32.xlu0 %v3695, 94
      %v3758 = vpop.permute.xlu0 %3757
      %v3759 = vsel %vm2499, %v3748, %v3750
      %v3760 = vsel %vm2499, %v3750, %v3752
      %v3761 = vsel %vm2499, %v3752, %v3754
      %v3762 = vsel %vm2499, %v3754, %v3756
      %v3763 = vsel %vm2499, %v3756, %v3758
      %v3764 = vld [vmem:[%s12] sm:$0xff]
      %v3765 = vld [vmem:[%s12 + $0x8] sm:$0xff]
      %v3766 = vld [vmem:[%s13] sm:$0xff]
      %v3767 = vld [vmem:[%s13 + $0x8] sm:$0xff]
      %3769 = vset.pattern.permute.xlu0 0
      %3770 = vperm.xlu0 %3769, %v3766
      %v3771 = vpop.permute.xlu0 %3770
      %3774 = vset.pattern.permute.xlu0 0
      %3775 = vperm.xlu0 %3774, %v3767
      %v3776 = vpop.permute.xlu0 %3775
      %v3780 = vunpack.c.l.b16 %v3764
      %v3781 = vunpack.c.h.b16 %v3764
      %v3782 = vunpack.c.l.b16 %v3765
      %v3783 = vunpack.c.h.b16 %v3765
      %v3784 = vpack.c.b16 %v3782, %v3780
      %v3785 = vpack.c.b16 %v3783, %v3781
      %3787 = vrot.lane.b32.xlu0 %v3596, 81
      %v3788 = vpop.permute.xlu0 %3787
      %3789 = vrot.lane.b32.xlu0 %v3597, 81
      %v3790 = vpop.permute.xlu0 %3789
      %3791 = vrot.lane.b32.xlu0 %v3598, 81
      %v3792 = vpop.permute.xlu0 %3791
      %3793 = vrot.lane.b32.xlu0 %v3599, 81
      %v3794 = vpop.permute.xlu0 %3793
      %3795 = vrot.lane.b32.xlu0 %v3600, 81
      %v3796 = vpop.permute.xlu0 %3795
      %3797 = vrot.lane.b32.xlu0 %v3601, 81
      %v3798 = vpop.permute.xlu0 %3797
      %3799 = vrot.lane.b32.xlu0 %v3614, 81
      %v3800 = vpop.permute.xlu0 %3799
      %3801 = vrot.lane.b32.xlu0 %v3615, 81
      %v3802 = vpop.permute.xlu0 %3801
      %3803 = vrot.lane.b32.xlu0 %v3616, 81
      %v3804 = vpop.permute.xlu0 %3803
      %3805 = vrot.lane.b32.xlu0 %v3617, 81
      %v3806 = vpop.permute.xlu0 %3805
      %3807 = vrot.lane.b32.xlu0 %v3618, 81
      %v3808 = vpop.permute.xlu0 %3807
      %3809 = vrot.lane.b32.xlu0 %v3613, 81
      %v3810 = vpop.permute.xlu0 %3809
      %3811 = vrot.lane.b32.xlu0 %v3631, 81
      %v3812 = vpop.permute.xlu0 %3811
      %3813 = vrot.lane.b32.xlu0 %v3632, 81
      %v3814 = vpop.permute.xlu0 %3813
      %3815 = vrot.lane.b32.xlu0 %v3633, 81
      %v3816 = vpop.permute.xlu0 %3815
      %3817 = vrot.lane.b32.xlu0 %v3634, 81
      %v3818 = vpop.permute.xlu0 %3817
      %3819 = vrot.lane.b32.xlu0 %v3635, 81
      %v3820 = vpop.permute.xlu0 %3819
      %3821 = vrot.lane.b32.xlu0 %v3630, 81
      %v3822 = vpop.permute.xlu0 %3821
      %3823 = vrot.lane.b32.xlu0 %v3648, 81
      %v3824 = vpop.permute.xlu0 %3823
      %3825 = vrot.lane.b32.xlu0 %v3649, 81
      %v3826 = vpop.permute.xlu0 %3825
      %3827 = vrot.lane.b32.xlu0 %v3650, 81
      %v3828 = vpop.permute.xlu0 %3827
      %3829 = vrot.lane.b32.xlu0 %v3651, 81
      %v3830 = vpop.permute.xlu0 %3829
      %3831 = vrot.lane.b32.xlu0 %v3652, 81
      %v3832 = vpop.permute.xlu0 %3831
      %3833 = vrot.lane.b32.xlu0 %v3647, 81
      %v3834 = vpop.permute.xlu0 %3833
      %3835 = vrot.lane.b32.xlu0 %v3675, 81
      %v3836 = vpop.permute.xlu0 %3835
      %3837 = vrot.lane.b32.xlu0 %v3684, 81
      %v3838 = vpop.permute.xlu0 %3837
      %3839 = vrot.lane.b32.xlu0 %v3685, 81
      %v3840 = vpop.permute.xlu0 %3839
      %3841 = vrot.lane.b32.xlu0 %v3686, 81
      %v3842 = vpop.permute.xlu0 %3841
      %3843 = vrot.lane.b32.xlu0 %v3687, 81
      %v3844 = vpop.permute.xlu0 %3843
      %3845 = vrot.lane.b32.xlu0 %v3683, 81
      %v3846 = vpop.permute.xlu0 %3845
      %3847 = vrot.lane.b32.xlu0 %v3697, 81
      %v3848 = vpop.permute.xlu0 %3847
      %3849 = vrot.lane.b32.xlu0 %v3708, 81
      %v3850 = vpop.permute.xlu0 %3849
      %3851 = vrot.lane.b32.xlu0 %v3709, 81
      %v3852 = vpop.permute.xlu0 %3851
      %3853 = vrot.lane.b32.xlu0 %v3710, 81
      %v3854 = vpop.permute.xlu0 %3853
      %3855 = vrot.lane.b32.xlu0 %v3711, 81
      %v3856 = vpop.permute.xlu0 %3855
      %3857 = vrot.lane.b32.xlu0 %v3712, 81
      %v3858 = vpop.permute.xlu0 %3857
      %3859 = vrot.lane.b32.xlu0 %v3725, 81
      %v3860 = vpop.permute.xlu0 %3859
      %3861 = vrot.lane.b32.xlu0 %v3726, 81
      %v3862 = vpop.permute.xlu0 %3861
      %3863 = vrot.lane.b32.xlu0 %v3727, 81
      %v3864 = vpop.permute.xlu0 %3863
      %3865 = vrot.lane.b32.xlu0 %v3728, 81
      %v3866 = vpop.permute.xlu0 %3865
      %3867 = vrot.lane.b32.xlu0 %v3729, 81
      %v3868 = vpop.permute.xlu0 %3867
      %3869 = vrot.lane.b32.xlu0 %v3724, 81
      %v3870 = vpop.permute.xlu0 %3869
      %3871 = vrot.lane.b32.xlu0 %v3742, 81
      %v3872 = vpop.permute.xlu0 %3871
      %3873 = vrot.lane.b32.xlu0 %v3743, 81
      %v3874 = vpop.permute.xlu0 %3873
      %3875 = vrot.lane.b32.xlu0 %v3744, 81
      %v3876 = vpop.permute.xlu0 %3875
      %3877 = vrot.lane.b32.xlu0 %v3745, 81
      %v3878 = vpop.permute.xlu0 %3877
      %3879 = vrot.lane.b32.xlu0 %v3746, 81
      %v3880 = vpop.permute.xlu0 %3879
      %3881 = vrot.lane.b32.xlu0 %v3741, 81
      %v3882 = vpop.permute.xlu0 %3881
      %3883 = vrot.lane.b32.xlu0 %v3759, 81
      %v3884 = vpop.permute.xlu0 %3883
      %3885 = vrot.lane.b32.xlu0 %v3760, 81
      %v3886 = vpop.permute.xlu0 %3885
      %3887 = vrot.lane.b32.xlu0 %v3761, 81
      %v3888 = vpop.permute.xlu0 %3887
      %3889 = vrot.lane.b32.xlu0 %v3762, 81
      %v3890 = vpop.permute.xlu0 %3889
      %3891 = vrot.lane.b32.xlu0 %v3763, 81
      %v3892 = vpop.permute.xlu0 %3891
      %3893 = vrot.lane.b32.xlu0 %v3758, 81
      %v3894 = vpop.permute.xlu0 %3893
      %v3895 = vsel %vm2636, %v3788, %v3790
      %v3896 = vsel %vm2636, %v3790, %v3792
      %v3897 = vsel %vm2636, %v3792, %v3794
      %v3898 = vsel %vm2636, %v3794, %v3796
      %v3899 = vsel %vm2636, %v3796, %v3798
      %v3900 = vsel %vm2636, %v3800, %v3802
      %v3901 = vsel %vm2636, %v3802, %v3804
      %v3902 = vsel %vm2636, %v3804, %v3806
      %v3903 = vsel %vm2636, %v3806, %v3808
      %v3904 = vsel %vm2636, %v3808, %v3810
      %v3905 = vsel %vm2636, %v3812, %v3814
      %v3906 = vsel %vm2636, %v3814, %v3816
      %v3907 = vsel %vm2636, %v3816, %v3818
      %v3908 = vsel %vm2636, %v3818, %v3820
      %v3909 = vsel %vm2636, %v3820, %v3822
      %v3910 = vsel %vm2636, %v3824, %v3826
      %v3911 = vsel %vm2636, %v3826, %v3828
      %v3912 = vsel %vm2636, %v3828, %v3830
      %v3913 = vsel %vm2636, %v3830, %v3832
      %v3914 = vsel %vm2636, %v3832, %v3834
      %v3915 = vsel %vm2636, %v3836, %v3838
      %v3916 = vsel %vm2636, %v3838, %v3840
      %v3917 = vsel %vm2636, %v3840, %v3842
      %v3918 = vsel %vm2636, %v3842, %v3844
      %v3919 = vsel %vm2636, %v3844, %v3846
      %v3920 = vsel %vm2636, %v3848, %v3850
      %v3921 = vsel %vm2636, %v3850, %v3852
      %v3922 = vsel %vm2636, %v3852, %v3854
      %v3923 = vsel %vm2636, %v3854, %v3856
      %v3924 = vsel %vm2636, %v3856, %v3858
      %v3925 = vsel %vm2636, %v3860, %v3862
      %v3926 = vsel %vm2636, %v3862, %v3864
      %v3927 = vsel %vm2636, %v3864, %v3866
      %v3928 = vsel %vm2636, %v3866, %v3868
      %v3929 = vsel %vm2636, %v3868, %v3870
      %v3930 = vsel %vm2636, %v3872, %v3874
      %v3931 = vsel %vm2636, %v3874, %v3876
      %v3932 = vsel %vm2636, %v3876, %v3878
      %v3933 = vsel %vm2636, %v3878, %v3880
      %v3934 = vsel %vm2636, %v3880, %v3882
      %v3935 = vsel %vm2636, %v3884, %v3886
      %v3936 = vsel %vm2636, %v3886, %v3888
      %v3937 = vsel %vm2636, %v3888, %v3890
      %v3938 = vsel %vm2636, %v3890, %v3892
      %v3939 = vsel %vm2636, %v3892, %v3894
      %v3986 = vsel %vm992, %v3785, 0
      %3988 = vmatprep.subr.bf16.mxu0 %v3931
      %3989 = vmatpush1.bf16.msra.mxu0 %v3930
      %3990 = vmatprep.subr.bf16.mxu0 %v3926
      %3991 = vmatpush1.bf16.msra.mxu0 %v3925
      %3992 = vmatprep.subr.bf16.mxu0 %v3921
      %3993 = vmatpush1.bf16.msra.mxu0 %v3920
      %3994 = vmatprep.subr.bf16.mxu0 %v3916
      %3995 = vmatpush1.bf16.msra.mxu0 %v3915
      %3996 = vmatprep.subr.bf16.mxu0 %v3911
      %3997 = vmatpush1.bf16.msra.mxu0 %v3910
      %3998 = vmatprep.subr.bf16.mxu0 %v3906
      %3999 = vmatpush1.bf16.msra.mxu0 %v3905
      %4000 = vmatprep.subr.bf16.mxu0 %v3901
      %4001 = vmatpush1.bf16.msra.mxu0 %v3900
      %4002 = vmatprep.subr.bf16.mxu0 %v3896
      %4003 = vmatpush1.bf16.msra.mxu0 %v3895
      %4004 = vmatprep.subr.bf16.mxu0 0
      %4005 = vmatpush2.bf16.msra.mxu0 0
      %4006 = vmatprep.subr.bf16.mxu0 0
      %4007 = vmatpush2.bf16.msra.mxu0 0
      %4008 = vmatprep.subr.bf16.mxu0 0
      %4009 = vmatpush2.bf16.msra.mxu0 0
      %4010 = vmatprep.subr.bf16.mxu0 0
      %4011 = vmatpush2.bf16.msra.mxu0 0
      %4012 = vmatprep.subr.bf16.mxu0 0
      %4013 = vmatpush2.bf16.msra.mxu0 0
      %4014 = vmatprep.subr.bf16.mxu0 0
      %4015 = vmatpush2.bf16.msra.mxu0 0
      %4016 = vmatprep.subr.bf16.mxu0 0
      %4017 = vmatpush2.bf16.msra.mxu0 0
      %4018 = vmatprep.subr.bf16.mxu0 %v3936
      %4019 = vmatpush2.bf16.msra.mxu0 %v3935
      %4020 = vmatprep.mubr.bf16.mxu0 %v3986
      %4021 = vmatmul.mubr.bf16.gmra.mxu0 %v3784
      %v4022 = vpop.f32.mrf.mxu0
      %v4023 = vadd.f32 %v3771, %v4022
      %v4024 = vpop.f32.mrf.mxu0
      %v4025 = vadd.f32 %v3771, %v4024
      %v4026 = vpop.f32.mrf.mxu0
      %v4027 = vadd.f32 %v3776, %v4026
      %v4028 = vpop.f32.mrf.mxu0
      %v4029 = vadd.f32 %v3776, %v4028
      %4030 = vdwg.mxu0
      %4031 = vmatprep.subr.bf16.mxu0 %v3933
      %4032 = vmatpush1.bf16.msra.mxu0 %v3932
      %4033 = vmatprep.subr.bf16.mxu0 %v3928
      %4034 = vmatpush1.bf16.msra.mxu0 %v3927
      %4035 = vmatprep.subr.bf16.mxu0 %v3923
      %4036 = vmatpush1.bf16.msra.mxu0 %v3922
      %4037 = vmatprep.subr.bf16.mxu0 %v3918
      %4038 = vmatpush1.bf16.msra.mxu0 %v3917
      %4039 = vmatprep.subr.bf16.mxu0 %v3913
      %4040 = vmatpush1.bf16.msra.mxu0 %v3912
      %4041 = vmatprep.subr.bf16.mxu0 %v3908
      %4042 = vmatpush1.bf16.msra.mxu0 %v3907
      %4043 = vmatprep.subr.bf16.mxu0 %v3903
      %4044 = vmatpush1.bf16.msra.mxu0 %v3902
      %4045 = vmatprep.subr.bf16.mxu0 %v3898
      %4046 = vmatpush1.bf16.msra.mxu0 %v3897
      %4047 = vmatprep.subr.bf16.mxu0 0
      %4048 = vmatpush2.bf16.msra.mxu0 0
      %4049 = vmatprep.subr.bf16.mxu0 0
      %4050 = vmatpush2.bf16.msra.mxu0 0
      %4051 = vmatprep.subr.bf16.mxu0 0
      %4052 = vmatpush2.bf16.msra.mxu0 0
      %4053 = vmatprep.subr.bf16.mxu0 0
      %4054 = vmatpush2.bf16.msra.mxu0 0
      %4055 = vmatprep.subr.bf16.mxu0 0
      %4056 = vmatpush2.bf16.msra.mxu0 0
      %4057 = vmatprep.subr.bf16.mxu0 0
      %4058 = vmatpush2.bf16.msra.mxu0 0
      %4059 = vmatprep.subr.bf16.mxu0 0
      %4060 = vmatpush2.bf16.msra.mxu0 0
      %4061 = vmatprep.subr.bf16.mxu0 %v3938
      %4062 = vmatpush2.bf16.msra.mxu0 %v3937
      %4063 = vmatprep.mubr.bf16.mxu0 %v3986
      %4064 = vmatmul.mubr.bf16.gmra.mxu0 %v3784
      %v4065 = vpop.f32.mrf.mxu0
      %v4066 = vadd.f32 %v3771, %v4065
      %v4067 = vpop.f32.mrf.mxu0
      %v4068 = vadd.f32 %v3771, %v4067
      %v4069 = vpop.f32.mrf.mxu0
      %v4070 = vadd.f32 %v3776, %v4069
      %v4071 = vpop.f32.mrf.mxu0
      %v4072 = vadd.f32 %v3776, %v4071
      %4073 = vdwg.mxu0
      %4074 = vmatprep.subr.bf16.mxu0 0
      %4075 = vmatpush1.bf16.msra.mxu0 %v3934
      %4076 = vmatprep.subr.bf16.mxu0 0
      %4077 = vmatpush1.bf16.msra.mxu0 %v3929
      %4078 = vmatprep.subr.bf16.mxu0 0
      %4079 = vmatpush1.bf16.msra.mxu0 %v3924
      %4080 = vmatprep.subr.bf16.mxu0 0
      %4081 = vmatpush1.bf16.msra.mxu0 %v3919
      %4082 = vmatprep.subr.bf16.mxu0 0
      %4083 = vmatpush1.bf16.msra.mxu0 %v3914
      %4084 = vmatprep.subr.bf16.mxu0 0
      %4085 = vmatpush1.bf16.msra.mxu0 %v3909
      %4086 = vmatprep.subr.bf16.mxu0 0
      %4087 = vmatpush1.bf16.msra.mxu0 %v3904
      %4088 = vmatprep.subr.bf16.mxu0 0
      %4089 = vmatpush1.bf16.msra.mxu0 %v3899
      %4090 = vmatprep.subr.bf16.mxu0 0
      %4091 = vmatpush2.bf16.msra.mxu0 0
      %4092 = vmatprep.subr.bf16.mxu0 0
      %4093 = vmatpush2.bf16.msra.mxu0 0
      %4094 = vmatprep.subr.bf16.mxu0 0
      %4095 = vmatpush2.bf16.msra.mxu0 0
      %4096 = vmatprep.subr.bf16.mxu0 0
      %4097 = vmatpush2.bf16.msra.mxu0 0
      %4098 = vmatprep.subr.bf16.mxu0 0
      %4099 = vmatpush2.bf16.msra.mxu0 0
      %4100 = vmatprep.subr.bf16.mxu0 0
      %4101 = vmatpush2.bf16.msra.mxu0 0
      %4102 = vmatprep.subr.bf16.mxu0 0
      %4103 = vmatpush2.bf16.msra.mxu0 0
      %4104 = vmatprep.subr.bf16.mxu0 0
      %4105 = vmatpush2.bf16.msra.mxu0 %v3939
      %4106 = vmatprep.mubr.bf16.mxu0 %v3986
      %4107 = vmatmul.mubr.bf16.gmra.mxu0 %v3784
      %v4108 = vpop.f32.mrf.mxu0
      %v4109 = vadd.f32 %v3771, %v4108
      %v4110 = vpop.f32.mrf.mxu0
      %v4111 = vpop.f32.mrf.mxu0
      %v4112 = vadd.f32 %v3776, %v4111
      %v4113 = vpop.f32.mrf.mxu0
      %4114 = vdwg.mxu0
      %v4115 = vld [vmem:[%s22] sm:$0xf]
      %v4116 = vld [vmem:[%s22 + $0x4] sm:$0xf]
      %v4117 = vpack.c.bf16 %v4027, %v4023
      %v4118 = vpack.c.bf16 %v4029, %v4025
      %v4119 = vpack.c.bf16 %v4070, %v4066
      %v4120 = vpack.c.bf16 %v4072, %v4068
      %v4121 = vpack.c.bf16 %v4112, %v4109
      %v4124 = vunpack.c.l.b16 %v4115
      %v4125 = vunpack.c.l.b16 %v4116
      %v4126 = vpack.c.b16 %v4125, %v4124
      %v4128 = vsel %vm992, %v4126, 0
      %4130 = vmatprep.subr.bf16.mxu0 0
      %4131 = vmatpush1.bf16.msra.mxu0 0
      %4132 = vmatprep.subr.bf16.mxu0 0
      %4133 = vmatpush1.bf16.msra.mxu0 0
      %4134 = vmatprep.subr.bf16.mxu0 0
      %4135 = vmatpush1.bf16.msra.mxu0 0
      %4136 = vmatprep.subr.bf16.mxu0 0
      %4137 = vmatpush1.bf16.msra.mxu0 0
      %4138 = vmatprep.subr.bf16.mxu0 0
      %4139 = vmatpush1.bf16.msra.mxu0 0
      %4140 = vmatprep.subr.bf16.mxu0 0
      %4141 = vmatpush1.bf16.msra.mxu0 0
      %4142 = vmatprep.subr.bf16.mxu0 0
      %4143 = vmatpush1.bf16.msra.mxu0 0
      %4144 = vmatprep.subr.bf16.mxu0 %v4118
      %4145 = vmatpush1.bf16.msra.mxu0 %v4117
      %4146 = vmatprep.subr.bf16.mxu0 0
      %4147 = vmatpush2.bf16.msra.mxu0 0
      %4148 = vmatprep.subr.bf16.mxu0 0
      %4149 = vmatpush2.bf16.msra.mxu0 0
      %4150 = vmatprep.subr.bf16.mxu0 0
      %4151 = vmatpush2.bf16.msra.mxu0 0
      %4152 = vmatprep.subr.bf16.mxu0 0
      %4153 = vmatpush2.bf16.msra.mxu0 0
      %4154 = vmatprep.subr.bf16.mxu0 0
      %4155 = vmatpush2.bf16.msra.mxu0 0
      %4156 = vmatprep.subr.bf16.mxu0 0
      %4157 = vmatpush2.bf16.msra.mxu0 0
      %4158 = vmatprep.subr.bf16.mxu0 0
      %4159 = vmatpush2.bf16.msra.mxu0 0
      %4160 = vmatprep.subr.bf16.mxu0 0
      %4161 = vmatpush2.bf16.msra.mxu0 0
      %4162 = vmatprep.mubr.bf16.mxu0 0
      %4163 = vmatmul.mubr.bf16.gmra.mxu0 %v4128
      %v4164 = vpop.f32.mrf.mxu0
      %v4165 = vadd.f32 0.0, %v4164
      %v4166 = vpop.f32.mrf.mxu0
      %v4167 = vadd.f32 0.0, %v4166
      %v4168 = vpop.f32.mrf.mxu0
      %v4169 = vadd.f32 0.0, %v4168
      %v4170 = vpop.f32.mrf.mxu0
      %v4171 = vadd.f32 0.0, %v4170
      %4172 = vdwg.mxu0
      %4173 = vmatprep.subr.bf16.mxu0 0
      %4174 = vmatpush1.bf16.msra.mxu0 0
      %4175 = vmatprep.subr.bf16.mxu0 0
      %4176 = vmatpush1.bf16.msra.mxu0 0
      %4177 = vmatprep.subr.bf16.mxu0 0
      %4178 = vmatpush1.bf16.msra.mxu0 0
      %4179 = vmatprep.subr.bf16.mxu0 0
      %4180 = vmatpush1.bf16.msra.mxu0 0
      %4181 = vmatprep.subr.bf16.mxu0 0
      %4182 = vmatpush1.bf16.msra.mxu0 0
      %4183 = vmatprep.subr.bf16.mxu0 0
      %4184 = vmatpush1.bf16.msra.mxu0 0
      %4185 = vmatprep.subr.bf16.mxu0 0
      %4186 = vmatpush1.bf16.msra.mxu0 0
      %4187 = vmatprep.subr.bf16.mxu0 %v4120
      %4188 = vmatpush1.bf16.msra.mxu0 %v4119
      %4189 = vmatprep.subr.bf16.mxu0 0
      %4190 = vmatpush2.bf16.msra.mxu0 0
      %4191 = vmatprep.subr.bf16.mxu0 0
      %4192 = vmatpush2.bf16.msra.mxu0 0
      %4193 = vmatprep.subr.bf16.mxu0 0
      %4194 = vmatpush2.bf16.msra.mxu0 0
      %4195 = vmatprep.subr.bf16.mxu0 0
      %4196 = vmatpush2.bf16.msra.mxu0 0
      %4197 = vmatprep.subr.bf16.mxu0 0
      %4198 = vmatpush2.bf16.msra.mxu0 0
      %4199 = vmatprep.subr.bf16.mxu0 0
      %4200 = vmatpush2.bf16.msra.mxu0 0
      %4201 = vmatprep.subr.bf16.mxu0 0
      %4202 = vmatpush2.bf16.msra.mxu0 0
      %4203 = vmatprep.subr.bf16.mxu0 0
      %4204 = vmatpush2.bf16.msra.mxu0 0
      %4205 = vmatprep.mubr.bf16.mxu0 0
      %4206 = vmatmul.mubr.bf16.gmra.mxu0 %v4128
      %v4207 = vpop.f32.mrf.mxu0
      %v4208 = vadd.f32 0.0, %v4207
      %v4209 = vpop.f32.mrf.mxu0
      %v4210 = vadd.f32 0.0, %v4209
      %v4211 = vpop.f32.mrf.mxu0
      %v4212 = vadd.f32 0.0, %v4211
      %v4213 = vpop.f32.mrf.mxu0
      %v4214 = vadd.f32 0.0, %v4213
      %4215 = vdwg.mxu0
      %4216 = vmatprep.subr.bf16.mxu0 0
      %4217 = vmatpush1.bf16.msra.mxu0 0
      %4218 = vmatprep.subr.bf16.mxu0 0
      %4219 = vmatpush1.bf16.msra.mxu0 0
      %4220 = vmatprep.subr.bf16.mxu0 0
      %4221 = vmatpush1.bf16.msra.mxu0 0
      %4222 = vmatprep.subr.bf16.mxu0 0
      %4223 = vmatpush1.bf16.msra.mxu0 0
      %4224 = vmatprep.subr.bf16.mxu0 0
      %4225 = vmatpush1.bf16.msra.mxu0 0
      %4226 = vmatprep.subr.bf16.mxu0 0
      %4227 = vmatpush1.bf16.msra.mxu0 0
      %4228 = vmatprep.subr.bf16.mxu0 0
      %4229 = vmatpush1.bf16.msra.mxu0 0
      %4230 = vmatprep.subr.bf16.mxu0 0
      %4231 = vmatpush1.bf16.msra.mxu0 %v4121
      %4232 = vmatprep.subr.bf16.mxu0 0
      %4233 = vmatpush2.bf16.msra.mxu0 0
      %4234 = vmatprep.subr.bf16.mxu0 0
      %4235 = vmatpush2.bf16.msra.mxu0 0
      %4236 = vmatprep.subr.bf16.mxu0 0
      %4237 = vmatpush2.bf16.msra.mxu0 0
      %4238 = vmatprep.subr.bf16.mxu0 0
      %4239 = vmatpush2.bf16.msra.mxu0 0
      %4240 = vmatprep.subr.bf16.mxu0 0
      %4241 = vmatpush2.bf16.msra.mxu0 0
      %4242 = vmatprep.subr.bf16.mxu0 0
      %4243 = vmatpush2.bf16.msra.mxu0 0
      %4244 = vmatprep.subr.bf16.mxu0 0
      %4245 = vmatpush2.bf16.msra.mxu0 0
      %4246 = vmatprep.subr.bf16.mxu0 0
      %4247 = vmatpush2.bf16.msra.mxu0 0
      %4248 = vmatprep.mubr.bf16.mxu0 0
      %4249 = vmatmul.mubr.bf16.gmra.mxu0 %v4128
      %v4250 = vpop.f32.mrf.mxu0
      %v4251 = vadd.f32 0.0, %v4250
      %v4252 = vpop.f32.mrf.mxu0
      %v4253 = vpop.f32.mrf.mxu0
      %v4254 = vadd.f32 0.0, %v4253
      %v4255 = vpop.f32.mrf.mxu0
      %4256 = vdwg.mxu0
      %v4257 = vadd.f32 %v3042, %v4165
      %v4258 = vadd.f32 %v3044, %v4167
      %v4259 = vadd.f32 %v3085, %v4208
      %v4260 = vadd.f32 %v3087, %v4210
      %v4261 = vadd.f32 %v3128, %v4251
      %v4262 = vadd.f32 %v3046, %v4169
      %v4263 = vadd.f32 %v3048, %v4171
      %v4264 = vadd.f32 %v3089, %v4212
      %v4265 = vadd.f32 %v3091, %v4214
      %v4266 = vadd.f32 %v3131, %v4254
      %v4267 = vmax.f32 %v1070, 0.0
      %v4268 = vmax.f32 %v1072, 0.0
      %v4269 = vmax.f32 %v1143, 0.0
      %v4270 = vmax.f32 %v1145, 0.0
      %v4271 = vmax.f32 %v1210, 0.0
      %v4272 = vmax.f32 %v1074, 0.0
      %v4273 = vmax.f32 %v1076, 0.0
      %v4274 = vmax.f32 %v1147, 0.0
      %v4275 = vmax.f32 %v1149, 0.0
      %v4276 = vmax.f32 %v1213, 0.0
      %v4277 = vmul.f32 %v4267, %v1230
      %v4278 = vmul.f32 %v4268, %v1234
      %v4279 = vmul.f32 %v4269, %v1238
      %v4280 = vmul.f32 %v4270, %v1242
      %v4281 = vmul.f32 %v4271, %v1246
      %v4282 = vmul.f32 %v4272, %v1230
      %v4283 = vmul.f32 %v4273, %v1234
      %v4284 = vmul.f32 %v4274, %v1238
      %v4285 = vmul.f32 %v4275, %v1242
      %v4286 = vmul.f32 %v4276, %v1246
      %v4287 = vpack.c.bf16 %v4282, %v4277
      %v4288 = vpack.c.bf16 %v4283, %v4278
      %v4289 = vpack.c.bf16 %v4284, %v4279
      %v4290 = vpack.c.bf16 %v4285, %v4280
      %v4291 = vpack.c.bf16 %v4286, %v4281
      %v4297 = vunpack.c.l.b16 %v4287
      %v4298 = vunpack.c.l.b16 %v4288
      %v4299 = vunpack.c.l.b16 %v4289
      %v4300 = vunpack.c.l.b16 %v4290
      %v4301 = vunpack.c.l.b16 %v4291
      %v4302 = vunpack.c.h.b16 %v4287
      %v4303 = vunpack.c.h.b16 %v4288
      %v4304 = vunpack.c.h.b16 %v4289
      %v4305 = vunpack.c.h.b16 %v4290
      %v4306 = vunpack.c.h.b16 %v4291
      %v4307 = vpack.c.b16 %v4298, %v4297
      %v4308 = vpack.c.b16 %v4300, %v4299
      %v4309 = vpack.c.b16 %v4301, %v4301
      %v4310 = vpack.c.b16 %v4303, %v4302
      %v4311 = vpack.c.b16 %v4305, %v4304
      %v4312 = vpack.c.b16 %v4306, %v4306
      %4319 = vst [vmem:[#allocation2 + $0x8] sm:$0xff] %v4307
      %4320 = vst [vmem:[#allocation2 + $0x10] sm:$0xff] %v4308
      %4321 = vst [vmem:[#allocation2 + $0x18] sm:$0xf] %v4309
      %4322 = vst [vmem:[#allocation2 + $0x2c] sm:$0xff] %v4310
      %4323 = vst [vmem:[#allocation2 + $0x34] sm:$0xff] %v4311
      %4324 = vst [vmem:[#allocation2 + $0x3c] sm:$0xf] %v4312
      %v4325 = vld [vmem:[#allocation2 + $0x4] sm:$0xff]
      %v4326 = vld [vmem:[#allocation2 + $0xc] sm:$0xff]
      %v4327 = vld [vmem:[#allocation2 + $0x14] sm:$0xff]
      %v4328 = vld [vmem:[#allocation2 + $0x28] sm:$0xff]
      %v4329 = vld [vmem:[#allocation2 + $0x30] sm:$0xff]
      %v4330 = vld [vmem:[#allocation2 + $0x38] sm:$0xff]
      %v4331 = vld [vmem:[#allocation2 + $0x8] sm:$0xff]
      %v4332 = vld [vmem:[#allocation2 + $0x10] sm:$0xff]
      %v4333 = vld [vmem:[#allocation2 + $0x18] sm:$0xf]
      %v4334 = vld [vmem:[#allocation2 + $0x2c] sm:$0xff]
      %v4335 = vld [vmem:[#allocation2 + $0x34] sm:$0xff]
      %v4336 = vld [vmem:[#allocation2 + $0x3c] sm:$0xf]
      %v4337 = vld [vmem:[#allocation2 + $0x18] sm:$0xff]
      %v4338 = vld [vmem:[#allocation2 + $0x3c] sm:$0xff]
      %v4345 = vunpack.c.l.b16 %v4325
      %v4346 = vunpack.c.h.b16 %v4325
      %v4347 = vunpack.c.l.b16 %v4326
      %v4348 = vunpack.c.h.b16 %v4326
      %v4349 = vunpack.c.l.b16 %v4327
      %v4350 = vunpack.c.h.b16 %v4327
      %v4351 = vunpack.c.l.b16 %v4328
      %v4352 = vunpack.c.h.b16 %v4328
      %v4353 = vunpack.c.l.b16 %v4329
      %v4354 = vunpack.c.h.b16 %v4329
      %v4355 = vunpack.c.l.b16 %v4330
      %v4356 = vunpack.c.h.b16 %v4330
      %v4357 = vpack.c.b16 %v4351, %v4345
      %v4358 = vpack.c.b16 %v4352, %v4346
      %v4359 = vpack.c.b16 %v4353, %v4347
      %v4360 = vpack.c.b16 %v4354, %v4348
      %v4361 = vpack.c.b16 %v4355, %v4349
      %v4362 = vpack.c.b16 %v4356, %v4350
      %v4369 = vunpack.c.l.b16 %v4331
      %v4370 = vunpack.c.h.b16 %v4331
      %v4371 = vunpack.c.l.b16 %v4332
      %v4372 = vunpack.c.h.b16 %v4332
      %v4373 = vunpack.c.l.b16 %v4333
      %v4374 = vunpack.c.l.b16 %v4334
      %v4375 = vunpack.c.h.b16 %v4334
      %v4376 = vunpack.c.l.b16 %v4335
      %v4377 = vunpack.c.h.b16 %v4335
      %v4378 = vunpack.c.l.b16 %v4336
      %v4379 = vpack.c.b16 %v4374, %v4369
      %v4380 = vpack.c.b16 %v4375, %v4370
      %v4381 = vpack.c.b16 %v4376, %v4371
      %v4382 = vpack.c.b16 %v4377, %v4372
      %v4383 = vpack.c.b16 %v4378, %v4373
      %4384 = vrot.lane.b32.xlu0 %v4379, 127
      %v4385 = vpop.permute.xlu0 %4384
      %4386 = vrot.lane.b32.xlu0 %v4380, 127
      %v4387 = vpop.permute.xlu0 %4386
      %4388 = vrot.lane.b32.xlu0 %v4381, 127
      %v4389 = vpop.permute.xlu0 %4388
      %4390 = vrot.lane.b32.xlu0 %v4382, 127
      %v4391 = vpop.permute.xlu0 %4390
      %4392 = vrot.lane.b32.xlu0 %v4383, 127
      %v4393 = vpop.permute.xlu0 %4392
      %v4394 = vsel %vm1350, %v4385, %v4387
      %v4395 = vsel %vm1350, %v4387, %v4389
      %v4396 = vsel %vm1350, %v4389, %v4391
      %v4397 = vsel %vm1350, %v4391, %v4393
      %v4400 = vunpack.c.l.b16 %v4337
      %v4401 = vunpack.c.h.b16 %v4337
      %v4402 = vunpack.c.l.b16 %v4338
      %v4403 = vunpack.c.h.b16 %v4338
      %v4404 = vpack.c.b16 %v4402, %v4400
      %v4405 = vpack.c.b16 %v4403, %v4401
      %4406 = vrot.lane.b32.xlu0 %v4379, 126
      %v4407 = vpop.permute.xlu0 %4406
      %4408 = vrot.lane.b32.xlu0 %v4380, 126
      %v4409 = vpop.permute.xlu0 %4408
      %4410 = vrot.lane.b32.xlu0 %v4381, 126
      %v4411 = vpop.permute.xlu0 %4410
      %4412 = vrot.lane.b32.xlu0 %v4382, 126
      %v4413 = vpop.permute.xlu0 %4412
      %4414 = vrot.lane.b32.xlu0 %v4404, 126
      %v4415 = vpop.permute.xlu0 %4414
      %4416 = vrot.lane.b32.xlu0 %v4405, 126
      %v4417 = vpop.permute.xlu0 %4416
      %v4418 = vsel %vm1368, %v4407, %v4409
      %v4419 = vsel %vm1368, %v4409, %v4411
      %v4420 = vsel %vm1368, %v4411, %v4413
      %v4421 = vsel %vm1368, %v4413, %v4415
      %v4422 = vsel %vm1368, %v4415, %v4417
      %v4423 = vld [vmem:[%s14] sm:$0xf]
      %v4424 = vld [vmem:[%s14 + $0x4] sm:$0xf]
      %v4425 = vld [vmem:[%s15] sm:$0xff]
      %v4426 = vld [vmem:[%s15 + $0x8] sm:$0xff]
      %4428 = vset.pattern.permute.xlu0 0
      %4429 = vperm.xlu0 %4428, %v4425
      %v4430 = vpop.permute.xlu0 %4429
      %4433 = vset.pattern.permute.xlu0 0
      %4434 = vperm.xlu0 %4433, %v4426
      %v4435 = vpop.permute.xlu0 %4434
      %v4439 = vunpack.c.l.b16 %v4423
      %v4440 = vunpack.c.l.b16 %v4424
      %v4441 = vpack.c.b16 %v4440, %v4439
      %4442 = vrot.lane.b32.xlu0 %v4357, 1
      %v4443 = vpop.permute.xlu0 %4442
      %4444 = vrot.lane.b32.xlu0 %v4358, 1
      %v4445 = vpop.permute.xlu0 %4444
      %4446 = vrot.lane.b32.xlu0 %v4359, 1
      %v4447 = vpop.permute.xlu0 %4446
      %4448 = vrot.lane.b32.xlu0 %v4360, 1
      %v4449 = vpop.permute.xlu0 %4448
      %4450 = vrot.lane.b32.xlu0 %v4361, 1
      %v4451 = vpop.permute.xlu0 %4450
      %4452 = vrot.lane.b32.xlu0 %v4362, 1
      %v4453 = vpop.permute.xlu0 %4452
      %4454 = vrot.lane.b32.xlu0 %v4385, 1
      %v4455 = vpop.permute.xlu0 %4454
      %4456 = vrot.lane.b32.xlu0 %v4394, 1
      %v4457 = vpop.permute.xlu0 %4456
      %4458 = vrot.lane.b32.xlu0 %v4395, 1
      %v4459 = vpop.permute.xlu0 %4458
      %4460 = vrot.lane.b32.xlu0 %v4396, 1
      %v4461 = vpop.permute.xlu0 %4460
      %4462 = vrot.lane.b32.xlu0 %v4397, 1
      %v4463 = vpop.permute.xlu0 %4462
      %4464 = vrot.lane.b32.xlu0 %v4393, 1
      %v4465 = vpop.permute.xlu0 %4464
      %4466 = vrot.lane.b32.xlu0 %v4407, 1
      %v4467 = vpop.permute.xlu0 %4466
      %4468 = vrot.lane.b32.xlu0 %v4418, 1
      %v4469 = vpop.permute.xlu0 %4468
      %4470 = vrot.lane.b32.xlu0 %v4419, 1
      %v4471 = vpop.permute.xlu0 %4470
      %4472 = vrot.lane.b32.xlu0 %v4420, 1
      %v4473 = vpop.permute.xlu0 %4472
      %4474 = vrot.lane.b32.xlu0 %v4421, 1
      %v4475 = vpop.permute.xlu0 %4474
      %4476 = vrot.lane.b32.xlu0 %v4422, 1
      %v4477 = vpop.permute.xlu0 %4476
      %v4478 = vsel %vm3345, %v4443, %v4445
      %v4479 = vsel %vm3345, %v4445, %v4447
      %v4480 = vsel %vm3345, %v4447, %v4449
      %v4481 = vsel %vm3345, %v4449, %v4451
      %v4482 = vsel %vm3345, %v4451, %v4453
      %v4483 = vsel %vm3345, %v4455, %v4457
      %v4484 = vsel %vm3345, %v4457, %v4459
      %v4485 = vsel %vm3345, %v4459, %v4461
      %v4486 = vsel %vm3345, %v4461, %v4463
      %v4487 = vsel %vm3345, %v4463, %v4465
      %v4488 = vsel %vm3345, %v4467, %v4469
      %v4489 = vsel %vm3345, %v4469, %v4471
      %v4490 = vsel %vm3345, %v4471, %v4473
      %v4491 = vsel %vm3345, %v4473, %v4475
      %v4492 = vsel %vm3345, %v4475, %v4477
      %v4509 = vsel %vm2109, %v4441, 0
      %4511 = vmatprep.subr.bf16.mxu0 0
      %4512 = vmatpush1.bf16.msra.mxu0 0
      %4513 = vmatprep.subr.bf16.mxu0 0
      %4514 = vmatpush1.bf16.msra.mxu0 0
      %4515 = vmatprep.subr.bf16.mxu0 0
      %4516 = vmatpush1.bf16.msra.mxu0 0
      %4517 = vmatprep.subr.bf16.mxu0 0
      %4518 = vmatpush1.bf16.msra.mxu0 0
      %4519 = vmatprep.subr.bf16.mxu0 0
      %4520 = vmatpush1.bf16.msra.mxu0 0
      %4521 = vmatprep.subr.bf16.mxu0 %v4489
      %4522 = vmatpush1.bf16.msra.mxu0 %v4488
      %4523 = vmatprep.subr.bf16.mxu0 %v4484
      %4524 = vmatpush1.bf16.msra.mxu0 %v4483
      %4525 = vmatprep.subr.bf16.mxu0 %v4479
      %4526 = vmatpush1.bf16.msra.mxu0 %v4478
      %4527 = vmatprep.subr.bf16.mxu0 0
      %4528 = vmatpush2.bf16.msra.mxu0 0
      %4529 = vmatprep.subr.bf16.mxu0 0
      %4530 = vmatpush2.bf16.msra.mxu0 0
      %4531 = vmatprep.subr.bf16.mxu0 0
      %4532 = vmatpush2.bf16.msra.mxu0 0
      %4533 = vmatprep.subr.bf16.mxu0 0
      %4534 = vmatpush2.bf16.msra.mxu0 0
      %4535 = vmatprep.subr.bf16.mxu0 0
      %4536 = vmatpush2.bf16.msra.mxu0 0
      %4537 = vmatprep.subr.bf16.mxu0 0
      %4538 = vmatpush2.bf16.msra.mxu0 0
      %4539 = vmatprep.subr.bf16.mxu0 0
      %4540 = vmatpush2.bf16.msra.mxu0 0
      %4541 = vmatprep.subr.bf16.mxu0 0
      %4542 = vmatpush2.bf16.msra.mxu0 0
      %4543 = vmatprep.mubr.bf16.mxu0 0
      %4544 = vmatmul.mubr.bf16.gmra.mxu0 %v4509
      %v4545 = vpop.f32.mrf.mxu0
      %v4546 = vadd.f32 %v4430, %v4545
      %v4547 = vpop.f32.mrf.mxu0
      %v4548 = vadd.f32 %v4430, %v4547
      %v4549 = vpop.f32.mrf.mxu0
      %v4550 = vadd.f32 %v4435, %v4549
      %v4551 = vpop.f32.mrf.mxu0
      %v4552 = vadd.f32 %v4435, %v4551
      %4553 = vdwg.mxu0
      %4554 = vmatprep.subr.bf16.mxu0 0
      %4555 = vmatpush1.bf16.msra.mxu0 0
      %4556 = vmatprep.subr.bf16.mxu0 0
      %4557 = vmatpush1.bf16.msra.mxu0 0
      %4558 = vmatprep.subr.bf16.mxu0 0
      %4559 = vmatpush1.bf16.msra.mxu0 0
      %4560 = vmatprep.subr.bf16.mxu0 0
      %4561 = vmatpush1.bf16.msra.mxu0 0
      %4562 = vmatprep.subr.bf16.mxu0 0
      %4563 = vmatpush1.bf16.msra.mxu0 0
      %4564 = vmatprep.subr.bf16.mxu0 %v4491
      %4565 = vmatpush1.bf16.msra.mxu0 %v4490
      %4566 = vmatprep.subr.bf16.mxu0 %v4486
      %4567 = vmatpush1.bf16.msra.mxu0 %v4485
      %4568 = vmatprep.subr.bf16.mxu0 %v4481
      %4569 = vmatpush1.bf16.msra.mxu0 %v4480
      %4570 = vmatprep.subr.bf16.mxu0 0
      %4571 = vmatpush2.bf16.msra.mxu0 0
      %4572 = vmatprep.subr.bf16.mxu0 0
      %4573 = vmatpush2.bf16.msra.mxu0 0
      %4574 = vmatprep.subr.bf16.mxu0 0
      %4575 = vmatpush2.bf16.msra.mxu0 0
      %4576 = vmatprep.subr.bf16.mxu0 0
      %4577 = vmatpush2.bf16.msra.mxu0 0
      %4578 = vmatprep.subr.bf16.mxu0 0
      %4579 = vmatpush2.bf16.msra.mxu0 0
      %4580 = vmatprep.subr.bf16.mxu0 0
      %4581 = vmatpush2.bf16.msra.mxu0 0
      %4582 = vmatprep.subr.bf16.mxu0 0
      %4583 = vmatpush2.bf16.msra.mxu0 0
      %4584 = vmatprep.subr.bf16.mxu0 0
      %4585 = vmatpush2.bf16.msra.mxu0 0
      %4586 = vmatprep.mubr.bf16.mxu0 0
      %4587 = vmatmul.mubr.bf16.gmra.mxu0 %v4509
      %v4588 = vpop.f32.mrf.mxu0
      %v4589 = vadd.f32 %v4430, %v4588
      %v4590 = vpop.f32.mrf.mxu0
      %v4591 = vadd.f32 %v4430, %v4590
      %v4592 = vpop.f32.mrf.mxu0
      %v4593 = vadd.f32 %v4435, %v4592
      %v4594 = vpop.f32.mrf.mxu0
      %v4595 = vadd.f32 %v4435, %v4594
      %4596 = vdwg.mxu0
      %4597 = vmatprep.subr.bf16.mxu0 0
      %4598 = vmatpush1.bf16.msra.mxu0 0
      %4599 = vmatprep.subr.bf16.mxu0 0
      %4600 = vmatpush1.bf16.msra.mxu0 0
      %4601 = vmatprep.subr.bf16.mxu0 0
      %4602 = vmatpush1.bf16.msra.mxu0 0
      %4603 = vmatprep.subr.bf16.mxu0 0
      %4604 = vmatpush1.bf16.msra.mxu0 0
      %4605 = vmatprep.subr.bf16.mxu0 0
      %4606 = vmatpush1.bf16.msra.mxu0 0
      %4607 = vmatprep.subr.bf16.mxu0 0
      %4608 = vmatpush1.bf16.msra.mxu0 %v4492
      %4609 = vmatprep.subr.bf16.mxu0 0
      %4610 = vmatpush1.bf16.msra.mxu0 %v4487
      %4611 = vmatprep.subr.bf16.mxu0 0
      %4612 = vmatpush1.bf16.msra.mxu0 %v4482
      %4613 = vmatprep.subr.bf16.mxu0 0
      %4614 = vmatpush2.bf16.msra.mxu0 0
      %4615 = vmatprep.subr.bf16.mxu0 0
      %4616 = vmatpush2.bf16.msra.mxu0 0
      %4617 = vmatprep.subr.bf16.mxu0 0
      %4618 = vmatpush2.bf16.msra.mxu0 0
      %4619 = vmatprep.subr.bf16.mxu0 0
      %4620 = vmatpush2.bf16.msra.mxu0 0
      %4621 = vmatprep.subr.bf16.mxu0 0
      %4622 = vmatpush2.bf16.msra.mxu0 0
      %4623 = vmatprep.subr.bf16.mxu0 0
      %4624 = vmatpush2.bf16.msra.mxu0 0
      %4625 = vmatprep.subr.bf16.mxu0 0
      %4626 = vmatpush2.bf16.msra.mxu0 0
      %4627 = vmatprep.subr.bf16.mxu0 0
      %4628 = vmatpush2.bf16.msra.mxu0 0
      %4629 = vmatprep.mubr.bf16.mxu0 0
      %4630 = vmatmul.mubr.bf16.gmra.mxu0 %v4509
      %v4631 = vpop.f32.mrf.mxu0
      %v4632 = vadd.f32 %v4430, %v4631
      %v4633 = vpop.f32.mrf.mxu0
      %v4634 = vpop.f32.mrf.mxu0
      %v4635 = vadd.f32 %v4435, %v4634
      %v4636 = vpop.f32.mrf.mxu0
      %4637 = vdwg.mxu0
      %v4638 = vmax.f32 %v4546, 0.0
      %v4639 = vmax.f32 %v4548, 0.0
      %v4640 = vmax.f32 %v4589, 0.0
      %v4641 = vmax.f32 %v4591, 0.0
      %v4642 = vmax.f32 %v4632, 0.0
      %v4643 = vmax.f32 %v4550, 0.0
      %v4644 = vmax.f32 %v4552, 0.0
      %v4645 = vmax.f32 %v4593, 0.0
      %v4646 = vmax.f32 %v4595, 0.0
      %v4647 = vmax.f32 %v4635, 0.0
      %v4648 = vmul.f32 %v4638, %v1230
      %v4649 = vmul.f32 %v4639, %v1234
      %v4650 = vmul.f32 %v4640, %v1238
      %v4651 = vmul.f32 %v4641, %v1242
      %v4652 = vmul.f32 %v4642, %v1246
      %v4653 = vmul.f32 %v4643, %v1230
      %v4654 = vmul.f32 %v4644, %v1234
      %v4655 = vmul.f32 %v4645, %v1238
      %v4656 = vmul.f32 %v4646, %v1242
      %v4657 = vmul.f32 %v4647, %v1246
      %v4658 = vpack.c.bf16 %v4653, %v4648
      %v4659 = vpack.c.bf16 %v4654, %v4649
      %v4660 = vpack.c.bf16 %v4655, %v4650
      %v4661 = vpack.c.bf16 %v4656, %v4651
      %v4662 = vpack.c.bf16 %v4657, %v4652
      %v4668 = vunpack.c.l.b16 %v4658
      %v4669 = vunpack.c.l.b16 %v4659
      %v4670 = vunpack.c.l.b16 %v4660
      %v4671 = vunpack.c.l.b16 %v4661
      %v4672 = vunpack.c.l.b16 %v4662
      %v4673 = vunpack.c.h.b16 %v4658
      %v4674 = vunpack.c.h.b16 %v4659
      %v4675 = vunpack.c.h.b16 %v4660
      %v4676 = vunpack.c.h.b16 %v4661
      %v4677 = vunpack.c.h.b16 %v4662
      %v4678 = vpack.c.b16 %v4669, %v4668
      %v4679 = vpack.c.b16 %v4671, %v4670
      %v4680 = vpack.c.b16 %v4672, %v4672
      %v4681 = vpack.c.b16 %v4674, %v4673
      %v4682 = vpack.c.b16 %v4676, %v4675
      %v4683 = vpack.c.b16 %v4677, %v4677
      %4690 = vst [vmem:[#allocation2 + $0x8] sm:$0xff] %v4678
      %4691 = vst [vmem:[#allocation2 + $0x10] sm:$0xff] %v4679
      %4692 = vst [vmem:[#allocation2 + $0x18] sm:$0xf] %v4680
      %4693 = vst [vmem:[#allocation2 + $0x2c] sm:$0xff] %v4681
      %4694 = vst [vmem:[#allocation2 + $0x34] sm:$0xff] %v4682
      %4695 = vst [vmem:[#allocation2 + $0x3c] sm:$0xf] %v4683
      %v4696 = vld [vmem:[#allocation2 + $0x4] sm:$0xff]
      %v4697 = vld [vmem:[#allocation2 + $0xc] sm:$0xff]
      %v4698 = vld [vmem:[#allocation2 + $0x14] sm:$0xff]
      %v4699 = vld [vmem:[#allocation2 + $0x28] sm:$0xff]
      %v4700 = vld [vmem:[#allocation2 + $0x30] sm:$0xff]
      %v4701 = vld [vmem:[#allocation2 + $0x38] sm:$0xff]
      %v4702 = vld [vmem:[#allocation2 + $0x8] sm:$0xff]
      %v4703 = vld [vmem:[#allocation2 + $0x10] sm:$0xff]
      %v4704 = vld [vmem:[#allocation2 + $0x18] sm:$0xf]
      %v4705 = vld [vmem:[#allocation2 + $0x2c] sm:$0xff]
      %v4706 = vld [vmem:[#allocation2 + $0x34] sm:$0xff]
      %v4707 = vld [vmem:[#allocation2 + $0x3c] sm:$0xf]
      %v4708 = vld [vmem:[#allocation2 + $0x18] sm:$0xff]
      %v4709 = vld [vmem:[#allocation2 + $0x3c] sm:$0xff]
      %v4716 = vunpack.c.l.b16 %v4696
      %v4717 = vunpack.c.h.b16 %v4696
      %v4718 = vunpack.c.l.b16 %v4697
      %v4719 = vunpack.c.h.b16 %v4697
      %v4720 = vunpack.c.l.b16 %v4698
      %v4721 = vunpack.c.h.b16 %v4698
      %v4722 = vunpack.c.l.b16 %v4699
      %v4723 = vunpack.c.h.b16 %v4699
      %v4724 = vunpack.c.l.b16 %v4700
      %v4725 = vunpack.c.h.b16 %v4700
      %v4726 = vunpack.c.l.b16 %v4701
      %v4727 = vunpack.c.h.b16 %v4701
      %v4728 = vpack.c.b16 %v4722, %v4716
      %v4729 = vpack.c.b16 %v4723, %v4717
      %v4730 = vpack.c.b16 %v4724, %v4718
      %v4731 = vpack.c.b16 %v4725, %v4719
      %v4732 = vpack.c.b16 %v4726, %v4720
      %v4733 = vpack.c.b16 %v4727, %v4721
      %v4740 = vunpack.c.l.b16 %v4702
      %v4741 = vunpack.c.h.b16 %v4702
      %v4742 = vunpack.c.l.b16 %v4703
      %v4743 = vunpack.c.h.b16 %v4703
      %v4744 = vunpack.c.l.b16 %v4704
      %v4745 = vunpack.c.l.b16 %v4705
      %v4746 = vunpack.c.h.b16 %v4705
      %v4747 = vunpack.c.l.b16 %v4706
      %v4748 = vunpack.c.h.b16 %v4706
      %v4749 = vunpack.c.l.b16 %v4707
      %v4750 = vpack.c.b16 %v4745, %v4740
      %v4751 = vpack.c.b16 %v4746, %v4741
      %v4752 = vpack.c.b16 %v4747, %v4742
      %v4753 = vpack.c.b16 %v4748, %v4743
      %v4754 = vpack.c.b16 %v4749, %v4744
      %4755 = vrot.lane.b32.xlu0 %v4750, 102
      %v4756 = vpop.permute.xlu0 %4755
      %4757 = vrot.lane.b32.xlu0 %v4751, 102
      %v4758 = vpop.permute.xlu0 %4757
      %4759 = vrot.lane.b32.xlu0 %v4752, 102
      %v4760 = vpop.permute.xlu0 %4759
      %4761 = vrot.lane.b32.xlu0 %v4753, 102
      %v4762 = vpop.permute.xlu0 %4761
      %4763 = vrot.lane.b32.xlu0 %v4754, 102
      %v4764 = vpop.permute.xlu0 %4763
      %v4765 = vsel %vm1386, %v4756, %v4758
      %v4766 = vsel %vm1386, %v4758, %v4760
      %v4767 = vsel %vm1386, %v4760, %v4762
      %v4768 = vsel %vm1386, %v4762, %v4764
      %v4771 = vunpack.c.l.b16 %v4708
      %v4772 = vunpack.c.h.b16 %v4708
      %v4773 = vunpack.c.l.b16 %v4709
      %v4774 = vunpack.c.h.b16 %v4709
      %v4775 = vpack.c.b16 %v4773, %v4771
      %v4776 = vpack.c.b16 %v4774, %v4772
      %4777 = vrot.lane.b32.xlu0 %v4750, 76
      %v4778 = vpop.permute.xlu0 %4777
      %4779 = vrot.lane.b32.xlu0 %v4751, 76
      %v4780 = vpop.permute.xlu0 %4779
      %4781 = vrot.lane.b32.xlu0 %v4752, 76
      %v4782 = vpop.permute.xlu0 %4781
      %4783 = vrot.lane.b32.xlu0 %v4753, 76
      %v4784 = vpop.permute.xlu0 %4783
      %4785 = vrot.lane.b32.xlu0 %v4775, 76
      %v4786 = vpop.permute.xlu0 %4785
      %4787 = vrot.lane.b32.xlu0 %v4776, 76
      %v4788 = vpop.permute.xlu0 %4787
      %v4789 = vsel %vm1466, %v4778, %v4780
      %v4790 = vsel %vm1466, %v4780, %v4782
      %v4791 = vsel %vm1466, %v4782, %v4784
      %v4792 = vsel %vm1466, %v4784, %v4786
      %v4793 = vsel %vm1466, %v4786, %v4788
      %v4794 = vld [vmem:[%s16] sm:$0xf]
      %v4795 = vld [vmem:[%s16 + $0x4] sm:$0xf]
      %v4796 = vld [vmem:[%s17] sm:$0xff]
      %v4797 = vld [vmem:[%s17 + $0x8] sm:$0xff]
      %4799 = vset.pattern.permute.xlu0 0
      %4800 = vperm.xlu0 %4799, %v4796
      %v4801 = vpop.permute.xlu0 %4800
      %4804 = vset.pattern.permute.xlu0 0
      %4805 = vperm.xlu0 %4804, %v4797
      %v4806 = vpop.permute.xlu0 %4805
      %v4810 = vunpack.c.l.b16 %v4794
      %v4811 = vunpack.c.l.b16 %v4795
      %v4812 = vpack.c.b16 %v4811, %v4810
      %4813 = vrot.lane.b32.xlu0 %v4728, 26
      %v4814 = vpop.permute.xlu0 %4813
      %4815 = vrot.lane.b32.xlu0 %v4729, 26
      %v4816 = vpop.permute.xlu0 %4815
      %4817 = vrot.lane.b32.xlu0 %v4730, 26
      %v4818 = vpop.permute.xlu0 %4817
      %4819 = vrot.lane.b32.xlu0 %v4731, 26
      %v4820 = vpop.permute.xlu0 %4819
      %4821 = vrot.lane.b32.xlu0 %v4732, 26
      %v4822 = vpop.permute.xlu0 %4821
      %4823 = vrot.lane.b32.xlu0 %v4733, 26
      %v4824 = vpop.permute.xlu0 %4823
      %4825 = vrot.lane.b32.xlu0 %v4756, 26
      %v4826 = vpop.permute.xlu0 %4825
      %4827 = vrot.lane.b32.xlu0 %v4765, 26
      %v4828 = vpop.permute.xlu0 %4827
      %4829 = vrot.lane.b32.xlu0 %v4766, 26
      %v4830 = vpop.permute.xlu0 %4829
      %4831 = vrot.lane.b32.xlu0 %v4767, 26
      %v4832 = vpop.permute.xlu0 %4831
      %4833 = vrot.lane.b32.xlu0 %v4768, 26
      %v4834 = vpop.permute.xlu0 %4833
      %4835 = vrot.lane.b32.xlu0 %v4764, 26
      %v4836 = vpop.permute.xlu0 %4835
      %4837 = vrot.lane.b32.xlu0 %v4778, 26
      %v4838 = vpop.permute.xlu0 %4837
      %4839 = vrot.lane.b32.xlu0 %v4789, 26
      %v4840 = vpop.permute.xlu0 %4839
      %4841 = vrot.lane.b32.xlu0 %v4790, 26
      %v4842 = vpop.permute.xlu0 %4841
      %4843 = vrot.lane.b32.xlu0 %v4791, 26
      %v4844 = vpop.permute.xlu0 %4843
      %4845 = vrot.lane.b32.xlu0 %v4792, 26
      %v4846 = vpop.permute.xlu0 %4845
      %4847 = vrot.lane.b32.xlu0 %v4793, 26
      %v4848 = vpop.permute.xlu0 %4847
      %v4849 = vsel %vm2078, %v4814, %v4816
      %v4850 = vsel %vm2078, %v4816, %v4818
      %v4851 = vsel %vm2078, %v4818, %v4820
      %v4852 = vsel %vm2078, %v4820, %v4822
      %v4853 = vsel %vm2078, %v4822, %v4824
      %v4854 = vsel %vm2078, %v4826, %v4828
      %v4855 = vsel %vm2078, %v4828, %v4830
      %v4856 = vsel %vm2078, %v4830, %v4832
      %v4857 = vsel %vm2078, %v4832, %v4834
      %v4858 = vsel %vm2078, %v4834, %v4836
      %v4859 = vsel %vm2078, %v4838, %v4840
      %v4860 = vsel %vm2078, %v4840, %v4842
      %v4861 = vsel %vm2078, %v4842, %v4844
      %v4862 = vsel %vm2078, %v4844, %v4846
      %v4863 = vsel %vm2078, %v4846, %v4848
      %v4880 = vsel %vm2109, %v4812, 0
      %4882 = vmatprep.subr.bf16.mxu0 0
      %4883 = vmatpush1.bf16.msra.mxu0 0
      %4884 = vmatprep.subr.bf16.mxu0 0
      %4885 = vmatpush1.bf16.msra.mxu0 0
      %4886 = vmatprep.subr.bf16.mxu0 0
      %4887 = vmatpush1.bf16.msra.mxu0 0
      %4888 = vmatprep.subr.bf16.mxu0 0
      %4889 = vmatpush1.bf16.msra.mxu0 0
      %4890 = vmatprep.subr.bf16.mxu0 0
      %4891 = vmatpush1.bf16.msra.mxu0 0
      %4892 = vmatprep.subr.bf16.mxu0 %v4860
      %4893 = vmatpush1.bf16.msra.mxu0 %v4859
      %4894 = vmatprep.subr.bf16.mxu0 %v4855
      %4895 = vmatpush1.bf16.msra.mxu0 %v4854
      %4896 = vmatprep.subr.bf16.mxu0 %v4850
      %4897 = vmatpush1.bf16.msra.mxu0 %v4849
      %4898 = vmatprep.subr.bf16.mxu0 0
      %4899 = vmatpush2.bf16.msra.mxu0 0
      %4900 = vmatprep.subr.bf16.mxu0 0
      %4901 = vmatpush2.bf16.msra.mxu0 0
      %4902 = vmatprep.subr.bf16.mxu0 0
      %4903 = vmatpush2.bf16.msra.mxu0 0
      %4904 = vmatprep.subr.bf16.mxu0 0
      %4905 = vmatpush2.bf16.msra.mxu0 0
      %4906 = vmatprep.subr.bf16.mxu0 0
      %4907 = vmatpush2.bf16.msra.mxu0 0
      %4908 = vmatprep.subr.bf16.mxu0 0
      %4909 = vmatpush2.bf16.msra.mxu0 0
      %4910 = vmatprep.subr.bf16.mxu0 0
      %4911 = vmatpush2.bf16.msra.mxu0 0
      %4912 = vmatprep.subr.bf16.mxu0 0
      %4913 = vmatpush2.bf16.msra.mxu0 0
      %4914 = vmatprep.mubr.bf16.mxu0 0
      %4915 = vmatmul.mubr.bf16.gmra.mxu0 %v4880
      %v4916 = vpop.f32.mrf.mxu0
      %v4917 = vadd.f32 %v4801, %v4916
      %v4918 = vpop.f32.mrf.mxu0
      %v4919 = vadd.f32 %v4801, %v4918
      %v4920 = vpop.f32.mrf.mxu0
      %v4921 = vadd.f32 %v4806, %v4920
      %v4922 = vpop.f32.mrf.mxu0
      %v4923 = vadd.f32 %v4806, %v4922
      %4924 = vdwg.mxu0
      %4925 = vmatprep.subr.bf16.mxu0 0
      %4926 = vmatpush1.bf16.msra.mxu0 0
      %4927 = vmatprep.subr.bf16.mxu0 0
      %4928 = vmatpush1.bf16.msra.mxu0 0
      %4929 = vmatprep.subr.bf16.mxu0 0
      %4930 = vmatpush1.bf16.msra.mxu0 0
      %4931 = vmatprep.subr.bf16.mxu0 0
      %4932 = vmatpush1.bf16.msra.mxu0 0
      %4933 = vmatprep.subr.bf16.mxu0 0
      %4934 = vmatpush1.bf16.msra.mxu0 0
      %4935 = vmatprep.subr.bf16.mxu0 %v4862
      %4936 = vmatpush1.bf16.msra.mxu0 %v4861
      %4937 = vmatprep.subr.bf16.mxu0 %v4857
      %4938 = vmatpush1.bf16.msra.mxu0 %v4856
      %4939 = vmatprep.subr.bf16.mxu0 %v4852
      %4940 = vmatpush1.bf16.msra.mxu0 %v4851
      %4941 = vmatprep.subr.bf16.mxu0 0
      %4942 = vmatpush2.bf16.msra.mxu0 0
      %4943 = vmatprep.subr.bf16.mxu0 0
      %4944 = vmatpush2.bf16.msra.mxu0 0
      %4945 = vmatprep.subr.bf16.mxu0 0
      %4946 = vmatpush2.bf16.msra.mxu0 0
      %4947 = vmatprep.subr.bf16.mxu0 0
      %4948 = vmatpush2.bf16.msra.mxu0 0
      %4949 = vmatprep.subr.bf16.mxu0 0
      %4950 = vmatpush2.bf16.msra.mxu0 0
      %4951 = vmatprep.subr.bf16.mxu0 0
      %4952 = vmatpush2.bf16.msra.mxu0 0
      %4953 = vmatprep.subr.bf16.mxu0 0
      %4954 = vmatpush2.bf16.msra.mxu0 0
      %4955 = vmatprep.subr.bf16.mxu0 0
      %4956 = vmatpush2.bf16.msra.mxu0 0
      %4957 = vmatprep.mubr.bf16.mxu0 0
      %4958 = vmatmul.mubr.bf16.gmra.mxu0 %v4880
      %v4959 = vpop.f32.mrf.mxu0
      %v4960 = vadd.f32 %v4801, %v4959
      %v4961 = vpop.f32.mrf.mxu0
      %v4962 = vadd.f32 %v4801, %v4961
      %v4963 = vpop.f32.mrf.mxu0
      %v4964 = vadd.f32 %v4806, %v4963
      %v4965 = vpop.f32.mrf.mxu0
      %v4966 = vadd.f32 %v4806, %v4965
      %4967 = vdwg.mxu0
      %4968 = vmatprep.subr.bf16.mxu0 0
      %4969 = vmatpush1.bf16.msra.mxu0 0
      %4970 = vmatprep.subr.bf16.mxu0 0
      %4971 = vmatpush1.bf16.msra.mxu0 0
      %4972 = vmatprep.subr.bf16.mxu0 0
      %4973 = vmatpush1.bf16.msra.mxu0 0
      %4974 = vmatprep.subr.bf16.mxu0 0
      %4975 = vmatpush1.bf16.msra.mxu0 0
      %4976 = vmatprep.subr.bf16.mxu0 0
      %4977 = vmatpush1.bf16.msra.mxu0 0
      %4978 = vmatprep.subr.bf16.mxu0 0
      %4979 = vmatpush1.bf16.msra.mxu0 %v4863
      %4980 = vmatprep.subr.bf16.mxu0 0
      %4981 = vmatpush1.bf16.msra.mxu0 %v4858
      %4982 = vmatprep.subr.bf16.mxu0 0
      %4983 = vmatpush1.bf16.msra.mxu0 %v4853
      %4984 = vmatprep.subr.bf16.mxu0 0
      %4985 = vmatpush2.bf16.msra.mxu0 0
      %4986 = vmatprep.subr.bf16.mxu0 0
      %4987 = vmatpush2.bf16.msra.mxu0 0
      %4988 = vmatprep.subr.bf16.mxu0 0
      %4989 = vmatpush2.bf16.msra.mxu0 0
      %4990 = vmatprep.subr.bf16.mxu0 0
      %4991 = vmatpush2.bf16.msra.mxu0 0
      %4992 = vmatprep.subr.bf16.mxu0 0
      %4993 = vmatpush2.bf16.msra.mxu0 0
      %4994 = vmatprep.subr.bf16.mxu0 0
      %4995 = vmatpush2.bf16.msra.mxu0 0
      %4996 = vmatprep.subr.bf16.mxu0 0
      %4997 = vmatpush2.bf16.msra.mxu0 0
      %4998 = vmatprep.subr.bf16.mxu0 0
      %4999 = vmatpush2.bf16.msra.mxu0 0
      %5000 = vmatprep.mubr.bf16.mxu0 0
      %5001 = vmatmul.mubr.bf16.gmra.mxu0 %v4880
      %v5002 = vpop.f32.mrf.mxu0
      %v5003 = vadd.f32 %v4801, %v5002
      %v5004 = vpop.f32.mrf.mxu0
      %v5005 = vpop.f32.mrf.mxu0
      %v5006 = vadd.f32 %v4806, %v5005
      %v5007 = vpop.f32.mrf.mxu0
      %5008 = vdwg.mxu0
      %v5009 = vmax.f32 %v4917, 0.0
      %v5010 = vmax.f32 %v4919, 0.0
      %v5011 = vmax.f32 %v4960, 0.0
      %v5012 = vmax.f32 %v4962, 0.0
      %v5013 = vmax.f32 %v5003, 0.0
      %v5014 = vmax.f32 %v4921, 0.0
      %v5015 = vmax.f32 %v4923, 0.0
      %v5016 = vmax.f32 %v4964, 0.0
      %v5017 = vmax.f32 %v4966, 0.0
      %v5018 = vmax.f32 %v5006, 0.0
      %v5019 = vmul.f32 %v5009, %v1230
      %v5020 = vmul.f32 %v5010, %v1234
      %v5021 = vmul.f32 %v5011, %v1238
      %v5022 = vmul.f32 %v5012, %v1242
      %v5023 = vmul.f32 %v5013, %v1246
      %v5024 = vmul.f32 %v5014, %v1230
      %v5025 = vmul.f32 %v5015, %v1234
      %v5026 = vmul.f32 %v5016, %v1238
      %v5027 = vmul.f32 %v5017, %v1242
      %v5028 = vmul.f32 %v5018, %v1246
      %v5029 = vpack.c.bf16 %v5024, %v5019
      %v5030 = vpack.c.bf16 %v5025, %v5020
      %v5031 = vpack.c.bf16 %v5026, %v5021
      %v5032 = vpack.c.bf16 %v5027, %v5022
      %v5033 = vpack.c.bf16 %v5028, %v5023
      %v5039 = vunpack.c.l.b16 %v5029
      %v5040 = vunpack.c.l.b16 %v5030
      %v5041 = vunpack.c.l.b16 %v5031
      %v5042 = vunpack.c.l.b16 %v5032
      %v5043 = vunpack.c.l.b16 %v5033
      %v5044 = vunpack.c.h.b16 %v5029
      %v5045 = vunpack.c.h.b16 %v5030
      %v5046 = vunpack.c.h.b16 %v5031
      %v5047 = vunpack.c.h.b16 %v5032
      %v5048 = vunpack.c.h.b16 %v5033
      %v5049 = vpack.c.b16 %v5040, %v5039
      %v5050 = vpack.c.b16 %v5042, %v5041
      %v5051 = vpack.c.b16 %v5043, %v5043
      %v5052 = vpack.c.b16 %v5045, %v5044
      %v5053 = vpack.c.b16 %v5047, %v5046
      %v5054 = vpack.c.b16 %v5048, %v5048
      %5061 = vst [vmem:[#allocation2 + $0x8] sm:$0xff] %v5049
      %5062 = vst [vmem:[#allocation2 + $0x10] sm:$0xff] %v5050
      %5063 = vst [vmem:[#allocation2 + $0x18] sm:$0xf] %v5051
      %5064 = vst [vmem:[#allocation2 + $0x2c] sm:$0xff] %v5052
      %5065 = vst [vmem:[#allocation2 + $0x34] sm:$0xff] %v5053
      %5066 = vst [vmem:[#allocation2 + $0x3c] sm:$0xf] %v5054
      %v5067 = vld [vmem:[#allocation2] sm:$0xff]
      %v5068 = vld [vmem:[#allocation2 + $0x8] sm:$0xff]
      %v5069 = vld [vmem:[#allocation2 + $0x10] sm:$0xff]
      %v5070 = vld [vmem:[#allocation2 + $0x24] sm:$0xff]
      %v5071 = vld [vmem:[#allocation2 + $0x2c] sm:$0xff]
      %v5072 = vld [vmem:[#allocation2 + $0x34] sm:$0xff]
      %v5073 = vld [vmem:[#allocation2 + $0x4] sm:$0xff]
      %v5074 = vld [vmem:[#allocation2 + $0xc] sm:$0xff]
      %v5075 = vld [vmem:[#allocation2 + $0x14] sm:$0xff]
      %v5076 = vld [vmem:[#allocation2 + $0x28] sm:$0xff]
      %v5077 = vld [vmem:[#allocation2 + $0x30] sm:$0xff]
      %v5078 = vld [vmem:[#allocation2 + $0x38] sm:$0xff]
      %v5079 = vld [vmem:[#allocation2 + $0x18] sm:$0xf]
      %v5080 = vld [vmem:[#allocation2 + $0x3c] sm:$0xf]
      %v5081 = vld [vmem:[#allocation2 + $0x18] sm:$0xff]
      %v5082 = vld [vmem:[#allocation2 + $0x3c] sm:$0xff]
      %v5083 = vld [vmem:[#allocation2 + $0xc] sm:$0xff]
      %v5084 = vld [vmem:[#allocation2 + $0x14] sm:$0xff]
      %v5085 = vld [vmem:[#allocation2 + $0x1c] sm:$0xff]
      %v5086 = vld [vmem:[#allocation2 + $0x30] sm:$0xff]
      %v5087 = vld [vmem:[#allocation2 + $0x38] sm:$0xff]
      %v5088 = vld [vmem:[#allocation2 + $0x40] sm:$0xff]
      %v5095 = vunpack.c.l.b16 %v5067
      %v5096 = vunpack.c.h.b16 %v5067
      %v5097 = vunpack.c.l.b16 %v5068
      %v5098 = vunpack.c.h.b16 %v5068
      %v5099 = vunpack.c.l.b16 %v5069
      %v5100 = vunpack.c.h.b16 %v5069
      %v5101 = vunpack.c.l.b16 %v5070
      %v5102 = vunpack.c.h.b16 %v5070
      %v5103 = vunpack.c.l.b16 %v5071
      %v5104 = vunpack.c.h.b16 %v5071
      %v5105 = vunpack.c.l.b16 %v5072
      %v5106 = vunpack.c.h.b16 %v5072
      %v5107 = vpack.c.b16 %v5101, %v5095
      %v5108 = vpack.c.b16 %v5102, %v5096
      %v5109 = vpack.c.b16 %v5103, %v5097
      %v5110 = vpack.c.b16 %v5104, %v5098
      %v5111 = vpack.c.b16 %v5105, %v5099
      %v5112 = vpack.c.b16 %v5106, %v5100
      %5113 = vrot.lane.b32.xlu0 %v5107, 123
      %v5114 = vpop.permute.xlu0 %5113
      %5115 = vrot.lane.b32.xlu0 %v5108, 123
      %v5116 = vpop.permute.xlu0 %5115
      %5117 = vrot.lane.b32.xlu0 %v5109, 123
      %v5118 = vpop.permute.xlu0 %5117
      %5119 = vrot.lane.b32.xlu0 %v5110, 123
      %v5120 = vpop.permute.xlu0 %5119
      %5121 = vrot.lane.b32.xlu0 %v5111, 123
      %v5122 = vpop.permute.xlu0 %5121
      %5123 = vrot.lane.b32.xlu0 %v5112, 123
      %v5124 = vpop.permute.xlu0 %5123
      %vm5125 = vcmask 1006592
      %v5126 = vsel %vm5125, %v5114, %v5116
      %v5127 = vsel %vm5125, %v5116, %v5118
      %v5128 = vsel %vm5125, %v5118, %v5120
      %v5129 = vsel %vm5125, %v5120, %v5122
      %v5130 = vsel %vm5125, %v5122, %v5124
      %v5137 = vunpack.c.l.b16 %v5073
      %v5138 = vunpack.c.h.b16 %v5073
      %v5139 = vunpack.c.l.b16 %v5074
      %v5140 = vunpack.c.h.b16 %v5074
      %v5141 = vunpack.c.l.b16 %v5075
      %v5142 = vunpack.c.h.b16 %v5075
      %v5143 = vunpack.c.l.b16 %v5076
      %v5144 = vunpack.c.h.b16 %v5076
      %v5145 = vunpack.c.l.b16 %v5077
      %v5146 = vunpack.c.h.b16 %v5077
      %v5147 = vunpack.c.l.b16 %v5078
      %v5148 = vunpack.c.h.b16 %v5078
      %v5149 = vpack.c.b16 %v5143, %v5137
      %v5150 = vpack.c.b16 %v5144, %v5138
      %v5151 = vpack.c.b16 %v5145, %v5139
      %v5152 = vpack.c.b16 %v5146, %v5140
      %v5153 = vpack.c.b16 %v5147, %v5141
      %v5154 = vpack.c.b16 %v5148, %v5142
      %5155 = vrot.lane.b32.xlu0 %v5149, 118
      %v5156 = vpop.permute.xlu0 %5155
      %5157 = vrot.lane.b32.xlu0 %v5150, 118
      %v5158 = vpop.permute.xlu0 %5157
      %5159 = vrot.lane.b32.xlu0 %v5151, 118
      %v5160 = vpop.permute.xlu0 %5159
      %5161 = vrot.lane.b32.xlu0 %v5152, 118
      %v5162 = vpop.permute.xlu0 %5161
      %5163 = vrot.lane.b32.xlu0 %v5153, 118
      %v5164 = vpop.permute.xlu0 %5163
      %5165 = vrot.lane.b32.xlu0 %v5154, 118
      %v5166 = vpop.permute.xlu0 %5165
      %vm5167 = vcmask 965632
      %v5168 = vsel %vm5167, %v5156, %v5158
      %v5169 = vsel %vm5167, %v5158, %v5160
      %v5170 = vsel %vm5167, %v5160, %v5162
      %v5171 = vsel %vm5167, %v5162, %v5164
      %v5172 = vsel %vm5167, %v5164, %v5166
      %5173 = vrot.lane.b32.xlu0 %v5149, 126
      %v5174 = vpop.permute.xlu0 %5173
      %5175 = vrot.lane.b32.xlu0 %v5150, 126
      %v5176 = vpop.permute.xlu0 %5175
      %5177 = vrot.lane.b32.xlu0 %v5151, 126
      %v5178 = vpop.permute.xlu0 %5177
      %5179 = vrot.lane.b32.xlu0 %v5152, 126
      %v5180 = vpop.permute.xlu0 %5179
      %5181 = vrot.lane.b32.xlu0 %v5153, 126
      %v5182 = vpop.permute.xlu0 %5181
      %5183 = vrot.lane.b32.xlu0 %v5154, 126
      %v5184 = vpop.permute.xlu0 %5183
      %v5185 = vsel %vm1368, %v5174, %v5176
      %v5186 = vsel %vm1368, %v5176, %v5178
      %v5187 = vsel %vm1368, %v5178, %v5180
      %v5188 = vsel %vm1368, %v5180, %v5182
      %v5189 = vsel %vm1368, %v5182, %v5184
      %v5192 = vunpack.c.l.b16 %v5079
      %v5193 = vunpack.c.l.b16 %v5080
      %v5194 = vpack.c.b16 %v5193, %v5192
      %5195 = vrot.lane.b32.xlu0 %v5109, 121
      %v5196 = vpop.permute.xlu0 %5195
      %5197 = vrot.lane.b32.xlu0 %v5110, 121
      %v5198 = vpop.permute.xlu0 %5197
      %5199 = vrot.lane.b32.xlu0 %v5111, 121
      %v5200 = vpop.permute.xlu0 %5199
      %5201 = vrot.lane.b32.xlu0 %v5112, 121
      %v5202 = vpop.permute.xlu0 %5201
      %5203 = vrot.lane.b32.xlu0 %v5194, 121
      %v5204 = vpop.permute.xlu0 %5203
      %vm5205 = vcmask 990208
      %v5206 = vsel %vm5205, %v5196, %v5198
      %v5207 = vsel %vm5205, %v5198, %v5200
      %v5208 = vsel %vm5205, %v5200, %v5202
      %v5209 = vsel %vm5205, %v5202, %v5204
      %v5212 = vunpack.c.l.b16 %v5081
      %v5213 = vunpack.c.h.b16 %v5081
      %v5214 = vunpack.c.l.b16 %v5082
      %v5215 = vunpack.c.h.b16 %v5082
      %v5216 = vpack.c.b16 %v5214, %v5212
      %v5217 = vpack.c.b16 %v5215, %v5213
      %5218 = vrot.lane.b32.xlu0 %v5109, 116
      %v5219 = vpop.permute.xlu0 %5218
      %5220 = vrot.lane.b32.xlu0 %v5110, 116
      %v5221 = vpop.permute.xlu0 %5220
      %5222 = vrot.lane.b32.xlu0 %v5111, 116
      %v5223 = vpop.permute.xlu0 %5222
      %5224 = vrot.lane.b32.xlu0 %v5112, 116
      %v5225 = vpop.permute.xlu0 %5224
      %5226 = vrot.lane.b32.xlu0 %v5216, 116
      %v5227 = vpop.permute.xlu0 %5226
      %5228 = vrot.lane.b32.xlu0 %v5217, 116
      %v5229 = vpop.permute.xlu0 %5228
      %vm5230 = vcmask 949248
      %v5231 = vsel %vm5230, %v5219, %v5221
      %v5232 = vsel %vm5230, %v5221, %v5223
      %v5233 = vsel %vm5230, %v5223, %v5225
      %v5234 = vsel %vm5230, %v5225, %v5227
      %v5235 = vsel %vm5230, %v5227, %v5229
      %5236 = vrot.lane.b32.xlu0 %v5109, 124
      %v5237 = vpop.permute.xlu0 %5236
      %5238 = vrot.lane.b32.xlu0 %v5110, 124
      %v5239 = vpop.permute.xlu0 %5238
      %5240 = vrot.lane.b32.xlu0 %v5111, 124
      %v5241 = vpop.permute.xlu0 %5240
      %5242 = vrot.lane.b32.xlu0 %v5112, 124
      %v5243 = vpop.permute.xlu0 %5242
      %5244 = vrot.lane.b32.xlu0 %v5216, 124
      %v5245 = vpop.permute.xlu0 %5244
      %5246 = vrot.lane.b32.xlu0 %v5217, 124
      %v5247 = vpop.permute.xlu0 %5246
      %vm5248 = vcmask 1014784
      %v5249 = vsel %vm5248, %v5237, %v5239
      %v5250 = vsel %vm5248, %v5239, %v5241
      %v5251 = vsel %vm5248, %v5241, %v5243
      %v5252 = vsel %vm5248, %v5243, %v5245
      %v5253 = vsel %vm5248, %v5245, %v5247
      %v5260 = vunpack.c.l.b16 %v5083
      %v5261 = vunpack.c.h.b16 %v5083
      %v5262 = vunpack.c.l.b16 %v5084
      %v5263 = vunpack.c.h.b16 %v5084
      %v5264 = vunpack.c.l.b16 %v5085
      %v5265 = vunpack.c.h.b16 %v5085
      %v5266 = vunpack.c.l.b16 %v5086
      %v5267 = vunpack.c.h.b16 %v5086
      %v5268 = vunpack.c.l.b16 %v5087
      %v5269 = vunpack.c.h.b16 %v5087
      %v5270 = vunpack.c.l.b16 %v5088
      %v5271 = vunpack.c.h.b16 %v5088
      %v5272 = vpack.c.b16 %v5266, %v5260
      %v5273 = vpack.c.b16 %v5267, %v5261
      %v5274 = vpack.c.b16 %v5268, %v5262
      %v5275 = vpack.c.b16 %v5269, %v5263
      %v5276 = vpack.c.b16 %v5270, %v5264
      %v5277 = vpack.c.b16 %v5271, %v5265
      %5278 = vrot.lane.b32.xlu0 %v5272, 119
      %v5279 = vpop.permute.xlu0 %5278
      %5280 = vrot.lane.b32.xlu0 %v5273, 119
      %v5281 = vpop.permute.xlu0 %5280
      %5282 = vrot.lane.b32.xlu0 %v5274, 119
      %v5283 = vpop.permute.xlu0 %5282
      %5284 = vrot.lane.b32.xlu0 %v5275, 119
      %v5285 = vpop.permute.xlu0 %5284
      %5286 = vrot.lane.b32.xlu0 %v5276, 119
      %v5287 = vpop.permute.xlu0 %5286
      %5288 = vrot.lane.b32.xlu0 %v5277, 119
      %v5289 = vpop.permute.xlu0 %5288
      %vm5290 = vcmask 973824
      %v5291 = vsel %vm5290, %v5279, %v5281
      %v5292 = vsel %vm5290, %v5281, %v5283
      %v5293 = vsel %vm5290, %v5283, %v5285
      %v5294 = vsel %vm5290, %v5285, %v5287
      %v5295 = vsel %vm5290, %v5287, %v5289
      %5296 = vrot.lane.b32.xlu0 %v5272, 114
      %v5297 = vpop.permute.xlu0 %5296
      %5298 = vrot.lane.b32.xlu0 %v5273, 114
      %v5299 = vpop.permute.xlu0 %5298
      %5300 = vrot.lane.b32.xlu0 %v5274, 114
      %v5301 = vpop.permute.xlu0 %5300
      %5302 = vrot.lane.b32.xlu0 %v5275, 114
      %v5303 = vpop.permute.xlu0 %5302
      %5304 = vrot.lane.b32.xlu0 %v5276, 114
      %v5305 = vpop.permute.xlu0 %5304
      %5306 = vrot.lane.b32.xlu0 %v5277, 114
      %v5307 = vpop.permute.xlu0 %5306
      %vm5308 = vcmask 932864
      %v5309 = vsel %vm5308, %v5297, %v5299
      %v5310 = vsel %vm5308, %v5299, %v5301
      %v5311 = vsel %vm5308, %v5301, %v5303
      %v5312 = vsel %vm5308, %v5303, %v5305
      %v5313 = vsel %vm5308, %v5305, %v5307
      %v5314 = vld [vmem:[%s18] sm:$0xff]
      %v5315 = vld [vmem:[%s18 + $0x8] sm:$0xff]
      %v5316 = vld [vmem:[%s19] sm:$0xff]
      %v5317 = vld [vmem:[%s19 + $0x8] sm:$0xff]
      %5319 = vset.pattern.permute.xlu0 0
      %5320 = vperm.xlu0 %5319, %v5316
      %v5321 = vpop.permute.xlu0 %5320
      %5324 = vset.pattern.permute.xlu0 0
      %5325 = vperm.xlu0 %5324, %v5317
      %v5326 = vpop.permute.xlu0 %5325
      %v5330 = vunpack.c.l.b16 %v5314
      %v5331 = vunpack.c.h.b16 %v5314
      %v5332 = vunpack.c.l.b16 %v5315
      %v5333 = vunpack.c.h.b16 %v5315
      %v5334 = vpack.c.b16 %v5332, %v5330
      %v5335 = vpack.c.b16 %v5333, %v5331
      %5337 = vrot.lane.b32.xlu0 %v5107, 7
      %v5338 = vpop.permute.xlu0 %5337
      %5339 = vrot.lane.b32.xlu0 %v5108, 7
      %v5340 = vpop.permute.xlu0 %5339
      %5341 = vrot.lane.b32.xlu0 %v5109, 7
      %v5342 = vpop.permute.xlu0 %5341
      %5343 = vrot.lane.b32.xlu0 %v5110, 7
      %v5344 = vpop.permute.xlu0 %5343
      %5345 = vrot.lane.b32.xlu0 %v5111, 7
      %v5346 = vpop.permute.xlu0 %5345
      %5347 = vrot.lane.b32.xlu0 %v5112, 7
      %v5348 = vpop.permute.xlu0 %5347
      %5349 = vrot.lane.b32.xlu0 %v5126, 7
      %v5350 = vpop.permute.xlu0 %5349
      %5351 = vrot.lane.b32.xlu0 %v5127, 7
      %v5352 = vpop.permute.xlu0 %5351
      %5353 = vrot.lane.b32.xlu0 %v5128, 7
      %v5354 = vpop.permute.xlu0 %5353
      %5355 = vrot.lane.b32.xlu0 %v5129, 7
      %v5356 = vpop.permute.xlu0 %5355
      %5357 = vrot.lane.b32.xlu0 %v5130, 7
      %v5358 = vpop.permute.xlu0 %5357
      %5359 = vrot.lane.b32.xlu0 %v5124, 7
      %v5360 = vpop.permute.xlu0 %5359
      %5361 = vrot.lane.b32.xlu0 %v5156, 7
      %v5362 = vpop.permute.xlu0 %5361
      %5363 = vrot.lane.b32.xlu0 %v5168, 7
      %v5364 = vpop.permute.xlu0 %5363
      %5365 = vrot.lane.b32.xlu0 %v5169, 7
      %v5366 = vpop.permute.xlu0 %5365
      %5367 = vrot.lane.b32.xlu0 %v5170, 7
      %v5368 = vpop.permute.xlu0 %5367
      %5369 = vrot.lane.b32.xlu0 %v5171, 7
      %v5370 = vpop.permute.xlu0 %5369
      %5371 = vrot.lane.b32.xlu0 %v5172, 7
      %v5372 = vpop.permute.xlu0 %5371
      %5373 = vrot.lane.b32.xlu0 %v5185, 7
      %v5374 = vpop.permute.xlu0 %5373
      %5375 = vrot.lane.b32.xlu0 %v5186, 7
      %v5376 = vpop.permute.xlu0 %5375
      %5377 = vrot.lane.b32.xlu0 %v5187, 7
      %v5378 = vpop.permute.xlu0 %5377
      %5379 = vrot.lane.b32.xlu0 %v5188, 7
      %v5380 = vpop.permute.xlu0 %5379
      %5381 = vrot.lane.b32.xlu0 %v5189, 7
      %v5382 = vpop.permute.xlu0 %5381
      %5383 = vrot.lane.b32.xlu0 %v5184, 7
      %v5384 = vpop.permute.xlu0 %5383
      %5385 = vrot.lane.b32.xlu0 %v5196, 7
      %v5386 = vpop.permute.xlu0 %5385
      %5387 = vrot.lane.b32.xlu0 %v5206, 7
      %v5388 = vpop.permute.xlu0 %5387
      %5389 = vrot.lane.b32.xlu0 %v5207, 7
      %v5390 = vpop.permute.xlu0 %5389
      %5391 = vrot.lane.b32.xlu0 %v5208, 7
      %v5392 = vpop.permute.xlu0 %5391
      %5393 = vrot.lane.b32.xlu0 %v5209, 7
      %v5394 = vpop.permute.xlu0 %5393
      %5395 = vrot.lane.b32.xlu0 %v5204, 7
      %v5396 = vpop.permute.xlu0 %5395
      %5397 = vrot.lane.b32.xlu0 %v5219, 7
      %v5398 = vpop.permute.xlu0 %5397
      %5399 = vrot.lane.b32.xlu0 %v5231, 7
      %v5400 = vpop.permute.xlu0 %5399
      %5401 = vrot.lane.b32.xlu0 %v5232, 7
      %v5402 = vpop.permute.xlu0 %5401
      %5403 = vrot.lane.b32.xlu0 %v5233, 7
      %v5404 = vpop.permute.xlu0 %5403
      %5405 = vrot.lane.b32.xlu0 %v5234, 7
      %v5406 = vpop.permute.xlu0 %5405
      %5407 = vrot.lane.b32.xlu0 %v5235, 7
      %v5408 = vpop.permute.xlu0 %5407
      %5409 = vrot.lane.b32.xlu0 %v5249, 7
      %v5410 = vpop.permute.xlu0 %5409
      %5411 = vrot.lane.b32.xlu0 %v5250, 7
      %v5412 = vpop.permute.xlu0 %5411
      %5413 = vrot.lane.b32.xlu0 %v5251, 7
      %v5414 = vpop.permute.xlu0 %5413
      %5415 = vrot.lane.b32.xlu0 %v5252, 7
      %v5416 = vpop.permute.xlu0 %5415
      %5417 = vrot.lane.b32.xlu0 %v5253, 7
      %v5418 = vpop.permute.xlu0 %5417
      %5419 = vrot.lane.b32.xlu0 %v5247, 7
      %v5420 = vpop.permute.xlu0 %5419
      %5421 = vrot.lane.b32.xlu0 %v5279, 7
      %v5422 = vpop.permute.xlu0 %5421
      %5423 = vrot.lane.b32.xlu0 %v5291, 7
      %v5424 = vpop.permute.xlu0 %5423
      %5425 = vrot.lane.b32.xlu0 %v5292, 7
      %v5426 = vpop.permute.xlu0 %5425
      %5427 = vrot.lane.b32.xlu0 %v5293, 7
      %v5428 = vpop.permute.xlu0 %5427
      %5429 = vrot.lane.b32.xlu0 %v5294, 7
      %v5430 = vpop.permute.xlu0 %5429
      %5431 = vrot.lane.b32.xlu0 %v5295, 7
      %v5432 = vpop.permute.xlu0 %5431
      %5433 = vrot.lane.b32.xlu0 %v5297, 7
      %v5434 = vpop.permute.xlu0 %5433
      %5435 = vrot.lane.b32.xlu0 %v5309, 7
      %v5436 = vpop.permute.xlu0 %5435
      %5437 = vrot.lane.b32.xlu0 %v5310, 7
      %v5438 = vpop.permute.xlu0 %5437
      %5439 = vrot.lane.b32.xlu0 %v5311, 7
      %v5440 = vpop.permute.xlu0 %5439
      %5441 = vrot.lane.b32.xlu0 %v5312, 7
      %v5442 = vpop.permute.xlu0 %5441
      %5443 = vrot.lane.b32.xlu0 %v5313, 7
      %v5444 = vpop.permute.xlu0 %5443
      %vm5445 = vcmask 56320
      %v5446 = vsel %vm5445, %v5338, %v5340
      %v5447 = vsel %vm5445, %v5340, %v5342
      %v5448 = vsel %vm5445, %v5342, %v5344
      %v5449 = vsel %vm5445, %v5344, %v5346
      %v5450 = vsel %vm5445, %v5346, %v5348
      %v5451 = vsel %vm5445, %v5350, %v5352
      %v5452 = vsel %vm5445, %v5352, %v5354
      %v5453 = vsel %vm5445, %v5354, %v5356
      %v5454 = vsel %vm5445, %v5356, %v5358
      %v5455 = vsel %vm5445, %v5358, %v5360
      %v5456 = vsel %vm5445, %v5362, %v5364
      %v5457 = vsel %vm5445, %v5364, %v5366
      %v5458 = vsel %vm5445, %v5366, %v5368
      %v5459 = vsel %vm5445, %v5368, %v5370
      %v5460 = vsel %vm5445, %v5370, %v5372
      %v5461 = vsel %vm5445, %v5374, %v5376
      %v5462 = vsel %vm5445, %v5376, %v5378
      %v5463 = vsel %vm5445, %v5378, %v5380
      %v5464 = vsel %vm5445, %v5380, %v5382
      %v5465 = vsel %vm5445, %v5382, %v5384
      %v5466 = vsel %vm5445, %v5386, %v5388
      %v5467 = vsel %vm5445, %v5388, %v5390
      %v5468 = vsel %vm5445, %v5390, %v5392
      %v5469 = vsel %vm5445, %v5392, %v5394
      %v5470 = vsel %vm5445, %v5394, %v5396
      %v5471 = vsel %vm5445, %v5398, %v5400
      %v5472 = vsel %vm5445, %v5400, %v5402
      %v5473 = vsel %vm5445, %v5402, %v5404
      %v5474 = vsel %vm5445, %v5404, %v5406
      %v5475 = vsel %vm5445, %v5406, %v5408
      %v5476 = vsel %vm5445, %v5410, %v5412
      %v5477 = vsel %vm5445, %v5412, %v5414
      %v5478 = vsel %vm5445, %v5414, %v5416
      %v5479 = vsel %vm5445, %v5416, %v5418
      %v5480 = vsel %vm5445, %v5418, %v5420
      %v5481 = vsel %vm5445, %v5422, %v5424
      %v5482 = vsel %vm5445, %v5424, %v5426
      %v5483 = vsel %vm5445, %v5426, %v5428
      %v5484 = vsel %vm5445, %v5428, %v5430
      %v5485 = vsel %vm5445, %v5430, %v5432
      %v5486 = vsel %vm5445, %v5434, %v5436
      %v5487 = vsel %vm5445, %v5436, %v5438
      %v5488 = vsel %vm5445, %v5438, %v5440
      %v5489 = vsel %vm5445, %v5440, %v5442
      %v5490 = vsel %vm5445, %v5442, %v5444
      %v5537 = vsel %vm992, %v5335, 0
      %5539 = vmatprep.subr.bf16.mxu0 %v5482
      %5540 = vmatpush1.bf16.msra.mxu0 %v5481
      %5541 = vmatprep.subr.bf16.mxu0 %v5477
      %5542 = vmatpush1.bf16.msra.mxu0 %v5476
      %5543 = vmatprep.subr.bf16.mxu0 %v5472
      %5544 = vmatpush1.bf16.msra.mxu0 %v5471
      %5545 = vmatprep.subr.bf16.mxu0 %v5467
      %5546 = vmatpush1.bf16.msra.mxu0 %v5466
      %5547 = vmatprep.subr.bf16.mxu0 %v5462
      %5548 = vmatpush1.bf16.msra.mxu0 %v5461
      %5549 = vmatprep.subr.bf16.mxu0 %v5457
      %5550 = vmatpush1.bf16.msra.mxu0 %v5456
      %5551 = vmatprep.subr.bf16.mxu0 %v5452
      %5552 = vmatpush1.bf16.msra.mxu0 %v5451
      %5553 = vmatprep.subr.bf16.mxu0 %v5447
      %5554 = vmatpush1.bf16.msra.mxu0 %v5446
      %5555 = vmatprep.subr.bf16.mxu0 0
      %5556 = vmatpush2.bf16.msra.mxu0 0
      %5557 = vmatprep.subr.bf16.mxu0 0
      %5558 = vmatpush2.bf16.msra.mxu0 0
      %5559 = vmatprep.subr.bf16.mxu0 0
      %5560 = vmatpush2.bf16.msra.mxu0 0
      %5561 = vmatprep.subr.bf16.mxu0 0
      %5562 = vmatpush2.bf16.msra.mxu0 0
      %5563 = vmatprep.subr.bf16.mxu0 0
      %5564 = vmatpush2.bf16.msra.mxu0 0
      %5565 = vmatprep.subr.bf16.mxu0 0
      %5566 = vmatpush2.bf16.msra.mxu0 0
      %5567 = vmatprep.subr.bf16.mxu0 0
      %5568 = vmatpush2.bf16.msra.mxu0 0
      %5569 = vmatprep.subr.bf16.mxu0 %v5487
      %5570 = vmatpush2.bf16.msra.mxu0 %v5486
      %5571 = vmatprep.mubr.bf16.mxu0 %v5537
      %5572 = vmatmul.mubr.bf16.gmra.mxu0 %v5334
      %v5573 = vpop.f32.mrf.mxu0
      %v5574 = vadd.f32 %v5321, %v5573
      %v5575 = vpop.f32.mrf.mxu0
      %v5576 = vadd.f32 %v5321, %v5575
      %v5577 = vpop.f32.mrf.mxu0
      %v5578 = vadd.f32 %v5326, %v5577
      %v5579 = vpop.f32.mrf.mxu0
      %v5580 = vadd.f32 %v5326, %v5579
      %5581 = vdwg.mxu0
      %5582 = vmatprep.subr.bf16.mxu0 %v5484
      %5583 = vmatpush1.bf16.msra.mxu0 %v5483
      %5584 = vmatprep.subr.bf16.mxu0 %v5479
      %5585 = vmatpush1.bf16.msra.mxu0 %v5478
      %5586 = vmatprep.subr.bf16.mxu0 %v5474
      %5587 = vmatpush1.bf16.msra.mxu0 %v5473
      %5588 = vmatprep.subr.bf16.mxu0 %v5469
      %5589 = vmatpush1.bf16.msra.mxu0 %v5468
      %5590 = vmatprep.subr.bf16.mxu0 %v5464
      %5591 = vmatpush1.bf16.msra.mxu0 %v5463
      %5592 = vmatprep.subr.bf16.mxu0 %v5459
      %5593 = vmatpush1.bf16.msra.mxu0 %v5458
      %5594 = vmatprep.subr.bf16.mxu0 %v5454
      %5595 = vmatpush1.bf16.msra.mxu0 %v5453
      %5596 = vmatprep.subr.bf16.mxu0 %v5449
      %5597 = vmatpush1.bf16.msra.mxu0 %v5448
      %5598 = vmatprep.subr.bf16.mxu0 0
      %5599 = vmatpush2.bf16.msra.mxu0 0
      %5600 = vmatprep.subr.bf16.mxu0 0
      %5601 = vmatpush2.bf16.msra.mxu0 0
      %5602 = vmatprep.subr.bf16.mxu0 0
      %5603 = vmatpush2.bf16.msra.mxu0 0
      %5604 = vmatprep.subr.bf16.mxu0 0
      %5605 = vmatpush2.bf16.msra.mxu0 0
      %5606 = vmatprep.subr.bf16.mxu0 0
      %5607 = vmatpush2.bf16.msra.mxu0 0
      %5608 = vmatprep.subr.bf16.mxu0 0
      %5609 = vmatpush2.bf16.msra.mxu0 0
      %5610 = vmatprep.subr.bf16.mxu0 0
      %5611 = vmatpush2.bf16.msra.mxu0 0
      %5612 = vmatprep.subr.bf16.mxu0 %v5489
      %5613 = vmatpush2.bf16.msra.mxu0 %v5488
      %5614 = vmatprep.mubr.bf16.mxu0 %v5537
      %5615 = vmatmul.mubr.bf16.gmra.mxu0 %v5334
      %v5616 = vpop.f32.mrf.mxu0
      %v5617 = vadd.f32 %v5321, %v5616
      %v5618 = vpop.f32.mrf.mxu0
      %v5619 = vadd.f32 %v5321, %v5618
      %v5620 = vpop.f32.mrf.mxu0
      %v5621 = vadd.f32 %v5326, %v5620
      %v5622 = vpop.f32.mrf.mxu0
      %v5623 = vadd.f32 %v5326, %v5622
      %5624 = vdwg.mxu0
      %5625 = vmatprep.subr.bf16.mxu0 0
      %5626 = vmatpush1.bf16.msra.mxu0 %v5485
      %5627 = vmatprep.subr.bf16.mxu0 0
      %5628 = vmatpush1.bf16.msra.mxu0 %v5480
      %5629 = vmatprep.subr.bf16.mxu0 0
      %5630 = vmatpush1.bf16.msra.mxu0 %v5475
      %5631 = vmatprep.subr.bf16.mxu0 0
      %5632 = vmatpush1.bf16.msra.mxu0 %v5470
      %5633 = vmatprep.subr.bf16.mxu0 0
      %5634 = vmatpush1.bf16.msra.mxu0 %v5465
      %5635 = vmatprep.subr.bf16.mxu0 0
      %5636 = vmatpush1.bf16.msra.mxu0 %v5460
      %5637 = vmatprep.subr.bf16.mxu0 0
      %5638 = vmatpush1.bf16.msra.mxu0 %v5455
      %5639 = vmatprep.subr.bf16.mxu0 0
      %5640 = vmatpush1.bf16.msra.mxu0 %v5450
      %5641 = vmatprep.subr.bf16.mxu0 0
      %5642 = vmatpush2.bf16.msra.mxu0 0
      %5643 = vmatprep.subr.bf16.mxu0 0
      %5644 = vmatpush2.bf16.msra.mxu0 0
      %5645 = vmatprep.subr.bf16.mxu0 0
      %5646 = vmatpush2.bf16.msra.mxu0 0
      %5647 = vmatprep.subr.bf16.mxu0 0
      %5648 = vmatpush2.bf16.msra.mxu0 0
      %5649 = vmatprep.subr.bf16.mxu0 0
      %5650 = vmatpush2.bf16.msra.mxu0 0
      %5651 = vmatprep.subr.bf16.mxu0 0
      %5652 = vmatpush2.bf16.msra.mxu0 0
      %5653 = vmatprep.subr.bf16.mxu0 0
      %5654 = vmatpush2.bf16.msra.mxu0 0
      %5655 = vmatprep.subr.bf16.mxu0 0
      %5656 = vmatpush2.bf16.msra.mxu0 %v5490
      %5657 = vmatprep.mubr.bf16.mxu0 %v5537
      %5658 = vmatmul.mubr.bf16.gmra.mxu0 %v5334
      %v5659 = vpop.f32.mrf.mxu0
      %v5660 = vadd.f32 %v5321, %v5659
      %v5661 = vpop.f32.mrf.mxu0
      %v5662 = vpop.f32.mrf.mxu0
      %v5663 = vadd.f32 %v5326, %v5662
      %v5664 = vpop.f32.mrf.mxu0
      %5665 = vdwg.mxu0
      %v5666 = vld [vmem:[%s23] sm:$0xf]
      %v5667 = vld [vmem:[%s23 + $0x4] sm:$0xf]
      %v5668 = vpack.c.bf16 %v5578, %v5574
      %v5669 = vpack.c.bf16 %v5580, %v5576
      %v5670 = vpack.c.bf16 %v5621, %v5617
      %v5671 = vpack.c.bf16 %v5623, %v5619
      %v5672 = vpack.c.bf16 %v5663, %v5660
      %v5675 = vunpack.c.l.b16 %v5666
      %v5676 = vunpack.c.l.b16 %v5667
      %v5677 = vpack.c.b16 %v5676, %v5675
      %v5679 = vsel %vm992, %v5677, 0
      %5681 = vmatprep.subr.bf16.mxu0 0
      %5682 = vmatpush1.bf16.msra.mxu0 0
      %5683 = vmatprep.subr.bf16.mxu0 0
      %5684 = vmatpush1.bf16.msra.mxu0 0
      %5685 = vmatprep.subr.bf16.mxu0 0
      %5686 = vmatpush1.bf16.msra.mxu0 0
      %5687 = vmatprep.subr.bf16.mxu0 0
      %5688 = vmatpush1.bf16.msra.mxu0 0
      %5689 = vmatprep.subr.bf16.mxu0 0
      %5690 = vmatpush1.bf16.msra.mxu0 0
      %5691 = vmatprep.subr.bf16.mxu0 0
      %5692 = vmatpush1.bf16.msra.mxu0 0
      %5693 = vmatprep.subr.bf16.mxu0 0
      %5694 = vmatpush1.bf16.msra.mxu0 0
      %5695 = vmatprep.subr.bf16.mxu0 %v5669
      %5696 = vmatpush1.bf16.msra.mxu0 %v5668
      %5697 = vmatprep.subr.bf16.mxu0 0
      %5698 = vmatpush2.bf16.msra.mxu0 0
      %5699 = vmatprep.subr.bf16.mxu0 0
      %5700 = vmatpush2.bf16.msra.mxu0 0
      %5701 = vmatprep.subr.bf16.mxu0 0
      %5702 = vmatpush2.bf16.msra.mxu0 0
      %5703 = vmatprep.subr.bf16.mxu0 0
      %5704 = vmatpush2.bf16.msra.mxu0 0
      %5705 = vmatprep.subr.bf16.mxu0 0
      %5706 = vmatpush2.bf16.msra.mxu0 0
      %5707 = vmatprep.subr.bf16.mxu0 0
      %5708 = vmatpush2.bf16.msra.mxu0 0
      %5709 = vmatprep.subr.bf16.mxu0 0
      %5710 = vmatpush2.bf16.msra.mxu0 0
      %5711 = vmatprep.subr.bf16.mxu0 0
      %5712 = vmatpush2.bf16.msra.mxu0 0
      %5713 = vmatprep.mubr.bf16.mxu0 0
      %5714 = vmatmul.mubr.bf16.gmra.mxu0 %v5679
      %v5715 = vpop.f32.mrf.mxu0
      %v5716 = vadd.f32 0.0, %v5715
      %v5717 = vpop.f32.mrf.mxu0
      %v5718 = vadd.f32 0.0, %v5717
      %v5719 = vpop.f32.mrf.mxu0
      %v5720 = vadd.f32 0.0, %v5719
      %v5721 = vpop.f32.mrf.mxu0
      %v5722 = vadd.f32 0.0, %v5721
      %5723 = vdwg.mxu0
      %5724 = vmatprep.subr.bf16.mxu0 0
      %5725 = vmatpush1.bf16.msra.mxu0 0
      %5726 = vmatprep.subr.bf16.mxu0 0
      %5727 = vmatpush1.bf16.msra.mxu0 0
      %5728 = vmatprep.subr.bf16.mxu0 0
      %5729 = vmatpush1.bf16.msra.mxu0 0
      %5730 = vmatprep.subr.bf16.mxu0 0
      %5731 = vmatpush1.bf16.msra.mxu0 0
      %5732 = vmatprep.subr.bf16.mxu0 0
      %5733 = vmatpush1.bf16.msra.mxu0 0
      %5734 = vmatprep.subr.bf16.mxu0 0
      %5735 = vmatpush1.bf16.msra.mxu0 0
      %5736 = vmatprep.subr.bf16.mxu0 0
      %5737 = vmatpush1.bf16.msra.mxu0 0
      %5738 = vmatprep.subr.bf16.mxu0 %v5671
      %5739 = vmatpush1.bf16.msra.mxu0 %v5670
      %5740 = vmatprep.subr.bf16.mxu0 0
      %5741 = vmatpush2.bf16.msra.mxu0 0
      %5742 = vmatprep.subr.bf16.mxu0 0
      %5743 = vmatpush2.bf16.msra.mxu0 0
      %5744 = vmatprep.subr.bf16.mxu0 0
      %5745 = vmatpush2.bf16.msra.mxu0 0
      %5746 = vmatprep.subr.bf16.mxu0 0
      %5747 = vmatpush2.bf16.msra.mxu0 0
      %5748 = vmatprep.subr.bf16.mxu0 0
      %5749 = vmatpush2.bf16.msra.mxu0 0
      %5750 = vmatprep.subr.bf16.mxu0 0
      %5751 = vmatpush2.bf16.msra.mxu0 0
      %5752 = vmatprep.subr.bf16.mxu0 0
      %5753 = vmatpush2.bf16.msra.mxu0 0
      %5754 = vmatprep.subr.bf16.mxu0 0
      %5755 = vmatpush2.bf16.msra.mxu0 0
      %5756 = vmatprep.mubr.bf16.mxu0 0
      %5757 = vmatmul.mubr.bf16.gmra.mxu0 %v5679
      %v5758 = vpop.f32.mrf.mxu0
      %v5759 = vadd.f32 0.0, %v5758
      %v5760 = vpop.f32.mrf.mxu0
      %v5761 = vadd.f32 0.0, %v5760
      %v5762 = vpop.f32.mrf.mxu0
      %v5763 = vadd.f32 0.0, %v5762
      %v5764 = vpop.f32.mrf.mxu0
      %v5765 = vadd.f32 0.0, %v5764
      %5766 = vdwg.mxu0
      %5767 = vmatprep.subr.bf16.mxu0 0
      %5768 = vmatpush1.bf16.msra.mxu0 0
      %5769 = vmatprep.subr.bf16.mxu0 0
      %5770 = vmatpush1.bf16.msra.mxu0 0
      %5771 = vmatprep.subr.bf16.mxu0 0
      %5772 = vmatpush1.bf16.msra.mxu0 0
      %5773 = vmatprep.subr.bf16.mxu0 0
      %5774 = vmatpush1.bf16.msra.mxu0 0
      %5775 = vmatprep.subr.bf16.mxu0 0
      %5776 = vmatpush1.bf16.msra.mxu0 0
      %5777 = vmatprep.subr.bf16.mxu0 0
      %5778 = vmatpush1.bf16.msra.mxu0 0
      %5779 = vmatprep.subr.bf16.mxu0 0
      %5780 = vmatpush1.bf16.msra.mxu0 0
      %5781 = vmatprep.subr.bf16.mxu0 0
      %5782 = vmatpush1.bf16.msra.mxu0 %v5672
      %5783 = vmatprep.subr.bf16.mxu0 0
      %5784 = vmatpush2.bf16.msra.mxu0 0
      %5785 = vmatprep.subr.bf16.mxu0 0
      %5786 = vmatpush2.bf16.msra.mxu0 0
      %5787 = vmatprep.subr.bf16.mxu0 0
      %5788 = vmatpush2.bf16.msra.mxu0 0
      %5789 = vmatprep.subr.bf16.mxu0 0
      %5790 = vmatpush2.bf16.msra.mxu0 0
      %5791 = vmatprep.subr.bf16.mxu0 0
      %5792 = vmatpush2.bf16.msra.mxu0 0
      %5793 = vmatprep.subr.bf16.mxu0 0
      %5794 = vmatpush2.bf16.msra.mxu0 0
      %5795 = vmatprep.subr.bf16.mxu0 0
      %5796 = vmatpush2.bf16.msra.mxu0 0
      %5797 = vmatprep.subr.bf16.mxu0 0
      %5798 = vmatpush2.bf16.msra.mxu0 0
      %5799 = vmatprep.mubr.bf16.mxu0 0
      %5800 = vmatmul.mubr.bf16.gmra.mxu0 %v5679
      %v5801 = vpop.f32.mrf.mxu0
      %v5802 = vadd.f32 0.0, %v5801
      %v5803 = vpop.f32.mrf.mxu0
      %v5804 = vpop.f32.mrf.mxu0
      %v5805 = vadd.f32 0.0, %v5804
      %v5806 = vpop.f32.mrf.mxu0
      %5807 = vdwg.mxu0
      %v5808 = vadd.f32 %v4257, %v5716
      %v5809 = vadd.f32 %v4258, %v5718
      %v5810 = vadd.f32 %v4259, %v5759
      %v5811 = vadd.f32 %v4260, %v5761
      %v5812 = vadd.f32 %v4261, %v5802
      %v5813 = vadd.f32 %v4262, %v5720
      %v5814 = vadd.f32 %v4263, %v5722
      %v5815 = vadd.f32 %v4264, %v5763
      %v5816 = vadd.f32 %v4265, %v5765
      %v5817 = vadd.f32 %v4266, %v5805
      %v5818 = vld [vmem:[%s24] sm:$0xff]
      %v5819 = vld [vmem:[%s24 + $0x8] sm:$0xff]
      %5821 = vset.pattern.permute.xlu0 0
      %5822 = vperm.xlu0 %5821, %v5818
      %v5823 = vpop.permute.xlu0 %5822
      %5826 = vset.pattern.permute.xlu0 0
      %5827 = vperm.xlu0 %5826, %v5819
      %v5828 = vpop.permute.xlu0 %5827
      %v5830 = vadd.f32 %v5808, %v5823
      %v5831 = vadd.f32 %v5809, %v5823
      %v5832 = vadd.f32 %v5810, %v5823
      %v5833 = vadd.f32 %v5811, %v5823
      %v5834 = vadd.f32 %v5812, %v5823
      %v5835 = vadd.f32 %v5813, %v5828
      %v5836 = vadd.f32 %v5814, %v5828
      %v5837 = vadd.f32 %v5815, %v5828
      %v5838 = vadd.f32 %v5816, %v5828
      %v5839 = vadd.f32 %v5817, %v5828
      %v5840 = vld [vmem:[%s25] sm:$0xf]
      %v5841 = vld [vmem:[%s25 + $0x4] sm:$0xf]
      %v5842 = vld [vmem:[%s26] sm:$0xff]
      %v5843 = vld [vmem:[%s26 + $0x8] sm:$0xff]
      %5845 = vset.pattern.permute.xlu0 0
      %5846 = vperm.xlu0 %5845, %v5842
      %v5847 = vpop.permute.xlu0 %5846
      %5850 = vset.pattern.permute.xlu0 0
      %5851 = vperm.xlu0 %5850, %v5843
      %v5852 = vpop.permute.xlu0 %5851
      %v5856 = vunpack.c.l.b16 %v5840
      %v5857 = vunpack.c.l.b16 %v5841
      %v5858 = vpack.c.b16 %v5857, %v5856
      %v5860 = vsel %vm992, %v5858, 0
      %5862 = vmatprep.subr.bf16.mxu0 0
      %5863 = vmatpush1.bf16.msra.mxu0 0
      %5864 = vmatprep.subr.bf16.mxu0 0
      %5865 = vmatpush1.bf16.msra.mxu0 0
      %5866 = vmatprep.subr.bf16.mxu0 0
      %5867 = vmatpush1.bf16.msra.mxu0 0
      %5868 = vmatprep.subr.bf16.mxu0 0
      %5869 = vmatpush1.bf16.msra.mxu0 0
      %5870 = vmatprep.subr.bf16.mxu0 0
      %5871 = vmatpush1.bf16.msra.mxu0 0
      %5872 = vmatprep.subr.bf16.mxu0 0
      %5873 = vmatpush1.bf16.msra.mxu0 0
      %5874 = vmatprep.subr.bf16.mxu0 0
      %5875 = vmatpush1.bf16.msra.mxu0 0
      %5876 = vmatprep.subr.bf16.mxu0 %v983
      %5877 = vmatpush1.bf16.msra.mxu0 %v982
      %5878 = vmatprep.subr.bf16.mxu0 0
      %5879 = vmatpush2.bf16.msra.mxu0 0
      %5880 = vmatprep.subr.bf16.mxu0 0
      %5881 = vmatpush2.bf16.msra.mxu0 0
      %5882 = vmatprep.subr.bf16.mxu0 0
      %5883 = vmatpush2.bf16.msra.mxu0 0
      %5884 = vmatprep.subr.bf16.mxu0 0
      %5885 = vmatpush2.bf16.msra.mxu0 0
      %5886 = vmatprep.subr.bf16.mxu0 0
      %5887 = vmatpush2.bf16.msra.mxu0 0
      %5888 = vmatprep.subr.bf16.mxu0 0
      %5889 = vmatpush2.bf16.msra.mxu0 0
      %5890 = vmatprep.subr.bf16.mxu0 0
      %5891 = vmatpush2.bf16.msra.mxu0 0
      %5892 = vmatprep.subr.bf16.mxu0 0
      %5893 = vmatpush2.bf16.msra.mxu0 0
      %5894 = vmatprep.mubr.bf16.mxu0 0
      %5895 = vmatmul.mubr.bf16.gmra.mxu0 %v5860
      %v5896 = vpop.f32.mrf.mxu0
      %v5897 = vadd.f32 %v5847, %v5896
      %v5898 = vpop.f32.mrf.mxu0
      %v5899 = vadd.f32 %v5847, %v5898
      %v5900 = vpop.f32.mrf.mxu0
      %v5901 = vadd.f32 %v5852, %v5900
      %v5902 = vpop.f32.mrf.mxu0
      %v5903 = vadd.f32 %v5852, %v5902
      %5904 = vdwg.mxu0
      %5905 = vmatprep.subr.bf16.mxu0 0
      %5906 = vmatpush1.bf16.msra.mxu0 0
      %5907 = vmatprep.subr.bf16.mxu0 0
      %5908 = vmatpush1.bf16.msra.mxu0 0
      %5909 = vmatprep.subr.bf16.mxu0 0
      %5910 = vmatpush1.bf16.msra.mxu0 0
      %5911 = vmatprep.subr.bf16.mxu0 0
      %5912 = vmatpush1.bf16.msra.mxu0 0
      %5913 = vmatprep.subr.bf16.mxu0 0
      %5914 = vmatpush1.bf16.msra.mxu0 0
      %5915 = vmatprep.subr.bf16.mxu0 0
      %5916 = vmatpush1.bf16.msra.mxu0 0
      %5917 = vmatprep.subr.bf16.mxu0 0
      %5918 = vmatpush1.bf16.msra.mxu0 0
      %5919 = vmatprep.subr.bf16.mxu0 %v985
      %5920 = vmatpush1.bf16.msra.mxu0 %v984
      %5921 = vmatprep.subr.bf16.mxu0 0
      %5922 = vmatpush2.bf16.msra.mxu0 0
      %5923 = vmatprep.subr.bf16.mxu0 0
      %5924 = vmatpush2.bf16.msra.mxu0 0
      %5925 = vmatprep.subr.bf16.mxu0 0
      %5926 = vmatpush2.bf16.msra.mxu0 0
      %5927 = vmatprep.subr.bf16.mxu0 0
      %5928 = vmatpush2.bf16.msra.mxu0 0
      %5929 = vmatprep.subr.bf16.mxu0 0
      %5930 = vmatpush2.bf16.msra.mxu0 0
      %5931 = vmatprep.subr.bf16.mxu0 0
      %5932 = vmatpush2.bf16.msra.mxu0 0
      %5933 = vmatprep.subr.bf16.mxu0 0
      %5934 = vmatpush2.bf16.msra.mxu0 0
      %5935 = vmatprep.subr.bf16.mxu0 0
      %5936 = vmatpush2.bf16.msra.mxu0 0
      %5937 = vmatprep.mubr.bf16.mxu0 0
      %5938 = vmatmul.mubr.bf16.gmra.mxu0 %v5860
      %v5939 = vpop.f32.mrf.mxu0
      %v5940 = vadd.f32 %v5847, %v5939
      %v5941 = vpop.f32.mrf.mxu0
      %v5942 = vadd.f32 %v5847, %v5941
      %v5943 = vpop.f32.mrf.mxu0
      %v5944 = vadd.f32 %v5852, %v5943
      %v5945 = vpop.f32.mrf.mxu0
      %v5946 = vadd.f32 %v5852, %v5945
      %5947 = vdwg.mxu0
      %5948 = vmatprep.subr.bf16.mxu0 0
      %5949 = vmatpush1.bf16.msra.mxu0 0
      %5950 = vmatprep.subr.bf16.mxu0 0
      %5951 = vmatpush1.bf16.msra.mxu0 0
      %5952 = vmatprep.subr.bf16.mxu0 0
      %5953 = vmatpush1.bf16.msra.mxu0 0
      %5954 = vmatprep.subr.bf16.mxu0 0
      %5955 = vmatpush1.bf16.msra.mxu0 0
      %5956 = vmatprep.subr.bf16.mxu0 0
      %5957 = vmatpush1.bf16.msra.mxu0 0
      %5958 = vmatprep.subr.bf16.mxu0 0
      %5959 = vmatpush1.bf16.msra.mxu0 0
      %5960 = vmatprep.subr.bf16.mxu0 0
      %5961 = vmatpush1.bf16.msra.mxu0 0
      %5962 = vmatprep.subr.bf16.mxu0 0
      %5963 = vmatpush1.bf16.msra.mxu0 %v986
      %5964 = vmatprep.subr.bf16.mxu0 0
      %5965 = vmatpush2.bf16.msra.mxu0 0
      %5966 = vmatprep.subr.bf16.mxu0 0
      %5967 = vmatpush2.bf16.msra.mxu0 0
      %5968 = vmatprep.subr.bf16.mxu0 0
      %5969 = vmatpush2.bf16.msra.mxu0 0
      %5970 = vmatprep.subr.bf16.mxu0 0
      %5971 = vmatpush2.bf16.msra.mxu0 0
      %5972 = vmatprep.subr.bf16.mxu0 0
      %5973 = vmatpush2.bf16.msra.mxu0 0
      %5974 = vmatprep.subr.bf16.mxu0 0
      %5975 = vmatpush2.bf16.msra.mxu0 0
      %5976 = vmatprep.subr.bf16.mxu0 0
      %5977 = vmatpush2.bf16.msra.mxu0 0
      %5978 = vmatprep.subr.bf16.mxu0 0
      %5979 = vmatpush2.bf16.msra.mxu0 0
      %5980 = vmatprep.mubr.bf16.mxu0 0
      %5981 = vmatmul.mubr.bf16.gmra.mxu0 %v5860
      %v5982 = vpop.f32.mrf.mxu0
      %v5983 = vadd.f32 %v5847, %v5982
      %v5984 = vpop.f32.mrf.mxu0
      %v5985 = vpop.f32.mrf.mxu0
      %v5986 = vadd.f32 %v5852, %v5985
      %v5987 = vpop.f32.mrf.mxu0
      %5988 = vdwg.mxu0
      %v5989 = vmul.f32 %v5830, 0.1
      %v5990 = vmul.f32 %v5831, 0.1
      %v5991 = vmul.f32 %v5832, 0.1
      %v5992 = vmul.f32 %v5833, 0.1
      %v5993 = vmul.f32 %v5834, 0.1
      %v5994 = vmul.f32 %v5835, 0.1
      %v5995 = vmul.f32 %v5836, 0.1
      %v5996 = vmul.f32 %v5837, 0.1
      %v5997 = vmul.f32 %v5838, 0.1
      %v5998 = vmul.f32 %v5839, 0.1
      %v5999 = vadd.f32 %v5989, %v5897
      %v6000 = vadd.f32 %v5990, %v5899
      %v6001 = vadd.f32 %v5991, %v5940
      %v6002 = vadd.f32 %v5992, %v5942
      %v6003 = vadd.f32 %v5993, %v5983
      %v6004 = vadd.f32 %v5994, %v5901
      %v6005 = vadd.f32 %v5995, %v5903
      %v6006 = vadd.f32 %v5996, %v5944
      %v6007 = vadd.f32 %v5997, %v5946
      %v6008 = vadd.f32 %v5998, %v5986
      %v6009 = vmax.f32 %v5999, 0.0
      %v6010 = vmax.f32 %v6000, 0.0
      %v6011 = vmax.f32 %v6001, 0.0
      %v6012 = vmax.f32 %v6002, 0.0
      %v6013 = vmax.f32 %v6003, 0.0
      %v6014 = vmax.f32 %v6004, 0.0
      %v6015 = vmax.f32 %v6005, 0.0
      %v6016 = vmax.f32 %v6006, 0.0
      %v6017 = vmax.f32 %v6007, 0.0
      %v6018 = vmax.f32 %v6008, 0.0
      %v6019 = vpack.c.bf16 %v6014, %v6009
      %v6020 = vpack.c.bf16 %v6015, %v6010
      %v6021 = vpack.c.bf16 %v6016, %v6011
      %v6022 = vpack.c.bf16 %v6017, %v6012
      %v6023 = vpack.c.bf16 %v6018, %v6013
      %v6029 = vunpack.c.l.b16 %v6019
      %v6030 = vunpack.c.l.b16 %v6020
      %v6031 = vunpack.c.l.b16 %v6021
      %v6032 = vunpack.c.l.b16 %v6022
      %v6033 = vunpack.c.l.b16 %v6023
      %v6034 = vunpack.c.h.b16 %v6019
      %v6035 = vunpack.c.h.b16 %v6020
      %v6036 = vunpack.c.h.b16 %v6021
      %v6037 = vunpack.c.h.b16 %v6022
      %v6038 = vunpack.c.h.b16 %v6023
      %v6039 = vpack.c.b16 %v6030, %v6029
      %v6040 = vpack.c.b16 %v6032, %v6031
      %v6041 = vpack.c.b16 %v6033, %v6033
      %v6042 = vpack.c.b16 %v6035, %v6034
      %v6043 = vpack.c.b16 %v6037, %v6036
      %v6044 = vpack.c.b16 %v6038, %v6038
      %6051 = vst [vmem:[%s871] sm:$0xff] %v6039
      %6052 = vst [vmem:[%s871 + $0x8] sm:$0xff] %v6040
      %6053 = vst [vmem:[%s871 + $0x10] sm:$0xf] %v6041
      %6054 = vst [vmem:[%s871 + $0x14] sm:$0xff] %v6042
      %6055 = vst [vmem:[%s871 + $0x1c] sm:$0xff] %v6043
      %6056 = vst [vmem:[%s871 + $0x24] sm:$0xf] %v6044
      %p6057 = scmp.lt.s32.totalorder %s42, 1
      %s6058 = scalar_select %p6057, %s42, 1
      %p6059 = scmp.lt.s32.totalorder %s43, 1
      %s6060 = scalar_select %p6059, %s43, 1
      %s6061 = smul.addr %s6060, 10
      %s6062 = smul.addr %s6058, 20
      %s6063 = sadd.s32 %s6061, %s6062
      %s6064 = smul.addr %s6063, 4
      %s6065 = scalar_lea.vmem %s27, %s6064
      // Predicated region
      $region129: #{basic_rfb_a_forward.1} parent=127 // pred_check
        %p6066 = pneg %p649
      $region130: #{basic_rfb_a_forward.1} parent=127 // pred_check_branch
        %6068 = sbr.rel (%p6066) target = $region132
      $region131: #{basic_rfb_a_forward.1} parent=127 // pred_region
        _
      $region132: #{basic_rfb_a_forward.1} parent=127 // pred_fallthru
        _
    $region128: #{basic_rfb_a_forward.1} parent=5 // pred_fallthru
      _
    %p6069 = scmp.le.s32.totalorder 2, %s33
    // Predicated region
    $region133: #{basic_rfb_a_forward.1} parent=5 // pred_check
      %p6070 = pneg %p6069
    $region134: #{basic_rfb_a_forward.1} parent=5 // pred_check_branch
      %6072 = sbr.rel (%p6070) target = $region136
    $region135: #{basic_rfb_a_forward.1} parent=5 // pred_region
      %s6073 = ssub.s32 %s33, 2
      // Predicated region
      $region137: #{basic_rfb_a_forward.1} parent=135 // pred_check
        %p6074 = pneg %p655
      $region138: #{basic_rfb_a_forward.1} parent=135 // pred_check_branch
        %6076 = sbr.rel (%p6074) target = $region140
      $region139: #{basic_rfb_a_forward.1} parent=135 // pred_region
        %p6077 = scmp.lt.s32.totalorder %s44, 1
        %s6078 = scalar_select %p6077, %s44, 1
        %p6079 = scmp.lt.s32.totalorder %s45, 1
        %s6080 = scalar_select %p6079, %s45, 1
        %s6081 = smul.addr %s6080, 10
        %s6082 = smul.addr %s6078, 20
        %s6083 = sadd.s32 %s6081, %s6082
        %s6084 = smul.addr %s6083, 4
        %s6085 = scalar_lea.vmem %s27, %s6084
      $region140: #{basic_rfb_a_forward.1} parent=135 // pred_fallthru
        _
    $region136: #{basic_rfb_a_forward.1} parent=5 // pred_fallthru
      _
  $region6: #{basic_rfb_a_forward.1} parent=0 // loop_footer
    %s37 = sadd.s32 1, %s33
  $region7: #{basic_rfb_a_forward.1} parent=0 // loop_footer_branch
    %32 = sbr.rel target = $region3
  $region8: #{basic_rfb_a_forward.1} parent=0 // loop_exit
    _

</llo_original>
